<compile_context>
chip_gen: v5e
topology: v5e:2x2
jax: 0.10.0
libtpu: 0.0.40
codegen_flags: <defaults>
</compile_context>

<pallas_src>
import functools
import math

import jax
import jax.numpy as jnp
from jax.experimental import pallas as pl


# --------------------------------------------------------------------------
# In-kernel helpers
# --------------------------------------------------------------------------
def _gru_update(gi, h, whh_ref, bhh_ref):
    """One GRU hidden-state update from precomputed input preactivations.

    gi      : tuple of 3 arrays [B, Hg] (r, z, n input preactivations, b_ih
              already folded in)
    h       : [B, Hg]    previous hidden state
    whh_ref : [3, Hg, Hg] per-gate hidden weights (lane-aligned blocks)
    bhh_ref : [3, 1, Hg]  per-gate hidden biases
    PyTorch GRU gate order r, z, n:
        r = sig(gi_r + h W_hr + b_hr); z = sig(gi_z + h W_hz + b_hz)
        n = tanh(gi_n + r * (h W_hn + b_hn)); h' = (1-z)*n + z*h
    """
    hr = jnp.dot(h, whh_ref[0], preferred_element_type=jnp.float32) + bhh_ref[0]
    hz = jnp.dot(h, whh_ref[1], preferred_element_type=jnp.float32) + bhh_ref[1]
    hn = jnp.dot(h, whh_ref[2], preferred_element_type=jnp.float32) + bhh_ref[2]
    r = jax.nn.sigmoid(gi[0] + hr)
    z = jax.nn.sigmoid(gi[1] + hz)
    n = jnp.tanh(gi[2] + r * hn)
    return (1.0 - z) * n + z * h


def _winseq2seq_kernel(S, W, Wp,
                       tok_ref,
                       tf_wih, tf_whh, tf_bih, tf_bhh,   # token encoder fwd
                       tb_wih, tb_whh, tb_bih, tb_bhh,   # token encoder bwd
                       uf_wih, uf_whh, uf_bih, uf_bhh,   # utt encoder fwd
                       ub_wih, ub_whh, ub_bih, ub_bhh,   # utt encoder bwd
                       d_wih, d_whh, d_bih, d_bhh,       # decoder GRU
                       fc_w, fc_b,
                       out_ref):
    """Entire WinSeq2Seq forward in one kernel invocation (no grid)."""
    H = tf_whh.shape[-1]
    x_flat = tok_ref[...]                                  # [S*Wp, E]

    def in_proj(x, wih_ref, bih_ref):
        # Hoisted input projection: one MXU matmul per gate (off the
        # recurrence critical path), b_ih folded in.
        return tuple(
            jnp.dot(x, wih_ref[g], preferred_element_type=jnp.float32)
            + bih_ref[g] for g in range(3))

    # ---- token encoder: fwd + bwd fused, static time loop ------------------
    gi_f = in_proj(x_flat, tf_wih, tf_bih)                 # 3 x [S*Wp, H]
    gi_b = in_proj(x_flat, tb_wih, tb_bih)

    h_f = jnp.zeros((Wp, H), jnp.float32)
    h_b = jnp.zeros((Wp, H), jnp.float32)
    for t in range(S):
        rows_f = slice(t * Wp, (t + 1) * Wp)               # sublane-aligned (Wp % 8 == 0)
        tr = S - 1 - t                                     # backward reads reversed index
        rows_b = slice(tr * Wp, (tr + 1) * Wp)
        h_f = _gru_update(tuple(g[rows_f] for g in gi_f), h_f, tf_whh, tf_bhh)
        h_b = _gru_update(tuple(g[rows_b] for g in gi_b), h_b, tb_whh, tb_bhh)

    # h_n.transpose(0,1).reshape(W, 2H) == per-row concat(h_fwd, h_bwd)
    utt_features = jnp.concatenate([h_f, h_b], axis=1)     # [Wp, 2H]

    # ---- utt encoder: bidirectional over the window axis, batch = 1 --------
    ugi_f = in_proj(utt_features, uf_wih, uf_bih)          # 3 x [Wp, H]
    ugi_b = in_proj(utt_features, ub_wih, ub_bih)

    c_f = jnp.zeros((1, H), jnp.float32)
    c_b = jnp.zeros((1, H), jnp.float32)
    for t in range(W):                                     # only real window rows
        tr = W - 1 - t
        c_f = _gru_update(tuple(g[t:t + 1] for g in ugi_f), c_f, uf_whh, uf_bhh)
        c_b = _gru_update(tuple(g[tr:tr + 1] for g in ugi_b), c_b, ub_whh, ub_bhh)

    context = jnp.concatenate([c_f, c_b], axis=1)          # [1, 2H]

    # ---- decoder: W autoregressive steps; input_t = output_{t-1} (== h) ----
    # In the PyTorch loop decoder output == h_n (seq_len=1), so the next-step
    # input equals the previous hidden state; the first input is all zeros.
    h = context
    dec_outs = []
    for i in range(W):
        if i == 0:
            gi = tuple(d_bih[g] for g in range(3))         # x = 0 -> gi = b_ih
        else:
            gi = tuple(
                jnp.dot(h, d_wih[g], preferred_element_type=jnp.float32)
                + d_bih[g] for g in range(3))
        h = _gru_update(gi, h, d_whh, d_bhh)
        dec_outs.append(h)
    dec_out = jnp.concatenate(dec_outs, axis=0)            # [W, 2H]

    # ---- fc fused as the kernel epilogue -----------------------------------
    out = jnp.dot(dec_out, fc_w[...], preferred_element_type=jnp.float32) + fc_b[...]
    out_ref[...] = out.astype(out_ref.dtype)


# --------------------------------------------------------------------------
# Wrapper (weight re-layout + embedding gather glue + single pallas_call)
# --------------------------------------------------------------------------
def _split_gru_params(w_ih, w_hh, b_ih, b_hh):
    """PyTorch [3H,Din]/[3H,H]/[3H] -> lane-aligned per-gate blocks.

    Returns wih [3, Din, H], whh [3, Hh, H], bih/bhh [3, 1, H]  (gate order r,z,n).
    """
    H3, Din = w_ih.shape
    Hh = w_hh.shape[1]
    H = H3 // 3
    wih = jnp.transpose(w_ih.reshape(3, H, Din), (0, 2, 1)).astype(jnp.float32)
    whh = jnp.transpose(w_hh.reshape(3, H, Hh), (0, 2, 1)).astype(jnp.float32)
    bih = b_ih.reshape(3, 1, H).astype(jnp.float32)
    bhh = b_hh.reshape(3, 1, H).astype(jnp.float32)
    return wih, whh, bih, bhh


def winseq2seq_forward(params, x_ids):
    """x_ids: int32 [window_size, max_seq_len] -> [window_size, output_dim]."""
    # TODO(synk): use_label_embed=True branch (LabelEmbedding outputs) not
    # implemented; ModelParam defaults it to False so only the fc output is built.
    W, S = x_ids.shape
    O = params["fc_b"].shape[0]
    Wp = max(8, ((W + 7) // 8) * 8)        # pad window/batch to full sublane tiles

    tok = params["embedding"][x_ids]       # [W, S, E]  embedding gather (JAX glue)
    tok_t = jnp.transpose(tok, (1, 0, 2))  # [S, W, E]  time-major
    tok_p = jnp.pad(tok_t, ((0, 0), (0, Wp - W), (0, 0)))
    E = tok_p.shape[-1]
    tok_flat = tok_p.reshape(S * Wp, E).astype(jnp.float32)

    flat = []
    for name in ("tok_f", "tok_b", "utt_f", "utt_b", "dec"):
        flat.extend(_split_gru_params(*params[name]))
    fc_w = jnp.transpose(params["fc_w"]).astype(jnp.float32)          # [2H, O]
    fc_b = params["fc_b"].astype(jnp.float32).reshape(1, O)

    kernel = functools.partial(_winseq2seq_kernel, S, W, Wp)
    return pl.pallas_call(
        kernel,
        out_shape=jax.ShapeDtypeStruct((W, O), jnp.float32),
    )(tok_flat, *flat, fc_w, fc_b)


# --------------------------------------------------------------------------
# Pure-JAX reference (mirrors the PyTorch forward exactly) for a sanity check
# --------------------------------------------------------------------------
def _gru_cell_ref(x, h, w_ih, w_hh, b_ih, b_hh):
    gi = x @ w_ih.T + b_ih
    gh = h @ w_hh.T + b_hh
    H = h.shape[-1]
    r = jax.nn.sigmoid(gi[..., :H] + gh[..., :H])
    z = jax.nn.sigmoid(gi[..., H:2 * H] + gh[..., H:2 * H])
    n = jnp.tanh(gi[..., 2 * H:] + r * gh[..., 2 * H:])
    return (1.0 - z) * n + z * h


def winseq2seq_reference(params, x_ids):
    W, S = x_ids.shape
    H = params["tok_f"][1].shape[1]
    tok_t = jnp.transpose(params["embedding"][x_ids], (1, 0, 2))   # [S, W, E]

    def run(seq, p, h0, reverse=False):
        order = range(seq.shape[0])
        if reverse:
            order = reversed(list(order))
        h = h0
        for t in order:
            h = _gru_cell_ref(seq[t], h, *p)
        return h

    z = jnp.zeros((W, H), jnp.float32)
    hf = run(tok_t, params["tok_f"], z)
    hb = run(tok_t, params["tok_b"], z, reverse=True)
    utt = jnp.concatenate([hf, hb], axis=1)                        # [W, 2H]

    utt_seq = utt[:, None, :]                                      # [W, 1, 2H]
    z1 = jnp.zeros((1, H), jnp.float32)
    cf = run(utt_seq, params["utt_f"], z1)
    cb = run(utt_seq, params["utt_b"], z1, reverse=True)
    h = jnp.concatenate([cf, cb], axis=1)                          # [1, 2H]

    x = jnp.zeros((1, 2 * H), jnp.float32)
    outs = []
    for _ in range(W):
        h = _gru_cell_ref(x, h, *params["dec"])
        x = h
        outs.append(h)
    dec_out = jnp.concatenate(outs, axis=0)                        # [W, 2H]
    return dec_out @ params["fc_w"].T + params["fc_b"]


# --------------------------------------------------------------------------
# Deterministic parameter init (mirrors the PyTorch module's shapes)
# --------------------------------------------------------------------------
def init_gru_params(key, in_dim, hidden):
    k = 1.0 / math.sqrt(hidden)
    k1, k2, k3, k4 = jax.random.split(key, 4)
    return (jax.random.uniform(k1, (3 * hidden, in_dim), jnp.float32, -k, k),
            jax.random.uniform(k2, (3 * hidden, hidden), jnp.float32, -k, k),
            jax.random.uniform(k3, (3 * hidden,), jnp.float32, -k, k),
            jax.random.uniform(k4, (3 * hidden,), jnp.float32, -k, k))


def init_params(key, vocab, embed, hidden, out_dim):
    keys = jax.random.split(key, 8)
    kfc = 1.0 / math.sqrt(2 * hidden)
    return {
        "embedding": jax.random.normal(keys[0], (vocab, embed), jnp.float32),
        # token_encoder: bidirectional GRU(embed -> hidden)
        "tok_f": init_gru_params(keys[1], embed, hidden),
        "tok_b": init_gru_params(keys[2], embed, hidden),
        # utt_encoder: bidirectional GRU(2*hidden -> hidden)
        "utt_f": init_gru_params(keys[3], 2 * hidden, hidden),
        "utt_b": init_gru_params(keys[4], 2 * hidden, hidden),
        # decoder: GRU(2*hidden -> 2*hidden)
        "dec": init_gru_params(keys[5], 2 * hidden, 2 * hidden),
        # fc: Linear(2*hidden -> output_dim)
        "fc_w": jax.random.uniform(keys[6], (out_dim, 2 * hidden), jnp.float32,
                                   -kfc, kfc),
        "fc_b": jax.random.uniform(keys[7], (out_dim,), jnp.float32, -kfc, kfc),
    }


# --------------------------------------------------------------------------
if __name__ == "__main__":
    key = jax.random.PRNGKey(0)
    k_params, k_input = jax.random.split(key)

    WINDOW, SEQ = 5, 8            # window_size, max_seq_len
    VOCAB, EMBED = 50, 16         # vocab_size, embed_dim
    HIDDEN, OUT = 32, 8           # hidden_dim, output_dim

    params = init_params(k_params, VOCAB, EMBED, HIDDEN, OUT)
    x = jax.random.randint(k_input, (WINDOW, SEQ), 0, VOCAB, dtype=jnp.int32)

    fwd = jax.jit(winseq2seq_forward)
    out = jax.block_until_ready(fwd(params, x))

    assert out.shape == (WINDOW, OUT), out.shape
    assert bool(jnp.all(jnp.isfinite(out)))

    # Loose-tolerance sanity check against a pure-JAX reference (MXU default
    # precision differs slightly from XLA f32 dots over the recurrence).
    ref = winseq2seq_reference(params, x)
    max_err = float(jnp.max(jnp.abs(out - ref)))
    assert max_err < 5e-2, f"kernel/reference mismatch, max abs err = {max_err}"

    print("KERNEL_OK")
</pallas_src>

<mosaic_0001>
module attributes {stable_mosaic.version = 11 : i64} {
  func.func @_winseq2seq_kernel(%arg0: memref<64x16xf32, #tpu.memory_space<vmem>>, %arg1: memref<3x16x32xf32, #tpu.memory_space<vmem>>, %arg2: memref<3x32x32xf32, #tpu.memory_space<vmem>>, %arg3: memref<3x1x32xf32, #tpu.memory_space<vmem>>, %arg4: memref<3x1x32xf32, #tpu.memory_space<vmem>>, %arg5: memref<3x16x32xf32, #tpu.memory_space<vmem>>, %arg6: memref<3x32x32xf32, #tpu.memory_space<vmem>>, %arg7: memref<3x1x32xf32, #tpu.memory_space<vmem>>, %arg8: memref<3x1x32xf32, #tpu.memory_space<vmem>>, %arg9: memref<3x64x32xf32, #tpu.memory_space<vmem>>, %arg10: memref<3x32x32xf32, #tpu.memory_space<vmem>>, %arg11: memref<3x1x32xf32, #tpu.memory_space<vmem>>, %arg12: memref<3x1x32xf32, #tpu.memory_space<vmem>>, %arg13: memref<3x64x32xf32, #tpu.memory_space<vmem>>, %arg14: memref<3x32x32xf32, #tpu.memory_space<vmem>>, %arg15: memref<3x1x32xf32, #tpu.memory_space<vmem>>, %arg16: memref<3x1x32xf32, #tpu.memory_space<vmem>>, %arg17: memref<3x64x64xf32, #tpu.memory_space<vmem>>, %arg18: memref<3x64x64xf32, #tpu.memory_space<vmem>>, %arg19: memref<3x1x64xf32, #tpu.memory_space<vmem>>, %arg20: memref<3x1x64xf32, #tpu.memory_space<vmem>>, %arg21: memref<64x8xf32, #tpu.memory_space<vmem>>, %arg22: memref<1x8xf32, #tpu.memory_space<vmem>>, %arg23: memref<5x8xf32, #tpu.memory_space<vmem>>) attributes {dimension_semantics = [], scalar_prefetch = 0 : i64, scratch_operands = 0 : i64, tpu.core_type = #tpu.core_type<tc>} {
    %c0 = arith.constant 0 : index
    %c0_0 = arith.constant 0 : index
    %0 = vector.load %arg0[%c0, %c0_0] : memref<64x16xf32, #tpu.memory_space<vmem>>, vector<64x16xf32>
    %c0_1 = arith.constant 0 : index
    %c0_2 = arith.constant 0 : index
    %c0_3 = arith.constant 0 : index
    %1 = vector.load %arg1[%c0_1, %c0_2, %c0_3] : memref<3x16x32xf32, #tpu.memory_space<vmem>>, vector<1x16x32xf32>
    %2 = vector.shape_cast %1 : vector<1x16x32xf32> to vector<16x32xf32>
    %cst = arith.constant dense<0.000000e+00> : vector<64x32xf32>
    %3 = tpu.matmul %0, %2, %cst {dimension_numbers = #tpu.dot_dimension_numbers<[1], [0], [0], [1], [0, 0, 1, 1], [], []>} : vector<64x16xf32>, vector<16x32xf32>, vector<64x32xf32> -> vector<64x32xf32>
    %c0_4 = arith.constant 0 : index
    %c0_5 = arith.constant 0 : index
    %c0_6 = arith.constant 0 : index
    %4 = vector.load %arg3[%c0_4, %c0_5, %c0_6] : memref<3x1x32xf32, #tpu.memory_space<vmem>>, vector<1x1x32xf32>
    %5 = vector.shape_cast %4 : vector<1x1x32xf32> to vector<1x32xf32>
    %6 = vector.broadcast %5 : vector<1x32xf32> to vector<64x32xf32>
    %7 = arith.addf %3, %6 : vector<64x32xf32>
    %c1 = arith.constant 1 : index
    %c0_7 = arith.constant 0 : index
    %c0_8 = arith.constant 0 : index
    %8 = vector.load %arg1[%c1, %c0_7, %c0_8] : memref<3x16x32xf32, #tpu.memory_space<vmem>>, vector<1x16x32xf32>
    %9 = vector.shape_cast %8 : vector<1x16x32xf32> to vector<16x32xf32>
    %cst_9 = arith.constant dense<0.000000e+00> : vector<64x32xf32>
    %10 = tpu.matmul %0, %9, %cst_9 {dimension_numbers = #tpu.dot_dimension_numbers<[1], [0], [0], [1], [0, 0, 1, 1], [], []>} : vector<64x16xf32>, vector<16x32xf32>, vector<64x32xf32> -> vector<64x32xf32>
    %c1_10 = arith.constant 1 : index
    %c0_11 = arith.constant 0 : index
    %c0_12 = arith.constant 0 : index
    %11 = vector.load %arg3[%c1_10, %c0_11, %c0_12] : memref<3x1x32xf32, #tpu.memory_space<vmem>>, vector<1x1x32xf32>
    %12 = vector.shape_cast %11 : vector<1x1x32xf32> to vector<1x32xf32>
    %13 = vector.broadcast %12 : vector<1x32xf32> to vector<64x32xf32>
    %14 = arith.addf %10, %13 : vector<64x32xf32>
    %c2 = arith.constant 2 : index
    %c0_13 = arith.constant 0 : index
    %c0_14 = arith.constant 0 : index
    %15 = vector.load %arg1[%c2, %c0_13, %c0_14] : memref<3x16x32xf32, #tpu.memory_space<vmem>>, vector<1x16x32xf32>
    %16 = vector.shape_cast %15 : vector<1x16x32xf32> to vector<16x32xf32>
    %cst_15 = arith.constant dense<0.000000e+00> : vector<64x32xf32>
    %17 = tpu.matmul %0, %16, %cst_15 {dimension_numbers = #tpu.dot_dimension_numbers<[1], [0], [0], [1], [0, 0, 1, 1], [], []>} : vector<64x16xf32>, vector<16x32xf32>, vector<64x32xf32> -> vector<64x32xf32>
    %c2_16 = arith.constant 2 : index
    %c0_17 = arith.constant 0 : index
    %c0_18 = arith.constant 0 : index
    %18 = vector.load %arg3[%c2_16, %c0_17, %c0_18] : memref<3x1x32xf32, #tpu.memory_space<vmem>>, vector<1x1x32xf32>
    %19 = vector.shape_cast %18 : vector<1x1x32xf32> to vector<1x32xf32>
    %20 = vector.broadcast %19 : vector<1x32xf32> to vector<64x32xf32>
    %21 = arith.addf %17, %20 : vector<64x32xf32>
    %c0_19 = arith.constant 0 : index
    %c0_20 = arith.constant 0 : index
    %c0_21 = arith.constant 0 : index
    %22 = vector.load %arg5[%c0_19, %c0_20, %c0_21] : memref<3x16x32xf32, #tpu.memory_space<vmem>>, vector<1x16x32xf32>
    %23 = vector.shape_cast %22 : vector<1x16x32xf32> to vector<16x32xf32>
    %cst_22 = arith.constant dense<0.000000e+00> : vector<64x32xf32>
    %24 = tpu.matmul %0, %23, %cst_22 {dimension_numbers = #tpu.dot_dimension_numbers<[1], [0], [0], [1], [0, 0, 1, 1], [], []>} : vector<64x16xf32>, vector<16x32xf32>, vector<64x32xf32> -> vector<64x32xf32>
    %c0_23 = arith.constant 0 : index
    %c0_24 = arith.constant 0 : index
    %c0_25 = arith.constant 0 : index
    %25 = vector.load %arg7[%c0_23, %c0_24, %c0_25] : memref<3x1x32xf32, #tpu.memory_space<vmem>>, vector<1x1x32xf32>
    %26 = vector.shape_cast %25 : vector<1x1x32xf32> to vector<1x32xf32>
    %27 = vector.broadcast %26 : vector<1x32xf32> to vector<64x32xf32>
    %28 = arith.addf %24, %27 : vector<64x32xf32>
    %c1_26 = arith.constant 1 : index
    %c0_27 = arith.constant 0 : index
    %c0_28 = arith.constant 0 : index
    %29 = vector.load %arg5[%c1_26, %c0_27, %c0_28] : memref<3x16x32xf32, #tpu.memory_space<vmem>>, vector<1x16x32xf32>
    %30 = vector.shape_cast %29 : vector<1x16x32xf32> to vector<16x32xf32>
    %cst_29 = arith.constant dense<0.000000e+00> : vector<64x32xf32>
    %31 = tpu.matmul %0, %30, %cst_29 {dimension_numbers = #tpu.dot_dimension_numbers<[1], [0], [0], [1], [0, 0, 1, 1], [], []>} : vector<64x16xf32>, vector<16x32xf32>, vector<64x32xf32> -> vector<64x32xf32>
    %c1_30 = arith.constant 1 : index
    %c0_31 = arith.constant 0 : index
    %c0_32 = arith.constant 0 : index
    %32 = vector.load %arg7[%c1_30, %c0_31, %c0_32] : memref<3x1x32xf32, #tpu.memory_space<vmem>>, vector<1x1x32xf32>
    %33 = vector.shape_cast %32 : vector<1x1x32xf32> to vector<1x32xf32>
    %34 = vector.broadcast %33 : vector<1x32xf32> to vector<64x32xf32>
    %35 = arith.addf %31, %34 : vector<64x32xf32>
    %c2_33 = arith.constant 2 : index
    %c0_34 = arith.constant 0 : index
    %c0_35 = arith.constant 0 : index
    %36 = vector.load %arg5[%c2_33, %c0_34, %c0_35] : memref<3x16x32xf32, #tpu.memory_space<vmem>>, vector<1x16x32xf32>
    %37 = vector.shape_cast %36 : vector<1x16x32xf32> to vector<16x32xf32>
    %cst_36 = arith.constant dense<0.000000e+00> : vector<64x32xf32>
    %38 = tpu.matmul %0, %37, %cst_36 {dimension_numbers = #tpu.dot_dimension_numbers<[1], [0], [0], [1], [0, 0, 1, 1], [], []>} : vector<64x16xf32>, vector<16x32xf32>, vector<64x32xf32> -> vector<64x32xf32>
    %c2_37 = arith.constant 2 : index
    %c0_38 = arith.constant 0 : index
    %c0_39 = arith.constant 0 : index
    %39 = vector.load %arg7[%c2_37, %c0_38, %c0_39] : memref<3x1x32xf32, #tpu.memory_space<vmem>>, vector<1x1x32xf32>
    %40 = vector.shape_cast %39 : vector<1x1x32xf32> to vector<1x32xf32>
    %41 = vector.broadcast %40 : vector<1x32xf32> to vector<64x32xf32>
    %42 = arith.addf %38, %41 : vector<64x32xf32>
    %cst_40 = arith.constant 0.000000e+00 : f32
    %43 = vector.broadcast %cst_40 : f32 to vector<8x32xf32>
    %cst_41 = arith.constant 0.000000e+00 : f32
    %44 = vector.broadcast %cst_41 : f32 to vector<8x32xf32>
    %45 = vector.extract_strided_slice %7 {offsets = [0, 0], sizes = [8, 32], strides = [1, 1]} : vector<64x32xf32> to vector<8x32xf32>
    %46 = vector.extract_strided_slice %14 {offsets = [0, 0], sizes = [8, 32], strides = [1, 1]} : vector<64x32xf32> to vector<8x32xf32>
    %47 = vector.extract_strided_slice %21 {offsets = [0, 0], sizes = [8, 32], strides = [1, 1]} : vector<64x32xf32> to vector<8x32xf32>
    %c0_42 = arith.constant 0 : index
    %c0_43 = arith.constant 0 : index
    %c0_44 = arith.constant 0 : index
    %48 = vector.load %arg2[%c0_42, %c0_43, %c0_44] : memref<3x32x32xf32, #tpu.memory_space<vmem>>, vector<1x32x32xf32>
    %49 = vector.shape_cast %48 : vector<1x32x32xf32> to vector<32x32xf32>
    %cst_45 = arith.constant dense<0.000000e+00> : vector<8x32xf32>
    %50 = tpu.matmul %43, %49, %cst_45 {dimension_numbers = #tpu.dot_dimension_numbers<[1], [0], [0], [1], [0, 0, 1, 1], [], []>} : vector<8x32xf32>, vector<32x32xf32>, vector<8x32xf32> -> vector<8x32xf32>
    %c0_46 = arith.constant 0 : index
    %c0_47 = arith.constant 0 : index
    %c0_48 = arith.constant 0 : index
    %51 = vector.load %arg4[%c0_46, %c0_47, %c0_48] : memref<3x1x32xf32, #tpu.memory_space<vmem>>, vector<1x1x32xf32>
    %52 = vector.shape_cast %51 : vector<1x1x32xf32> to vector<1x32xf32>
    %53 = vector.broadcast %52 : vector<1x32xf32> to vector<8x32xf32>
    %54 = arith.addf %50, %53 : vector<8x32xf32>
    %c1_49 = arith.constant 1 : index
    %c0_50 = arith.constant 0 : index
    %c0_51 = arith.constant 0 : index
    %55 = vector.load %arg2[%c1_49, %c0_50, %c0_51] : memref<3x32x32xf32, #tpu.memory_space<vmem>>, vector<1x32x32xf32>
    %56 = vector.shape_cast %55 : vector<1x32x32xf32> to vector<32x32xf32>
    %cst_52 = arith.constant dense<0.000000e+00> : vector<8x32xf32>
    %57 = tpu.matmul %43, %56, %cst_52 {dimension_numbers = #tpu.dot_dimension_numbers<[1], [0], [0], [1], [0, 0, 1, 1], [], []>} : vector<8x32xf32>, vector<32x32xf32>, vector<8x32xf32> -> vector<8x32xf32>
    %c1_53 = arith.constant 1 : index
    %c0_54 = arith.constant 0 : index
    %c0_55 = arith.constant 0 : index
    %58 = vector.load %arg4[%c1_53, %c0_54, %c0_55] : memref<3x1x32xf32, #tpu.memory_space<vmem>>, vector<1x1x32xf32>
    %59 = vector.shape_cast %58 : vector<1x1x32xf32> to vector<1x32xf32>
    %60 = vector.broadcast %59 : vector<1x32xf32> to vector<8x32xf32>
    %61 = arith.addf %57, %60 : vector<8x32xf32>
    %c2_56 = arith.constant 2 : index
    %c0_57 = arith.constant 0 : index
    %c0_58 = arith.constant 0 : index
    %62 = vector.load %arg2[%c2_56, %c0_57, %c0_58] : memref<3x32x32xf32, #tpu.memory_space<vmem>>, vector<1x32x32xf32>
    %63 = vector.shape_cast %62 : vector<1x32x32xf32> to vector<32x32xf32>
    %cst_59 = arith.constant dense<0.000000e+00> : vector<8x32xf32>
    %64 = tpu.matmul %43, %63, %cst_59 {dimension_numbers = #tpu.dot_dimension_numbers<[1], [0], [0], [1], [0, 0, 1, 1], [], []>} : vector<8x32xf32>, vector<32x32xf32>, vector<8x32xf32> -> vector<8x32xf32>
    %c2_60 = arith.constant 2 : index
    %c0_61 = arith.constant 0 : index
    %c0_62 = arith.constant 0 : index
    %65 = vector.load %arg4[%c2_60, %c0_61, %c0_62] : memref<3x1x32xf32, #tpu.memory_space<vmem>>, vector<1x1x32xf32>
    %66 = vector.shape_cast %65 : vector<1x1x32xf32> to vector<1x32xf32>
    %67 = vector.broadcast %66 : vector<1x32xf32> to vector<8x32xf32>
    %68 = arith.addf %64, %67 : vector<8x32xf32>
    %69 = arith.addf %45, %54 : vector<8x32xf32>
    %70 = arith.negf %69 : vector<8x32xf32>
    %71 = math.exp %70 : vector<8x32xf32>
    %cst_63 = arith.constant 1.000000e+00 : f32
    %72 = vector.broadcast %cst_63 : f32 to vector<8x32xf32>
    %73 = arith.addf %72, %71 : vector<8x32xf32>
    %74 = arith.divf %72, %73 : vector<8x32xf32>
    %75 = arith.addf %46, %61 : vector<8x32xf32>
    %76 = arith.negf %75 : vector<8x32xf32>
    %77 = math.exp %76 : vector<8x32xf32>
    %cst_64 = arith.constant 1.000000e+00 : f32
    %78 = vector.broadcast %cst_64 : f32 to vector<8x32xf32>
    %79 = arith.addf %78, %77 : vector<8x32xf32>
    %80 = arith.divf %78, %79 : vector<8x32xf32>
    %81 = arith.mulf %74, %68 : vector<8x32xf32>
    %82 = arith.addf %47, %81 : vector<8x32xf32>
    %83 = math.tanh %82 : vector<8x32xf32>
    %cst_65 = arith.constant 1.000000e+00 : f32
    %84 = vector.broadcast %cst_65 : f32 to vector<8x32xf32>
    %85 = arith.subf %84, %80 : vector<8x32xf32>
    %86 = arith.mulf %85, %83 : vector<8x32xf32>
    %87 = arith.mulf %80, %43 : vector<8x32xf32>
    %88 = arith.addf %86, %87 : vector<8x32xf32>
    %89 = vector.extract_strided_slice %28 {offsets = [56, 0], sizes = [8, 32], strides = [1, 1]} : vector<64x32xf32> to vector<8x32xf32>
    %90 = vector.extract_strided_slice %35 {offsets = [56, 0], sizes = [8, 32], strides = [1, 1]} : vector<64x32xf32> to vector<8x32xf32>
    %91 = vector.extract_strided_slice %42 {offsets = [56, 0], sizes = [8, 32], strides = [1, 1]} : vector<64x32xf32> to vector<8x32xf32>
    %c0_66 = arith.constant 0 : index
    %c0_67 = arith.constant 0 : index
    %c0_68 = arith.constant 0 : index
    %92 = vector.load %arg6[%c0_66, %c0_67, %c0_68] : memref<3x32x32xf32, #tpu.memory_space<vmem>>, vector<1x32x32xf32>
    %93 = vector.shape_cast %92 : vector<1x32x32xf32> to vector<32x32xf32>
    %cst_69 = arith.constant dense<0.000000e+00> : vector<8x32xf32>
    %94 = tpu.matmul %44, %93, %cst_69 {dimension_numbers = #tpu.dot_dimension_numbers<[1], [0], [0], [1], [0, 0, 1, 1], [], []>} : vector<8x32xf32>, vector<32x32xf32>, vector<8x32xf32> -> vector<8x32xf32>
    %c0_70 = arith.constant 0 : index
    %c0_71 = arith.constant 0 : index
    %c0_72 = arith.constant 0 : index
    %95 = vector.load %arg8[%c0_70, %c0_71, %c0_72] : memref<3x1x32xf32, #tpu.memory_space<vmem>>, vector<1x1x32xf32>
    %96 = vector.shape_cast %95 : vector<1x1x32xf32> to vector<1x32xf32>
    %97 = vector.broadcast %96 : vector<1x32xf32> to vector<8x32xf32>
    %98 = arith.addf %94, %97 : vector<8x32xf32>
    %c1_73 = arith.constant 1 : index
    %c0_74 = arith.constant 0 : index
    %c0_75 = arith.constant 0 : index
    %99 = vector.load %arg6[%c1_73, %c0_74, %c0_75] : memref<3x32x32xf32, #tpu.memory_space<vmem>>, vector<1x32x32xf32>
    %100 = vector.shape_cast %99 : vector<1x32x32xf32> to vector<32x32xf32>
    %cst_76 = arith.constant dense<0.000000e+00> : vector<8x32xf32>
    %101 = tpu.matmul %44, %100, %cst_76 {dimension_numbers = #tpu.dot_dimension_numbers<[1], [0], [0], [1], [0, 0, 1, 1], [], []>} : vector<8x32xf32>, vector<32x32xf32>, vector<8x32xf32> -> vector<8x32xf32>
    %c1_77 = arith.constant 1 : index
    %c0_78 = arith.constant 0 : index
    %c0_79 = arith.constant 0 : index
    %102 = vector.load %arg8[%c1_77, %c0_78, %c0_79] : memref<3x1x32xf32, #tpu.memory_space<vmem>>, vector<1x1x32xf32>
    %103 = vector.shape_cast %102 : vector<1x1x32xf32> to vector<1x32xf32>
    %104 = vector.broadcast %103 : vector<1x32xf32> to vector<8x32xf32>
    %105 = arith.addf %101, %104 : vector<8x32xf32>
    %c2_80 = arith.constant 2 : index
    %c0_81 = arith.constant 0 : index
    %c0_82 = arith.constant 0 : index
    %106 = vector.load %arg6[%c2_80, %c0_81, %c0_82] : memref<3x32x32xf32, #tpu.memory_space<vmem>>, vector<1x32x32xf32>
    %107 = vector.shape_cast %106 : vector<1x32x32xf32> to vector<32x32xf32>
    %cst_83 = arith.constant dense<0.000000e+00> : vector<8x32xf32>
    %108 = tpu.matmul %44, %107, %cst_83 {dimension_numbers = #tpu.dot_dimension_numbers<[1], [0], [0], [1], [0, 0, 1, 1], [], []>} : vector<8x32xf32>, vector<32x32xf32>, vector<8x32xf32> -> vector<8x32xf32>
    %c2_84 = arith.constant 2 : index
    %c0_85 = arith.constant 0 : index
    %c0_86 = arith.constant 0 : index
    %109 = vector.load %arg8[%c2_84, %c0_85, %c0_86] : memref<3x1x32xf32, #tpu.memory_space<vmem>>, vector<1x1x32xf32>
    %110 = vector.shape_cast %109 : vector<1x1x32xf32> to vector<1x32xf32>
    %111 = vector.broadcast %110 : vector<1x32xf32> to vector<8x32xf32>
    %112 = arith.addf %108, %111 : vector<8x32xf32>
    %113 = arith.addf %89, %98 : vector<8x32xf32>
    %114 = arith.negf %113 : vector<8x32xf32>
    %115 = math.exp %114 : vector<8x32xf32>
    %cst_87 = arith.constant 1.000000e+00 : f32
    %116 = vector.broadcast %cst_87 : f32 to vector<8x32xf32>
    %117 = arith.addf %116, %115 : vector<8x32xf32>
    %118 = arith.divf %116, %117 : vector<8x32xf32>
    %119 = arith.addf %90, %105 : vector<8x32xf32>
    %120 = arith.negf %119 : vector<8x32xf32>
    %121 = math.exp %120 : vector<8x32xf32>
    %cst_88 = arith.constant 1.000000e+00 : f32
    %122 = vector.broadcast %cst_88 : f32 to vector<8x32xf32>
    %123 = arith.addf %122, %121 : vector<8x32xf32>
    %124 = arith.divf %122, %123 : vector<8x32xf32>
    %125 = arith.mulf %118, %112 : vector<8x32xf32>
    %126 = arith.addf %91, %125 : vector<8x32xf32>
    %127 = math.tanh %126 : vector<8x32xf32>
    %cst_89 = arith.constant 1.000000e+00 : f32
    %128 = vector.broadcast %cst_89 : f32 to vector<8x32xf32>
    %129 = arith.subf %128, %124 : vector<8x32xf32>
    %130 = arith.mulf %129, %127 : vector<8x32xf32>
    %131 = arith.mulf %124, %44 : vector<8x32xf32>
    %132 = arith.addf %130, %131 : vector<8x32xf32>
    %133 = vector.extract_strided_slice %7 {offsets = [8, 0], sizes = [8, 32], strides = [1, 1]} : vector<64x32xf32> to vector<8x32xf32>
    %134 = vector.extract_strided_slice %14 {offsets = [8, 0], sizes = [8, 32], strides = [1, 1]} : vector<64x32xf32> to vector<8x32xf32>
    %135 = vector.extract_strided_slice %21 {offsets = [8, 0], sizes = [8, 32], strides = [1, 1]} : vector<64x32xf32> to vector<8x32xf32>
    %c0_90 = arith.constant 0 : index
    %c0_91 = arith.constant 0 : index
    %c0_92 = arith.constant 0 : index
    %136 = vector.load %arg2[%c0_90, %c0_91, %c0_92] : memref<3x32x32xf32, #tpu.memory_space<vmem>>, vector<1x32x32xf32>
    %137 = vector.shape_cast %136 : vector<1x32x32xf32> to vector<32x32xf32>
    %cst_93 = arith.constant dense<0.000000e+00> : vector<8x32xf32>
    %138 = tpu.matmul %88, %137, %cst_93 {dimension_numbers = #tpu.dot_dimension_numbers<[1], [0], [0], [1], [0, 0, 1, 1], [], []>} : vector<8x32xf32>, vector<32x32xf32>, vector<8x32xf32> -> vector<8x32xf32>
    %c0_94 = arith.constant 0 : index
    %c0_95 = arith.constant 0 : index
    %c0_96 = arith.constant 0 : index
    %139 = vector.load %arg4[%c0_94, %c0_95, %c0_96] : memref<3x1x32xf32, #tpu.memory_space<vmem>>, vector<1x1x32xf32>
    %140 = vector.shape_cast %139 : vector<1x1x32xf32> to vector<1x32xf32>
    %141 = vector.broadcast %140 : vector<1x32xf32> to vector<8x32xf32>
    %142 = arith.addf %138, %141 : vector<8x32xf32>
    %c1_97 = arith.constant 1 : index
    %c0_98 = arith.constant 0 : index
    %c0_99 = arith.constant 0 : index
    %143 = vector.load %arg2[%c1_97, %c0_98, %c0_99] : memref<3x32x32xf32, #tpu.memory_space<vmem>>, vector<1x32x32xf32>
    %144 = vector.shape_cast %143 : vector<1x32x32xf32> to vector<32x32xf32>
    %cst_100 = arith.constant dense<0.000000e+00> : vector<8x32xf32>
    %145 = tpu.matmul %88, %144, %cst_100 {dimension_numbers = #tpu.dot_dimension_numbers<[1], [0], [0], [1], [0, 0, 1, 1], [], []>} : vector<8x32xf32>, vector<32x32xf32>, vector<8x32xf32> -> vector<8x32xf32>
    %c1_101 = arith.constant 1 : index
    %c0_102 = arith.constant 0 : index
    %c0_103 = arith.constant 0 : index
    %146 = vector.load %arg4[%c1_101, %c0_102, %c0_103] : memref<3x1x32xf32, #tpu.memory_space<vmem>>, vector<1x1x32xf32>
    %147 = vector.shape_cast %146 : vector<1x1x32xf32> to vector<1x32xf32>
    %148 = vector.broadcast %147 : vector<1x32xf32> to vector<8x32xf32>
    %149 = arith.addf %145, %148 : vector<8x32xf32>
    %c2_104 = arith.constant 2 : index
    %c0_105 = arith.constant 0 : index
    %c0_106 = arith.constant 0 : index
    %150 = vector.load %arg2[%c2_104, %c0_105, %c0_106] : memref<3x32x32xf32, #tpu.memory_space<vmem>>, vector<1x32x32xf32>
    %151 = vector.shape_cast %150 : vector<1x32x32xf32> to vector<32x32xf32>
    %cst_107 = arith.constant dense<0.000000e+00> : vector<8x32xf32>
    %152 = tpu.matmul %88, %151, %cst_107 {dimension_numbers = #tpu.dot_dimension_numbers<[1], [0], [0], [1], [0, 0, 1, 1], [], []>} : vector<8x32xf32>, vector<32x32xf32>, vector<8x32xf32> -> vector<8x32xf32>
    %c2_108 = arith.constant 2 : index
    %c0_109 = arith.constant 0 : index
    %c0_110 = arith.constant 0 : index
    %153 = vector.load %arg4[%c2_108, %c0_109, %c0_110] : memref<3x1x32xf32, #tpu.memory_space<vmem>>, vector<1x1x32xf32>
    %154 = vector.shape_cast %153 : vector<1x1x32xf32> to vector<1x32xf32>
    %155 = vector.broadcast %154 : vector<1x32xf32> to vector<8x32xf32>
    %156 = arith.addf %152, %155 : vector<8x32xf32>
    %157 = arith.addf %133, %142 : vector<8x32xf32>
    %158 = arith.negf %157 : vector<8x32xf32>
    %159 = math.exp %158 : vector<8x32xf32>
    %cst_111 = arith.constant 1.000000e+00 : f32
    %160 = vector.broadcast %cst_111 : f32 to vector<8x32xf32>
    %161 = arith.addf %160, %159 : vector<8x32xf32>
    %162 = arith.divf %160, %161 : vector<8x32xf32>
    %163 = arith.addf %134, %149 : vector<8x32xf32>
    %164 = arith.negf %163 : vector<8x32xf32>
    %165 = math.exp %164 : vector<8x32xf32>
    %cst_112 = arith.constant 1.000000e+00 : f32
    %166 = vector.broadcast %cst_112 : f32 to vector<8x32xf32>
    %167 = arith.addf %166, %165 : vector<8x32xf32>
    %168 = arith.divf %166, %167 : vector<8x32xf32>
    %169 = arith.mulf %162, %156 : vector<8x32xf32>
    %170 = arith.addf %135, %169 : vector<8x32xf32>
    %171 = math.tanh %170 : vector<8x32xf32>
    %cst_113 = arith.constant 1.000000e+00 : f32
    %172 = vector.broadcast %cst_113 : f32 to vector<8x32xf32>
    %173 = arith.subf %172, %168 : vector<8x32xf32>
    %174 = arith.mulf %173, %171 : vector<8x32xf32>
    %175 = arith.mulf %168, %88 : vector<8x32xf32>
    %176 = arith.addf %174, %175 : vector<8x32xf32>
    %177 = vector.extract_strided_slice %28 {offsets = [48, 0], sizes = [8, 32], strides = [1, 1]} : vector<64x32xf32> to vector<8x32xf32>
    %178 = vector.extract_strided_slice %35 {offsets = [48, 0], sizes = [8, 32], strides = [1, 1]} : vector<64x32xf32> to vector<8x32xf32>
    %179 = vector.extract_strided_slice %42 {offsets = [48, 0], sizes = [8, 32], strides = [1, 1]} : vector<64x32xf32> to vector<8x32xf32>
    %c0_114 = arith.constant 0 : index
    %c0_115 = arith.constant 0 : index
    %c0_116 = arith.constant 0 : index
    %180 = vector.load %arg6[%c0_114, %c0_115, %c0_116] : memref<3x32x32xf32, #tpu.memory_space<vmem>>, vector<1x32x32xf32>
    %181 = vector.shape_cast %180 : vector<1x32x32xf32> to vector<32x32xf32>
    %cst_117 = arith.constant dense<0.000000e+00> : vector<8x32xf32>
    %182 = tpu.matmul %132, %181, %cst_117 {dimension_numbers = #tpu.dot_dimension_numbers<[1], [0], [0], [1], [0, 0, 1, 1], [], []>} : vector<8x32xf32>, vector<32x32xf32>, vector<8x32xf32> -> vector<8x32xf32>
    %c0_118 = arith.constant 0 : index
    %c0_119 = arith.constant 0 : index
    %c0_120 = arith.constant 0 : index
    %183 = vector.load %arg8[%c0_118, %c0_119, %c0_120] : memref<3x1x32xf32, #tpu.memory_space<vmem>>, vector<1x1x32xf32>
    %184 = vector.shape_cast %183 : vector<1x1x32xf32> to vector<1x32xf32>
    %185 = vector.broadcast %184 : vector<1x32xf32> to vector<8x32xf32>
    %186 = arith.addf %182, %185 : vector<8x32xf32>
    %c1_121 = arith.constant 1 : index
    %c0_122 = arith.constant 0 : index
    %c0_123 = arith.constant 0 : index
    %187 = vector.load %arg6[%c1_121, %c0_122, %c0_123] : memref<3x32x32xf32, #tpu.memory_space<vmem>>, vector<1x32x32xf32>
    %188 = vector.shape_cast %187 : vector<1x32x32xf32> to vector<32x32xf32>
    %cst_124 = arith.constant dense<0.000000e+00> : vector<8x32xf32>
    %189 = tpu.matmul %132, %188, %cst_124 {dimension_numbers = #tpu.dot_dimension_numbers<[1], [0], [0], [1], [0, 0, 1, 1], [], []>} : vector<8x32xf32>, vector<32x32xf32>, vector<8x32xf32> -> vector<8x32xf32>
    %c1_125 = arith.constant 1 : index
    %c0_126 = arith.constant 0 : index
    %c0_127 = arith.constant 0 : index
    %190 = vector.load %arg8[%c1_125, %c0_126, %c0_127] : memref<3x1x32xf32, #tpu.memory_space<vmem>>, vector<1x1x32xf32>
    %191 = vector.shape_cast %190 : vector<1x1x32xf32> to vector<1x32xf32>
    %192 = vector.broadcast %191 : vector<1x32xf32> to vector<8x32xf32>
    %193 = arith.addf %189, %192 : vector<8x32xf32>
    %c2_128 = arith.constant 2 : index
    %c0_129 = arith.constant 0 : index
    %c0_130 = arith.constant 0 : index
    %194 = vector.load %arg6[%c2_128, %c0_129, %c0_130] : memref<3x32x32xf32, #tpu.memory_space<vmem>>, vector<1x32x32xf32>
    %195 = vector.shape_cast %194 : vector<1x32x32xf32> to vector<32x32xf32>
    %cst_131 = arith.constant dense<0.000000e+00> : vector<8x32xf32>
    %196 = tpu.matmul %132, %195, %cst_131 {dimension_numbers = #tpu.dot_dimension_numbers<[1], [0], [0], [1], [0, 0, 1, 1], [], []>} : vector<8x32xf32>, vector<32x32xf32>, vector<8x32xf32> -> vector<8x32xf32>
    %c2_132 = arith.constant 2 : index
    %c0_133 = arith.constant 0 : index
    %c0_134 = arith.constant 0 : index
    %197 = vector.load %arg8[%c2_132, %c0_133, %c0_134] : memref<3x1x32xf32, #tpu.memory_space<vmem>>, vector<1x1x32xf32>
    %198 = vector.shape_cast %197 : vector<1x1x32xf32> to vector<1x32xf32>
    %199 = vector.broadcast %198 : vector<1x32xf32> to vector<8x32xf32>
    %200 = arith.addf %196, %199 : vector<8x32xf32>
    %201 = arith.addf %177, %186 : vector<8x32xf32>
    %202 = arith.negf %201 : vector<8x32xf32>
    %203 = math.exp %202 : vector<8x32xf32>
    %cst_135 = arith.constant 1.000000e+00 : f32
    %204 = vector.broadcast %cst_135 : f32 to vector<8x32xf32>
    %205 = arith.addf %204, %203 : vector<8x32xf32>
    %206 = arith.divf %204, %205 : vector<8x32xf32>
    %207 = arith.addf %178, %193 : vector<8x32xf32>
    %208 = arith.negf %207 : vector<8x32xf32>
    %209 = math.exp %208 : vector<8x32xf32>
    %cst_136 = arith.constant 1.000000e+00 : f32
    %210 = vector.broadcast %cst_136 : f32 to vector<8x32xf32>
    %211 = arith.addf %210, %209 : vector<8x32xf32>
    %212 = arith.divf %210, %211 : vector<8x32xf32>
    %213 = arith.mulf %206, %200 : vector<8x32xf32>
    %214 = arith.addf %179, %213 : vector<8x32xf32>
    %215 = math.tanh %214 : vector<8x32xf32>
    %cst_137 = arith.constant 1.000000e+00 : f32
    %216 = vector.broadcast %cst_137 : f32 to vector<8x32xf32>
    %217 = arith.subf %216, %212 : vector<8x32xf32>
    %218 = arith.mulf %217, %215 : vector<8x32xf32>
    %219 = arith.mulf %212, %132 : vector<8x32xf32>
    %220 = arith.addf %218, %219 : vector<8x32xf32>
    %221 = vector.extract_strided_slice %7 {offsets = [16, 0], sizes = [8, 32], strides = [1, 1]} : vector<64x32xf32> to vector<8x32xf32>
    %222 = vector.extract_strided_slice %14 {offsets = [16, 0], sizes = [8, 32], strides = [1, 1]} : vector<64x32xf32> to vector<8x32xf32>
    %223 = vector.extract_strided_slice %21 {offsets = [16, 0], sizes = [8, 32], strides = [1, 1]} : vector<64x32xf32> to vector<8x32xf32>
    %c0_138 = arith.constant 0 : index
    %c0_139 = arith.constant 0 : index
    %c0_140 = arith.constant 0 : index
    %224 = vector.load %arg2[%c0_138, %c0_139, %c0_140] : memref<3x32x32xf32, #tpu.memory_space<vmem>>, vector<1x32x32xf32>
    %225 = vector.shape_cast %224 : vector<1x32x32xf32> to vector<32x32xf32>
    %cst_141 = arith.constant dense<0.000000e+00> : vector<8x32xf32>
    %226 = tpu.matmul %176, %225, %cst_141 {dimension_numbers = #tpu.dot_dimension_numbers<[1], [0], [0], [1], [0, 0, 1, 1], [], []>} : vector<8x32xf32>, vector<32x32xf32>, vector<8x32xf32> -> vector<8x32xf32>
    %c0_142 = arith.constant 0 : index
    %c0_143 = arith.constant 0 : index
    %c0_144 = arith.constant 0 : index
    %227 = vector.load %arg4[%c0_142, %c0_143, %c0_144] : memref<3x1x32xf32, #tpu.memory_space<vmem>>, vector<1x1x32xf32>
    %228 = vector.shape_cast %227 : vector<1x1x32xf32> to vector<1x32xf32>
    %229 = vector.broadcast %228 : vector<1x32xf32> to vector<8x32xf32>
    %230 = arith.addf %226, %229 : vector<8x32xf32>
    %c1_145 = arith.constant 1 : index
    %c0_146 = arith.constant 0 : index
    %c0_147 = arith.constant 0 : index
    %231 = vector.load %arg2[%c1_145, %c0_146, %c0_147] : memref<3x32x32xf32, #tpu.memory_space<vmem>>, vector<1x32x32xf32>
    %232 = vector.shape_cast %231 : vector<1x32x32xf32> to vector<32x32xf32>
    %cst_148 = arith.constant dense<0.000000e+00> : vector<8x32xf32>
    %233 = tpu.matmul %176, %232, %cst_148 {dimension_numbers = #tpu.dot_dimension_numbers<[1], [0], [0], [1], [0, 0, 1, 1], [], []>} : vector<8x32xf32>, vector<32x32xf32>, vector<8x32xf32> -> vector<8x32xf32>
    %c1_149 = arith.constant 1 : index
    %c0_150 = arith.constant 0 : index
    %c0_151 = arith.constant 0 : index
    %234 = vector.load %arg4[%c1_149, %c0_150, %c0_151] : memref<3x1x32xf32, #tpu.memory_space<vmem>>, vector<1x1x32xf32>
    %235 = vector.shape_cast %234 : vector<1x1x32xf32> to vector<1x32xf32>
    %236 = vector.broadcast %235 : vector<1x32xf32> to vector<8x32xf32>
    %237 = arith.addf %233, %236 : vector<8x32xf32>
    %c2_152 = arith.constant 2 : index
    %c0_153 = arith.constant 0 : index
    %c0_154 = arith.constant 0 : index
    %238 = vector.load %arg2[%c2_152, %c0_153, %c0_154] : memref<3x32x32xf32, #tpu.memory_space<vmem>>, vector<1x32x32xf32>
    %239 = vector.shape_cast %238 : vector<1x32x32xf32> to vector<32x32xf32>
    %cst_155 = arith.constant dense<0.000000e+00> : vector<8x32xf32>
    %240 = tpu.matmul %176, %239, %cst_155 {dimension_numbers = #tpu.dot_dimension_numbers<[1], [0], [0], [1], [0, 0, 1, 1], [], []>} : vector<8x32xf32>, vector<32x32xf32>, vector<8x32xf32> -> vector<8x32xf32>
    %c2_156 = arith.constant 2 : index
    %c0_157 = arith.constant 0 : index
    %c0_158 = arith.constant 0 : index
    %241 = vector.load %arg4[%c2_156, %c0_157, %c0_158] : memref<3x1x32xf32, #tpu.memory_space<vmem>>, vector<1x1x32xf32>
    %242 = vector.shape_cast %241 : vector<1x1x32xf32> to vector<1x32xf32>
    %243 = vector.broadcast %242 : vector<1x32xf32> to vector<8x32xf32>
    %244 = arith.addf %240, %243 : vector<8x32xf32>
    %245 = arith.addf %221, %230 : vector<8x32xf32>
    %246 = arith.negf %245 : vector<8x32xf32>
    %247 = math.exp %246 : vector<8x32xf32>
    %cst_159 = arith.constant 1.000000e+00 : f32
    %248 = vector.broadcast %cst_159 : f32 to vector<8x32xf32>
    %249 = arith.addf %248, %247 : vector<8x32xf32>
    %250 = arith.divf %248, %249 : vector<8x32xf32>
    %251 = arith.addf %222, %237 : vector<8x32xf32>
    %252 = arith.negf %251 : vector<8x32xf32>
    %253 = math.exp %252 : vector<8x32xf32>
    %cst_160 = arith.constant 1.000000e+00 : f32
    %254 = vector.broadcast %cst_160 : f32 to vector<8x32xf32>
    %255 = arith.addf %254, %253 : vector<8x32xf32>
    %256 = arith.divf %254, %255 : vector<8x32xf32>
    %257 = arith.mulf %250, %244 : vector<8x32xf32>
    %258 = arith.addf %223, %257 : vector<8x32xf32>
    %259 = math.tanh %258 : vector<8x32xf32>
    %cst_161 = arith.constant 1.000000e+00 : f32
    %260 = vector.broadcast %cst_161 : f32 to vector<8x32xf32>
    %261 = arith.subf %260, %256 : vector<8x32xf32>
    %262 = arith.mulf %261, %259 : vector<8x32xf32>
    %263 = arith.mulf %256, %176 : vector<8x32xf32>
    %264 = arith.addf %262, %263 : vector<8x32xf32>
    %265 = vector.extract_strided_slice %28 {offsets = [40, 0], sizes = [8, 32], strides = [1, 1]} : vector<64x32xf32> to vector<8x32xf32>
    %266 = vector.extract_strided_slice %35 {offsets = [40, 0], sizes = [8, 32], strides = [1, 1]} : vector<64x32xf32> to vector<8x32xf32>
    %267 = vector.extract_strided_slice %42 {offsets = [40, 0], sizes = [8, 32], strides = [1, 1]} : vector<64x32xf32> to vector<8x32xf32>
    %c0_162 = arith.constant 0 : index
    %c0_163 = arith.constant 0 : index
    %c0_164 = arith.constant 0 : index
    %268 = vector.load %arg6[%c0_162, %c0_163, %c0_164] : memref<3x32x32xf32, #tpu.memory_space<vmem>>, vector<1x32x32xf32>
    %269 = vector.shape_cast %268 : vector<1x32x32xf32> to vector<32x32xf32>
    %cst_165 = arith.constant dense<0.000000e+00> : vector<8x32xf32>
    %270 = tpu.matmul %220, %269, %cst_165 {dimension_numbers = #tpu.dot_dimension_numbers<[1], [0], [0], [1], [0, 0, 1, 1], [], []>} : vector<8x32xf32>, vector<32x32xf32>, vector<8x32xf32> -> vector<8x32xf32>
    %c0_166 = arith.constant 0 : index
    %c0_167 = arith.constant 0 : index
    %c0_168 = arith.constant 0 : index
    %271 = vector.load %arg8[%c0_166, %c0_167, %c0_168] : memref<3x1x32xf32, #tpu.memory_space<vmem>>, vector<1x1x32xf32>
    %272 = vector.shape_cast %271 : vector<1x1x32xf32> to vector<1x32xf32>
    %273 = vector.broadcast %272 : vector<1x32xf32> to vector<8x32xf32>
    %274 = arith.addf %270, %273 : vector<8x32xf32>
    %c1_169 = arith.constant 1 : index
    %c0_170 = arith.constant 0 : index
    %c0_171 = arith.constant 0 : index
    %275 = vector.load %arg6[%c1_169, %c0_170, %c0_171] : memref<3x32x32xf32, #tpu.memory_space<vmem>>, vector<1x32x32xf32>
    %276 = vector.shape_cast %275 : vector<1x32x32xf32> to vector<32x32xf32>
    %cst_172 = arith.constant dense<0.000000e+00> : vector<8x32xf32>
    %277 = tpu.matmul %220, %276, %cst_172 {dimension_numbers = #tpu.dot_dimension_numbers<[1], [0], [0], [1], [0, 0, 1, 1], [], []>} : vector<8x32xf32>, vector<32x32xf32>, vector<8x32xf32> -> vector<8x32xf32>
    %c1_173 = arith.constant 1 : index
    %c0_174 = arith.constant 0 : index
    %c0_175 = arith.constant 0 : index
    %278 = vector.load %arg8[%c1_173, %c0_174, %c0_175] : memref<3x1x32xf32, #tpu.memory_space<vmem>>, vector<1x1x32xf32>
    %279 = vector.shape_cast %278 : vector<1x1x32xf32> to vector<1x32xf32>
    %280 = vector.broadcast %279 : vector<1x32xf32> to vector<8x32xf32>
    %281 = arith.addf %277, %280 : vector<8x32xf32>
    %c2_176 = arith.constant 2 : index
    %c0_177 = arith.constant 0 : index
    %c0_178 = arith.constant 0 : index
    %282 = vector.load %arg6[%c2_176, %c0_177, %c0_178] : memref<3x32x32xf32, #tpu.memory_space<vmem>>, vector<1x32x32xf32>
    %283 = vector.shape_cast %282 : vector<1x32x32xf32> to vector<32x32xf32>
    %cst_179 = arith.constant dense<0.000000e+00> : vector<8x32xf32>
    %284 = tpu.matmul %220, %283, %cst_179 {dimension_numbers = #tpu.dot_dimension_numbers<[1], [0], [0], [1], [0, 0, 1, 1], [], []>} : vector<8x32xf32>, vector<32x32xf32>, vector<8x32xf32> -> vector<8x32xf32>
    %c2_180 = arith.constant 2 : index
    %c0_181 = arith.constant 0 : index
    %c0_182 = arith.constant 0 : index
    %285 = vector.load %arg8[%c2_180, %c0_181, %c0_182] : memref<3x1x32xf32, #tpu.memory_space<vmem>>, vector<1x1x32xf32>
    %286 = vector.shape_cast %285 : vector<1x1x32xf32> to vector<1x32xf32>
    %287 = vector.broadcast %286 : vector<1x32xf32> to vector<8x32xf32>
    %288 = arith.addf %284, %287 : vector<8x32xf32>
    %289 = arith.addf %265, %274 : vector<8x32xf32>
    %290 = arith.negf %289 : vector<8x32xf32>
    %291 = math.exp %290 : vector<8x32xf32>
    %cst_183 = arith.constant 1.000000e+00 : f32
    %292 = vector.broadcast %cst_183 : f32 to vector<8x32xf32>
    %293 = arith.addf %292, %291 : vector<8x32xf32>
    %294 = arith.divf %292, %293 : vector<8x32xf32>
    %295 = arith.addf %266, %281 : vector<8x32xf32>
    %296 = arith.negf %295 : vector<8x32xf32>
    %297 = math.exp %296 : vector<8x32xf32>
    %cst_184 = arith.constant 1.000000e+00 : f32
    %298 = vector.broadcast %cst_184 : f32 to vector<8x32xf32>
    %299 = arith.addf %298, %297 : vector<8x32xf32>
    %300 = arith.divf %298, %299 : vector<8x32xf32>
    %301 = arith.mulf %294, %288 : vector<8x32xf32>
    %302 = arith.addf %267, %301 : vector<8x32xf32>
    %303 = math.tanh %302 : vector<8x32xf32>
    %cst_185 = arith.constant 1.000000e+00 : f32
    %304 = vector.broadcast %cst_185 : f32 to vector<8x32xf32>
    %305 = arith.subf %304, %300 : vector<8x32xf32>
    %306 = arith.mulf %305, %303 : vector<8x32xf32>
    %307 = arith.mulf %300, %220 : vector<8x32xf32>
    %308 = arith.addf %306, %307 : vector<8x32xf32>
    %309 = vector.extract_strided_slice %7 {offsets = [24, 0], sizes = [8, 32], strides = [1, 1]} : vector<64x32xf32> to vector<8x32xf32>
    %310 = vector.extract_strided_slice %14 {offsets = [24, 0], sizes = [8, 32], strides = [1, 1]} : vector<64x32xf32> to vector<8x32xf32>
    %311 = vector.extract_strided_slice %21 {offsets = [24, 0], sizes = [8, 32], strides = [1, 1]} : vector<64x32xf32> to vector<8x32xf32>
    %c0_186 = arith.constant 0 : index
    %c0_187 = arith.constant 0 : index
    %c0_188 = arith.constant 0 : index
    %312 = vector.load %arg2[%c0_186, %c0_187, %c0_188] : memref<3x32x32xf32, #tpu.memory_space<vmem>>, vector<1x32x32xf32>
    %313 = vector.shape_cast %312 : vector<1x32x32xf32> to vector<32x32xf32>
    %cst_189 = arith.constant dense<0.000000e+00> : vector<8x32xf32>
    %314 = tpu.matmul %264, %313, %cst_189 {dimension_numbers = #tpu.dot_dimension_numbers<[1], [0], [0], [1], [0, 0, 1, 1], [], []>} : vector<8x32xf32>, vector<32x32xf32>, vector<8x32xf32> -> vector<8x32xf32>
    %c0_190 = arith.constant 0 : index
    %c0_191 = arith.constant 0 : index
    %c0_192 = arith.constant 0 : index
    %315 = vector.load %arg4[%c0_190, %c0_191, %c0_192] : memref<3x1x32xf32, #tpu.memory_space<vmem>>, vector<1x1x32xf32>
    %316 = vector.shape_cast %315 : vector<1x1x32xf32> to vector<1x32xf32>
    %317 = vector.broadcast %316 : vector<1x32xf32> to vector<8x32xf32>
    %318 = arith.addf %314, %317 : vector<8x32xf32>
    %c1_193 = arith.constant 1 : index
    %c0_194 = arith.constant 0 : index
    %c0_195 = arith.constant 0 : index
    %319 = vector.load %arg2[%c1_193, %c0_194, %c0_195] : memref<3x32x32xf32, #tpu.memory_space<vmem>>, vector<1x32x32xf32>
    %320 = vector.shape_cast %319 : vector<1x32x32xf32> to vector<32x32xf32>
    %cst_196 = arith.constant dense<0.000000e+00> : vector<8x32xf32>
    %321 = tpu.matmul %264, %320, %cst_196 {dimension_numbers = #tpu.dot_dimension_numbers<[1], [0], [0], [1], [0, 0, 1, 1], [], []>} : vector<8x32xf32>, vector<32x32xf32>, vector<8x32xf32> -> vector<8x32xf32>
    %c1_197 = arith.constant 1 : index
    %c0_198 = arith.constant 0 : index
    %c0_199 = arith.constant 0 : index
    %322 = vector.load %arg4[%c1_197, %c0_198, %c0_199] : memref<3x1x32xf32, #tpu.memory_space<vmem>>, vector<1x1x32xf32>
    %323 = vector.shape_cast %322 : vector<1x1x32xf32> to vector<1x32xf32>
    %324 = vector.broadcast %323 : vector<1x32xf32> to vector<8x32xf32>
    %325 = arith.addf %321, %324 : vector<8x32xf32>
    %c2_200 = arith.constant 2 : index
    %c0_201 = arith.constant 0 : index
    %c0_202 = arith.constant 0 : index
    %326 = vector.load %arg2[%c2_200, %c0_201, %c0_202] : memref<3x32x32xf32, #tpu.memory_space<vmem>>, vector<1x32x32xf32>
    %327 = vector.shape_cast %326 : vector<1x32x32xf32> to vector<32x32xf32>
    %cst_203 = arith.constant dense<0.000000e+00> : vector<8x32xf32>
    %328 = tpu.matmul %264, %327, %cst_203 {dimension_numbers = #tpu.dot_dimension_numbers<[1], [0], [0], [1], [0, 0, 1, 1], [], []>} : vector<8x32xf32>, vector<32x32xf32>, vector<8x32xf32> -> vector<8x32xf32>
    %c2_204 = arith.constant 2 : index
    %c0_205 = arith.constant 0 : index
    %c0_206 = arith.constant 0 : index
    %329 = vector.load %arg4[%c2_204, %c0_205, %c0_206] : memref<3x1x32xf32, #tpu.memory_space<vmem>>, vector<1x1x32xf32>
    %330 = vector.shape_cast %329 : vector<1x1x32xf32> to vector<1x32xf32>
    %331 = vector.broadcast %330 : vector<1x32xf32> to vector<8x32xf32>
    %332 = arith.addf %328, %331 : vector<8x32xf32>
    %333 = arith.addf %309, %318 : vector<8x32xf32>
    %334 = arith.negf %333 : vector<8x32xf32>
    %335 = math.exp %334 : vector<8x32xf32>
    %cst_207 = arith.constant 1.000000e+00 : f32
    %336 = vector.broadcast %cst_207 : f32 to vector<8x32xf32>
    %337 = arith.addf %336, %335 : vector<8x32xf32>
    %338 = arith.divf %336, %337 : vector<8x32xf32>
    %339 = arith.addf %310, %325 : vector<8x32xf32>
    %340 = arith.negf %339 : vector<8x32xf32>
    %341 = math.exp %340 : vector<8x32xf32>
    %cst_208 = arith.constant 1.000000e+00 : f32
    %342 = vector.broadcast %cst_208 : f32 to vector<8x32xf32>
    %343 = arith.addf %342, %341 : vector<8x32xf32>
    %344 = arith.divf %342, %343 : vector<8x32xf32>
    %345 = arith.mulf %338, %332 : vector<8x32xf32>
    %346 = arith.addf %311, %345 : vector<8x32xf32>
    %347 = math.tanh %346 : vector<8x32xf32>
    %cst_209 = arith.constant 1.000000e+00 : f32
    %348 = vector.broadcast %cst_209 : f32 to vector<8x32xf32>
    %349 = arith.subf %348, %344 : vector<8x32xf32>
    %350 = arith.mulf %349, %347 : vector<8x32xf32>
    %351 = arith.mulf %344, %264 : vector<8x32xf32>
    %352 = arith.addf %350, %351 : vector<8x32xf32>
    %353 = vector.extract_strided_slice %28 {offsets = [32, 0], sizes = [8, 32], strides = [1, 1]} : vector<64x32xf32> to vector<8x32xf32>
    %354 = vector.extract_strided_slice %35 {offsets = [32, 0], sizes = [8, 32], strides = [1, 1]} : vector<64x32xf32> to vector<8x32xf32>
    %355 = vector.extract_strided_slice %42 {offsets = [32, 0], sizes = [8, 32], strides = [1, 1]} : vector<64x32xf32> to vector<8x32xf32>
    %c0_210 = arith.constant 0 : index
    %c0_211 = arith.constant 0 : index
    %c0_212 = arith.constant 0 : index
    %356 = vector.load %arg6[%c0_210, %c0_211, %c0_212] : memref<3x32x32xf32, #tpu.memory_space<vmem>>, vector<1x32x32xf32>
    %357 = vector.shape_cast %356 : vector<1x32x32xf32> to vector<32x32xf32>
    %cst_213 = arith.constant dense<0.000000e+00> : vector<8x32xf32>
    %358 = tpu.matmul %308, %357, %cst_213 {dimension_numbers = #tpu.dot_dimension_numbers<[1], [0], [0], [1], [0, 0, 1, 1], [], []>} : vector<8x32xf32>, vector<32x32xf32>, vector<8x32xf32> -> vector<8x32xf32>
    %c0_214 = arith.constant 0 : index
    %c0_215 = arith.constant 0 : index
    %c0_216 = arith.constant 0 : index
    %359 = vector.load %arg8[%c0_214, %c0_215, %c0_216] : memref<3x1x32xf32, #tpu.memory_space<vmem>>, vector<1x1x32xf32>
    %360 = vector.shape_cast %359 : vector<1x1x32xf32> to vector<1x32xf32>
    %361 = vector.broadcast %360 : vector<1x32xf32> to vector<8x32xf32>
    %362 = arith.addf %358, %361 : vector<8x32xf32>
    %c1_217 = arith.constant 1 : index
    %c0_218 = arith.constant 0 : index
    %c0_219 = arith.constant 0 : index
    %363 = vector.load %arg6[%c1_217, %c0_218, %c0_219] : memref<3x32x32xf32, #tpu.memory_space<vmem>>, vector<1x32x32xf32>
    %364 = vector.shape_cast %363 : vector<1x32x32xf32> to vector<32x32xf32>
    %cst_220 = arith.constant dense<0.000000e+00> : vector<8x32xf32>
    %365 = tpu.matmul %308, %364, %cst_220 {dimension_numbers = #tpu.dot_dimension_numbers<[1], [0], [0], [1], [0, 0, 1, 1], [], []>} : vector<8x32xf32>, vector<32x32xf32>, vector<8x32xf32> -> vector<8x32xf32>
    %c1_221 = arith.constant 1 : index
    %c0_222 = arith.constant 0 : index
    %c0_223 = arith.constant 0 : index
    %366 = vector.load %arg8[%c1_221, %c0_222, %c0_223] : memref<3x1x32xf32, #tpu.memory_space<vmem>>, vector<1x1x32xf32>
    %367 = vector.shape_cast %366 : vector<1x1x32xf32> to vector<1x32xf32>
    %368 = vector.broadcast %367 : vector<1x32xf32> to vector<8x32xf32>
    %369 = arith.addf %365, %368 : vector<8x32xf32>
    %c2_224 = arith.constant 2 : index
    %c0_225 = arith.constant 0 : index
    %c0_226 = arith.constant 0 : index
    %370 = vector.load %arg6[%c2_224, %c0_225, %c0_226] : memref<3x32x32xf32, #tpu.memory_space<vmem>>, vector<1x32x32xf32>
    %371 = vector.shape_cast %370 : vector<1x32x32xf32> to vector<32x32xf32>
    %cst_227 = arith.constant dense<0.000000e+00> : vector<8x32xf32>
    %372 = tpu.matmul %308, %371, %cst_227 {dimension_numbers = #tpu.dot_dimension_numbers<[1], [0], [0], [1], [0, 0, 1, 1], [], []>} : vector<8x32xf32>, vector<32x32xf32>, vector<8x32xf32> -> vector<8x32xf32>
    %c2_228 = arith.constant 2 : index
    %c0_229 = arith.constant 0 : index
    %c0_230 = arith.constant 0 : index
    %373 = vector.load %arg8[%c2_228, %c0_229, %c0_230] : memref<3x1x32xf32, #tpu.memory_space<vmem>>, vector<1x1x32xf32>
    %374 = vector.shape_cast %373 : vector<1x1x32xf32> to vector<1x32xf32>
    %375 = vector.broadcast %374 : vector<1x32xf32> to vector<8x32xf32>
    %376 = arith.addf %372, %375 : vector<8x32xf32>
    %377 = arith.addf %353, %362 : vector<8x32xf32>
    %378 = arith.negf %377 : vector<8x32xf32>
    %379 = math.exp %378 : vector<8x32xf32>
    %cst_231 = arith.constant 1.000000e+00 : f32
    %380 = vector.broadcast %cst_231 : f32 to vector<8x32xf32>
    %381 = arith.addf %380, %379 : vector<8x32xf32>
    %382 = arith.divf %380, %381 : vector<8x32xf32>
    %383 = arith.addf %354, %369 : vector<8x32xf32>
    %384 = arith.negf %383 : vector<8x32xf32>
    %385 = math.exp %384 : vector<8x32xf32>
    %cst_232 = arith.constant 1.000000e+00 : f32
    %386 = vector.broadcast %cst_232 : f32 to vector<8x32xf32>
    %387 = arith.addf %386, %385 : vector<8x32xf32>
    %388 = arith.divf %386, %387 : vector<8x32xf32>
    %389 = arith.mulf %382, %376 : vector<8x32xf32>
    %390 = arith.addf %355, %389 : vector<8x32xf32>
    %391 = math.tanh %390 : vector<8x32xf32>
    %cst_233 = arith.constant 1.000000e+00 : f32
    %392 = vector.broadcast %cst_233 : f32 to vector<8x32xf32>
    %393 = arith.subf %392, %388 : vector<8x32xf32>
    %394 = arith.mulf %393, %391 : vector<8x32xf32>
    %395 = arith.mulf %388, %308 : vector<8x32xf32>
    %396 = arith.addf %394, %395 : vector<8x32xf32>
    %397 = vector.extract_strided_slice %7 {offsets = [32, 0], sizes = [8, 32], strides = [1, 1]} : vector<64x32xf32> to vector<8x32xf32>
    %398 = vector.extract_strided_slice %14 {offsets = [32, 0], sizes = [8, 32], strides = [1, 1]} : vector<64x32xf32> to vector<8x32xf32>
    %399 = vector.extract_strided_slice %21 {offsets = [32, 0], sizes = [8, 32], strides = [1, 1]} : vector<64x32xf32> to vector<8x32xf32>
    %c0_234 = arith.constant 0 : index
    %c0_235 = arith.constant 0 : index
    %c0_236 = arith.constant 0 : index
    %400 = vector.load %arg2[%c0_234, %c0_235, %c0_236] : memref<3x32x32xf32, #tpu.memory_space<vmem>>, vector<1x32x32xf32>
    %401 = vector.shape_cast %400 : vector<1x32x32xf32> to vector<32x32xf32>
    %cst_237 = arith.constant dense<0.000000e+00> : vector<8x32xf32>
    %402 = tpu.matmul %352, %401, %cst_237 {dimension_numbers = #tpu.dot_dimension_numbers<[1], [0], [0], [1], [0, 0, 1, 1], [], []>} : vector<8x32xf32>, vector<32x32xf32>, vector<8x32xf32> -> vector<8x32xf32>
    %c0_238 = arith.constant 0 : index
    %c0_239 = arith.constant 0 : index
    %c0_240 = arith.constant 0 : index
    %403 = vector.load %arg4[%c0_238, %c0_239, %c0_240] : memref<3x1x32xf32, #tpu.memory_space<vmem>>, vector<1x1x32xf32>
    %404 = vector.shape_cast %403 : vector<1x1x32xf32> to vector<1x32xf32>
    %405 = vector.broadcast %404 : vector<1x32xf32> to vector<8x32xf32>
    %406 = arith.addf %402, %405 : vector<8x32xf32>
    %c1_241 = arith.constant 1 : index
    %c0_242 = arith.constant 0 : index
    %c0_243 = arith.constant 0 : index
    %407 = vector.load %arg2[%c1_241, %c0_242, %c0_243] : memref<3x32x32xf32, #tpu.memory_space<vmem>>, vector<1x32x32xf32>
    %408 = vector.shape_cast %407 : vector<1x32x32xf32> to vector<32x32xf32>
    %cst_244 = arith.constant dense<0.000000e+00> : vector<8x32xf32>
    %409 = tpu.matmul %352, %408, %cst_244 {dimension_numbers = #tpu.dot_dimension_numbers<[1], [0], [0], [1], [0, 0, 1, 1], [], []>} : vector<8x32xf32>, vector<32x32xf32>, vector<8x32xf32> -> vector<8x32xf32>
    %c1_245 = arith.constant 1 : index
    %c0_246 = arith.constant 0 : index
    %c0_247 = arith.constant 0 : index
    %410 = vector.load %arg4[%c1_245, %c0_246, %c0_247] : memref<3x1x32xf32, #tpu.memory_space<vmem>>, vector<1x1x32xf32>
    %411 = vector.shape_cast %410 : vector<1x1x32xf32> to vector<1x32xf32>
    %412 = vector.broadcast %411 : vector<1x32xf32> to vector<8x32xf32>
    %413 = arith.addf %409, %412 : vector<8x32xf32>
    %c2_248 = arith.constant 2 : index
    %c0_249 = arith.constant 0 : index
    %c0_250 = arith.constant 0 : index
    %414 = vector.load %arg2[%c2_248, %c0_249, %c0_250] : memref<3x32x32xf32, #tpu.memory_space<vmem>>, vector<1x32x32xf32>
    %415 = vector.shape_cast %414 : vector<1x32x32xf32> to vector<32x32xf32>
    %cst_251 = arith.constant dense<0.000000e+00> : vector<8x32xf32>
    %416 = tpu.matmul %352, %415, %cst_251 {dimension_numbers = #tpu.dot_dimension_numbers<[1], [0], [0], [1], [0, 0, 1, 1], [], []>} : vector<8x32xf32>, vector<32x32xf32>, vector<8x32xf32> -> vector<8x32xf32>
    %c2_252 = arith.constant 2 : index
    %c0_253 = arith.constant 0 : index
    %c0_254 = arith.constant 0 : index
    %417 = vector.load %arg4[%c2_252, %c0_253, %c0_254] : memref<3x1x32xf32, #tpu.memory_space<vmem>>, vector<1x1x32xf32>
    %418 = vector.shape_cast %417 : vector<1x1x32xf32> to vector<1x32xf32>
    %419 = vector.broadcast %418 : vector<1x32xf32> to vector<8x32xf32>
    %420 = arith.addf %416, %419 : vector<8x32xf32>
    %421 = arith.addf %397, %406 : vector<8x32xf32>
    %422 = arith.negf %421 : vector<8x32xf32>
    %423 = math.exp %422 : vector<8x32xf32>
    %cst_255 = arith.constant 1.000000e+00 : f32
    %424 = vector.broadcast %cst_255 : f32 to vector<8x32xf32>
    %425 = arith.addf %424, %423 : vector<8x32xf32>
    %426 = arith.divf %424, %425 : vector<8x32xf32>
    %427 = arith.addf %398, %413 : vector<8x32xf32>
    %428 = arith.negf %427 : vector<8x32xf32>
    %429 = math.exp %428 : vector<8x32xf32>
    %cst_256 = arith.constant 1.000000e+00 : f32
    %430 = vector.broadcast %cst_256 : f32 to vector<8x32xf32>
    %431 = arith.addf %430, %429 : vector<8x32xf32>
    %432 = arith.divf %430, %431 : vector<8x32xf32>
    %433 = arith.mulf %426, %420 : vector<8x32xf32>
    %434 = arith.addf %399, %433 : vector<8x32xf32>
    %435 = math.tanh %434 : vector<8x32xf32>
    %cst_257 = arith.constant 1.000000e+00 : f32
    %436 = vector.broadcast %cst_257 : f32 to vector<8x32xf32>
    %437 = arith.subf %436, %432 : vector<8x32xf32>
    %438 = arith.mulf %437, %435 : vector<8x32xf32>
    %439 = arith.mulf %432, %352 : vector<8x32xf32>
    %440 = arith.addf %438, %439 : vector<8x32xf32>
    %441 = vector.extract_strided_slice %28 {offsets = [24, 0], sizes = [8, 32], strides = [1, 1]} : vector<64x32xf32> to vector<8x32xf32>
    %442 = vector.extract_strided_slice %35 {offsets = [24, 0], sizes = [8, 32], strides = [1, 1]} : vector<64x32xf32> to vector<8x32xf32>
    %443 = vector.extract_strided_slice %42 {offsets = [24, 0], sizes = [8, 32], strides = [1, 1]} : vector<64x32xf32> to vector<8x32xf32>
    %c0_258 = arith.constant 0 : index
    %c0_259 = arith.constant 0 : index
    %c0_260 = arith.constant 0 : index
    %444 = vector.load %arg6[%c0_258, %c0_259, %c0_260] : memref<3x32x32xf32, #tpu.memory_space<vmem>>, vector<1x32x32xf32>
    %445 = vector.shape_cast %444 : vector<1x32x32xf32> to vector<32x32xf32>
    %cst_261 = arith.constant dense<0.000000e+00> : vector<8x32xf32>
    %446 = tpu.matmul %396, %445, %cst_261 {dimension_numbers = #tpu.dot_dimension_numbers<[1], [0], [0], [1], [0, 0, 1, 1], [], []>} : vector<8x32xf32>, vector<32x32xf32>, vector<8x32xf32> -> vector<8x32xf32>
    %c0_262 = arith.constant 0 : index
    %c0_263 = arith.constant 0 : index
    %c0_264 = arith.constant 0 : index
    %447 = vector.load %arg8[%c0_262, %c0_263, %c0_264] : memref<3x1x32xf32, #tpu.memory_space<vmem>>, vector<1x1x32xf32>
    %448 = vector.shape_cast %447 : vector<1x1x32xf32> to vector<1x32xf32>
    %449 = vector.broadcast %448 : vector<1x32xf32> to vector<8x32xf32>
    %450 = arith.addf %446, %449 : vector<8x32xf32>
    %c1_265 = arith.constant 1 : index
    %c0_266 = arith.constant 0 : index
    %c0_267 = arith.constant 0 : index
    %451 = vector.load %arg6[%c1_265, %c0_266, %c0_267] : memref<3x32x32xf32, #tpu.memory_space<vmem>>, vector<1x32x32xf32>
    %452 = vector.shape_cast %451 : vector<1x32x32xf32> to vector<32x32xf32>
    %cst_268 = arith.constant dense<0.000000e+00> : vector<8x32xf32>
    %453 = tpu.matmul %396, %452, %cst_268 {dimension_numbers = #tpu.dot_dimension_numbers<[1], [0], [0], [1], [0, 0, 1, 1], [], []>} : vector<8x32xf32>, vector<32x32xf32>, vector<8x32xf32> -> vector<8x32xf32>
    %c1_269 = arith.constant 1 : index
    %c0_270 = arith.constant 0 : index
    %c0_271 = arith.constant 0 : index
    %454 = vector.load %arg8[%c1_269, %c0_270, %c0_271] : memref<3x1x32xf32, #tpu.memory_space<vmem>>, vector<1x1x32xf32>
    %455 = vector.shape_cast %454 : vector<1x1x32xf32> to vector<1x32xf32>
    %456 = vector.broadcast %455 : vector<1x32xf32> to vector<8x32xf32>
    %457 = arith.addf %453, %456 : vector<8x32xf32>
    %c2_272 = arith.constant 2 : index
    %c0_273 = arith.constant 0 : index
    %c0_274 = arith.constant 0 : index
    %458 = vector.load %arg6[%c2_272, %c0_273, %c0_274] : memref<3x32x32xf32, #tpu.memory_space<vmem>>, vector<1x32x32xf32>
    %459 = vector.shape_cast %458 : vector<1x32x32xf32> to vector<32x32xf32>
    %cst_275 = arith.constant dense<0.000000e+00> : vector<8x32xf32>
    %460 = tpu.matmul %396, %459, %cst_275 {dimension_numbers = #tpu.dot_dimension_numbers<[1], [0], [0], [1], [0, 0, 1, 1], [], []>} : vector<8x32xf32>, vector<32x32xf32>, vector<8x32xf32> -> vector<8x32xf32>
    %c2_276 = arith.constant 2 : index
    %c0_277 = arith.constant 0 : index
    %c0_278 = arith.constant 0 : index
    %461 = vector.load %arg8[%c2_276, %c0_277, %c0_278] : memref<3x1x32xf32, #tpu.memory_space<vmem>>, vector<1x1x32xf32>
    %462 = vector.shape_cast %461 : vector<1x1x32xf32> to vector<1x32xf32>
    %463 = vector.broadcast %462 : vector<1x32xf32> to vector<8x32xf32>
    %464 = arith.addf %460, %463 : vector<8x32xf32>
    %465 = arith.addf %441, %450 : vector<8x32xf32>
    %466 = arith.negf %465 : vector<8x32xf32>
    %467 = math.exp %466 : vector<8x32xf32>
    %cst_279 = arith.constant 1.000000e+00 : f32
    %468 = vector.broadcast %cst_279 : f32 to vector<8x32xf32>
    %469 = arith.addf %468, %467 : vector<8x32xf32>
    %470 = arith.divf %468, %469 : vector<8x32xf32>
    %471 = arith.addf %442, %457 : vector<8x32xf32>
    %472 = arith.negf %471 : vector<8x32xf32>
    %473 = math.exp %472 : vector<8x32xf32>
    %cst_280 = arith.constant 1.000000e+00 : f32
    %474 = vector.broadcast %cst_280 : f32 to vector<8x32xf32>
    %475 = arith.addf %474, %473 : vector<8x32xf32>
    %476 = arith.divf %474, %475 : vector<8x32xf32>
    %477 = arith.mulf %470, %464 : vector<8x32xf32>
    %478 = arith.addf %443, %477 : vector<8x32xf32>
    %479 = math.tanh %478 : vector<8x32xf32>
    %cst_281 = arith.constant 1.000000e+00 : f32
    %480 = vector.broadcast %cst_281 : f32 to vector<8x32xf32>
    %481 = arith.subf %480, %476 : vector<8x32xf32>
    %482 = arith.mulf %481, %479 : vector<8x32xf32>
    %483 = arith.mulf %476, %396 : vector<8x32xf32>
    %484 = arith.addf %482, %483 : vector<8x32xf32>
    %485 = vector.extract_strided_slice %7 {offsets = [40, 0], sizes = [8, 32], strides = [1, 1]} : vector<64x32xf32> to vector<8x32xf32>
    %486 = vector.extract_strided_slice %14 {offsets = [40, 0], sizes = [8, 32], strides = [1, 1]} : vector<64x32xf32> to vector<8x32xf32>
    %487 = vector.extract_strided_slice %21 {offsets = [40, 0], sizes = [8, 32], strides = [1, 1]} : vector<64x32xf32> to vector<8x32xf32>
    %c0_282 = arith.constant 0 : index
    %c0_283 = arith.constant 0 : index
    %c0_284 = arith.constant 0 : index
    %488 = vector.load %arg2[%c0_282, %c0_283, %c0_284] : memref<3x32x32xf32, #tpu.memory_space<vmem>>, vector<1x32x32xf32>
    %489 = vector.shape_cast %488 : vector<1x32x32xf32> to vector<32x32xf32>
    %cst_285 = arith.constant dense<0.000000e+00> : vector<8x32xf32>
    %490 = tpu.matmul %440, %489, %cst_285 {dimension_numbers = #tpu.dot_dimension_numbers<[1], [0], [0], [1], [0, 0, 1, 1], [], []>} : vector<8x32xf32>, vector<32x32xf32>, vector<8x32xf32> -> vector<8x32xf32>
    %c0_286 = arith.constant 0 : index
    %c0_287 = arith.constant 0 : index
    %c0_288 = arith.constant 0 : index
    %491 = vector.load %arg4[%c0_286, %c0_287, %c0_288] : memref<3x1x32xf32, #tpu.memory_space<vmem>>, vector<1x1x32xf32>
    %492 = vector.shape_cast %491 : vector<1x1x32xf32> to vector<1x32xf32>
    %493 = vector.broadcast %492 : vector<1x32xf32> to vector<8x32xf32>
    %494 = arith.addf %490, %493 : vector<8x32xf32>
    %c1_289 = arith.constant 1 : index
    %c0_290 = arith.constant 0 : index
    %c0_291 = arith.constant 0 : index
    %495 = vector.load %arg2[%c1_289, %c0_290, %c0_291] : memref<3x32x32xf32, #tpu.memory_space<vmem>>, vector<1x32x32xf32>
    %496 = vector.shape_cast %495 : vector<1x32x32xf32> to vector<32x32xf32>
    %cst_292 = arith.constant dense<0.000000e+00> : vector<8x32xf32>
    %497 = tpu.matmul %440, %496, %cst_292 {dimension_numbers = #tpu.dot_dimension_numbers<[1], [0], [0], [1], [0, 0, 1, 1], [], []>} : vector<8x32xf32>, vector<32x32xf32>, vector<8x32xf32> -> vector<8x32xf32>
    %c1_293 = arith.constant 1 : index
    %c0_294 = arith.constant 0 : index
    %c0_295 = arith.constant 0 : index
    %498 = vector.load %arg4[%c1_293, %c0_294, %c0_295] : memref<3x1x32xf32, #tpu.memory_space<vmem>>, vector<1x1x32xf32>
    %499 = vector.shape_cast %498 : vector<1x1x32xf32> to vector<1x32xf32>
    %500 = vector.broadcast %499 : vector<1x32xf32> to vector<8x32xf32>
    %501 = arith.addf %497, %500 : vector<8x32xf32>
    %c2_296 = arith.constant 2 : index
    %c0_297 = arith.constant 0 : index
    %c0_298 = arith.constant 0 : index
    %502 = vector.load %arg2[%c2_296, %c0_297, %c0_298] : memref<3x32x32xf32, #tpu.memory_space<vmem>>, vector<1x32x32xf32>
    %503 = vector.shape_cast %502 : vector<1x32x32xf32> to vector<32x32xf32>
    %cst_299 = arith.constant dense<0.000000e+00> : vector<8x32xf32>
    %504 = tpu.matmul %440, %503, %cst_299 {dimension_numbers = #tpu.dot_dimension_numbers<[1], [0], [0], [1], [0, 0, 1, 1], [], []>} : vector<8x32xf32>, vector<32x32xf32>, vector<8x32xf32> -> vector<8x32xf32>
    %c2_300 = arith.constant 2 : index
    %c0_301 = arith.constant 0 : index
    %c0_302 = arith.constant 0 : index
    %505 = vector.load %arg4[%c2_300, %c0_301, %c0_302] : memref<3x1x32xf32, #tpu.memory_space<vmem>>, vector<1x1x32xf32>
    %506 = vector.shape_cast %505 : vector<1x1x32xf32> to vector<1x32xf32>
    %507 = vector.broadcast %506 : vector<1x32xf32> to vector<8x32xf32>
    %508 = arith.addf %504, %507 : vector<8x32xf32>
    %509 = arith.addf %485, %494 : vector<8x32xf32>
    %510 = arith.negf %509 : vector<8x32xf32>
    %511 = math.exp %510 : vector<8x32xf32>
    %cst_303 = arith.constant 1.000000e+00 : f32
    %512 = vector.broadcast %cst_303 : f32 to vector<8x32xf32>
    %513 = arith.addf %512, %511 : vector<8x32xf32>
    %514 = arith.divf %512, %513 : vector<8x32xf32>
    %515 = arith.addf %486, %501 : vector<8x32xf32>
    %516 = arith.negf %515 : vector<8x32xf32>
    %517 = math.exp %516 : vector<8x32xf32>
    %cst_304 = arith.constant 1.000000e+00 : f32
    %518 = vector.broadcast %cst_304 : f32 to vector<8x32xf32>
    %519 = arith.addf %518, %517 : vector<8x32xf32>
    %520 = arith.divf %518, %519 : vector<8x32xf32>
    %521 = arith.mulf %514, %508 : vector<8x32xf32>
    %522 = arith.addf %487, %521 : vector<8x32xf32>
    %523 = math.tanh %522 : vector<8x32xf32>
    %cst_305 = arith.constant 1.000000e+00 : f32
    %524 = vector.broadcast %cst_305 : f32 to vector<8x32xf32>
    %525 = arith.subf %524, %520 : vector<8x32xf32>
    %526 = arith.mulf %525, %523 : vector<8x32xf32>
    %527 = arith.mulf %520, %440 : vector<8x32xf32>
    %528 = arith.addf %526, %527 : vector<8x32xf32>
    %529 = vector.extract_strided_slice %28 {offsets = [16, 0], sizes = [8, 32], strides = [1, 1]} : vector<64x32xf32> to vector<8x32xf32>
    %530 = vector.extract_strided_slice %35 {offsets = [16, 0], sizes = [8, 32], strides = [1, 1]} : vector<64x32xf32> to vector<8x32xf32>
    %531 = vector.extract_strided_slice %42 {offsets = [16, 0], sizes = [8, 32], strides = [1, 1]} : vector<64x32xf32> to vector<8x32xf32>
    %c0_306 = arith.constant 0 : index
    %c0_307 = arith.constant 0 : index
    %c0_308 = arith.constant 0 : index
    %532 = vector.load %arg6[%c0_306, %c0_307, %c0_308] : memref<3x32x32xf32, #tpu.memory_space<vmem>>, vector<1x32x32xf32>
    %533 = vector.shape_cast %532 : vector<1x32x32xf32> to vector<32x32xf32>
    %cst_309 = arith.constant dense<0.000000e+00> : vector<8x32xf32>
    %534 = tpu.matmul %484, %533, %cst_309 {dimension_numbers = #tpu.dot_dimension_numbers<[1], [0], [0], [1], [0, 0, 1, 1], [], []>} : vector<8x32xf32>, vector<32x32xf32>, vector<8x32xf32> -> vector<8x32xf32>
    %c0_310 = arith.constant 0 : index
    %c0_311 = arith.constant 0 : index
    %c0_312 = arith.constant 0 : index
    %535 = vector.load %arg8[%c0_310, %c0_311, %c0_312] : memref<3x1x32xf32, #tpu.memory_space<vmem>>, vector<1x1x32xf32>
    %536 = vector.shape_cast %535 : vector<1x1x32xf32> to vector<1x32xf32>
    %537 = vector.broadcast %536 : vector<1x32xf32> to vector<8x32xf32>
    %538 = arith.addf %534, %537 : vector<8x32xf32>
    %c1_313 = arith.constant 1 : index
    %c0_314 = arith.constant 0 : index
    %c0_315 = arith.constant 0 : index
    %539 = vector.load %arg6[%c1_313, %c0_314, %c0_315] : memref<3x32x32xf32, #tpu.memory_space<vmem>>, vector<1x32x32xf32>
    %540 = vector.shape_cast %539 : vector<1x32x32xf32> to vector<32x32xf32>
    %cst_316 = arith.constant dense<0.000000e+00> : vector<8x32xf32>
    %541 = tpu.matmul %484, %540, %cst_316 {dimension_numbers = #tpu.dot_dimension_numbers<[1], [0], [0], [1], [0, 0, 1, 1], [], []>} : vector<8x32xf32>, vector<32x32xf32>, vector<8x32xf32> -> vector<8x32xf32>
    %c1_317 = arith.constant 1 : index
    %c0_318 = arith.constant 0 : index
    %c0_319 = arith.constant 0 : index
    %542 = vector.load %arg8[%c1_317, %c0_318, %c0_319] : memref<3x1x32xf32, #tpu.memory_space<vmem>>, vector<1x1x32xf32>
    %543 = vector.shape_cast %542 : vector<1x1x32xf32> to vector<1x32xf32>
    %544 = vector.broadcast %543 : vector<1x32xf32> to vector<8x32xf32>
    %545 = arith.addf %541, %544 : vector<8x32xf32>
    %c2_320 = arith.constant 2 : index
    %c0_321 = arith.constant 0 : index
    %c0_322 = arith.constant 0 : index
    %546 = vector.load %arg6[%c2_320, %c0_321, %c0_322] : memref<3x32x32xf32, #tpu.memory_space<vmem>>, vector<1x32x32xf32>
    %547 = vector.shape_cast %546 : vector<1x32x32xf32> to vector<32x32xf32>
    %cst_323 = arith.constant dense<0.000000e+00> : vector<8x32xf32>
    %548 = tpu.matmul %484, %547, %cst_323 {dimension_numbers = #tpu.dot_dimension_numbers<[1], [0], [0], [1], [0, 0, 1, 1], [], []>} : vector<8x32xf32>, vector<32x32xf32>, vector<8x32xf32> -> vector<8x32xf32>
    %c2_324 = arith.constant 2 : index
    %c0_325 = arith.constant 0 : index
    %c0_326 = arith.constant 0 : index
    %549 = vector.load %arg8[%c2_324, %c0_325, %c0_326] : memref<3x1x32xf32, #tpu.memory_space<vmem>>, vector<1x1x32xf32>
    %550 = vector.shape_cast %549 : vector<1x1x32xf32> to vector<1x32xf32>
    %551 = vector.broadcast %550 : vector<1x32xf32> to vector<8x32xf32>
    %552 = arith.addf %548, %551 : vector<8x32xf32>
    %553 = arith.addf %529, %538 : vector<8x32xf32>
    %554 = arith.negf %553 : vector<8x32xf32>
    %555 = math.exp %554 : vector<8x32xf32>
    %cst_327 = arith.constant 1.000000e+00 : f32
    %556 = vector.broadcast %cst_327 : f32 to vector<8x32xf32>
    %557 = arith.addf %556, %555 : vector<8x32xf32>
    %558 = arith.divf %556, %557 : vector<8x32xf32>
    %559 = arith.addf %530, %545 : vector<8x32xf32>
    %560 = arith.negf %559 : vector<8x32xf32>
    %561 = math.exp %560 : vector<8x32xf32>
    %cst_328 = arith.constant 1.000000e+00 : f32
    %562 = vector.broadcast %cst_328 : f32 to vector<8x32xf32>
    %563 = arith.addf %562, %561 : vector<8x32xf32>
    %564 = arith.divf %562, %563 : vector<8x32xf32>
    %565 = arith.mulf %558, %552 : vector<8x32xf32>
    %566 = arith.addf %531, %565 : vector<8x32xf32>
    %567 = math.tanh %566 : vector<8x32xf32>
    %cst_329 = arith.constant 1.000000e+00 : f32
    %568 = vector.broadcast %cst_329 : f32 to vector<8x32xf32>
    %569 = arith.subf %568, %564 : vector<8x32xf32>
    %570 = arith.mulf %569, %567 : vector<8x32xf32>
    %571 = arith.mulf %564, %484 : vector<8x32xf32>
    %572 = arith.addf %570, %571 : vector<8x32xf32>
    %573 = vector.extract_strided_slice %7 {offsets = [48, 0], sizes = [8, 32], strides = [1, 1]} : vector<64x32xf32> to vector<8x32xf32>
    %574 = vector.extract_strided_slice %14 {offsets = [48, 0], sizes = [8, 32], strides = [1, 1]} : vector<64x32xf32> to vector<8x32xf32>
    %575 = vector.extract_strided_slice %21 {offsets = [48, 0], sizes = [8, 32], strides = [1, 1]} : vector<64x32xf32> to vector<8x32xf32>
    %c0_330 = arith.constant 0 : index
    %c0_331 = arith.constant 0 : index
    %c0_332 = arith.constant 0 : index
    %576 = vector.load %arg2[%c0_330, %c0_331, %c0_332] : memref<3x32x32xf32, #tpu.memory_space<vmem>>, vector<1x32x32xf32>
    %577 = vector.shape_cast %576 : vector<1x32x32xf32> to vector<32x32xf32>
    %cst_333 = arith.constant dense<0.000000e+00> : vector<8x32xf32>
    %578 = tpu.matmul %528, %577, %cst_333 {dimension_numbers = #tpu.dot_dimension_numbers<[1], [0], [0], [1], [0, 0, 1, 1], [], []>} : vector<8x32xf32>, vector<32x32xf32>, vector<8x32xf32> -> vector<8x32xf32>
    %c0_334 = arith.constant 0 : index
    %c0_335 = arith.constant 0 : index
    %c0_336 = arith.constant 0 : index
    %579 = vector.load %arg4[%c0_334, %c0_335, %c0_336] : memref<3x1x32xf32, #tpu.memory_space<vmem>>, vector<1x1x32xf32>
    %580 = vector.shape_cast %579 : vector<1x1x32xf32> to vector<1x32xf32>
    %581 = vector.broadcast %580 : vector<1x32xf32> to vector<8x32xf32>
    %582 = arith.addf %578, %581 : vector<8x32xf32>
    %c1_337 = arith.constant 1 : index
    %c0_338 = arith.constant 0 : index
    %c0_339 = arith.constant 0 : index
    %583 = vector.load %arg2[%c1_337, %c0_338, %c0_339] : memref<3x32x32xf32, #tpu.memory_space<vmem>>, vector<1x32x32xf32>
    %584 = vector.shape_cast %583 : vector<1x32x32xf32> to vector<32x32xf32>
    %cst_340 = arith.constant dense<0.000000e+00> : vector<8x32xf32>
    %585 = tpu.matmul %528, %584, %cst_340 {dimension_numbers = #tpu.dot_dimension_numbers<[1], [0], [0], [1], [0, 0, 1, 1], [], []>} : vector<8x32xf32>, vector<32x32xf32>, vector<8x32xf32> -> vector<8x32xf32>
    %c1_341 = arith.constant 1 : index
    %c0_342 = arith.constant 0 : index
    %c0_343 = arith.constant 0 : index
    %586 = vector.load %arg4[%c1_341, %c0_342, %c0_343] : memref<3x1x32xf32, #tpu.memory_space<vmem>>, vector<1x1x32xf32>
    %587 = vector.shape_cast %586 : vector<1x1x32xf32> to vector<1x32xf32>
    %588 = vector.broadcast %587 : vector<1x32xf32> to vector<8x32xf32>
    %589 = arith.addf %585, %588 : vector<8x32xf32>
    %c2_344 = arith.constant 2 : index
    %c0_345 = arith.constant 0 : index
    %c0_346 = arith.constant 0 : index
    %590 = vector.load %arg2[%c2_344, %c0_345, %c0_346] : memref<3x32x32xf32, #tpu.memory_space<vmem>>, vector<1x32x32xf32>
    %591 = vector.shape_cast %590 : vector<1x32x32xf32> to vector<32x32xf32>
    %cst_347 = arith.constant dense<0.000000e+00> : vector<8x32xf32>
    %592 = tpu.matmul %528, %591, %cst_347 {dimension_numbers = #tpu.dot_dimension_numbers<[1], [0], [0], [1], [0, 0, 1, 1], [], []>} : vector<8x32xf32>, vector<32x32xf32>, vector<8x32xf32> -> vector<8x32xf32>
    %c2_348 = arith.constant 2 : index
    %c0_349 = arith.constant 0 : index
    %c0_350 = arith.constant 0 : index
    %593 = vector.load %arg4[%c2_348, %c0_349, %c0_350] : memref<3x1x32xf32, #tpu.memory_space<vmem>>, vector<1x1x32xf32>
    %594 = vector.shape_cast %593 : vector<1x1x32xf32> to vector<1x32xf32>
    %595 = vector.broadcast %594 : vector<1x32xf32> to vector<8x32xf32>
    %596 = arith.addf %592, %595 : vector<8x32xf32>
    %597 = arith.addf %573, %582 : vector<8x32xf32>
    %598 = arith.negf %597 : vector<8x32xf32>
    %599 = math.exp %598 : vector<8x32xf32>
    %cst_351 = arith.constant 1.000000e+00 : f32
    %600 = vector.broadcast %cst_351 : f32 to vector<8x32xf32>
    %601 = arith.addf %600, %599 : vector<8x32xf32>
    %602 = arith.divf %600, %601 : vector<8x32xf32>
    %603 = arith.addf %574, %589 : vector<8x32xf32>
    %604 = arith.negf %603 : vector<8x32xf32>
    %605 = math.exp %604 : vector<8x32xf32>
    %cst_352 = arith.constant 1.000000e+00 : f32
    %606 = vector.broadcast %cst_352 : f32 to vector<8x32xf32>
    %607 = arith.addf %606, %605 : vector<8x32xf32>
    %608 = arith.divf %606, %607 : vector<8x32xf32>
    %609 = arith.mulf %602, %596 : vector<8x32xf32>
    %610 = arith.addf %575, %609 : vector<8x32xf32>
    %611 = math.tanh %610 : vector<8x32xf32>
    %cst_353 = arith.constant 1.000000e+00 : f32
    %612 = vector.broadcast %cst_353 : f32 to vector<8x32xf32>
    %613 = arith.subf %612, %608 : vector<8x32xf32>
    %614 = arith.mulf %613, %611 : vector<8x32xf32>
    %615 = arith.mulf %608, %528 : vector<8x32xf32>
    %616 = arith.addf %614, %615 : vector<8x32xf32>
    %617 = vector.extract_strided_slice %28 {offsets = [8, 0], sizes = [8, 32], strides = [1, 1]} : vector<64x32xf32> to vector<8x32xf32>
    %618 = vector.extract_strided_slice %35 {offsets = [8, 0], sizes = [8, 32], strides = [1, 1]} : vector<64x32xf32> to vector<8x32xf32>
    %619 = vector.extract_strided_slice %42 {offsets = [8, 0], sizes = [8, 32], strides = [1, 1]} : vector<64x32xf32> to vector<8x32xf32>
    %c0_354 = arith.constant 0 : index
    %c0_355 = arith.constant 0 : index
    %c0_356 = arith.constant 0 : index
    %620 = vector.load %arg6[%c0_354, %c0_355, %c0_356] : memref<3x32x32xf32, #tpu.memory_space<vmem>>, vector<1x32x32xf32>
    %621 = vector.shape_cast %620 : vector<1x32x32xf32> to vector<32x32xf32>
    %cst_357 = arith.constant dense<0.000000e+00> : vector<8x32xf32>
    %622 = tpu.matmul %572, %621, %cst_357 {dimension_numbers = #tpu.dot_dimension_numbers<[1], [0], [0], [1], [0, 0, 1, 1], [], []>} : vector<8x32xf32>, vector<32x32xf32>, vector<8x32xf32> -> vector<8x32xf32>
    %c0_358 = arith.constant 0 : index
    %c0_359 = arith.constant 0 : index
    %c0_360 = arith.constant 0 : index
    %623 = vector.load %arg8[%c0_358, %c0_359, %c0_360] : memref<3x1x32xf32, #tpu.memory_space<vmem>>, vector<1x1x32xf32>
    %624 = vector.shape_cast %623 : vector<1x1x32xf32> to vector<1x32xf32>
    %625 = vector.broadcast %624 : vector<1x32xf32> to vector<8x32xf32>
    %626 = arith.addf %622, %625 : vector<8x32xf32>
    %c1_361 = arith.constant 1 : index
    %c0_362 = arith.constant 0 : index
    %c0_363 = arith.constant 0 : index
    %627 = vector.load %arg6[%c1_361, %c0_362, %c0_363] : memref<3x32x32xf32, #tpu.memory_space<vmem>>, vector<1x32x32xf32>
    %628 = vector.shape_cast %627 : vector<1x32x32xf32> to vector<32x32xf32>
    %cst_364 = arith.constant dense<0.000000e+00> : vector<8x32xf32>
    %629 = tpu.matmul %572, %628, %cst_364 {dimension_numbers = #tpu.dot_dimension_numbers<[1], [0], [0], [1], [0, 0, 1, 1], [], []>} : vector<8x32xf32>, vector<32x32xf32>, vector<8x32xf32> -> vector<8x32xf32>
    %c1_365 = arith.constant 1 : index
    %c0_366 = arith.constant 0 : index
    %c0_367 = arith.constant 0 : index
    %630 = vector.load %arg8[%c1_365, %c0_366, %c0_367] : memref<3x1x32xf32, #tpu.memory_space<vmem>>, vector<1x1x32xf32>
    %631 = vector.shape_cast %630 : vector<1x1x32xf32> to vector<1x32xf32>
    %632 = vector.broadcast %631 : vector<1x32xf32> to vector<8x32xf32>
    %633 = arith.addf %629, %632 : vector<8x32xf32>
    %c2_368 = arith.constant 2 : index
    %c0_369 = arith.constant 0 : index
    %c0_370 = arith.constant 0 : index
    %634 = vector.load %arg6[%c2_368, %c0_369, %c0_370] : memref<3x32x32xf32, #tpu.memory_space<vmem>>, vector<1x32x32xf32>
    %635 = vector.shape_cast %634 : vector<1x32x32xf32> to vector<32x32xf32>
    %cst_371 = arith.constant dense<0.000000e+00> : vector<8x32xf32>
    %636 = tpu.matmul %572, %635, %cst_371 {dimension_numbers = #tpu.dot_dimension_numbers<[1], [0], [0], [1], [0, 0, 1, 1], [], []>} : vector<8x32xf32>, vector<32x32xf32>, vector<8x32xf32> -> vector<8x32xf32>
    %c2_372 = arith.constant 2 : index
    %c0_373 = arith.constant 0 : index
    %c0_374 = arith.constant 0 : index
    %637 = vector.load %arg8[%c2_372, %c0_373, %c0_374] : memref<3x1x32xf32, #tpu.memory_space<vmem>>, vector<1x1x32xf32>
    %638 = vector.shape_cast %637 : vector<1x1x32xf32> to vector<1x32xf32>
    %639 = vector.broadcast %638 : vector<1x32xf32> to vector<8x32xf32>
    %640 = arith.addf %636, %639 : vector<8x32xf32>
    %641 = arith.addf %617, %626 : vector<8x32xf32>
    %642 = arith.negf %641 : vector<8x32xf32>
    %643 = math.exp %642 : vector<8x32xf32>
    %cst_375 = arith.constant 1.000000e+00 : f32
    %644 = vector.broadcast %cst_375 : f32 to vector<8x32xf32>
    %645 = arith.addf %644, %643 : vector<8x32xf32>
    %646 = arith.divf %644, %645 : vector<8x32xf32>
    %647 = arith.addf %618, %633 : vector<8x32xf32>
    %648 = arith.negf %647 : vector<8x32xf32>
    %649 = math.exp %648 : vector<8x32xf32>
    %cst_376 = arith.constant 1.000000e+00 : f32
    %650 = vector.broadcast %cst_376 : f32 to vector<8x32xf32>
    %651 = arith.addf %650, %649 : vector<8x32xf32>
    %652 = arith.divf %650, %651 : vector<8x32xf32>
    %653 = arith.mulf %646, %640 : vector<8x32xf32>
    %654 = arith.addf %619, %653 : vector<8x32xf32>
    %655 = math.tanh %654 : vector<8x32xf32>
    %cst_377 = arith.constant 1.000000e+00 : f32
    %656 = vector.broadcast %cst_377 : f32 to vector<8x32xf32>
    %657 = arith.subf %656, %652 : vector<8x32xf32>
    %658 = arith.mulf %657, %655 : vector<8x32xf32>
    %659 = arith.mulf %652, %572 : vector<8x32xf32>
    %660 = arith.addf %658, %659 : vector<8x32xf32>
    %661 = vector.extract_strided_slice %7 {offsets = [56, 0], sizes = [8, 32], strides = [1, 1]} : vector<64x32xf32> to vector<8x32xf32>
    %662 = vector.extract_strided_slice %14 {offsets = [56, 0], sizes = [8, 32], strides = [1, 1]} : vector<64x32xf32> to vector<8x32xf32>
    %663 = vector.extract_strided_slice %21 {offsets = [56, 0], sizes = [8, 32], strides = [1, 1]} : vector<64x32xf32> to vector<8x32xf32>
    %c0_378 = arith.constant 0 : index
    %c0_379 = arith.constant 0 : index
    %c0_380 = arith.constant 0 : index
    %664 = vector.load %arg2[%c0_378, %c0_379, %c0_380] : memref<3x32x32xf32, #tpu.memory_space<vmem>>, vector<1x32x32xf32>
    %665 = vector.shape_cast %664 : vector<1x32x32xf32> to vector<32x32xf32>
    %cst_381 = arith.constant dense<0.000000e+00> : vector<8x32xf32>
    %666 = tpu.matmul %616, %665, %cst_381 {dimension_numbers = #tpu.dot_dimension_numbers<[1], [0], [0], [1], [0, 0, 1, 1], [], []>} : vector<8x32xf32>, vector<32x32xf32>, vector<8x32xf32> -> vector<8x32xf32>
    %c0_382 = arith.constant 0 : index
    %c0_383 = arith.constant 0 : index
    %c0_384 = arith.constant 0 : index
    %667 = vector.load %arg4[%c0_382, %c0_383, %c0_384] : memref<3x1x32xf32, #tpu.memory_space<vmem>>, vector<1x1x32xf32>
    %668 = vector.shape_cast %667 : vector<1x1x32xf32> to vector<1x32xf32>
    %669 = vector.broadcast %668 : vector<1x32xf32> to vector<8x32xf32>
    %670 = arith.addf %666, %669 : vector<8x32xf32>
    %c1_385 = arith.constant 1 : index
    %c0_386 = arith.constant 0 : index
    %c0_387 = arith.constant 0 : index
    %671 = vector.load %arg2[%c1_385, %c0_386, %c0_387] : memref<3x32x32xf32, #tpu.memory_space<vmem>>, vector<1x32x32xf32>
    %672 = vector.shape_cast %671 : vector<1x32x32xf32> to vector<32x32xf32>
    %cst_388 = arith.constant dense<0.000000e+00> : vector<8x32xf32>
    %673 = tpu.matmul %616, %672, %cst_388 {dimension_numbers = #tpu.dot_dimension_numbers<[1], [0], [0], [1], [0, 0, 1, 1], [], []>} : vector<8x32xf32>, vector<32x32xf32>, vector<8x32xf32> -> vector<8x32xf32>
    %c1_389 = arith.constant 1 : index
    %c0_390 = arith.constant 0 : index
    %c0_391 = arith.constant 0 : index
    %674 = vector.load %arg4[%c1_389, %c0_390, %c0_391] : memref<3x1x32xf32, #tpu.memory_space<vmem>>, vector<1x1x32xf32>
    %675 = vector.shape_cast %674 : vector<1x1x32xf32> to vector<1x32xf32>
    %676 = vector.broadcast %675 : vector<1x32xf32> to vector<8x32xf32>
    %677 = arith.addf %673, %676 : vector<8x32xf32>
    %c2_392 = arith.constant 2 : index
    %c0_393 = arith.constant 0 : index
    %c0_394 = arith.constant 0 : index
    %678 = vector.load %arg2[%c2_392, %c0_393, %c0_394] : memref<3x32x32xf32, #tpu.memory_space<vmem>>, vector<1x32x32xf32>
    %679 = vector.shape_cast %678 : vector<1x32x32xf32> to vector<32x32xf32>
    %cst_395 = arith.constant dense<0.000000e+00> : vector<8x32xf32>
    %680 = tpu.matmul %616, %679, %cst_395 {dimension_numbers = #tpu.dot_dimension_numbers<[1], [0], [0], [1], [0, 0, 1, 1], [], []>} : vector<8x32xf32>, vector<32x32xf32>, vector<8x32xf32> -> vector<8x32xf32>
    %c2_396 = arith.constant 2 : index
    %c0_397 = arith.constant 0 : index
    %c0_398 = arith.constant 0 : index
    %681 = vector.load %arg4[%c2_396, %c0_397, %c0_398] : memref<3x1x32xf32, #tpu.memory_space<vmem>>, vector<1x1x32xf32>
    %682 = vector.shape_cast %681 : vector<1x1x32xf32> to vector<1x32xf32>
    %683 = vector.broadcast %682 : vector<1x32xf32> to vector<8x32xf32>
    %684 = arith.addf %680, %683 : vector<8x32xf32>
    %685 = arith.addf %661, %670 : vector<8x32xf32>
    %686 = arith.negf %685 : vector<8x32xf32>
    %687 = math.exp %686 : vector<8x32xf32>
    %cst_399 = arith.constant 1.000000e+00 : f32
    %688 = vector.broadcast %cst_399 : f32 to vector<8x32xf32>
    %689 = arith.addf %688, %687 : vector<8x32xf32>
    %690 = arith.divf %688, %689 : vector<8x32xf32>
    %691 = arith.addf %662, %677 : vector<8x32xf32>
    %692 = arith.negf %691 : vector<8x32xf32>
    %693 = math.exp %692 : vector<8x32xf32>
    %cst_400 = arith.constant 1.000000e+00 : f32
    %694 = vector.broadcast %cst_400 : f32 to vector<8x32xf32>
    %695 = arith.addf %694, %693 : vector<8x32xf32>
    %696 = arith.divf %694, %695 : vector<8x32xf32>
    %697 = arith.mulf %690, %684 : vector<8x32xf32>
    %698 = arith.addf %663, %697 : vector<8x32xf32>
    %699 = math.tanh %698 : vector<8x32xf32>
    %cst_401 = arith.constant 1.000000e+00 : f32
    %700 = vector.broadcast %cst_401 : f32 to vector<8x32xf32>
    %701 = arith.subf %700, %696 : vector<8x32xf32>
    %702 = arith.mulf %701, %699 : vector<8x32xf32>
    %703 = arith.mulf %696, %616 : vector<8x32xf32>
    %704 = arith.addf %702, %703 : vector<8x32xf32>
    %705 = vector.extract_strided_slice %28 {offsets = [0, 0], sizes = [8, 32], strides = [1, 1]} : vector<64x32xf32> to vector<8x32xf32>
    %706 = vector.extract_strided_slice %35 {offsets = [0, 0], sizes = [8, 32], strides = [1, 1]} : vector<64x32xf32> to vector<8x32xf32>
    %707 = vector.extract_strided_slice %42 {offsets = [0, 0], sizes = [8, 32], strides = [1, 1]} : vector<64x32xf32> to vector<8x32xf32>
    %c0_402 = arith.constant 0 : index
    %c0_403 = arith.constant 0 : index
    %c0_404 = arith.constant 0 : index
    %708 = vector.load %arg6[%c0_402, %c0_403, %c0_404] : memref<3x32x32xf32, #tpu.memory_space<vmem>>, vector<1x32x32xf32>
    %709 = vector.shape_cast %708 : vector<1x32x32xf32> to vector<32x32xf32>
    %cst_405 = arith.constant dense<0.000000e+00> : vector<8x32xf32>
    %710 = tpu.matmul %660, %709, %cst_405 {dimension_numbers = #tpu.dot_dimension_numbers<[1], [0], [0], [1], [0, 0, 1, 1], [], []>} : vector<8x32xf32>, vector<32x32xf32>, vector<8x32xf32> -> vector<8x32xf32>
    %c0_406 = arith.constant 0 : index
    %c0_407 = arith.constant 0 : index
    %c0_408 = arith.constant 0 : index
    %711 = vector.load %arg8[%c0_406, %c0_407, %c0_408] : memref<3x1x32xf32, #tpu.memory_space<vmem>>, vector<1x1x32xf32>
    %712 = vector.shape_cast %711 : vector<1x1x32xf32> to vector<1x32xf32>
    %713 = vector.broadcast %712 : vector<1x32xf32> to vector<8x32xf32>
    %714 = arith.addf %710, %713 : vector<8x32xf32>
    %c1_409 = arith.constant 1 : index
    %c0_410 = arith.constant 0 : index
    %c0_411 = arith.constant 0 : index
    %715 = vector.load %arg6[%c1_409, %c0_410, %c0_411] : memref<3x32x32xf32, #tpu.memory_space<vmem>>, vector<1x32x32xf32>
    %716 = vector.shape_cast %715 : vector<1x32x32xf32> to vector<32x32xf32>
    %cst_412 = arith.constant dense<0.000000e+00> : vector<8x32xf32>
    %717 = tpu.matmul %660, %716, %cst_412 {dimension_numbers = #tpu.dot_dimension_numbers<[1], [0], [0], [1], [0, 0, 1, 1], [], []>} : vector<8x32xf32>, vector<32x32xf32>, vector<8x32xf32> -> vector<8x32xf32>
    %c1_413 = arith.constant 1 : index
    %c0_414 = arith.constant 0 : index
    %c0_415 = arith.constant 0 : index
    %718 = vector.load %arg8[%c1_413, %c0_414, %c0_415] : memref<3x1x32xf32, #tpu.memory_space<vmem>>, vector<1x1x32xf32>
    %719 = vector.shape_cast %718 : vector<1x1x32xf32> to vector<1x32xf32>
    %720 = vector.broadcast %719 : vector<1x32xf32> to vector<8x32xf32>
    %721 = arith.addf %717, %720 : vector<8x32xf32>
    %c2_416 = arith.constant 2 : index
    %c0_417 = arith.constant 0 : index
    %c0_418 = arith.constant 0 : index
    %722 = vector.load %arg6[%c2_416, %c0_417, %c0_418] : memref<3x32x32xf32, #tpu.memory_space<vmem>>, vector<1x32x32xf32>
    %723 = vector.shape_cast %722 : vector<1x32x32xf32> to vector<32x32xf32>
    %cst_419 = arith.constant dense<0.000000e+00> : vector<8x32xf32>
    %724 = tpu.matmul %660, %723, %cst_419 {dimension_numbers = #tpu.dot_dimension_numbers<[1], [0], [0], [1], [0, 0, 1, 1], [], []>} : vector<8x32xf32>, vector<32x32xf32>, vector<8x32xf32> -> vector<8x32xf32>
    %c2_420 = arith.constant 2 : index
    %c0_421 = arith.constant 0 : index
    %c0_422 = arith.constant 0 : index
    %725 = vector.load %arg8[%c2_420, %c0_421, %c0_422] : memref<3x1x32xf32, #tpu.memory_space<vmem>>, vector<1x1x32xf32>
    %726 = vector.shape_cast %725 : vector<1x1x32xf32> to vector<1x32xf32>
    %727 = vector.broadcast %726 : vector<1x32xf32> to vector<8x32xf32>
    %728 = arith.addf %724, %727 : vector<8x32xf32>
    %729 = arith.addf %705, %714 : vector<8x32xf32>
    %730 = arith.negf %729 : vector<8x32xf32>
    %731 = math.exp %730 : vector<8x32xf32>
    %cst_423 = arith.constant 1.000000e+00 : f32
    %732 = vector.broadcast %cst_423 : f32 to vector<8x32xf32>
    %733 = arith.addf %732, %731 : vector<8x32xf32>
    %734 = arith.divf %732, %733 : vector<8x32xf32>
    %735 = arith.addf %706, %721 : vector<8x32xf32>
    %736 = arith.negf %735 : vector<8x32xf32>
    %737 = math.exp %736 : vector<8x32xf32>
    %cst_424 = arith.constant 1.000000e+00 : f32
    %738 = vector.broadcast %cst_424 : f32 to vector<8x32xf32>
    %739 = arith.addf %738, %737 : vector<8x32xf32>
    %740 = arith.divf %738, %739 : vector<8x32xf32>
    %741 = arith.mulf %734, %728 : vector<8x32xf32>
    %742 = arith.addf %707, %741 : vector<8x32xf32>
    %743 = math.tanh %742 : vector<8x32xf32>
    %cst_425 = arith.constant 1.000000e+00 : f32
    %744 = vector.broadcast %cst_425 : f32 to vector<8x32xf32>
    %745 = arith.subf %744, %740 : vector<8x32xf32>
    %746 = arith.mulf %745, %743 : vector<8x32xf32>
    %747 = arith.mulf %740, %660 : vector<8x32xf32>
    %748 = arith.addf %746, %747 : vector<8x32xf32>
    %749 = tpu.concatenate %704, %748 in 1 : vector<8x32xf32>, vector<8x32xf32> -> vector<8x64xf32>
    %c0_426 = arith.constant 0 : index
    %c0_427 = arith.constant 0 : index
    %c0_428 = arith.constant 0 : index
    %750 = vector.load %arg9[%c0_426, %c0_427, %c0_428] : memref<3x64x32xf32, #tpu.memory_space<vmem>>, vector<1x64x32xf32>
    %751 = vector.shape_cast %750 : vector<1x64x32xf32> to vector<64x32xf32>
    %cst_429 = arith.constant dense<0.000000e+00> : vector<8x32xf32>
    %752 = tpu.matmul %749, %751, %cst_429 {dimension_numbers = #tpu.dot_dimension_numbers<[1], [0], [0], [1], [0, 0, 1, 1], [], []>} : vector<8x64xf32>, vector<64x32xf32>, vector<8x32xf32> -> vector<8x32xf32>
    %c0_430 = arith.constant 0 : index
    %c0_431 = arith.constant 0 : index
    %c0_432 = arith.constant 0 : index
    %753 = vector.load %arg11[%c0_430, %c0_431, %c0_432] : memref<3x1x32xf32, #tpu.memory_space<vmem>>, vector<1x1x32xf32>
    %754 = vector.shape_cast %753 : vector<1x1x32xf32> to vector<1x32xf32>
    %755 = vector.broadcast %754 : vector<1x32xf32> to vector<8x32xf32>
    %756 = arith.addf %752, %755 : vector<8x32xf32>
    %c1_433 = arith.constant 1 : index
    %c0_434 = arith.constant 0 : index
    %c0_435 = arith.constant 0 : index
    %757 = vector.load %arg9[%c1_433, %c0_434, %c0_435] : memref<3x64x32xf32, #tpu.memory_space<vmem>>, vector<1x64x32xf32>
    %758 = vector.shape_cast %757 : vector<1x64x32xf32> to vector<64x32xf32>
    %cst_436 = arith.constant dense<0.000000e+00> : vector<8x32xf32>
    %759 = tpu.matmul %749, %758, %cst_436 {dimension_numbers = #tpu.dot_dimension_numbers<[1], [0], [0], [1], [0, 0, 1, 1], [], []>} : vector<8x64xf32>, vector<64x32xf32>, vector<8x32xf32> -> vector<8x32xf32>
    %c1_437 = arith.constant 1 : index
    %c0_438 = arith.constant 0 : index
    %c0_439 = arith.constant 0 : index
    %760 = vector.load %arg11[%c1_437, %c0_438, %c0_439] : memref<3x1x32xf32, #tpu.memory_space<vmem>>, vector<1x1x32xf32>
    %761 = vector.shape_cast %760 : vector<1x1x32xf32> to vector<1x32xf32>
    %762 = vector.broadcast %761 : vector<1x32xf32> to vector<8x32xf32>
    %763 = arith.addf %759, %762 : vector<8x32xf32>
    %c2_440 = arith.constant 2 : index
    %c0_441 = arith.constant 0 : index
    %c0_442 = arith.constant 0 : index
    %764 = vector.load %arg9[%c2_440, %c0_441, %c0_442] : memref<3x64x32xf32, #tpu.memory_space<vmem>>, vector<1x64x32xf32>
    %765 = vector.shape_cast %764 : vector<1x64x32xf32> to vector<64x32xf32>
    %cst_443 = arith.constant dense<0.000000e+00> : vector<8x32xf32>
    %766 = tpu.matmul %749, %765, %cst_443 {dimension_numbers = #tpu.dot_dimension_numbers<[1], [0], [0], [1], [0, 0, 1, 1], [], []>} : vector<8x64xf32>, vector<64x32xf32>, vector<8x32xf32> -> vector<8x32xf32>
    %c2_444 = arith.constant 2 : index
    %c0_445 = arith.constant 0 : index
    %c0_446 = arith.constant 0 : index
    %767 = vector.load %arg11[%c2_444, %c0_445, %c0_446] : memref<3x1x32xf32, #tpu.memory_space<vmem>>, vector<1x1x32xf32>
    %768 = vector.shape_cast %767 : vector<1x1x32xf32> to vector<1x32xf32>
    %769 = vector.broadcast %768 : vector<1x32xf32> to vector<8x32xf32>
    %770 = arith.addf %766, %769 : vector<8x32xf32>
    %c0_447 = arith.constant 0 : index
    %c0_448 = arith.constant 0 : index
    %c0_449 = arith.constant 0 : index
    %771 = vector.load %arg13[%c0_447, %c0_448, %c0_449] : memref<3x64x32xf32, #tpu.memory_space<vmem>>, vector<1x64x32xf32>
    %772 = vector.shape_cast %771 : vector<1x64x32xf32> to vector<64x32xf32>
    %cst_450 = arith.constant dense<0.000000e+00> : vector<8x32xf32>
    %773 = tpu.matmul %749, %772, %cst_450 {dimension_numbers = #tpu.dot_dimension_numbers<[1], [0], [0], [1], [0, 0, 1, 1], [], []>} : vector<8x64xf32>, vector<64x32xf32>, vector<8x32xf32> -> vector<8x32xf32>
    %c0_451 = arith.constant 0 : index
    %c0_452 = arith.constant 0 : index
    %c0_453 = arith.constant 0 : index
    %774 = vector.load %arg15[%c0_451, %c0_452, %c0_453] : memref<3x1x32xf32, #tpu.memory_space<vmem>>, vector<1x1x32xf32>
    %775 = vector.shape_cast %774 : vector<1x1x32xf32> to vector<1x32xf32>
    %776 = vector.broadcast %775 : vector<1x32xf32> to vector<8x32xf32>
    %777 = arith.addf %773, %776 : vector<8x32xf32>
    %c1_454 = arith.constant 1 : index
    %c0_455 = arith.constant 0 : index
    %c0_456 = arith.constant 0 : index
    %778 = vector.load %arg13[%c1_454, %c0_455, %c0_456] : memref<3x64x32xf32, #tpu.memory_space<vmem>>, vector<1x64x32xf32>
    %779 = vector.shape_cast %778 : vector<1x64x32xf32> to vector<64x32xf32>
    %cst_457 = arith.constant dense<0.000000e+00> : vector<8x32xf32>
    %780 = tpu.matmul %749, %779, %cst_457 {dimension_numbers = #tpu.dot_dimension_numbers<[1], [0], [0], [1], [0, 0, 1, 1], [], []>} : vector<8x64xf32>, vector<64x32xf32>, vector<8x32xf32> -> vector<8x32xf32>
    %c1_458 = arith.constant 1 : index
    %c0_459 = arith.constant 0 : index
    %c0_460 = arith.constant 0 : index
    %781 = vector.load %arg15[%c1_458, %c0_459, %c0_460] : memref<3x1x32xf32, #tpu.memory_space<vmem>>, vector<1x1x32xf32>
    %782 = vector.shape_cast %781 : vector<1x1x32xf32> to vector<1x32xf32>
    %783 = vector.broadcast %782 : vector<1x32xf32> to vector<8x32xf32>
    %784 = arith.addf %780, %783 : vector<8x32xf32>
    %c2_461 = arith.constant 2 : index
    %c0_462 = arith.constant 0 : index
    %c0_463 = arith.constant 0 : index
    %785 = vector.load %arg13[%c2_461, %c0_462, %c0_463] : memref<3x64x32xf32, #tpu.memory_space<vmem>>, vector<1x64x32xf32>
    %786 = vector.shape_cast %785 : vector<1x64x32xf32> to vector<64x32xf32>
    %cst_464 = arith.constant dense<0.000000e+00> : vector<8x32xf32>
    %787 = tpu.matmul %749, %786, %cst_464 {dimension_numbers = #tpu.dot_dimension_numbers<[1], [0], [0], [1], [0, 0, 1, 1], [], []>} : vector<8x64xf32>, vector<64x32xf32>, vector<8x32xf32> -> vector<8x32xf32>
    %c2_465 = arith.constant 2 : index
    %c0_466 = arith.constant 0 : index
    %c0_467 = arith.constant 0 : index
    %788 = vector.load %arg15[%c2_465, %c0_466, %c0_467] : memref<3x1x32xf32, #tpu.memory_space<vmem>>, vector<1x1x32xf32>
    %789 = vector.shape_cast %788 : vector<1x1x32xf32> to vector<1x32xf32>
    %790 = vector.broadcast %789 : vector<1x32xf32> to vector<8x32xf32>
    %791 = arith.addf %787, %790 : vector<8x32xf32>
    %cst_468 = arith.constant 0.000000e+00 : f32
    %792 = vector.broadcast %cst_468 : f32 to vector<1x32xf32>
    %cst_469 = arith.constant 0.000000e+00 : f32
    %793 = vector.broadcast %cst_469 : f32 to vector<1x32xf32>
    %794 = vector.extract_strided_slice %756 {offsets = [0, 0], sizes = [1, 32], strides = [1, 1]} : vector<8x32xf32> to vector<1x32xf32>
    %795 = vector.extract_strided_slice %763 {offsets = [0, 0], sizes = [1, 32], strides = [1, 1]} : vector<8x32xf32> to vector<1x32xf32>
    %796 = vector.extract_strided_slice %770 {offsets = [0, 0], sizes = [1, 32], strides = [1, 1]} : vector<8x32xf32> to vector<1x32xf32>
    %c0_470 = arith.constant 0 : index
    %c0_471 = arith.constant 0 : index
    %c0_472 = arith.constant 0 : index
    %797 = vector.load %arg10[%c0_470, %c0_471, %c0_472] : memref<3x32x32xf32, #tpu.memory_space<vmem>>, vector<1x32x32xf32>
    %798 = vector.shape_cast %797 : vector<1x32x32xf32> to vector<32x32xf32>
    %cst_473 = arith.constant dense<0.000000e+00> : vector<1x32xf32>
    %799 = tpu.matmul %792, %798, %cst_473 {dimension_numbers = #tpu.dot_dimension_numbers<[1], [0], [0], [1], [0, 0, 1, 1], [], []>} : vector<1x32xf32>, vector<32x32xf32>, vector<1x32xf32> -> vector<1x32xf32>
    %c0_474 = arith.constant 0 : index
    %c0_475 = arith.constant 0 : index
    %c0_476 = arith.constant 0 : index
    %800 = vector.load %arg12[%c0_474, %c0_475, %c0_476] : memref<3x1x32xf32, #tpu.memory_space<vmem>>, vector<1x1x32xf32>
    %801 = vector.shape_cast %800 : vector<1x1x32xf32> to vector<1x32xf32>
    %802 = arith.addf %799, %801 : vector<1x32xf32>
    %c1_477 = arith.constant 1 : index
    %c0_478 = arith.constant 0 : index
    %c0_479 = arith.constant 0 : index
    %803 = vector.load %arg10[%c1_477, %c0_478, %c0_479] : memref<3x32x32xf32, #tpu.memory_space<vmem>>, vector<1x32x32xf32>
    %804 = vector.shape_cast %803 : vector<1x32x32xf32> to vector<32x32xf32>
    %cst_480 = arith.constant dense<0.000000e+00> : vector<1x32xf32>
    %805 = tpu.matmul %792, %804, %cst_480 {dimension_numbers = #tpu.dot_dimension_numbers<[1], [0], [0], [1], [0, 0, 1, 1], [], []>} : vector<1x32xf32>, vector<32x32xf32>, vector<1x32xf32> -> vector<1x32xf32>
    %c1_481 = arith.constant 1 : index
    %c0_482 = arith.constant 0 : index
    %c0_483 = arith.constant 0 : index
    %806 = vector.load %arg12[%c1_481, %c0_482, %c0_483] : memref<3x1x32xf32, #tpu.memory_space<vmem>>, vector<1x1x32xf32>
    %807 = vector.shape_cast %806 : vector<1x1x32xf32> to vector<1x32xf32>
    %808 = arith.addf %805, %807 : vector<1x32xf32>
    %c2_484 = arith.constant 2 : index
    %c0_485 = arith.constant 0 : index
    %c0_486 = arith.constant 0 : index
    %809 = vector.load %arg10[%c2_484, %c0_485, %c0_486] : memref<3x32x32xf32, #tpu.memory_space<vmem>>, vector<1x32x32xf32>
    %810 = vector.shape_cast %809 : vector<1x32x32xf32> to vector<32x32xf32>
    %cst_487 = arith.constant dense<0.000000e+00> : vector<1x32xf32>
    %811 = tpu.matmul %792, %810, %cst_487 {dimension_numbers = #tpu.dot_dimension_numbers<[1], [0], [0], [1], [0, 0, 1, 1], [], []>} : vector<1x32xf32>, vector<32x32xf32>, vector<1x32xf32> -> vector<1x32xf32>
    %c2_488 = arith.constant 2 : index
    %c0_489 = arith.constant 0 : index
    %c0_490 = arith.constant 0 : index
    %812 = vector.load %arg12[%c2_488, %c0_489, %c0_490] : memref<3x1x32xf32, #tpu.memory_space<vmem>>, vector<1x1x32xf32>
    %813 = vector.shape_cast %812 : vector<1x1x32xf32> to vector<1x32xf32>
    %814 = arith.addf %811, %813 : vector<1x32xf32>
    %815 = arith.addf %794, %802 : vector<1x32xf32>
    %816 = arith.negf %815 : vector<1x32xf32>
    %817 = math.exp %816 : vector<1x32xf32>
    %cst_491 = arith.constant 1.000000e+00 : f32
    %818 = vector.broadcast %cst_491 : f32 to vector<1x32xf32>
    %819 = arith.addf %818, %817 : vector<1x32xf32>
    %820 = arith.divf %818, %819 : vector<1x32xf32>
    %821 = arith.addf %795, %808 : vector<1x32xf32>
    %822 = arith.negf %821 : vector<1x32xf32>
    %823 = math.exp %822 : vector<1x32xf32>
    %cst_492 = arith.constant 1.000000e+00 : f32
    %824 = vector.broadcast %cst_492 : f32 to vector<1x32xf32>
    %825 = arith.addf %824, %823 : vector<1x32xf32>
    %826 = arith.divf %824, %825 : vector<1x32xf32>
    %827 = arith.mulf %820, %814 : vector<1x32xf32>
    %828 = arith.addf %796, %827 : vector<1x32xf32>
    %829 = math.tanh %828 : vector<1x32xf32>
    %cst_493 = arith.constant 1.000000e+00 : f32
    %830 = vector.broadcast %cst_493 : f32 to vector<1x32xf32>
    %831 = arith.subf %830, %826 : vector<1x32xf32>
    %832 = arith.mulf %831, %829 : vector<1x32xf32>
    %833 = arith.mulf %826, %792 : vector<1x32xf32>
    %834 = arith.addf %832, %833 : vector<1x32xf32>
    %835 = vector.extract_strided_slice %777 {offsets = [4, 0], sizes = [1, 32], strides = [1, 1]} : vector<8x32xf32> to vector<1x32xf32>
    %836 = vector.extract_strided_slice %784 {offsets = [4, 0], sizes = [1, 32], strides = [1, 1]} : vector<8x32xf32> to vector<1x32xf32>
    %837 = vector.extract_strided_slice %791 {offsets = [4, 0], sizes = [1, 32], strides = [1, 1]} : vector<8x32xf32> to vector<1x32xf32>
    %c0_494 = arith.constant 0 : index
    %c0_495 = arith.constant 0 : index
    %c0_496 = arith.constant 0 : index
    %838 = vector.load %arg14[%c0_494, %c0_495, %c0_496] : memref<3x32x32xf32, #tpu.memory_space<vmem>>, vector<1x32x32xf32>
    %839 = vector.shape_cast %838 : vector<1x32x32xf32> to vector<32x32xf32>
    %cst_497 = arith.constant dense<0.000000e+00> : vector<1x32xf32>
    %840 = tpu.matmul %793, %839, %cst_497 {dimension_numbers = #tpu.dot_dimension_numbers<[1], [0], [0], [1], [0, 0, 1, 1], [], []>} : vector<1x32xf32>, vector<32x32xf32>, vector<1x32xf32> -> vector<1x32xf32>
    %c0_498 = arith.constant 0 : index
    %c0_499 = arith.constant 0 : index
    %c0_500 = arith.constant 0 : index
    %841 = vector.load %arg16[%c0_498, %c0_499, %c0_500] : memref<3x1x32xf32, #tpu.memory_space<vmem>>, vector<1x1x32xf32>
    %842 = vector.shape_cast %841 : vector<1x1x32xf32> to vector<1x32xf32>
    %843 = arith.addf %840, %842 : vector<1x32xf32>
    %c1_501 = arith.constant 1 : index
    %c0_502 = arith.constant 0 : index
    %c0_503 = arith.constant 0 : index
    %844 = vector.load %arg14[%c1_501, %c0_502, %c0_503] : memref<3x32x32xf32, #tpu.memory_space<vmem>>, vector<1x32x32xf32>
    %845 = vector.shape_cast %844 : vector<1x32x32xf32> to vector<32x32xf32>
    %cst_504 = arith.constant dense<0.000000e+00> : vector<1x32xf32>
    %846 = tpu.matmul %793, %845, %cst_504 {dimension_numbers = #tpu.dot_dimension_numbers<[1], [0], [0], [1], [0, 0, 1, 1], [], []>} : vector<1x32xf32>, vector<32x32xf32>, vector<1x32xf32> -> vector<1x32xf32>
    %c1_505 = arith.constant 1 : index
    %c0_506 = arith.constant 0 : index
    %c0_507 = arith.constant 0 : index
    %847 = vector.load %arg16[%c1_505, %c0_506, %c0_507] : memref<3x1x32xf32, #tpu.memory_space<vmem>>, vector<1x1x32xf32>
    %848 = vector.shape_cast %847 : vector<1x1x32xf32> to vector<1x32xf32>
    %849 = arith.addf %846, %848 : vector<1x32xf32>
    %c2_508 = arith.constant 2 : index
    %c0_509 = arith.constant 0 : index
    %c0_510 = arith.constant 0 : index
    %850 = vector.load %arg14[%c2_508, %c0_509, %c0_510] : memref<3x32x32xf32, #tpu.memory_space<vmem>>, vector<1x32x32xf32>
    %851 = vector.shape_cast %850 : vector<1x32x32xf32> to vector<32x32xf32>
    %cst_511 = arith.constant dense<0.000000e+00> : vector<1x32xf32>
    %852 = tpu.matmul %793, %851, %cst_511 {dimension_numbers = #tpu.dot_dimension_numbers<[1], [0], [0], [1], [0, 0, 1, 1], [], []>} : vector<1x32xf32>, vector<32x32xf32>, vector<1x32xf32> -> vector<1x32xf32>
    %c2_512 = arith.constant 2 : index
    %c0_513 = arith.constant 0 : index
    %c0_514 = arith.constant 0 : index
    %853 = vector.load %arg16[%c2_512, %c0_513, %c0_514] : memref<3x1x32xf32, #tpu.memory_space<vmem>>, vector<1x1x32xf32>
    %854 = vector.shape_cast %853 : vector<1x1x32xf32> to vector<1x32xf32>
    %855 = arith.addf %852, %854 : vector<1x32xf32>
    %856 = arith.addf %835, %843 : vector<1x32xf32>
    %857 = arith.negf %856 : vector<1x32xf32>
    %858 = math.exp %857 : vector<1x32xf32>
    %cst_515 = arith.constant 1.000000e+00 : f32
    %859 = vector.broadcast %cst_515 : f32 to vector<1x32xf32>
    %860 = arith.addf %859, %858 : vector<1x32xf32>
    %861 = arith.divf %859, %860 : vector<1x32xf32>
    %862 = arith.addf %836, %849 : vector<1x32xf32>
    %863 = arith.negf %862 : vector<1x32xf32>
    %864 = math.exp %863 : vector<1x32xf32>
    %cst_516 = arith.constant 1.000000e+00 : f32
    %865 = vector.broadcast %cst_516 : f32 to vector<1x32xf32>
    %866 = arith.addf %865, %864 : vector<1x32xf32>
    %867 = arith.divf %865, %866 : vector<1x32xf32>
    %868 = arith.mulf %861, %855 : vector<1x32xf32>
    %869 = arith.addf %837, %868 : vector<1x32xf32>
    %870 = math.tanh %869 : vector<1x32xf32>
    %cst_517 = arith.constant 1.000000e+00 : f32
    %871 = vector.broadcast %cst_517 : f32 to vector<1x32xf32>
    %872 = arith.subf %871, %867 : vector<1x32xf32>
    %873 = arith.mulf %872, %870 : vector<1x32xf32>
    %874 = arith.mulf %867, %793 : vector<1x32xf32>
    %875 = arith.addf %873, %874 : vector<1x32xf32>
    %876 = vector.extract_strided_slice %756 {offsets = [1, 0], sizes = [1, 32], strides = [1, 1]} : vector<8x32xf32> to vector<1x32xf32>
    %877 = vector.extract_strided_slice %763 {offsets = [1, 0], sizes = [1, 32], strides = [1, 1]} : vector<8x32xf32> to vector<1x32xf32>
    %878 = vector.extract_strided_slice %770 {offsets = [1, 0], sizes = [1, 32], strides = [1, 1]} : vector<8x32xf32> to vector<1x32xf32>
    %c0_518 = arith.constant 0 : index
    %c0_519 = arith.constant 0 : index
    %c0_520 = arith.constant 0 : index
    %879 = vector.load %arg10[%c0_518, %c0_519, %c0_520] : memref<3x32x32xf32, #tpu.memory_space<vmem>>, vector<1x32x32xf32>
    %880 = vector.shape_cast %879 : vector<1x32x32xf32> to vector<32x32xf32>
    %cst_521 = arith.constant dense<0.000000e+00> : vector<1x32xf32>
    %881 = tpu.matmul %834, %880, %cst_521 {dimension_numbers = #tpu.dot_dimension_numbers<[1], [0], [0], [1], [0, 0, 1, 1], [], []>} : vector<1x32xf32>, vector<32x32xf32>, vector<1x32xf32> -> vector<1x32xf32>
    %c0_522 = arith.constant 0 : index
    %c0_523 = arith.constant 0 : index
    %c0_524 = arith.constant 0 : index
    %882 = vector.load %arg12[%c0_522, %c0_523, %c0_524] : memref<3x1x32xf32, #tpu.memory_space<vmem>>, vector<1x1x32xf32>
    %883 = vector.shape_cast %882 : vector<1x1x32xf32> to vector<1x32xf32>
    %884 = arith.addf %881, %883 : vector<1x32xf32>
    %c1_525 = arith.constant 1 : index
    %c0_526 = arith.constant 0 : index
    %c0_527 = arith.constant 0 : index
    %885 = vector.load %arg10[%c1_525, %c0_526, %c0_527] : memref<3x32x32xf32, #tpu.memory_space<vmem>>, vector<1x32x32xf32>
    %886 = vector.shape_cast %885 : vector<1x32x32xf32> to vector<32x32xf32>
    %cst_528 = arith.constant dense<0.000000e+00> : vector<1x32xf32>
    %887 = tpu.matmul %834, %886, %cst_528 {dimension_numbers = #tpu.dot_dimension_numbers<[1], [0], [0], [1], [0, 0, 1, 1], [], []>} : vector<1x32xf32>, vector<32x32xf32>, vector<1x32xf32> -> vector<1x32xf32>
    %c1_529 = arith.constant 1 : index
    %c0_530 = arith.constant 0 : index
    %c0_531 = arith.constant 0 : index
    %888 = vector.load %arg12[%c1_529, %c0_530, %c0_531] : memref<3x1x32xf32, #tpu.memory_space<vmem>>, vector<1x1x32xf32>
    %889 = vector.shape_cast %888 : vector<1x1x32xf32> to vector<1x32xf32>
    %890 = arith.addf %887, %889 : vector<1x32xf32>
    %c2_532 = arith.constant 2 : index
    %c0_533 = arith.constant 0 : index
    %c0_534 = arith.constant 0 : index
    %891 = vector.load %arg10[%c2_532, %c0_533, %c0_534] : memref<3x32x32xf32, #tpu.memory_space<vmem>>, vector<1x32x32xf32>
    %892 = vector.shape_cast %891 : vector<1x32x32xf32> to vector<32x32xf32>
    %cst_535 = arith.constant dense<0.000000e+00> : vector<1x32xf32>
    %893 = tpu.matmul %834, %892, %cst_535 {dimension_numbers = #tpu.dot_dimension_numbers<[1], [0], [0], [1], [0, 0, 1, 1], [], []>} : vector<1x32xf32>, vector<32x32xf32>, vector<1x32xf32> -> vector<1x32xf32>
    %c2_536 = arith.constant 2 : index
    %c0_537 = arith.constant 0 : index
    %c0_538 = arith.constant 0 : index
    %894 = vector.load %arg12[%c2_536, %c0_537, %c0_538] : memref<3x1x32xf32, #tpu.memory_space<vmem>>, vector<1x1x32xf32>
    %895 = vector.shape_cast %894 : vector<1x1x32xf32> to vector<1x32xf32>
    %896 = arith.addf %893, %895 : vector<1x32xf32>
    %897 = arith.addf %876, %884 : vector<1x32xf32>
    %898 = arith.negf %897 : vector<1x32xf32>
    %899 = math.exp %898 : vector<1x32xf32>
    %cst_539 = arith.constant 1.000000e+00 : f32
    %900 = vector.broadcast %cst_539 : f32 to vector<1x32xf32>
    %901 = arith.addf %900, %899 : vector<1x32xf32>
    %902 = arith.divf %900, %901 : vector<1x32xf32>
    %903 = arith.addf %877, %890 : vector<1x32xf32>
    %904 = arith.negf %903 : vector<1x32xf32>
    %905 = math.exp %904 : vector<1x32xf32>
    %cst_540 = arith.constant 1.000000e+00 : f32
    %906 = vector.broadcast %cst_540 : f32 to vector<1x32xf32>
    %907 = arith.addf %906, %905 : vector<1x32xf32>
    %908 = arith.divf %906, %907 : vector<1x32xf32>
    %909 = arith.mulf %902, %896 : vector<1x32xf32>
    %910 = arith.addf %878, %909 : vector<1x32xf32>
    %911 = math.tanh %910 : vector<1x32xf32>
    %cst_541 = arith.constant 1.000000e+00 : f32
    %912 = vector.broadcast %cst_541 : f32 to vector<1x32xf32>
    %913 = arith.subf %912, %908 : vector<1x32xf32>
    %914 = arith.mulf %913, %911 : vector<1x32xf32>
    %915 = arith.mulf %908, %834 : vector<1x32xf32>
    %916 = arith.addf %914, %915 : vector<1x32xf32>
    %917 = vector.extract_strided_slice %777 {offsets = [3, 0], sizes = [1, 32], strides = [1, 1]} : vector<8x32xf32> to vector<1x32xf32>
    %918 = vector.extract_strided_slice %784 {offsets = [3, 0], sizes = [1, 32], strides = [1, 1]} : vector<8x32xf32> to vector<1x32xf32>
    %919 = vector.extract_strided_slice %791 {offsets = [3, 0], sizes = [1, 32], strides = [1, 1]} : vector<8x32xf32> to vector<1x32xf32>
    %c0_542 = arith.constant 0 : index
    %c0_543 = arith.constant 0 : index
    %c0_544 = arith.constant 0 : index
    %920 = vector.load %arg14[%c0_542, %c0_543, %c0_544] : memref<3x32x32xf32, #tpu.memory_space<vmem>>, vector<1x32x32xf32>
    %921 = vector.shape_cast %920 : vector<1x32x32xf32> to vector<32x32xf32>
    %cst_545 = arith.constant dense<0.000000e+00> : vector<1x32xf32>
    %922 = tpu.matmul %875, %921, %cst_545 {dimension_numbers = #tpu.dot_dimension_numbers<[1], [0], [0], [1], [0, 0, 1, 1], [], []>} : vector<1x32xf32>, vector<32x32xf32>, vector<1x32xf32> -> vector<1x32xf32>
    %c0_546 = arith.constant 0 : index
    %c0_547 = arith.constant 0 : index
    %c0_548 = arith.constant 0 : index
    %923 = vector.load %arg16[%c0_546, %c0_547, %c0_548] : memref<3x1x32xf32, #tpu.memory_space<vmem>>, vector<1x1x32xf32>
    %924 = vector.shape_cast %923 : vector<1x1x32xf32> to vector<1x32xf32>
    %925 = arith.addf %922, %924 : vector<1x32xf32>
    %c1_549 = arith.constant 1 : index
    %c0_550 = arith.constant 0 : index
    %c0_551 = arith.constant 0 : index
    %926 = vector.load %arg14[%c1_549, %c0_550, %c0_551] : memref<3x32x32xf32, #tpu.memory_space<vmem>>, vector<1x32x32xf32>
    %927 = vector.shape_cast %926 : vector<1x32x32xf32> to vector<32x32xf32>
    %cst_552 = arith.constant dense<0.000000e+00> : vector<1x32xf32>
    %928 = tpu.matmul %875, %927, %cst_552 {dimension_numbers = #tpu.dot_dimension_numbers<[1], [0], [0], [1], [0, 0, 1, 1], [], []>} : vector<1x32xf32>, vector<32x32xf32>, vector<1x32xf32> -> vector<1x32xf32>
    %c1_553 = arith.constant 1 : index
    %c0_554 = arith.constant 0 : index
    %c0_555 = arith.constant 0 : index
    %929 = vector.load %arg16[%c1_553, %c0_554, %c0_555] : memref<3x1x32xf32, #tpu.memory_space<vmem>>, vector<1x1x32xf32>
    %930 = vector.shape_cast %929 : vector<1x1x32xf32> to vector<1x32xf32>
    %931 = arith.addf %928, %930 : vector<1x32xf32>
    %c2_556 = arith.constant 2 : index
    %c0_557 = arith.constant 0 : index
    %c0_558 = arith.constant 0 : index
    %932 = vector.load %arg14[%c2_556, %c0_557, %c0_558] : memref<3x32x32xf32, #tpu.memory_space<vmem>>, vector<1x32x32xf32>
    %933 = vector.shape_cast %932 : vector<1x32x32xf32> to vector<32x32xf32>
    %cst_559 = arith.constant dense<0.000000e+00> : vector<1x32xf32>
    %934 = tpu.matmul %875, %933, %cst_559 {dimension_numbers = #tpu.dot_dimension_numbers<[1], [0], [0], [1], [0, 0, 1, 1], [], []>} : vector<1x32xf32>, vector<32x32xf32>, vector<1x32xf32> -> vector<1x32xf32>
    %c2_560 = arith.constant 2 : index
    %c0_561 = arith.constant 0 : index
    %c0_562 = arith.constant 0 : index
    %935 = vector.load %arg16[%c2_560, %c0_561, %c0_562] : memref<3x1x32xf32, #tpu.memory_space<vmem>>, vector<1x1x32xf32>
    %936 = vector.shape_cast %935 : vector<1x1x32xf32> to vector<1x32xf32>
    %937 = arith.addf %934, %936 : vector<1x32xf32>
    %938 = arith.addf %917, %925 : vector<1x32xf32>
    %939 = arith.negf %938 : vector<1x32xf32>
    %940 = math.exp %939 : vector<1x32xf32>
    %cst_563 = arith.constant 1.000000e+00 : f32
    %941 = vector.broadcast %cst_563 : f32 to vector<1x32xf32>
    %942 = arith.addf %941, %940 : vector<1x32xf32>
    %943 = arith.divf %941, %942 : vector<1x32xf32>
    %944 = arith.addf %918, %931 : vector<1x32xf32>
    %945 = arith.negf %944 : vector<1x32xf32>
    %946 = math.exp %945 : vector<1x32xf32>
    %cst_564 = arith.constant 1.000000e+00 : f32
    %947 = vector.broadcast %cst_564 : f32 to vector<1x32xf32>
    %948 = arith.addf %947, %946 : vector<1x32xf32>
    %949 = arith.divf %947, %948 : vector<1x32xf32>
    %950 = arith.mulf %943, %937 : vector<1x32xf32>
    %951 = arith.addf %919, %950 : vector<1x32xf32>
    %952 = math.tanh %951 : vector<1x32xf32>
    %cst_565 = arith.constant 1.000000e+00 : f32
    %953 = vector.broadcast %cst_565 : f32 to vector<1x32xf32>
    %954 = arith.subf %953, %949 : vector<1x32xf32>
    %955 = arith.mulf %954, %952 : vector<1x32xf32>
    %956 = arith.mulf %949, %875 : vector<1x32xf32>
    %957 = arith.addf %955, %956 : vector<1x32xf32>
    %958 = vector.extract_strided_slice %756 {offsets = [2, 0], sizes = [1, 32], strides = [1, 1]} : vector<8x32xf32> to vector<1x32xf32>
    %959 = vector.extract_strided_slice %763 {offsets = [2, 0], sizes = [1, 32], strides = [1, 1]} : vector<8x32xf32> to vector<1x32xf32>
    %960 = vector.extract_strided_slice %770 {offsets = [2, 0], sizes = [1, 32], strides = [1, 1]} : vector<8x32xf32> to vector<1x32xf32>
    %c0_566 = arith.constant 0 : index
    %c0_567 = arith.constant 0 : index
    %c0_568 = arith.constant 0 : index
    %961 = vector.load %arg10[%c0_566, %c0_567, %c0_568] : memref<3x32x32xf32, #tpu.memory_space<vmem>>, vector<1x32x32xf32>
    %962 = vector.shape_cast %961 : vector<1x32x32xf32> to vector<32x32xf32>
    %cst_569 = arith.constant dense<0.000000e+00> : vector<1x32xf32>
    %963 = tpu.matmul %916, %962, %cst_569 {dimension_numbers = #tpu.dot_dimension_numbers<[1], [0], [0], [1], [0, 0, 1, 1], [], []>} : vector<1x32xf32>, vector<32x32xf32>, vector<1x32xf32> -> vector<1x32xf32>
    %c0_570 = arith.constant 0 : index
    %c0_571 = arith.constant 0 : index
    %c0_572 = arith.constant 0 : index
    %964 = vector.load %arg12[%c0_570, %c0_571, %c0_572] : memref<3x1x32xf32, #tpu.memory_space<vmem>>, vector<1x1x32xf32>
    %965 = vector.shape_cast %964 : vector<1x1x32xf32> to vector<1x32xf32>
    %966 = arith.addf %963, %965 : vector<1x32xf32>
    %c1_573 = arith.constant 1 : index
    %c0_574 = arith.constant 0 : index
    %c0_575 = arith.constant 0 : index
    %967 = vector.load %arg10[%c1_573, %c0_574, %c0_575] : memref<3x32x32xf32, #tpu.memory_space<vmem>>, vector<1x32x32xf32>
    %968 = vector.shape_cast %967 : vector<1x32x32xf32> to vector<32x32xf32>
    %cst_576 = arith.constant dense<0.000000e+00> : vector<1x32xf32>
    %969 = tpu.matmul %916, %968, %cst_576 {dimension_numbers = #tpu.dot_dimension_numbers<[1], [0], [0], [1], [0, 0, 1, 1], [], []>} : vector<1x32xf32>, vector<32x32xf32>, vector<1x32xf32> -> vector<1x32xf32>
    %c1_577 = arith.constant 1 : index
    %c0_578 = arith.constant 0 : index
    %c0_579 = arith.constant 0 : index
    %970 = vector.load %arg12[%c1_577, %c0_578, %c0_579] : memref<3x1x32xf32, #tpu.memory_space<vmem>>, vector<1x1x32xf32>
    %971 = vector.shape_cast %970 : vector<1x1x32xf32> to vector<1x32xf32>
    %972 = arith.addf %969, %971 : vector<1x32xf32>
    %c2_580 = arith.constant 2 : index
    %c0_581 = arith.constant 0 : index
    %c0_582 = arith.constant 0 : index
    %973 = vector.load %arg10[%c2_580, %c0_581, %c0_582] : memref<3x32x32xf32, #tpu.memory_space<vmem>>, vector<1x32x32xf32>
    %974 = vector.shape_cast %973 : vector<1x32x32xf32> to vector<32x32xf32>
    %cst_583 = arith.constant dense<0.000000e+00> : vector<1x32xf32>
    %975 = tpu.matmul %916, %974, %cst_583 {dimension_numbers = #tpu.dot_dimension_numbers<[1], [0], [0], [1], [0, 0, 1, 1], [], []>} : vector<1x32xf32>, vector<32x32xf32>, vector<1x32xf32> -> vector<1x32xf32>
    %c2_584 = arith.constant 2 : index
    %c0_585 = arith.constant 0 : index
    %c0_586 = arith.constant 0 : index
    %976 = vector.load %arg12[%c2_584, %c0_585, %c0_586] : memref<3x1x32xf32, #tpu.memory_space<vmem>>, vector<1x1x32xf32>
    %977 = vector.shape_cast %976 : vector<1x1x32xf32> to vector<1x32xf32>
    %978 = arith.addf %975, %977 : vector<1x32xf32>
    %979 = arith.addf %958, %966 : vector<1x32xf32>
    %980 = arith.negf %979 : vector<1x32xf32>
    %981 = math.exp %980 : vector<1x32xf32>
    %cst_587 = arith.constant 1.000000e+00 : f32
    %982 = vector.broadcast %cst_587 : f32 to vector<1x32xf32>
    %983 = arith.addf %982, %981 : vector<1x32xf32>
    %984 = arith.divf %982, %983 : vector<1x32xf32>
    %985 = arith.addf %959, %972 : vector<1x32xf32>
    %986 = arith.negf %985 : vector<1x32xf32>
    %987 = math.exp %986 : vector<1x32xf32>
    %cst_588 = arith.constant 1.000000e+00 : f32
    %988 = vector.broadcast %cst_588 : f32 to vector<1x32xf32>
    %989 = arith.addf %988, %987 : vector<1x32xf32>
    %990 = arith.divf %988, %989 : vector<1x32xf32>
    %991 = arith.mulf %984, %978 : vector<1x32xf32>
    %992 = arith.addf %960, %991 : vector<1x32xf32>
    %993 = math.tanh %992 : vector<1x32xf32>
    %cst_589 = arith.constant 1.000000e+00 : f32
    %994 = vector.broadcast %cst_589 : f32 to vector<1x32xf32>
    %995 = arith.subf %994, %990 : vector<1x32xf32>
    %996 = arith.mulf %995, %993 : vector<1x32xf32>
    %997 = arith.mulf %990, %916 : vector<1x32xf32>
    %998 = arith.addf %996, %997 : vector<1x32xf32>
    %999 = vector.extract_strided_slice %777 {offsets = [2, 0], sizes = [1, 32], strides = [1, 1]} : vector<8x32xf32> to vector<1x32xf32>
    %1000 = vector.extract_strided_slice %784 {offsets = [2, 0], sizes = [1, 32], strides = [1, 1]} : vector<8x32xf32> to vector<1x32xf32>
    %1001 = vector.extract_strided_slice %791 {offsets = [2, 0], sizes = [1, 32], strides = [1, 1]} : vector<8x32xf32> to vector<1x32xf32>
    %c0_590 = arith.constant 0 : index
    %c0_591 = arith.constant 0 : index
    %c0_592 = arith.constant 0 : index
    %1002 = vector.load %arg14[%c0_590, %c0_591, %c0_592] : memref<3x32x32xf32, #tpu.memory_space<vmem>>, vector<1x32x32xf32>
    %1003 = vector.shape_cast %1002 : vector<1x32x32xf32> to vector<32x32xf32>
    %cst_593 = arith.constant dense<0.000000e+00> : vector<1x32xf32>
    %1004 = tpu.matmul %957, %1003, %cst_593 {dimension_numbers = #tpu.dot_dimension_numbers<[1], [0], [0], [1], [0, 0, 1, 1], [], []>} : vector<1x32xf32>, vector<32x32xf32>, vector<1x32xf32> -> vector<1x32xf32>
    %c0_594 = arith.constant 0 : index
    %c0_595 = arith.constant 0 : index
    %c0_596 = arith.constant 0 : index
    %1005 = vector.load %arg16[%c0_594, %c0_595, %c0_596] : memref<3x1x32xf32, #tpu.memory_space<vmem>>, vector<1x1x32xf32>
    %1006 = vector.shape_cast %1005 : vector<1x1x32xf32> to vector<1x32xf32>
    %1007 = arith.addf %1004, %1006 : vector<1x32xf32>
    %c1_597 = arith.constant 1 : index
    %c0_598 = arith.constant 0 : index
    %c0_599 = arith.constant 0 : index
    %1008 = vector.load %arg14[%c1_597, %c0_598, %c0_599] : memref<3x32x32xf32, #tpu.memory_space<vmem>>, vector<1x32x32xf32>
    %1009 = vector.shape_cast %1008 : vector<1x32x32xf32> to vector<32x32xf32>
    %cst_600 = arith.constant dense<0.000000e+00> : vector<1x32xf32>
    %1010 = tpu.matmul %957, %1009, %cst_600 {dimension_numbers = #tpu.dot_dimension_numbers<[1], [0], [0], [1], [0, 0, 1, 1], [], []>} : vector<1x32xf32>, vector<32x32xf32>, vector<1x32xf32> -> vector<1x32xf32>
    %c1_601 = arith.constant 1 : index
    %c0_602 = arith.constant 0 : index
    %c0_603 = arith.constant 0 : index
    %1011 = vector.load %arg16[%c1_601, %c0_602, %c0_603] : memref<3x1x32xf32, #tpu.memory_space<vmem>>, vector<1x1x32xf32>
    %1012 = vector.shape_cast %1011 : vector<1x1x32xf32> to vector<1x32xf32>
    %1013 = arith.addf %1010, %1012 : vector<1x32xf32>
    %c2_604 = arith.constant 2 : index
    %c0_605 = arith.constant 0 : index
    %c0_606 = arith.constant 0 : index
    %1014 = vector.load %arg14[%c2_604, %c0_605, %c0_606] : memref<3x32x32xf32, #tpu.memory_space<vmem>>, vector<1x32x32xf32>
    %1015 = vector.shape_cast %1014 : vector<1x32x32xf32> to vector<32x32xf32>
    %cst_607 = arith.constant dense<0.000000e+00> : vector<1x32xf32>
    %1016 = tpu.matmul %957, %1015, %cst_607 {dimension_numbers = #tpu.dot_dimension_numbers<[1], [0], [0], [1], [0, 0, 1, 1], [], []>} : vector<1x32xf32>, vector<32x32xf32>, vector<1x32xf32> -> vector<1x32xf32>
    %c2_608 = arith.constant 2 : index
    %c0_609 = arith.constant 0 : index
    %c0_610 = arith.constant 0 : index
    %1017 = vector.load %arg16[%c2_608, %c0_609, %c0_610] : memref<3x1x32xf32, #tpu.memory_space<vmem>>, vector<1x1x32xf32>
    %1018 = vector.shape_cast %1017 : vector<1x1x32xf32> to vector<1x32xf32>
    %1019 = arith.addf %1016, %1018 : vector<1x32xf32>
    %1020 = arith.addf %999, %1007 : vector<1x32xf32>
    %1021 = arith.negf %1020 : vector<1x32xf32>
    %1022 = math.exp %1021 : vector<1x32xf32>
    %cst_611 = arith.constant 1.000000e+00 : f32
    %1023 = vector.broadcast %cst_611 : f32 to vector<1x32xf32>
    %1024 = arith.addf %1023, %1022 : vector<1x32xf32>
    %1025 = arith.divf %1023, %1024 : vector<1x32xf32>
    %1026 = arith.addf %1000, %1013 : vector<1x32xf32>
    %1027 = arith.negf %1026 : vector<1x32xf32>
    %1028 = math.exp %1027 : vector<1x32xf32>
    %cst_612 = arith.constant 1.000000e+00 : f32
    %1029 = vector.broadcast %cst_612 : f32 to vector<1x32xf32>
    %1030 = arith.addf %1029, %1028 : vector<1x32xf32>
    %1031 = arith.divf %1029, %1030 : vector<1x32xf32>
    %1032 = arith.mulf %1025, %1019 : vector<1x32xf32>
    %1033 = arith.addf %1001, %1032 : vector<1x32xf32>
    %1034 = math.tanh %1033 : vector<1x32xf32>
    %cst_613 = arith.constant 1.000000e+00 : f32
    %1035 = vector.broadcast %cst_613 : f32 to vector<1x32xf32>
    %1036 = arith.subf %1035, %1031 : vector<1x32xf32>
    %1037 = arith.mulf %1036, %1034 : vector<1x32xf32>
    %1038 = arith.mulf %1031, %957 : vector<1x32xf32>
    %1039 = arith.addf %1037, %1038 : vector<1x32xf32>
    %1040 = vector.extract_strided_slice %756 {offsets = [3, 0], sizes = [1, 32], strides = [1, 1]} : vector<8x32xf32> to vector<1x32xf32>
    %1041 = vector.extract_strided_slice %763 {offsets = [3, 0], sizes = [1, 32], strides = [1, 1]} : vector<8x32xf32> to vector<1x32xf32>
    %1042 = vector.extract_strided_slice %770 {offsets = [3, 0], sizes = [1, 32], strides = [1, 1]} : vector<8x32xf32> to vector<1x32xf32>
    %c0_614 = arith.constant 0 : index
    %c0_615 = arith.constant 0 : index
    %c0_616 = arith.constant 0 : index
    %1043 = vector.load %arg10[%c0_614, %c0_615, %c0_616] : memref<3x32x32xf32, #tpu.memory_space<vmem>>, vector<1x32x32xf32>
    %1044 = vector.shape_cast %1043 : vector<1x32x32xf32> to vector<32x32xf32>
    %cst_617 = arith.constant dense<0.000000e+00> : vector<1x32xf32>
    %1045 = tpu.matmul %998, %1044, %cst_617 {dimension_numbers = #tpu.dot_dimension_numbers<[1], [0], [0], [1], [0, 0, 1, 1], [], []>} : vector<1x32xf32>, vector<32x32xf32>, vector<1x32xf32> -> vector<1x32xf32>
    %c0_618 = arith.constant 0 : index
    %c0_619 = arith.constant 0 : index
    %c0_620 = arith.constant 0 : index
    %1046 = vector.load %arg12[%c0_618, %c0_619, %c0_620] : memref<3x1x32xf32, #tpu.memory_space<vmem>>, vector<1x1x32xf32>
    %1047 = vector.shape_cast %1046 : vector<1x1x32xf32> to vector<1x32xf32>
    %1048 = arith.addf %1045, %1047 : vector<1x32xf32>
    %c1_621 = arith.constant 1 : index
    %c0_622 = arith.constant 0 : index
    %c0_623 = arith.constant 0 : index
    %1049 = vector.load %arg10[%c1_621, %c0_622, %c0_623] : memref<3x32x32xf32, #tpu.memory_space<vmem>>, vector<1x32x32xf32>
    %1050 = vector.shape_cast %1049 : vector<1x32x32xf32> to vector<32x32xf32>
    %cst_624 = arith.constant dense<0.000000e+00> : vector<1x32xf32>
    %1051 = tpu.matmul %998, %1050, %cst_624 {dimension_numbers = #tpu.dot_dimension_numbers<[1], [0], [0], [1], [0, 0, 1, 1], [], []>} : vector<1x32xf32>, vector<32x32xf32>, vector<1x32xf32> -> vector<1x32xf32>
    %c1_625 = arith.constant 1 : index
    %c0_626 = arith.constant 0 : index
    %c0_627 = arith.constant 0 : index
    %1052 = vector.load %arg12[%c1_625, %c0_626, %c0_627] : memref<3x1x32xf32, #tpu.memory_space<vmem>>, vector<1x1x32xf32>
    %1053 = vector.shape_cast %1052 : vector<1x1x32xf32> to vector<1x32xf32>
    %1054 = arith.addf %1051, %1053 : vector<1x32xf32>
    %c2_628 = arith.constant 2 : index
    %c0_629 = arith.constant 0 : index
    %c0_630 = arith.constant 0 : index
    %1055 = vector.load %arg10[%c2_628, %c0_629, %c0_630] : memref<3x32x32xf32, #tpu.memory_space<vmem>>, vector<1x32x32xf32>
    %1056 = vector.shape_cast %1055 : vector<1x32x32xf32> to vector<32x32xf32>
    %cst_631 = arith.constant dense<0.000000e+00> : vector<1x32xf32>
    %1057 = tpu.matmul %998, %1056, %cst_631 {dimension_numbers = #tpu.dot_dimension_numbers<[1], [0], [0], [1], [0, 0, 1, 1], [], []>} : vector<1x32xf32>, vector<32x32xf32>, vector<1x32xf32> -> vector<1x32xf32>
    %c2_632 = arith.constant 2 : index
    %c0_633 = arith.constant 0 : index
    %c0_634 = arith.constant 0 : index
    %1058 = vector.load %arg12[%c2_632, %c0_633, %c0_634] : memref<3x1x32xf32, #tpu.memory_space<vmem>>, vector<1x1x32xf32>
    %1059 = vector.shape_cast %1058 : vector<1x1x32xf32> to vector<1x32xf32>
    %1060 = arith.addf %1057, %1059 : vector<1x32xf32>
    %1061 = arith.addf %1040, %1048 : vector<1x32xf32>
    %1062 = arith.negf %1061 : vector<1x32xf32>
    %1063 = math.exp %1062 : vector<1x32xf32>
    %cst_635 = arith.constant 1.000000e+00 : f32
    %1064 = vector.broadcast %cst_635 : f32 to vector<1x32xf32>
    %1065 = arith.addf %1064, %1063 : vector<1x32xf32>
    %1066 = arith.divf %1064, %1065 : vector<1x32xf32>
    %1067 = arith.addf %1041, %1054 : vector<1x32xf32>
    %1068 = arith.negf %1067 : vector<1x32xf32>
    %1069 = math.exp %1068 : vector<1x32xf32>
    %cst_636 = arith.constant 1.000000e+00 : f32
    %1070 = vector.broadcast %cst_636 : f32 to vector<1x32xf32>
    %1071 = arith.addf %1070, %1069 : vector<1x32xf32>
    %1072 = arith.divf %1070, %1071 : vector<1x32xf32>
    %1073 = arith.mulf %1066, %1060 : vector<1x32xf32>
    %1074 = arith.addf %1042, %1073 : vector<1x32xf32>
    %1075 = math.tanh %1074 : vector<1x32xf32>
    %cst_637 = arith.constant 1.000000e+00 : f32
    %1076 = vector.broadcast %cst_637 : f32 to vector<1x32xf32>
    %1077 = arith.subf %1076, %1072 : vector<1x32xf32>
    %1078 = arith.mulf %1077, %1075 : vector<1x32xf32>
    %1079 = arith.mulf %1072, %998 : vector<1x32xf32>
    %1080 = arith.addf %1078, %1079 : vector<1x32xf32>
    %1081 = vector.extract_strided_slice %777 {offsets = [1, 0], sizes = [1, 32], strides = [1, 1]} : vector<8x32xf32> to vector<1x32xf32>
    %1082 = vector.extract_strided_slice %784 {offsets = [1, 0], sizes = [1, 32], strides = [1, 1]} : vector<8x32xf32> to vector<1x32xf32>
    %1083 = vector.extract_strided_slice %791 {offsets = [1, 0], sizes = [1, 32], strides = [1, 1]} : vector<8x32xf32> to vector<1x32xf32>
    %c0_638 = arith.constant 0 : index
    %c0_639 = arith.constant 0 : index
    %c0_640 = arith.constant 0 : index
    %1084 = vector.load %arg14[%c0_638, %c0_639, %c0_640] : memref<3x32x32xf32, #tpu.memory_space<vmem>>, vector<1x32x32xf32>
    %1085 = vector.shape_cast %1084 : vector<1x32x32xf32> to vector<32x32xf32>
    %cst_641 = arith.constant dense<0.000000e+00> : vector<1x32xf32>
    %1086 = tpu.matmul %1039, %1085, %cst_641 {dimension_numbers = #tpu.dot_dimension_numbers<[1], [0], [0], [1], [0, 0, 1, 1], [], []>} : vector<1x32xf32>, vector<32x32xf32>, vector<1x32xf32> -> vector<1x32xf32>
    %c0_642 = arith.constant 0 : index
    %c0_643 = arith.constant 0 : index
    %c0_644 = arith.constant 0 : index
    %1087 = vector.load %arg16[%c0_642, %c0_643, %c0_644] : memref<3x1x32xf32, #tpu.memory_space<vmem>>, vector<1x1x32xf32>
    %1088 = vector.shape_cast %1087 : vector<1x1x32xf32> to vector<1x32xf32>
    %1089 = arith.addf %1086, %1088 : vector<1x32xf32>
    %c1_645 = arith.constant 1 : index
    %c0_646 = arith.constant 0 : index
    %c0_647 = arith.constant 0 : index
    %1090 = vector.load %arg14[%c1_645, %c0_646, %c0_647] : memref<3x32x32xf32, #tpu.memory_space<vmem>>, vector<1x32x32xf32>
    %1091 = vector.shape_cast %1090 : vector<1x32x32xf32> to vector<32x32xf32>
    %cst_648 = arith.constant dense<0.000000e+00> : vector<1x32xf32>
    %1092 = tpu.matmul %1039, %1091, %cst_648 {dimension_numbers = #tpu.dot_dimension_numbers<[1], [0], [0], [1], [0, 0, 1, 1], [], []>} : vector<1x32xf32>, vector<32x32xf32>, vector<1x32xf32> -> vector<1x32xf32>
    %c1_649 = arith.constant 1 : index
    %c0_650 = arith.constant 0 : index
    %c0_651 = arith.constant 0 : index
    %1093 = vector.load %arg16[%c1_649, %c0_650, %c0_651] : memref<3x1x32xf32, #tpu.memory_space<vmem>>, vector<1x1x32xf32>
    %1094 = vector.shape_cast %1093 : vector<1x1x32xf32> to vector<1x32xf32>
    %1095 = arith.addf %1092, %1094 : vector<1x32xf32>
    %c2_652 = arith.constant 2 : index
    %c0_653 = arith.constant 0 : index
    %c0_654 = arith.constant 0 : index
    %1096 = vector.load %arg14[%c2_652, %c0_653, %c0_654] : memref<3x32x32xf32, #tpu.memory_space<vmem>>, vector<1x32x32xf32>
    %1097 = vector.shape_cast %1096 : vector<1x32x32xf32> to vector<32x32xf32>
    %cst_655 = arith.constant dense<0.000000e+00> : vector<1x32xf32>
    %1098 = tpu.matmul %1039, %1097, %cst_655 {dimension_numbers = #tpu.dot_dimension_numbers<[1], [0], [0], [1], [0, 0, 1, 1], [], []>} : vector<1x32xf32>, vector<32x32xf32>, vector<1x32xf32> -> vector<1x32xf32>
    %c2_656 = arith.constant 2 : index
    %c0_657 = arith.constant 0 : index
    %c0_658 = arith.constant 0 : index
    %1099 = vector.load %arg16[%c2_656, %c0_657, %c0_658] : memref<3x1x32xf32, #tpu.memory_space<vmem>>, vector<1x1x32xf32>
    %1100 = vector.shape_cast %1099 : vector<1x1x32xf32> to vector<1x32xf32>
    %1101 = arith.addf %1098, %1100 : vector<1x32xf32>
    %1102 = arith.addf %1081, %1089 : vector<1x32xf32>
    %1103 = arith.negf %1102 : vector<1x32xf32>
    %1104 = math.exp %1103 : vector<1x32xf32>
    %cst_659 = arith.constant 1.000000e+00 : f32
    %1105 = vector.broadcast %cst_659 : f32 to vector<1x32xf32>
    %1106 = arith.addf %1105, %1104 : vector<1x32xf32>
    %1107 = arith.divf %1105, %1106 : vector<1x32xf32>
    %1108 = arith.addf %1082, %1095 : vector<1x32xf32>
    %1109 = arith.negf %1108 : vector<1x32xf32>
    %1110 = math.exp %1109 : vector<1x32xf32>
    %cst_660 = arith.constant 1.000000e+00 : f32
    %1111 = vector.broadcast %cst_660 : f32 to vector<1x32xf32>
    %1112 = arith.addf %1111, %1110 : vector<1x32xf32>
    %1113 = arith.divf %1111, %1112 : vector<1x32xf32>
    %1114 = arith.mulf %1107, %1101 : vector<1x32xf32>
    %1115 = arith.addf %1083, %1114 : vector<1x32xf32>
    %1116 = math.tanh %1115 : vector<1x32xf32>
    %cst_661 = arith.constant 1.000000e+00 : f32
    %1117 = vector.broadcast %cst_661 : f32 to vector<1x32xf32>
    %1118 = arith.subf %1117, %1113 : vector<1x32xf32>
    %1119 = arith.mulf %1118, %1116 : vector<1x32xf32>
    %1120 = arith.mulf %1113, %1039 : vector<1x32xf32>
    %1121 = arith.addf %1119, %1120 : vector<1x32xf32>
    %1122 = vector.extract_strided_slice %756 {offsets = [4, 0], sizes = [1, 32], strides = [1, 1]} : vector<8x32xf32> to vector<1x32xf32>
    %1123 = vector.extract_strided_slice %763 {offsets = [4, 0], sizes = [1, 32], strides = [1, 1]} : vector<8x32xf32> to vector<1x32xf32>
    %1124 = vector.extract_strided_slice %770 {offsets = [4, 0], sizes = [1, 32], strides = [1, 1]} : vector<8x32xf32> to vector<1x32xf32>
    %c0_662 = arith.constant 0 : index
    %c0_663 = arith.constant 0 : index
    %c0_664 = arith.constant 0 : index
    %1125 = vector.load %arg10[%c0_662, %c0_663, %c0_664] : memref<3x32x32xf32, #tpu.memory_space<vmem>>, vector<1x32x32xf32>
    %1126 = vector.shape_cast %1125 : vector<1x32x32xf32> to vector<32x32xf32>
    %cst_665 = arith.constant dense<0.000000e+00> : vector<1x32xf32>
    %1127 = tpu.matmul %1080, %1126, %cst_665 {dimension_numbers = #tpu.dot_dimension_numbers<[1], [0], [0], [1], [0, 0, 1, 1], [], []>} : vector<1x32xf32>, vector<32x32xf32>, vector<1x32xf32> -> vector<1x32xf32>
    %c0_666 = arith.constant 0 : index
    %c0_667 = arith.constant 0 : index
    %c0_668 = arith.constant 0 : index
    %1128 = vector.load %arg12[%c0_666, %c0_667, %c0_668] : memref<3x1x32xf32, #tpu.memory_space<vmem>>, vector<1x1x32xf32>
    %1129 = vector.shape_cast %1128 : vector<1x1x32xf32> to vector<1x32xf32>
    %1130 = arith.addf %1127, %1129 : vector<1x32xf32>
    %c1_669 = arith.constant 1 : index
    %c0_670 = arith.constant 0 : index
    %c0_671 = arith.constant 0 : index
    %1131 = vector.load %arg10[%c1_669, %c0_670, %c0_671] : memref<3x32x32xf32, #tpu.memory_space<vmem>>, vector<1x32x32xf32>
    %1132 = vector.shape_cast %1131 : vector<1x32x32xf32> to vector<32x32xf32>
    %cst_672 = arith.constant dense<0.000000e+00> : vector<1x32xf32>
    %1133 = tpu.matmul %1080, %1132, %cst_672 {dimension_numbers = #tpu.dot_dimension_numbers<[1], [0], [0], [1], [0, 0, 1, 1], [], []>} : vector<1x32xf32>, vector<32x32xf32>, vector<1x32xf32> -> vector<1x32xf32>
    %c1_673 = arith.constant 1 : index
    %c0_674 = arith.constant 0 : index
    %c0_675 = arith.constant 0 : index
    %1134 = vector.load %arg12[%c1_673, %c0_674, %c0_675] : memref<3x1x32xf32, #tpu.memory_space<vmem>>, vector<1x1x32xf32>
    %1135 = vector.shape_cast %1134 : vector<1x1x32xf32> to vector<1x32xf32>
    %1136 = arith.addf %1133, %1135 : vector<1x32xf32>
    %c2_676 = arith.constant 2 : index
    %c0_677 = arith.constant 0 : index
    %c0_678 = arith.constant 0 : index
    %1137 = vector.load %arg10[%c2_676, %c0_677, %c0_678] : memref<3x32x32xf32, #tpu.memory_space<vmem>>, vector<1x32x32xf32>
    %1138 = vector.shape_cast %1137 : vector<1x32x32xf32> to vector<32x32xf32>
    %cst_679 = arith.constant dense<0.000000e+00> : vector<1x32xf32>
    %1139 = tpu.matmul %1080, %1138, %cst_679 {dimension_numbers = #tpu.dot_dimension_numbers<[1], [0], [0], [1], [0, 0, 1, 1], [], []>} : vector<1x32xf32>, vector<32x32xf32>, vector<1x32xf32> -> vector<1x32xf32>
    %c2_680 = arith.constant 2 : index
    %c0_681 = arith.constant 0 : index
    %c0_682 = arith.constant 0 : index
    %1140 = vector.load %arg12[%c2_680, %c0_681, %c0_682] : memref<3x1x32xf32, #tpu.memory_space<vmem>>, vector<1x1x32xf32>
    %1141 = vector.shape_cast %1140 : vector<1x1x32xf32> to vector<1x32xf32>
    %1142 = arith.addf %1139, %1141 : vector<1x32xf32>
    %1143 = arith.addf %1122, %1130 : vector<1x32xf32>
    %1144 = arith.negf %1143 : vector<1x32xf32>
    %1145 = math.exp %1144 : vector<1x32xf32>
    %cst_683 = arith.constant 1.000000e+00 : f32
    %1146 = vector.broadcast %cst_683 : f32 to vector<1x32xf32>
    %1147 = arith.addf %1146, %1145 : vector<1x32xf32>
    %1148 = arith.divf %1146, %1147 : vector<1x32xf32>
    %1149 = arith.addf %1123, %1136 : vector<1x32xf32>
    %1150 = arith.negf %1149 : vector<1x32xf32>
    %1151 = math.exp %1150 : vector<1x32xf32>
    %cst_684 = arith.constant 1.000000e+00 : f32
    %1152 = vector.broadcast %cst_684 : f32 to vector<1x32xf32>
    %1153 = arith.addf %1152, %1151 : vector<1x32xf32>
    %1154 = arith.divf %1152, %1153 : vector<1x32xf32>
    %1155 = arith.mulf %1148, %1142 : vector<1x32xf32>
    %1156 = arith.addf %1124, %1155 : vector<1x32xf32>
    %1157 = math.tanh %1156 : vector<1x32xf32>
    %cst_685 = arith.constant 1.000000e+00 : f32
    %1158 = vector.broadcast %cst_685 : f32 to vector<1x32xf32>
    %1159 = arith.subf %1158, %1154 : vector<1x32xf32>
    %1160 = arith.mulf %1159, %1157 : vector<1x32xf32>
    %1161 = arith.mulf %1154, %1080 : vector<1x32xf32>
    %1162 = arith.addf %1160, %1161 : vector<1x32xf32>
    %1163 = vector.extract_strided_slice %777 {offsets = [0, 0], sizes = [1, 32], strides = [1, 1]} : vector<8x32xf32> to vector<1x32xf32>
    %1164 = vector.extract_strided_slice %784 {offsets = [0, 0], sizes = [1, 32], strides = [1, 1]} : vector<8x32xf32> to vector<1x32xf32>
    %1165 = vector.extract_strided_slice %791 {offsets = [0, 0], sizes = [1, 32], strides = [1, 1]} : vector<8x32xf32> to vector<1x32xf32>
    %c0_686 = arith.constant 0 : index
    %c0_687 = arith.constant 0 : index
    %c0_688 = arith.constant 0 : index
    %1166 = vector.load %arg14[%c0_686, %c0_687, %c0_688] : memref<3x32x32xf32, #tpu.memory_space<vmem>>, vector<1x32x32xf32>
    %1167 = vector.shape_cast %1166 : vector<1x32x32xf32> to vector<32x32xf32>
    %cst_689 = arith.constant dense<0.000000e+00> : vector<1x32xf32>
    %1168 = tpu.matmul %1121, %1167, %cst_689 {dimension_numbers = #tpu.dot_dimension_numbers<[1], [0], [0], [1], [0, 0, 1, 1], [], []>} : vector<1x32xf32>, vector<32x32xf32>, vector<1x32xf32> -> vector<1x32xf32>
    %c0_690 = arith.constant 0 : index
    %c0_691 = arith.constant 0 : index
    %c0_692 = arith.constant 0 : index
    %1169 = vector.load %arg16[%c0_690, %c0_691, %c0_692] : memref<3x1x32xf32, #tpu.memory_space<vmem>>, vector<1x1x32xf32>
    %1170 = vector.shape_cast %1169 : vector<1x1x32xf32> to vector<1x32xf32>
    %1171 = arith.addf %1168, %1170 : vector<1x32xf32>
    %c1_693 = arith.constant 1 : index
    %c0_694 = arith.constant 0 : index
    %c0_695 = arith.constant 0 : index
    %1172 = vector.load %arg14[%c1_693, %c0_694, %c0_695] : memref<3x32x32xf32, #tpu.memory_space<vmem>>, vector<1x32x32xf32>
    %1173 = vector.shape_cast %1172 : vector<1x32x32xf32> to vector<32x32xf32>
    %cst_696 = arith.constant dense<0.000000e+00> : vector<1x32xf32>
    %1174 = tpu.matmul %1121, %1173, %cst_696 {dimension_numbers = #tpu.dot_dimension_numbers<[1], [0], [0], [1], [0, 0, 1, 1], [], []>} : vector<1x32xf32>, vector<32x32xf32>, vector<1x32xf32> -> vector<1x32xf32>
    %c1_697 = arith.constant 1 : index
    %c0_698 = arith.constant 0 : index
    %c0_699 = arith.constant 0 : index
    %1175 = vector.load %arg16[%c1_697, %c0_698, %c0_699] : memref<3x1x32xf32, #tpu.memory_space<vmem>>, vector<1x1x32xf32>
    %1176 = vector.shape_cast %1175 : vector<1x1x32xf32> to vector<1x32xf32>
    %1177 = arith.addf %1174, %1176 : vector<1x32xf32>
    %c2_700 = arith.constant 2 : index
    %c0_701 = arith.constant 0 : index
    %c0_702 = arith.constant 0 : index
    %1178 = vector.load %arg14[%c2_700, %c0_701, %c0_702] : memref<3x32x32xf32, #tpu.memory_space<vmem>>, vector<1x32x32xf32>
    %1179 = vector.shape_cast %1178 : vector<1x32x32xf32> to vector<32x32xf32>
    %cst_703 = arith.constant dense<0.000000e+00> : vector<1x32xf32>
    %1180 = tpu.matmul %1121, %1179, %cst_703 {dimension_numbers = #tpu.dot_dimension_numbers<[1], [0], [0], [1], [0, 0, 1, 1], [], []>} : vector<1x32xf32>, vector<32x32xf32>, vector<1x32xf32> -> vector<1x32xf32>
    %c2_704 = arith.constant 2 : index
    %c0_705 = arith.constant 0 : index
    %c0_706 = arith.constant 0 : index
    %1181 = vector.load %arg16[%c2_704, %c0_705, %c0_706] : memref<3x1x32xf32, #tpu.memory_space<vmem>>, vector<1x1x32xf32>
    %1182 = vector.shape_cast %1181 : vector<1x1x32xf32> to vector<1x32xf32>
    %1183 = arith.addf %1180, %1182 : vector<1x32xf32>
    %1184 = arith.addf %1163, %1171 : vector<1x32xf32>
    %1185 = arith.negf %1184 : vector<1x32xf32>
    %1186 = math.exp %1185 : vector<1x32xf32>
    %cst_707 = arith.constant 1.000000e+00 : f32
    %1187 = vector.broadcast %cst_707 : f32 to vector<1x32xf32>
    %1188 = arith.addf %1187, %1186 : vector<1x32xf32>
    %1189 = arith.divf %1187, %1188 : vector<1x32xf32>
    %1190 = arith.addf %1164, %1177 : vector<1x32xf32>
    %1191 = arith.negf %1190 : vector<1x32xf32>
    %1192 = math.exp %1191 : vector<1x32xf32>
    %cst_708 = arith.constant 1.000000e+00 : f32
    %1193 = vector.broadcast %cst_708 : f32 to vector<1x32xf32>
    %1194 = arith.addf %1193, %1192 : vector<1x32xf32>
    %1195 = arith.divf %1193, %1194 : vector<1x32xf32>
    %1196 = arith.mulf %1189, %1183 : vector<1x32xf32>
    %1197 = arith.addf %1165, %1196 : vector<1x32xf32>
    %1198 = math.tanh %1197 : vector<1x32xf32>
    %cst_709 = arith.constant 1.000000e+00 : f32
    %1199 = vector.broadcast %cst_709 : f32 to vector<1x32xf32>
    %1200 = arith.subf %1199, %1195 : vector<1x32xf32>
    %1201 = arith.mulf %1200, %1198 : vector<1x32xf32>
    %1202 = arith.mulf %1195, %1121 : vector<1x32xf32>
    %1203 = arith.addf %1201, %1202 : vector<1x32xf32>
    %1204 = tpu.concatenate %1162, %1203 in 1 : vector<1x32xf32>, vector<1x32xf32> -> vector<1x64xf32>
    %c0_710 = arith.constant 0 : index
    %c0_711 = arith.constant 0 : index
    %c0_712 = arith.constant 0 : index
    %1205 = vector.load %arg19[%c0_710, %c0_711, %c0_712] : memref<3x1x64xf32, #tpu.memory_space<vmem>>, vector<1x1x64xf32>
    %1206 = vector.shape_cast %1205 : vector<1x1x64xf32> to vector<1x64xf32>
    %c1_713 = arith.constant 1 : index
    %c0_714 = arith.constant 0 : index
    %c0_715 = arith.constant 0 : index
    %1207 = vector.load %arg19[%c1_713, %c0_714, %c0_715] : memref<3x1x64xf32, #tpu.memory_space<vmem>>, vector<1x1x64xf32>
    %1208 = vector.shape_cast %1207 : vector<1x1x64xf32> to vector<1x64xf32>
    %c2_716 = arith.constant 2 : index
    %c0_717 = arith.constant 0 : index
    %c0_718 = arith.constant 0 : index
    %1209 = vector.load %arg19[%c2_716, %c0_717, %c0_718] : memref<3x1x64xf32, #tpu.memory_space<vmem>>, vector<1x1x64xf32>
    %1210 = vector.shape_cast %1209 : vector<1x1x64xf32> to vector<1x64xf32>
    %c0_719 = arith.constant 0 : index
    %c0_720 = arith.constant 0 : index
    %c0_721 = arith.constant 0 : index
    %1211 = vector.load %arg18[%c0_719, %c0_720, %c0_721] : memref<3x64x64xf32, #tpu.memory_space<vmem>>, vector<1x64x64xf32>
    %1212 = vector.shape_cast %1211 : vector<1x64x64xf32> to vector<64x64xf32>
    %cst_722 = arith.constant dense<0.000000e+00> : vector<1x64xf32>
    %1213 = tpu.matmul %1204, %1212, %cst_722 {dimension_numbers = #tpu.dot_dimension_numbers<[1], [0], [0], [1], [0, 0, 1, 1], [], []>} : vector<1x64xf32>, vector<64x64xf32>, vector<1x64xf32> -> vector<1x64xf32>
    %c0_723 = arith.constant 0 : index
    %c0_724 = arith.constant 0 : index
    %c0_725 = arith.constant 0 : index
    %1214 = vector.load %arg20[%c0_723, %c0_724, %c0_725] : memref<3x1x64xf32, #tpu.memory_space<vmem>>, vector<1x1x64xf32>
    %1215 = vector.shape_cast %1214 : vector<1x1x64xf32> to vector<1x64xf32>
    %1216 = arith.addf %1213, %1215 : vector<1x64xf32>
    %c1_726 = arith.constant 1 : index
    %c0_727 = arith.constant 0 : index
    %c0_728 = arith.constant 0 : index
    %1217 = vector.load %arg18[%c1_726, %c0_727, %c0_728] : memref<3x64x64xf32, #tpu.memory_space<vmem>>, vector<1x64x64xf32>
    %1218 = vector.shape_cast %1217 : vector<1x64x64xf32> to vector<64x64xf32>
    %cst_729 = arith.constant dense<0.000000e+00> : vector<1x64xf32>
    %1219 = tpu.matmul %1204, %1218, %cst_729 {dimension_numbers = #tpu.dot_dimension_numbers<[1], [0], [0], [1], [0, 0, 1, 1], [], []>} : vector<1x64xf32>, vector<64x64xf32>, vector<1x64xf32> -> vector<1x64xf32>
    %c1_730 = arith.constant 1 : index
    %c0_731 = arith.constant 0 : index
    %c0_732 = arith.constant 0 : index
    %1220 = vector.load %arg20[%c1_730, %c0_731, %c0_732] : memref<3x1x64xf32, #tpu.memory_space<vmem>>, vector<1x1x64xf32>
    %1221 = vector.shape_cast %1220 : vector<1x1x64xf32> to vector<1x64xf32>
    %1222 = arith.addf %1219, %1221 : vector<1x64xf32>
    %c2_733 = arith.constant 2 : index
    %c0_734 = arith.constant 0 : index
    %c0_735 = arith.constant 0 : index
    %1223 = vector.load %arg18[%c2_733, %c0_734, %c0_735] : memref<3x64x64xf32, #tpu.memory_space<vmem>>, vector<1x64x64xf32>
    %1224 = vector.shape_cast %1223 : vector<1x64x64xf32> to vector<64x64xf32>
    %cst_736 = arith.constant dense<0.000000e+00> : vector<1x64xf32>
    %1225 = tpu.matmul %1204, %1224, %cst_736 {dimension_numbers = #tpu.dot_dimension_numbers<[1], [0], [0], [1], [0, 0, 1, 1], [], []>} : vector<1x64xf32>, vector<64x64xf32>, vector<1x64xf32> -> vector<1x64xf32>
    %c2_737 = arith.constant 2 : index
    %c0_738 = arith.constant 0 : index
    %c0_739 = arith.constant 0 : index
    %1226 = vector.load %arg20[%c2_737, %c0_738, %c0_739] : memref<3x1x64xf32, #tpu.memory_space<vmem>>, vector<1x1x64xf32>
    %1227 = vector.shape_cast %1226 : vector<1x1x64xf32> to vector<1x64xf32>
    %1228 = arith.addf %1225, %1227 : vector<1x64xf32>
    %1229 = arith.addf %1206, %1216 : vector<1x64xf32>
    %1230 = arith.negf %1229 : vector<1x64xf32>
    %1231 = math.exp %1230 : vector<1x64xf32>
    %cst_740 = arith.constant 1.000000e+00 : f32
    %1232 = vector.broadcast %cst_740 : f32 to vector<1x64xf32>
    %1233 = arith.addf %1232, %1231 : vector<1x64xf32>
    %1234 = arith.divf %1232, %1233 : vector<1x64xf32>
    %1235 = arith.addf %1208, %1222 : vector<1x64xf32>
    %1236 = arith.negf %1235 : vector<1x64xf32>
    %1237 = math.exp %1236 : vector<1x64xf32>
    %cst_741 = arith.constant 1.000000e+00 : f32
    %1238 = vector.broadcast %cst_741 : f32 to vector<1x64xf32>
    %1239 = arith.addf %1238, %1237 : vector<1x64xf32>
    %1240 = arith.divf %1238, %1239 : vector<1x64xf32>
    %1241 = arith.mulf %1234, %1228 : vector<1x64xf32>
    %1242 = arith.addf %1210, %1241 : vector<1x64xf32>
    %1243 = math.tanh %1242 : vector<1x64xf32>
    %cst_742 = arith.constant 1.000000e+00 : f32
    %1244 = vector.broadcast %cst_742 : f32 to vector<1x64xf32>
    %1245 = arith.subf %1244, %1240 : vector<1x64xf32>
    %1246 = arith.mulf %1245, %1243 : vector<1x64xf32>
    %1247 = arith.mulf %1240, %1204 : vector<1x64xf32>
    %1248 = arith.addf %1246, %1247 : vector<1x64xf32>
    %c0_743 = arith.constant 0 : index
    %c0_744 = arith.constant 0 : index
    %c0_745 = arith.constant 0 : index
    %1249 = vector.load %arg17[%c0_743, %c0_744, %c0_745] : memref<3x64x64xf32, #tpu.memory_space<vmem>>, vector<1x64x64xf32>
    %1250 = vector.shape_cast %1249 : vector<1x64x64xf32> to vector<64x64xf32>
    %cst_746 = arith.constant dense<0.000000e+00> : vector<1x64xf32>
    %1251 = tpu.matmul %1248, %1250, %cst_746 {dimension_numbers = #tpu.dot_dimension_numbers<[1], [0], [0], [1], [0, 0, 1, 1], [], []>} : vector<1x64xf32>, vector<64x64xf32>, vector<1x64xf32> -> vector<1x64xf32>
    %c0_747 = arith.constant 0 : index
    %c0_748 = arith.constant 0 : index
    %c0_749 = arith.constant 0 : index
    %1252 = vector.load %arg19[%c0_747, %c0_748, %c0_749] : memref<3x1x64xf32, #tpu.memory_space<vmem>>, vector<1x1x64xf32>
    %1253 = vector.shape_cast %1252 : vector<1x1x64xf32> to vector<1x64xf32>
    %1254 = arith.addf %1251, %1253 : vector<1x64xf32>
    %c1_750 = arith.constant 1 : index
    %c0_751 = arith.constant 0 : index
    %c0_752 = arith.constant 0 : index
    %1255 = vector.load %arg17[%c1_750, %c0_751, %c0_752] : memref<3x64x64xf32, #tpu.memory_space<vmem>>, vector<1x64x64xf32>
    %1256 = vector.shape_cast %1255 : vector<1x64x64xf32> to vector<64x64xf32>
    %cst_753 = arith.constant dense<0.000000e+00> : vector<1x64xf32>
    %1257 = tpu.matmul %1248, %1256, %cst_753 {dimension_numbers = #tpu.dot_dimension_numbers<[1], [0], [0], [1], [0, 0, 1, 1], [], []>} : vector<1x64xf32>, vector<64x64xf32>, vector<1x64xf32> -> vector<1x64xf32>
    %c1_754 = arith.constant 1 : index
    %c0_755 = arith.constant 0 : index
    %c0_756 = arith.constant 0 : index
    %1258 = vector.load %arg19[%c1_754, %c0_755, %c0_756] : memref<3x1x64xf32, #tpu.memory_space<vmem>>, vector<1x1x64xf32>
    %1259 = vector.shape_cast %1258 : vector<1x1x64xf32> to vector<1x64xf32>
    %1260 = arith.addf %1257, %1259 : vector<1x64xf32>
    %c2_757 = arith.constant 2 : index
    %c0_758 = arith.constant 0 : index
    %c0_759 = arith.constant 0 : index
    %1261 = vector.load %arg17[%c2_757, %c0_758, %c0_759] : memref<3x64x64xf32, #tpu.memory_space<vmem>>, vector<1x64x64xf32>
    %1262 = vector.shape_cast %1261 : vector<1x64x64xf32> to vector<64x64xf32>
    %cst_760 = arith.constant dense<0.000000e+00> : vector<1x64xf32>
    %1263 = tpu.matmul %1248, %1262, %cst_760 {dimension_numbers = #tpu.dot_dimension_numbers<[1], [0], [0], [1], [0, 0, 1, 1], [], []>} : vector<1x64xf32>, vector<64x64xf32>, vector<1x64xf32> -> vector<1x64xf32>
    %c2_761 = arith.constant 2 : index
    %c0_762 = arith.constant 0 : index
    %c0_763 = arith.constant 0 : index
    %1264 = vector.load %arg19[%c2_761, %c0_762, %c0_763] : memref<3x1x64xf32, #tpu.memory_space<vmem>>, vector<1x1x64xf32>
    %1265 = vector.shape_cast %1264 : vector<1x1x64xf32> to vector<1x64xf32>
    %1266 = arith.addf %1263, %1265 : vector<1x64xf32>
    %c0_764 = arith.constant 0 : index
    %c0_765 = arith.constant 0 : index
    %c0_766 = arith.constant 0 : index
    %1267 = vector.load %arg18[%c0_764, %c0_765, %c0_766] : memref<3x64x64xf32, #tpu.memory_space<vmem>>, vector<1x64x64xf32>
    %1268 = vector.shape_cast %1267 : vector<1x64x64xf32> to vector<64x64xf32>
    %cst_767 = arith.constant dense<0.000000e+00> : vector<1x64xf32>
    %1269 = tpu.matmul %1248, %1268, %cst_767 {dimension_numbers = #tpu.dot_dimension_numbers<[1], [0], [0], [1], [0, 0, 1, 1], [], []>} : vector<1x64xf32>, vector<64x64xf32>, vector<1x64xf32> -> vector<1x64xf32>
    %c0_768 = arith.constant 0 : index
    %c0_769 = arith.constant 0 : index
    %c0_770 = arith.constant 0 : index
    %1270 = vector.load %arg20[%c0_768, %c0_769, %c0_770] : memref<3x1x64xf32, #tpu.memory_space<vmem>>, vector<1x1x64xf32>
    %1271 = vector.shape_cast %1270 : vector<1x1x64xf32> to vector<1x64xf32>
    %1272 = arith.addf %1269, %1271 : vector<1x64xf32>
    %c1_771 = arith.constant 1 : index
    %c0_772 = arith.constant 0 : index
    %c0_773 = arith.constant 0 : index
    %1273 = vector.load %arg18[%c1_771, %c0_772, %c0_773] : memref<3x64x64xf32, #tpu.memory_space<vmem>>, vector<1x64x64xf32>
    %1274 = vector.shape_cast %1273 : vector<1x64x64xf32> to vector<64x64xf32>
    %cst_774 = arith.constant dense<0.000000e+00> : vector<1x64xf32>
    %1275 = tpu.matmul %1248, %1274, %cst_774 {dimension_numbers = #tpu.dot_dimension_numbers<[1], [0], [0], [1], [0, 0, 1, 1], [], []>} : vector<1x64xf32>, vector<64x64xf32>, vector<1x64xf32> -> vector<1x64xf32>
    %c1_775 = arith.constant 1 : index
    %c0_776 = arith.constant 0 : index
    %c0_777 = arith.constant 0 : index
    %1276 = vector.load %arg20[%c1_775, %c0_776, %c0_777] : memref<3x1x64xf32, #tpu.memory_space<vmem>>, vector<1x1x64xf32>
    %1277 = vector.shape_cast %1276 : vector<1x1x64xf32> to vector<1x64xf32>
    %1278 = arith.addf %1275, %1277 : vector<1x64xf32>
    %c2_778 = arith.constant 2 : index
    %c0_779 = arith.constant 0 : index
    %c0_780 = arith.constant 0 : index
    %1279 = vector.load %arg18[%c2_778, %c0_779, %c0_780] : memref<3x64x64xf32, #tpu.memory_space<vmem>>, vector<1x64x64xf32>
    %1280 = vector.shape_cast %1279 : vector<1x64x64xf32> to vector<64x64xf32>
    %cst_781 = arith.constant dense<0.000000e+00> : vector<1x64xf32>
    %1281 = tpu.matmul %1248, %1280, %cst_781 {dimension_numbers = #tpu.dot_dimension_numbers<[1], [0], [0], [1], [0, 0, 1, 1], [], []>} : vector<1x64xf32>, vector<64x64xf32>, vector<1x64xf32> -> vector<1x64xf32>
    %c2_782 = arith.constant 2 : index
    %c0_783 = arith.constant 0 : index
    %c0_784 = arith.constant 0 : index
    %1282 = vector.load %arg20[%c2_782, %c0_783, %c0_784] : memref<3x1x64xf32, #tpu.memory_space<vmem>>, vector<1x1x64xf32>
    %1283 = vector.shape_cast %1282 : vector<1x1x64xf32> to vector<1x64xf32>
    %1284 = arith.addf %1281, %1283 : vector<1x64xf32>
    %1285 = arith.addf %1254, %1272 : vector<1x64xf32>
    %1286 = arith.negf %1285 : vector<1x64xf32>
    %1287 = math.exp %1286 : vector<1x64xf32>
    %cst_785 = arith.constant 1.000000e+00 : f32
    %1288 = vector.broadcast %cst_785 : f32 to vector<1x64xf32>
    %1289 = arith.addf %1288, %1287 : vector<1x64xf32>
    %1290 = arith.divf %1288, %1289 : vector<1x64xf32>
    %1291 = arith.addf %1260, %1278 : vector<1x64xf32>
    %1292 = arith.negf %1291 : vector<1x64xf32>
    %1293 = math.exp %1292 : vector<1x64xf32>
    %cst_786 = arith.constant 1.000000e+00 : f32
    %1294 = vector.broadcast %cst_786 : f32 to vector<1x64xf32>
    %1295 = arith.addf %1294, %1293 : vector<1x64xf32>
    %1296 = arith.divf %1294, %1295 : vector<1x64xf32>
    %1297 = arith.mulf %1290, %1284 : vector<1x64xf32>
    %1298 = arith.addf %1266, %1297 : vector<1x64xf32>
    %1299 = math.tanh %1298 : vector<1x64xf32>
    %cst_787 = arith.constant 1.000000e+00 : f32
    %1300 = vector.broadcast %cst_787 : f32 to vector<1x64xf32>
    %1301 = arith.subf %1300, %1296 : vector<1x64xf32>
    %1302 = arith.mulf %1301, %1299 : vector<1x64xf32>
    %1303 = arith.mulf %1296, %1248 : vector<1x64xf32>
    %1304 = arith.addf %1302, %1303 : vector<1x64xf32>
    %c0_788 = arith.constant 0 : index
    %c0_789 = arith.constant 0 : index
    %c0_790 = arith.constant 0 : index
    %1305 = vector.load %arg17[%c0_788, %c0_789, %c0_790] : memref<3x64x64xf32, #tpu.memory_space<vmem>>, vector<1x64x64xf32>
    %1306 = vector.shape_cast %1305 : vector<1x64x64xf32> to vector<64x64xf32>
    %cst_791 = arith.constant dense<0.000000e+00> : vector<1x64xf32>
    %1307 = tpu.matmul %1304, %1306, %cst_791 {dimension_numbers = #tpu.dot_dimension_numbers<[1], [0], [0], [1], [0, 0, 1, 1], [], []>} : vector<1x64xf32>, vector<64x64xf32>, vector<1x64xf32> -> vector<1x64xf32>
    %c0_792 = arith.constant 0 : index
    %c0_793 = arith.constant 0 : index
    %c0_794 = arith.constant 0 : index
    %1308 = vector.load %arg19[%c0_792, %c0_793, %c0_794] : memref<3x1x64xf32, #tpu.memory_space<vmem>>, vector<1x1x64xf32>
    %1309 = vector.shape_cast %1308 : vector<1x1x64xf32> to vector<1x64xf32>
    %1310 = arith.addf %1307, %1309 : vector<1x64xf32>
    %c1_795 = arith.constant 1 : index
    %c0_796 = arith.constant 0 : index
    %c0_797 = arith.constant 0 : index
    %1311 = vector.load %arg17[%c1_795, %c0_796, %c0_797] : memref<3x64x64xf32, #tpu.memory_space<vmem>>, vector<1x64x64xf32>
    %1312 = vector.shape_cast %1311 : vector<1x64x64xf32> to vector<64x64xf32>
    %cst_798 = arith.constant dense<0.000000e+00> : vector<1x64xf32>
    %1313 = tpu.matmul %1304, %1312, %cst_798 {dimension_numbers = #tpu.dot_dimension_numbers<[1], [0], [0], [1], [0, 0, 1, 1], [], []>} : vector<1x64xf32>, vector<64x64xf32>, vector<1x64xf32> -> vector<1x64xf32>
    %c1_799 = arith.constant 1 : index
    %c0_800 = arith.constant 0 : index
    %c0_801 = arith.constant 0 : index
    %1314 = vector.load %arg19[%c1_799, %c0_800, %c0_801] : memref<3x1x64xf32, #tpu.memory_space<vmem>>, vector<1x1x64xf32>
    %1315 = vector.shape_cast %1314 : vector<1x1x64xf32> to vector<1x64xf32>
    %1316 = arith.addf %1313, %1315 : vector<1x64xf32>
    %c2_802 = arith.constant 2 : index
    %c0_803 = arith.constant 0 : index
    %c0_804 = arith.constant 0 : index
    %1317 = vector.load %arg17[%c2_802, %c0_803, %c0_804] : memref<3x64x64xf32, #tpu.memory_space<vmem>>, vector<1x64x64xf32>
    %1318 = vector.shape_cast %1317 : vector<1x64x64xf32> to vector<64x64xf32>
    %cst_805 = arith.constant dense<0.000000e+00> : vector<1x64xf32>
    %1319 = tpu.matmul %1304, %1318, %cst_805 {dimension_numbers = #tpu.dot_dimension_numbers<[1], [0], [0], [1], [0, 0, 1, 1], [], []>} : vector<1x64xf32>, vector<64x64xf32>, vector<1x64xf32> -> vector<1x64xf32>
    %c2_806 = arith.constant 2 : index
    %c0_807 = arith.constant 0 : index
    %c0_808 = arith.constant 0 : index
    %1320 = vector.load %arg19[%c2_806, %c0_807, %c0_808] : memref<3x1x64xf32, #tpu.memory_space<vmem>>, vector<1x1x64xf32>
    %1321 = vector.shape_cast %1320 : vector<1x1x64xf32> to vector<1x64xf32>
    %1322 = arith.addf %1319, %1321 : vector<1x64xf32>
    %c0_809 = arith.constant 0 : index
    %c0_810 = arith.constant 0 : index
    %c0_811 = arith.constant 0 : index
    %1323 = vector.load %arg18[%c0_809, %c0_810, %c0_811] : memref<3x64x64xf32, #tpu.memory_space<vmem>>, vector<1x64x64xf32>
    %1324 = vector.shape_cast %1323 : vector<1x64x64xf32> to vector<64x64xf32>
    %cst_812 = arith.constant dense<0.000000e+00> : vector<1x64xf32>
    %1325 = tpu.matmul %1304, %1324, %cst_812 {dimension_numbers = #tpu.dot_dimension_numbers<[1], [0], [0], [1], [0, 0, 1, 1], [], []>} : vector<1x64xf32>, vector<64x64xf32>, vector<1x64xf32> -> vector<1x64xf32>
    %c0_813 = arith.constant 0 : index
    %c0_814 = arith.constant 0 : index
    %c0_815 = arith.constant 0 : index
    %1326 = vector.load %arg20[%c0_813, %c0_814, %c0_815] : memref<3x1x64xf32, #tpu.memory_space<vmem>>, vector<1x1x64xf32>
    %1327 = vector.shape_cast %1326 : vector<1x1x64xf32> to vector<1x64xf32>
    %1328 = arith.addf %1325, %1327 : vector<1x64xf32>
    %c1_816 = arith.constant 1 : index
    %c0_817 = arith.constant 0 : index
    %c0_818 = arith.constant 0 : index
    %1329 = vector.load %arg18[%c1_816, %c0_817, %c0_818] : memref<3x64x64xf32, #tpu.memory_space<vmem>>, vector<1x64x64xf32>
    %1330 = vector.shape_cast %1329 : vector<1x64x64xf32> to vector<64x64xf32>
    %cst_819 = arith.constant dense<0.000000e+00> : vector<1x64xf32>
    %1331 = tpu.matmul %1304, %1330, %cst_819 {dimension_numbers = #tpu.dot_dimension_numbers<[1], [0], [0], [1], [0, 0, 1, 1], [], []>} : vector<1x64xf32>, vector<64x64xf32>, vector<1x64xf32> -> vector<1x64xf32>
    %c1_820 = arith.constant 1 : index
    %c0_821 = arith.constant 0 : index
    %c0_822 = arith.constant 0 : index
    %1332 = vector.load %arg20[%c1_820, %c0_821, %c0_822] : memref<3x1x64xf32, #tpu.memory_space<vmem>>, vector<1x1x64xf32>
    %1333 = vector.shape_cast %1332 : vector<1x1x64xf32> to vector<1x64xf32>
    %1334 = arith.addf %1331, %1333 : vector<1x64xf32>
    %c2_823 = arith.constant 2 : index
    %c0_824 = arith.constant 0 : index
    %c0_825 = arith.constant 0 : index
    %1335 = vector.load %arg18[%c2_823, %c0_824, %c0_825] : memref<3x64x64xf32, #tpu.memory_space<vmem>>, vector<1x64x64xf32>
    %1336 = vector.shape_cast %1335 : vector<1x64x64xf32> to vector<64x64xf32>
    %cst_826 = arith.constant dense<0.000000e+00> : vector<1x64xf32>
    %1337 = tpu.matmul %1304, %1336, %cst_826 {dimension_numbers = #tpu.dot_dimension_numbers<[1], [0], [0], [1], [0, 0, 1, 1], [], []>} : vector<1x64xf32>, vector<64x64xf32>, vector<1x64xf32> -> vector<1x64xf32>
    %c2_827 = arith.constant 2 : index
    %c0_828 = arith.constant 0 : index
    %c0_829 = arith.constant 0 : index
    %1338 = vector.load %arg20[%c2_827, %c0_828, %c0_829] : memref<3x1x64xf32, #tpu.memory_space<vmem>>, vector<1x1x64xf32>
    %1339 = vector.shape_cast %1338 : vector<1x1x64xf32> to vector<1x64xf32>
    %1340 = arith.addf %1337, %1339 : vector<1x64xf32>
    %1341 = arith.addf %1310, %1328 : vector<1x64xf32>
    %1342 = arith.negf %1341 : vector<1x64xf32>
    %1343 = math.exp %1342 : vector<1x64xf32>
    %cst_830 = arith.constant 1.000000e+00 : f32
    %1344 = vector.broadcast %cst_830 : f32 to vector<1x64xf32>
    %1345 = arith.addf %1344, %1343 : vector<1x64xf32>
    %1346 = arith.divf %1344, %1345 : vector<1x64xf32>
    %1347 = arith.addf %1316, %1334 : vector<1x64xf32>
    %1348 = arith.negf %1347 : vector<1x64xf32>
    %1349 = math.exp %1348 : vector<1x64xf32>
    %cst_831 = arith.constant 1.000000e+00 : f32
    %1350 = vector.broadcast %cst_831 : f32 to vector<1x64xf32>
    %1351 = arith.addf %1350, %1349 : vector<1x64xf32>
    %1352 = arith.divf %1350, %1351 : vector<1x64xf32>
    %1353 = arith.mulf %1346, %1340 : vector<1x64xf32>
    %1354 = arith.addf %1322, %1353 : vector<1x64xf32>
    %1355 = math.tanh %1354 : vector<1x64xf32>
    %cst_832 = arith.constant 1.000000e+00 : f32
    %1356 = vector.broadcast %cst_832 : f32 to vector<1x64xf32>
    %1357 = arith.subf %1356, %1352 : vector<1x64xf32>
    %1358 = arith.mulf %1357, %1355 : vector<1x64xf32>
    %1359 = arith.mulf %1352, %1304 : vector<1x64xf32>
    %1360 = arith.addf %1358, %1359 : vector<1x64xf32>
    %c0_833 = arith.constant 0 : index
    %c0_834 = arith.constant 0 : index
    %c0_835 = arith.constant 0 : index
    %1361 = vector.load %arg17[%c0_833, %c0_834, %c0_835] : memref<3x64x64xf32, #tpu.memory_space<vmem>>, vector<1x64x64xf32>
    %1362 = vector.shape_cast %1361 : vector<1x64x64xf32> to vector<64x64xf32>
    %cst_836 = arith.constant dense<0.000000e+00> : vector<1x64xf32>
    %1363 = tpu.matmul %1360, %1362, %cst_836 {dimension_numbers = #tpu.dot_dimension_numbers<[1], [0], [0], [1], [0, 0, 1, 1], [], []>} : vector<1x64xf32>, vector<64x64xf32>, vector<1x64xf32> -> vector<1x64xf32>
    %c0_837 = arith.constant 0 : index
    %c0_838 = arith.constant 0 : index
    %c0_839 = arith.constant 0 : index
    %1364 = vector.load %arg19[%c0_837, %c0_838, %c0_839] : memref<3x1x64xf32, #tpu.memory_space<vmem>>, vector<1x1x64xf32>
    %1365 = vector.shape_cast %1364 : vector<1x1x64xf32> to vector<1x64xf32>
    %1366 = arith.addf %1363, %1365 : vector<1x64xf32>
    %c1_840 = arith.constant 1 : index
    %c0_841 = arith.constant 0 : index
    %c0_842 = arith.constant 0 : index
    %1367 = vector.load %arg17[%c1_840, %c0_841, %c0_842] : memref<3x64x64xf32, #tpu.memory_space<vmem>>, vector<1x64x64xf32>
    %1368 = vector.shape_cast %1367 : vector<1x64x64xf32> to vector<64x64xf32>
    %cst_843 = arith.constant dense<0.000000e+00> : vector<1x64xf32>
    %1369 = tpu.matmul %1360, %1368, %cst_843 {dimension_numbers = #tpu.dot_dimension_numbers<[1], [0], [0], [1], [0, 0, 1, 1], [], []>} : vector<1x64xf32>, vector<64x64xf32>, vector<1x64xf32> -> vector<1x64xf32>
    %c1_844 = arith.constant 1 : index
    %c0_845 = arith.constant 0 : index
    %c0_846 = arith.constant 0 : index
    %1370 = vector.load %arg19[%c1_844, %c0_845, %c0_846] : memref<3x1x64xf32, #tpu.memory_space<vmem>>, vector<1x1x64xf32>
    %1371 = vector.shape_cast %1370 : vector<1x1x64xf32> to vector<1x64xf32>
    %1372 = arith.addf %1369, %1371 : vector<1x64xf32>
    %c2_847 = arith.constant 2 : index
    %c0_848 = arith.constant 0 : index
    %c0_849 = arith.constant 0 : index
    %1373 = vector.load %arg17[%c2_847, %c0_848, %c0_849] : memref<3x64x64xf32, #tpu.memory_space<vmem>>, vector<1x64x64xf32>
    %1374 = vector.shape_cast %1373 : vector<1x64x64xf32> to vector<64x64xf32>
    %cst_850 = arith.constant dense<0.000000e+00> : vector<1x64xf32>
    %1375 = tpu.matmul %1360, %1374, %cst_850 {dimension_numbers = #tpu.dot_dimension_numbers<[1], [0], [0], [1], [0, 0, 1, 1], [], []>} : vector<1x64xf32>, vector<64x64xf32>, vector<1x64xf32> -> vector<1x64xf32>
    %c2_851 = arith.constant 2 : index
    %c0_852 = arith.constant 0 : index
    %c0_853 = arith.constant 0 : index
    %1376 = vector.load %arg19[%c2_851, %c0_852, %c0_853] : memref<3x1x64xf32, #tpu.memory_space<vmem>>, vector<1x1x64xf32>
    %1377 = vector.shape_cast %1376 : vector<1x1x64xf32> to vector<1x64xf32>
    %1378 = arith.addf %1375, %1377 : vector<1x64xf32>
    %c0_854 = arith.constant 0 : index
    %c0_855 = arith.constant 0 : index
    %c0_856 = arith.constant 0 : index
    %1379 = vector.load %arg18[%c0_854, %c0_855, %c0_856] : memref<3x64x64xf32, #tpu.memory_space<vmem>>, vector<1x64x64xf32>
    %1380 = vector.shape_cast %1379 : vector<1x64x64xf32> to vector<64x64xf32>
    %cst_857 = arith.constant dense<0.000000e+00> : vector<1x64xf32>
    %1381 = tpu.matmul %1360, %1380, %cst_857 {dimension_numbers = #tpu.dot_dimension_numbers<[1], [0], [0], [1], [0, 0, 1, 1], [], []>} : vector<1x64xf32>, vector<64x64xf32>, vector<1x64xf32> -> vector<1x64xf32>
    %c0_858 = arith.constant 0 : index
    %c0_859 = arith.constant 0 : index
    %c0_860 = arith.constant 0 : index
    %1382 = vector.load %arg20[%c0_858, %c0_859, %c0_860] : memref<3x1x64xf32, #tpu.memory_space<vmem>>, vector<1x1x64xf32>
    %1383 = vector.shape_cast %1382 : vector<1x1x64xf32> to vector<1x64xf32>
    %1384 = arith.addf %1381, %1383 : vector<1x64xf32>
    %c1_861 = arith.constant 1 : index
    %c0_862 = arith.constant 0 : index
    %c0_863 = arith.constant 0 : index
    %1385 = vector.load %arg18[%c1_861, %c0_862, %c0_863] : memref<3x64x64xf32, #tpu.memory_space<vmem>>, vector<1x64x64xf32>
    %1386 = vector.shape_cast %1385 : vector<1x64x64xf32> to vector<64x64xf32>
    %cst_864 = arith.constant dense<0.000000e+00> : vector<1x64xf32>
    %1387 = tpu.matmul %1360, %1386, %cst_864 {dimension_numbers = #tpu.dot_dimension_numbers<[1], [0], [0], [1], [0, 0, 1, 1], [], []>} : vector<1x64xf32>, vector<64x64xf32>, vector<1x64xf32> -> vector<1x64xf32>
    %c1_865 = arith.constant 1 : index
    %c0_866 = arith.constant 0 : index
    %c0_867 = arith.constant 0 : index
    %1388 = vector.load %arg20[%c1_865, %c0_866, %c0_867] : memref<3x1x64xf32, #tpu.memory_space<vmem>>, vector<1x1x64xf32>
    %1389 = vector.shape_cast %1388 : vector<1x1x64xf32> to vector<1x64xf32>
    %1390 = arith.addf %1387, %1389 : vector<1x64xf32>
    %c2_868 = arith.constant 2 : index
    %c0_869 = arith.constant 0 : index
    %c0_870 = arith.constant 0 : index
    %1391 = vector.load %arg18[%c2_868, %c0_869, %c0_870] : memref<3x64x64xf32, #tpu.memory_space<vmem>>, vector<1x64x64xf32>
    %1392 = vector.shape_cast %1391 : vector<1x64x64xf32> to vector<64x64xf32>
    %cst_871 = arith.constant dense<0.000000e+00> : vector<1x64xf32>
    %1393 = tpu.matmul %1360, %1392, %cst_871 {dimension_numbers = #tpu.dot_dimension_numbers<[1], [0], [0], [1], [0, 0, 1, 1], [], []>} : vector<1x64xf32>, vector<64x64xf32>, vector<1x64xf32> -> vector<1x64xf32>
    %c2_872 = arith.constant 2 : index
    %c0_873 = arith.constant 0 : index
    %c0_874 = arith.constant 0 : index
    %1394 = vector.load %arg20[%c2_872, %c0_873, %c0_874] : memref<3x1x64xf32, #tpu.memory_space<vmem>>, vector<1x1x64xf32>
    %1395 = vector.shape_cast %1394 : vector<1x1x64xf32> to vector<1x64xf32>
    %1396 = arith.addf %1393, %1395 : vector<1x64xf32>
    %1397 = arith.addf %1366, %1384 : vector<1x64xf32>
    %1398 = arith.negf %1397 : vector<1x64xf32>
    %1399 = math.exp %1398 : vector<1x64xf32>
    %cst_875 = arith.constant 1.000000e+00 : f32
    %1400 = vector.broadcast %cst_875 : f32 to vector<1x64xf32>
    %1401 = arith.addf %1400, %1399 : vector<1x64xf32>
    %1402 = arith.divf %1400, %1401 : vector<1x64xf32>
    %1403 = arith.addf %1372, %1390 : vector<1x64xf32>
    %1404 = arith.negf %1403 : vector<1x64xf32>
    %1405 = math.exp %1404 : vector<1x64xf32>
    %cst_876 = arith.constant 1.000000e+00 : f32
    %1406 = vector.broadcast %cst_876 : f32 to vector<1x64xf32>
    %1407 = arith.addf %1406, %1405 : vector<1x64xf32>
    %1408 = arith.divf %1406, %1407 : vector<1x64xf32>
    %1409 = arith.mulf %1402, %1396 : vector<1x64xf32>
    %1410 = arith.addf %1378, %1409 : vector<1x64xf32>
    %1411 = math.tanh %1410 : vector<1x64xf32>
    %cst_877 = arith.constant 1.000000e+00 : f32
    %1412 = vector.broadcast %cst_877 : f32 to vector<1x64xf32>
    %1413 = arith.subf %1412, %1408 : vector<1x64xf32>
    %1414 = arith.mulf %1413, %1411 : vector<1x64xf32>
    %1415 = arith.mulf %1408, %1360 : vector<1x64xf32>
    %1416 = arith.addf %1414, %1415 : vector<1x64xf32>
    %c0_878 = arith.constant 0 : index
    %c0_879 = arith.constant 0 : index
    %c0_880 = arith.constant 0 : index
    %1417 = vector.load %arg17[%c0_878, %c0_879, %c0_880] : memref<3x64x64xf32, #tpu.memory_space<vmem>>, vector<1x64x64xf32>
    %1418 = vector.shape_cast %1417 : vector<1x64x64xf32> to vector<64x64xf32>
    %cst_881 = arith.constant dense<0.000000e+00> : vector<1x64xf32>
    %1419 = tpu.matmul %1416, %1418, %cst_881 {dimension_numbers = #tpu.dot_dimension_numbers<[1], [0], [0], [1], [0, 0, 1, 1], [], []>} : vector<1x64xf32>, vector<64x64xf32>, vector<1x64xf32> -> vector<1x64xf32>
    %c0_882 = arith.constant 0 : index
    %c0_883 = arith.constant 0 : index
    %c0_884 = arith.constant 0 : index
    %1420 = vector.load %arg19[%c0_882, %c0_883, %c0_884] : memref<3x1x64xf32, #tpu.memory_space<vmem>>, vector<1x1x64xf32>
    %1421 = vector.shape_cast %1420 : vector<1x1x64xf32> to vector<1x64xf32>
    %1422 = arith.addf %1419, %1421 : vector<1x64xf32>
    %c1_885 = arith.constant 1 : index
    %c0_886 = arith.constant 0 : index
    %c0_887 = arith.constant 0 : index
    %1423 = vector.load %arg17[%c1_885, %c0_886, %c0_887] : memref<3x64x64xf32, #tpu.memory_space<vmem>>, vector<1x64x64xf32>
    %1424 = vector.shape_cast %1423 : vector<1x64x64xf32> to vector<64x64xf32>
    %cst_888 = arith.constant dense<0.000000e+00> : vector<1x64xf32>
    %1425 = tpu.matmul %1416, %1424, %cst_888 {dimension_numbers = #tpu.dot_dimension_numbers<[1], [0], [0], [1], [0, 0, 1, 1], [], []>} : vector<1x64xf32>, vector<64x64xf32>, vector<1x64xf32> -> vector<1x64xf32>
    %c1_889 = arith.constant 1 : index
    %c0_890 = arith.constant 0 : index
    %c0_891 = arith.constant 0 : index
    %1426 = vector.load %arg19[%c1_889, %c0_890, %c0_891] : memref<3x1x64xf32, #tpu.memory_space<vmem>>, vector<1x1x64xf32>
    %1427 = vector.shape_cast %1426 : vector<1x1x64xf32> to vector<1x64xf32>
    %1428 = arith.addf %1425, %1427 : vector<1x64xf32>
    %c2_892 = arith.constant 2 : index
    %c0_893 = arith.constant 0 : index
    %c0_894 = arith.constant 0 : index
    %1429 = vector.load %arg17[%c2_892, %c0_893, %c0_894] : memref<3x64x64xf32, #tpu.memory_space<vmem>>, vector<1x64x64xf32>
    %1430 = vector.shape_cast %1429 : vector<1x64x64xf32> to vector<64x64xf32>
    %cst_895 = arith.constant dense<0.000000e+00> : vector<1x64xf32>
    %1431 = tpu.matmul %1416, %1430, %cst_895 {dimension_numbers = #tpu.dot_dimension_numbers<[1], [0], [0], [1], [0, 0, 1, 1], [], []>} : vector<1x64xf32>, vector<64x64xf32>, vector<1x64xf32> -> vector<1x64xf32>
    %c2_896 = arith.constant 2 : index
    %c0_897 = arith.constant 0 : index
    %c0_898 = arith.constant 0 : index
    %1432 = vector.load %arg19[%c2_896, %c0_897, %c0_898] : memref<3x1x64xf32, #tpu.memory_space<vmem>>, vector<1x1x64xf32>
    %1433 = vector.shape_cast %1432 : vector<1x1x64xf32> to vector<1x64xf32>
    %1434 = arith.addf %1431, %1433 : vector<1x64xf32>
    %c0_899 = arith.constant 0 : index
    %c0_900 = arith.constant 0 : index
    %c0_901 = arith.constant 0 : index
    %1435 = vector.load %arg18[%c0_899, %c0_900, %c0_901] : memref<3x64x64xf32, #tpu.memory_space<vmem>>, vector<1x64x64xf32>
    %1436 = vector.shape_cast %1435 : vector<1x64x64xf32> to vector<64x64xf32>
    %cst_902 = arith.constant dense<0.000000e+00> : vector<1x64xf32>
    %1437 = tpu.matmul %1416, %1436, %cst_902 {dimension_numbers = #tpu.dot_dimension_numbers<[1], [0], [0], [1], [0, 0, 1, 1], [], []>} : vector<1x64xf32>, vector<64x64xf32>, vector<1x64xf32> -> vector<1x64xf32>
    %c0_903 = arith.constant 0 : index
    %c0_904 = arith.constant 0 : index
    %c0_905 = arith.constant 0 : index
    %1438 = vector.load %arg20[%c0_903, %c0_904, %c0_905] : memref<3x1x64xf32, #tpu.memory_space<vmem>>, vector<1x1x64xf32>
    %1439 = vector.shape_cast %1438 : vector<1x1x64xf32> to vector<1x64xf32>
    %1440 = arith.addf %1437, %1439 : vector<1x64xf32>
    %c1_906 = arith.constant 1 : index
    %c0_907 = arith.constant 0 : index
    %c0_908 = arith.constant 0 : index
    %1441 = vector.load %arg18[%c1_906, %c0_907, %c0_908] : memref<3x64x64xf32, #tpu.memory_space<vmem>>, vector<1x64x64xf32>
    %1442 = vector.shape_cast %1441 : vector<1x64x64xf32> to vector<64x64xf32>
    %cst_909 = arith.constant dense<0.000000e+00> : vector<1x64xf32>
    %1443 = tpu.matmul %1416, %1442, %cst_909 {dimension_numbers = #tpu.dot_dimension_numbers<[1], [0], [0], [1], [0, 0, 1, 1], [], []>} : vector<1x64xf32>, vector<64x64xf32>, vector<1x64xf32> -> vector<1x64xf32>
    %c1_910 = arith.constant 1 : index
    %c0_911 = arith.constant 0 : index
    %c0_912 = arith.constant 0 : index
    %1444 = vector.load %arg20[%c1_910, %c0_911, %c0_912] : memref<3x1x64xf32, #tpu.memory_space<vmem>>, vector<1x1x64xf32>
    %1445 = vector.shape_cast %1444 : vector<1x1x64xf32> to vector<1x64xf32>
    %1446 = arith.addf %1443, %1445 : vector<1x64xf32>
    %c2_913 = arith.constant 2 : index
    %c0_914 = arith.constant 0 : index
    %c0_915 = arith.constant 0 : index
    %1447 = vector.load %arg18[%c2_913, %c0_914, %c0_915] : memref<3x64x64xf32, #tpu.memory_space<vmem>>, vector<1x64x64xf32>
    %1448 = vector.shape_cast %1447 : vector<1x64x64xf32> to vector<64x64xf32>
    %cst_916 = arith.constant dense<0.000000e+00> : vector<1x64xf32>
    %1449 = tpu.matmul %1416, %1448, %cst_916 {dimension_numbers = #tpu.dot_dimension_numbers<[1], [0], [0], [1], [0, 0, 1, 1], [], []>} : vector<1x64xf32>, vector<64x64xf32>, vector<1x64xf32> -> vector<1x64xf32>
    %c2_917 = arith.constant 2 : index
    %c0_918 = arith.constant 0 : index
    %c0_919 = arith.constant 0 : index
    %1450 = vector.load %arg20[%c2_917, %c0_918, %c0_919] : memref<3x1x64xf32, #tpu.memory_space<vmem>>, vector<1x1x64xf32>
    %1451 = vector.shape_cast %1450 : vector<1x1x64xf32> to vector<1x64xf32>
    %1452 = arith.addf %1449, %1451 : vector<1x64xf32>
    %1453 = arith.addf %1422, %1440 : vector<1x64xf32>
    %1454 = arith.negf %1453 : vector<1x64xf32>
    %1455 = math.exp %1454 : vector<1x64xf32>
    %cst_920 = arith.constant 1.000000e+00 : f32
    %1456 = vector.broadcast %cst_920 : f32 to vector<1x64xf32>
    %1457 = arith.addf %1456, %1455 : vector<1x64xf32>
    %1458 = arith.divf %1456, %1457 : vector<1x64xf32>
    %1459 = arith.addf %1428, %1446 : vector<1x64xf32>
    %1460 = arith.negf %1459 : vector<1x64xf32>
    %1461 = math.exp %1460 : vector<1x64xf32>
    %cst_921 = arith.constant 1.000000e+00 : f32
    %1462 = vector.broadcast %cst_921 : f32 to vector<1x64xf32>
    %1463 = arith.addf %1462, %1461 : vector<1x64xf32>
    %1464 = arith.divf %1462, %1463 : vector<1x64xf32>
    %1465 = arith.mulf %1458, %1452 : vector<1x64xf32>
    %1466 = arith.addf %1434, %1465 : vector<1x64xf32>
    %1467 = math.tanh %1466 : vector<1x64xf32>
    %cst_922 = arith.constant 1.000000e+00 : f32
    %1468 = vector.broadcast %cst_922 : f32 to vector<1x64xf32>
    %1469 = arith.subf %1468, %1464 : vector<1x64xf32>
    %1470 = arith.mulf %1469, %1467 : vector<1x64xf32>
    %1471 = arith.mulf %1464, %1416 : vector<1x64xf32>
    %1472 = arith.addf %1470, %1471 : vector<1x64xf32>
    %1473 = tpu.concatenate %1248, %1304, %1360, %1416, %1472 in 0 : vector<1x64xf32>, vector<1x64xf32>, vector<1x64xf32>, vector<1x64xf32>, vector<1x64xf32> -> vector<5x64xf32>
    %c0_923 = arith.constant 0 : index
    %c0_924 = arith.constant 0 : index
    %1474 = vector.load %arg21[%c0_923, %c0_924] : memref<64x8xf32, #tpu.memory_space<vmem>>, vector<64x8xf32>
    %cst_925 = arith.constant dense<0.000000e+00> : vector<5x8xf32>
    %1475 = tpu.matmul %1473, %1474, %cst_925 {dimension_numbers = #tpu.dot_dimension_numbers<[1], [0], [0], [1], [0, 0, 1, 1], [], []>} : vector<5x64xf32>, vector<64x8xf32>, vector<5x8xf32> -> vector<5x8xf32>
    %c0_926 = arith.constant 0 : index
    %c0_927 = arith.constant 0 : index
    %1476 = vector.load %arg22[%c0_926, %c0_927] : memref<1x8xf32, #tpu.memory_space<vmem>>, vector<1x8xf32>
    %1477 = vector.broadcast %1476 : vector<1x8xf32> to vector<5x8xf32>
    %1478 = arith.addf %1475, %1477 : vector<5x8xf32>
    %c0_928 = arith.constant 0 : index
    %c0_929 = arith.constant 0 : index
    %1479 = vector.load %arg23[%c0_928, %c0_929] : memref<5x8xf32, #tpu.memory_space<vmem>>, vector<5x8xf32>
    tpu.vector_store %arg23[%c0_928, %c0_929], %1478 {strides = array<i32>} : memref<5x8xf32, #tpu.memory_space<vmem>>, vector<5x8xf32>,
    return
  }
}

</mosaic_0001>

<llo_original>
// kernel: winseq2seq_forward.1
$region0: #{winseq2seq_forward.1}
  #allocation0 [shape = 'u32[]', space=smem, size = 0x4, offset = 0x4, fixed_abs, tag = 'smem constant byte address 0x4 - core index']
  #allocation1 [shape = 'u32[72,128]{1,0:T(1,128)}', space=vmem, size = 0x9000, scoped, tag = 'internal scratch']
  %s0 = inlined_call_operand.vmem [shape: f32[64,16], index: 0, kind: input, shape index: {}]
  %s1 = inlined_call_operand.vmem [shape: f32[3,16,32], index: 1, kind: input, shape index: {}]
  %s2 = inlined_call_operand.vmem [shape: f32[3,32,32], index: 2, kind: input, shape index: {}]
  %s3 = inlined_call_operand.vmem [shape: f32[3,1,32], index: 3, kind: input, shape index: {}]
  %s4 = inlined_call_operand.vmem [shape: f32[3,1,32], index: 4, kind: input, shape index: {}]
  %s5 = inlined_call_operand.vmem [shape: f32[3,16,32], index: 5, kind: input, shape index: {}]
  %s6 = inlined_call_operand.vmem [shape: f32[3,32,32], index: 6, kind: input, shape index: {}]
  %s7 = inlined_call_operand.vmem [shape: f32[3,1,32], index: 7, kind: input, shape index: {}]
  %s8 = inlined_call_operand.vmem [shape: f32[3,1,32], index: 8, kind: input, shape index: {}]
  %s9 = inlined_call_operand.vmem [shape: f32[3,64,32], index: 9, kind: input, shape index: {}]
  %s10 = inlined_call_operand.vmem [shape: f32[3,32,32], index: 10, kind: input, shape index: {}]
  %s11 = inlined_call_operand.vmem [shape: f32[3,1,32], index: 11, kind: input, shape index: {}]
  %s12 = inlined_call_operand.vmem [shape: f32[3,1,32], index: 12, kind: input, shape index: {}]
  %s13 = inlined_call_operand.vmem [shape: f32[3,64,32], index: 13, kind: input, shape index: {}]
  %s14 = inlined_call_operand.vmem [shape: f32[3,32,32], index: 14, kind: input, shape index: {}]
  %s15 = inlined_call_operand.vmem [shape: f32[3,1,32], index: 15, kind: input, shape index: {}]
  %s16 = inlined_call_operand.vmem [shape: f32[3,1,32], index: 16, kind: input, shape index: {}]
  %s17 = inlined_call_operand.vmem [shape: f32[3,64,64], index: 17, kind: input, shape index: {}]
  %s18 = inlined_call_operand.vmem [shape: f32[3,64,64], index: 18, kind: input, shape index: {}]
  %s19 = inlined_call_operand.vmem [shape: f32[3,1,64], index: 19, kind: input, shape index: {}]
  %s20 = inlined_call_operand.vmem [shape: f32[3,1,64], index: 20, kind: input, shape index: {}]
  %s21 = inlined_call_operand.vmem [shape: f32[64,8], index: 21, kind: input, shape index: {}]
  %s22 = inlined_call_operand.vmem [shape: f32[1,8], index: 22, kind: input, shape index: {}]
  %s23 = inlined_call_operand.hbm [shape: f32[5,8], index: 23, kind: output, shape index: {}]
  %s24 = sld [smem:[#allocation0]]
  $region102: #{winseq2seq_forward.1} parent=0
    _
  %s26 = ssub.s32 1, %s24
  %s27 = scalar_select 0, %s26, %s24
  $region1: #{winseq2seq_forward.1} parent=0
    #allocation2 [shape = 'u8[4096]{0}', space=vmem, size = 0x1000, scoped, tag = 'output window, operand 0, single buffered']
    #allocation3 [shape = 's32[1]{0}', space=sflag, size = 0x4, scoped, tag = 'scoped memory for winseq2seq_forward.1']
    %28 = vsyncpa [#allocation3], 0
    // Predicated region
    $region2: #{winseq2seq_forward.1} parent=1 // pred_check
      _
    $region3: #{winseq2seq_forward.1} parent=1 // pred_check_branch
      %30 = sbr.rel (0) target = $region5
    $region4: #{winseq2seq_forward.1} parent=1 // pred_region
      _
    $region5: #{winseq2seq_forward.1} parent=1 // pred_fallthru
      _
    // Predicated region
    $region6: #{winseq2seq_forward.1} parent=1 // pred_check
      _
    $region7: #{winseq2seq_forward.1} parent=1 // pred_check_branch
      %32 = sbr.rel (0) target = $region9
    $region8: #{winseq2seq_forward.1} parent=1 // pred_region
      _
    $region9: #{winseq2seq_forward.1} parent=1 // pred_fallthru
      _
    // Predicated region
    $region10: #{winseq2seq_forward.1} parent=1 // pred_check
      _
    $region11: #{winseq2seq_forward.1} parent=1 // pred_check_branch
      %34 = sbr.rel (0) target = $region13
    $region12: #{winseq2seq_forward.1} parent=1 // pred_region
      _
    $region13: #{winseq2seq_forward.1} parent=1 // pred_fallthru
      _
    // Predicated region
    $region14: #{winseq2seq_forward.1} parent=1 // pred_check
      _
    $region15: #{winseq2seq_forward.1} parent=1 // pred_check_branch
      %36 = sbr.rel (0) target = $region17
    $region16: #{winseq2seq_forward.1} parent=1 // pred_region
      _
    $region17: #{winseq2seq_forward.1} parent=1 // pred_fallthru
      _
    // Predicated region
    $region18: #{winseq2seq_forward.1} parent=1 // pred_check
      _
    $region19: #{winseq2seq_forward.1} parent=1 // pred_check_branch
      %38 = sbr.rel (0) target = $region21
    $region20: #{winseq2seq_forward.1} parent=1 // pred_region
      _
    $region21: #{winseq2seq_forward.1} parent=1 // pred_fallthru
      _
    // Predicated region
    $region22: #{winseq2seq_forward.1} parent=1 // pred_check
      _
    $region23: #{winseq2seq_forward.1} parent=1 // pred_check_branch
      %40 = sbr.rel (0) target = $region25
    $region24: #{winseq2seq_forward.1} parent=1 // pred_region
      _
    $region25: #{winseq2seq_forward.1} parent=1 // pred_fallthru
      _
    // Predicated region
    $region26: #{winseq2seq_forward.1} parent=1 // pred_check
      _
    $region27: #{winseq2seq_forward.1} parent=1 // pred_check_branch
      %42 = sbr.rel (0) target = $region29
    $region28: #{winseq2seq_forward.1} parent=1 // pred_region
      _
    $region29: #{winseq2seq_forward.1} parent=1 // pred_fallthru
      _
    // Predicated region
    $region30: #{winseq2seq_forward.1} parent=1 // pred_check
      _
    $region31: #{winseq2seq_forward.1} parent=1 // pred_check_branch
      %44 = sbr.rel (0) target = $region33
    $region32: #{winseq2seq_forward.1} parent=1 // pred_region
      _
    $region33: #{winseq2seq_forward.1} parent=1 // pred_fallthru
      _
    // Predicated region
    $region34: #{winseq2seq_forward.1} parent=1 // pred_check
      _
    $region35: #{winseq2seq_forward.1} parent=1 // pred_check_branch
      %46 = sbr.rel (0) target = $region37
    $region36: #{winseq2seq_forward.1} parent=1 // pred_region
      _
    $region37: #{winseq2seq_forward.1} parent=1 // pred_fallthru
      _
    // Predicated region
    $region38: #{winseq2seq_forward.1} parent=1 // pred_check
      _
    $region39: #{winseq2seq_forward.1} parent=1 // pred_check_branch
      %48 = sbr.rel (0) target = $region41
    $region40: #{winseq2seq_forward.1} parent=1 // pred_region
      _
    $region41: #{winseq2seq_forward.1} parent=1 // pred_fallthru
      _
    // Predicated region
    $region42: #{winseq2seq_forward.1} parent=1 // pred_check
      _
    $region43: #{winseq2seq_forward.1} parent=1 // pred_check_branch
      %50 = sbr.rel (0) target = $region45
    $region44: #{winseq2seq_forward.1} parent=1 // pred_region
      _
    $region45: #{winseq2seq_forward.1} parent=1 // pred_fallthru
      _
    // Predicated region
    $region46: #{winseq2seq_forward.1} parent=1 // pred_check
      _
    $region47: #{winseq2seq_forward.1} parent=1 // pred_check_branch
      %52 = sbr.rel (0) target = $region49
    $region48: #{winseq2seq_forward.1} parent=1 // pred_region
      _
    $region49: #{winseq2seq_forward.1} parent=1 // pred_fallthru
      _
    // Predicated region
    $region50: #{winseq2seq_forward.1} parent=1 // pred_check
      _
    $region51: #{winseq2seq_forward.1} parent=1 // pred_check_branch
      %54 = sbr.rel (0) target = $region53
    $region52: #{winseq2seq_forward.1} parent=1 // pred_region
      _
    $region53: #{winseq2seq_forward.1} parent=1 // pred_fallthru
      _
    // Predicated region
    $region54: #{winseq2seq_forward.1} parent=1 // pred_check
      _
    $region55: #{winseq2seq_forward.1} parent=1 // pred_check_branch
      %56 = sbr.rel (0) target = $region57
    $region56: #{winseq2seq_forward.1} parent=1 // pred_region
      _
    $region57: #{winseq2seq_forward.1} parent=1 // pred_fallthru
      _
    // Predicated region
    $region58: #{winseq2seq_forward.1} parent=1 // pred_check
      _
    $region59: #{winseq2seq_forward.1} parent=1 // pred_check_branch
      %58 = sbr.rel (0) target = $region61
    $region60: #{winseq2seq_forward.1} parent=1 // pred_region
      _
    $region61: #{winseq2seq_forward.1} parent=1 // pred_fallthru
      _
    // Predicated region
    $region62: #{winseq2seq_forward.1} parent=1 // pred_check
      _
    $region63: #{winseq2seq_forward.1} parent=1 // pred_check_branch
      %60 = sbr.rel (0) target = $region65
    $region64: #{winseq2seq_forward.1} parent=1 // pred_region
      _
    $region65: #{winseq2seq_forward.1} parent=1 // pred_fallthru
      _
    // Predicated region
    $region66: #{winseq2seq_forward.1} parent=1 // pred_check
      _
    $region67: #{winseq2seq_forward.1} parent=1 // pred_check_branch
      %62 = sbr.rel (0) target = $region69
    $region68: #{winseq2seq_forward.1} parent=1 // pred_region
      _
    $region69: #{winseq2seq_forward.1} parent=1 // pred_fallthru
      _
    // Predicated region
    $region70: #{winseq2seq_forward.1} parent=1 // pred_check
      _
    $region71: #{winseq2seq_forward.1} parent=1 // pred_check_branch
      %64 = sbr.rel (0) target = $region73
    $region72: #{winseq2seq_forward.1} parent=1 // pred_region
      _
    $region73: #{winseq2seq_forward.1} parent=1 // pred_fallthru
      _
    // Predicated region
    $region74: #{winseq2seq_forward.1} parent=1 // pred_check
      _
    $region75: #{winseq2seq_forward.1} parent=1 // pred_check_branch
      %66 = sbr.rel (0) target = $region77
    $region76: #{winseq2seq_forward.1} parent=1 // pred_region
      _
    $region77: #{winseq2seq_forward.1} parent=1 // pred_fallthru
      _
    // Predicated region
    $region78: #{winseq2seq_forward.1} parent=1 // pred_check
      _
    $region79: #{winseq2seq_forward.1} parent=1 // pred_check_branch
      %68 = sbr.rel (0) target = $region81
    $region80: #{winseq2seq_forward.1} parent=1 // pred_region
      _
    $region81: #{winseq2seq_forward.1} parent=1 // pred_fallthru
      _
    // Predicated region
    $region82: #{winseq2seq_forward.1} parent=1 // pred_check
      _
    $region83: #{winseq2seq_forward.1} parent=1 // pred_check_branch
      %70 = sbr.rel (0) target = $region85
    $region84: #{winseq2seq_forward.1} parent=1 // pred_region
      _
    $region85: #{winseq2seq_forward.1} parent=1 // pred_fallthru
      _
    // Predicated region
    $region86: #{winseq2seq_forward.1} parent=1 // pred_check
      _
    $region87: #{winseq2seq_forward.1} parent=1 // pred_check_branch
      %72 = sbr.rel (0) target = $region89
    $region88: #{winseq2seq_forward.1} parent=1 // pred_region
      _
    $region89: #{winseq2seq_forward.1} parent=1 // pred_fallthru
      _
    // Predicated region
    $region90: #{winseq2seq_forward.1} parent=1 // pred_check
      _
    $region91: #{winseq2seq_forward.1} parent=1 // pred_check_branch
      %74 = sbr.rel (0) target = $region93
    $region92: #{winseq2seq_forward.1} parent=1 // pred_region
      _
    $region93: #{winseq2seq_forward.1} parent=1 // pred_fallthru
      _
    %v75 = vld [vmem:[%s0] sm:$0xff]
    %v76 = vld [vmem:[%s0 + $0x8] sm:$0xff]
    %v77 = vld [vmem:[%s0 + $0x10] sm:$0xff]
    %v78 = vld [vmem:[%s0 + $0x18] sm:$0xff]
    %v79 = vld [vmem:[%s0 + $0x20] sm:$0xff]
    %v80 = vld [vmem:[%s0 + $0x28] sm:$0xff]
    %v81 = vld [vmem:[%s0 + $0x30] sm:$0xff]
    %v82 = vld [vmem:[%s0 + $0x38] sm:$0xff]
    %v83 = vld [vmem:[%s1] sm:$0xff]
    %v84 = vld [vmem:[%s1 + $0x8] sm:$0xff]
    %v85 = vld [vmem:[%s3] sm:$0x1]
    %v87 = vperm.slane %v85, 0
    %vm89 = vcmask 130048
    %v91 = vsel %vm89, %v75, 0
    %v94 = vsel %vm89, %v76, 0
    %v97 = vsel %vm89, %v77, 0
    %v100 = vsel %vm89, %v78, 0
    %v103 = vsel %vm89, %v79, 0
    %v106 = vsel %vm89, %v80, 0
    %v109 = vsel %vm89, %v81, 0
    %v112 = vsel %vm89, %v82, 0
    %114 = vmatpush.msra.mxu0 0.0
    %115 = vmatpush.msra.mxu0 0.0
    %116 = vmatpush.msra.mxu0 0.0
    %117 = vmatpush.msra.mxu0 0.0
    %118 = vmatpush.msra.mxu0 0.0
    %119 = vmatpush.msra.mxu0 0.0
    %120 = vmatpush.msra.mxu0 0.0
    %121 = vmatpush.msra.mxu0 0.0
    %122 = vmatpush.msra.mxu0 0.0
    %123 = vmatpush.msra.mxu0 0.0
    %124 = vmatpush.msra.mxu0 0.0
    %125 = vmatpush.msra.mxu0 0.0
    %126 = vmatpush.msra.mxu0 0.0
    %127 = vmatpush.msra.mxu0 0.0
    %128 = vmatpush.msra.mxu0 %v84
    %129 = vmatpush.msra.mxu0 %v83
    %130 = vmatmul.f32.gmra.mxu0 %v91
    %v131 = vpop.f32.mrf.mxu0
    %v132 = vadd.f32 %v87, %v131
    %133 = vmatmul.f32.gmra.mxu0 %v94
    %v134 = vpop.f32.mrf.mxu0
    %v135 = vadd.f32 %v87, %v134
    %136 = vmatmul.f32.gmra.mxu0 %v97
    %v137 = vpop.f32.mrf.mxu0
    %v138 = vadd.f32 %v87, %v137
    %139 = vmatmul.f32.gmra.mxu0 %v100
    %v140 = vpop.f32.mrf.mxu0
    %v141 = vadd.f32 %v87, %v140
    %142 = vmatmul.f32.gmra.mxu0 %v103
    %v143 = vpop.f32.mrf.mxu0
    %v144 = vadd.f32 %v87, %v143
    %145 = vmatmul.f32.gmra.mxu0 %v106
    %v146 = vpop.f32.mrf.mxu0
    %v147 = vadd.f32 %v87, %v146
    %148 = vmatmul.f32.gmra.mxu0 %v109
    %v149 = vpop.f32.mrf.mxu0
    %v150 = vadd.f32 %v87, %v149
    %151 = vmatmul.f32.gmra.mxu0 %v112
    %v152 = vpop.f32.mrf.mxu0
    %v153 = vadd.f32 %v87, %v152
    %154 = vdwg.mxu0
    %s155 = scalar_lea.vmem %s1, 16
    %v156 = vld [vmem:[%s155] sm:$0xff]
    %v157 = vld [vmem:[%s155 + $0x8] sm:$0xff]
    %s158 = scalar_lea.vmem %s3, 1
    %v159 = vld [vmem:[%s158] sm:$0x1]
    %v161 = vperm.slane %v159, 0
    %163 = vmatpush.msra.mxu0 0.0
    %164 = vmatpush.msra.mxu0 0.0
    %165 = vmatpush.msra.mxu0 0.0
    %166 = vmatpush.msra.mxu0 0.0
    %167 = vmatpush.msra.mxu0 0.0
    %168 = vmatpush.msra.mxu0 0.0
    %169 = vmatpush.msra.mxu0 0.0
    %170 = vmatpush.msra.mxu0 0.0
    %171 = vmatpush.msra.mxu0 0.0
    %172 = vmatpush.msra.mxu0 0.0
    %173 = vmatpush.msra.mxu0 0.0
    %174 = vmatpush.msra.mxu0 0.0
    %175 = vmatpush.msra.mxu0 0.0
    %176 = vmatpush.msra.mxu0 0.0
    %177 = vmatpush.msra.mxu0 %v157
    %178 = vmatpush.msra.mxu0 %v156
    %179 = vmatmul.f32.gmra.mxu0 %v91
    %v180 = vpop.f32.mrf.mxu0
    %v181 = vadd.f32 %v161, %v180
    %182 = vmatmul.f32.gmra.mxu0 %v94
    %v183 = vpop.f32.mrf.mxu0
    %v184 = vadd.f32 %v161, %v183
    %185 = vmatmul.f32.gmra.mxu0 %v97
    %v186 = vpop.f32.mrf.mxu0
    %v187 = vadd.f32 %v161, %v186
    %188 = vmatmul.f32.gmra.mxu0 %v100
    %v189 = vpop.f32.mrf.mxu0
    %v190 = vadd.f32 %v161, %v189
    %191 = vmatmul.f32.gmra.mxu0 %v103
    %v192 = vpop.f32.mrf.mxu0
    %v193 = vadd.f32 %v161, %v192
    %194 = vmatmul.f32.gmra.mxu0 %v106
    %v195 = vpop.f32.mrf.mxu0
    %v196 = vadd.f32 %v161, %v195
    %197 = vmatmul.f32.gmra.mxu0 %v109
    %v198 = vpop.f32.mrf.mxu0
    %v199 = vadd.f32 %v161, %v198
    %200 = vmatmul.f32.gmra.mxu0 %v112
    %v201 = vpop.f32.mrf.mxu0
    %v202 = vadd.f32 %v161, %v201
    %203 = vdwg.mxu0
    %s204 = scalar_lea.vmem %s1, 32
    %v205 = vld [vmem:[%s204] sm:$0xff]
    %v206 = vld [vmem:[%s204 + $0x8] sm:$0xff]
    %s207 = scalar_lea.vmem %s3, 2
    %v208 = vld [vmem:[%s207] sm:$0x1]
    %v210 = vperm.slane %v208, 0
    %212 = vmatpush.msra.mxu0 0.0
    %213 = vmatpush.msra.mxu0 0.0
    %214 = vmatpush.msra.mxu0 0.0
    %215 = vmatpush.msra.mxu0 0.0
    %216 = vmatpush.msra.mxu0 0.0
    %217 = vmatpush.msra.mxu0 0.0
    %218 = vmatpush.msra.mxu0 0.0
    %219 = vmatpush.msra.mxu0 0.0
    %220 = vmatpush.msra.mxu0 0.0
    %221 = vmatpush.msra.mxu0 0.0
    %222 = vmatpush.msra.mxu0 0.0
    %223 = vmatpush.msra.mxu0 0.0
    %224 = vmatpush.msra.mxu0 0.0
    %225 = vmatpush.msra.mxu0 0.0
    %226 = vmatpush.msra.mxu0 %v206
    %227 = vmatpush.msra.mxu0 %v205
    %228 = vmatmul.f32.gmra.mxu0 %v91
    %v229 = vpop.f32.mrf.mxu0
    %v230 = vadd.f32 %v210, %v229
    %231 = vmatmul.f32.gmra.mxu0 %v94
    %v232 = vpop.f32.mrf.mxu0
    %v233 = vadd.f32 %v210, %v232
    %234 = vmatmul.f32.gmra.mxu0 %v97
    %v235 = vpop.f32.mrf.mxu0
    %v236 = vadd.f32 %v210, %v235
    %237 = vmatmul.f32.gmra.mxu0 %v100
    %v238 = vpop.f32.mrf.mxu0
    %v239 = vadd.f32 %v210, %v238
    %240 = vmatmul.f32.gmra.mxu0 %v103
    %v241 = vpop.f32.mrf.mxu0
    %v242 = vadd.f32 %v210, %v241
    %243 = vmatmul.f32.gmra.mxu0 %v106
    %v244 = vpop.f32.mrf.mxu0
    %v245 = vadd.f32 %v210, %v244
    %246 = vmatmul.f32.gmra.mxu0 %v109
    %v247 = vpop.f32.mrf.mxu0
    %v248 = vadd.f32 %v210, %v247
    %249 = vmatmul.f32.gmra.mxu0 %v112
    %v250 = vpop.f32.mrf.mxu0
    %v251 = vadd.f32 %v210, %v250
    %252 = vdwg.mxu0
    %v253 = vld [vmem:[%s5] sm:$0xff]
    %v254 = vld [vmem:[%s5 + $0x8] sm:$0xff]
    %v255 = vld [vmem:[%s7] sm:$0x1]
    %v257 = vperm.slane %v255, 0
    %259 = vmatpush.msra.mxu0 0.0
    %260 = vmatpush.msra.mxu0 0.0
    %261 = vmatpush.msra.mxu0 0.0
    %262 = vmatpush.msra.mxu0 0.0
    %263 = vmatpush.msra.mxu0 0.0
    %264 = vmatpush.msra.mxu0 0.0
    %265 = vmatpush.msra.mxu0 0.0
    %266 = vmatpush.msra.mxu0 0.0
    %267 = vmatpush.msra.mxu0 0.0
    %268 = vmatpush.msra.mxu0 0.0
    %269 = vmatpush.msra.mxu0 0.0
    %270 = vmatpush.msra.mxu0 0.0
    %271 = vmatpush.msra.mxu0 0.0
    %272 = vmatpush.msra.mxu0 0.0
    %273 = vmatpush.msra.mxu0 %v254
    %274 = vmatpush.msra.mxu0 %v253
    %275 = vmatmul.f32.gmra.mxu0 %v91
    %v276 = vpop.f32.mrf.mxu0
    %v277 = vadd.f32 %v257, %v276
    %278 = vmatmul.f32.gmra.mxu0 %v94
    %v279 = vpop.f32.mrf.mxu0
    %v280 = vadd.f32 %v257, %v279
    %281 = vmatmul.f32.gmra.mxu0 %v97
    %v282 = vpop.f32.mrf.mxu0
    %v283 = vadd.f32 %v257, %v282
    %284 = vmatmul.f32.gmra.mxu0 %v100
    %v285 = vpop.f32.mrf.mxu0
    %v286 = vadd.f32 %v257, %v285
    %287 = vmatmul.f32.gmra.mxu0 %v103
    %v288 = vpop.f32.mrf.mxu0
    %v289 = vadd.f32 %v257, %v288
    %290 = vmatmul.f32.gmra.mxu0 %v106
    %v291 = vpop.f32.mrf.mxu0
    %v292 = vadd.f32 %v257, %v291
    %293 = vmatmul.f32.gmra.mxu0 %v109
    %v294 = vpop.f32.mrf.mxu0
    %v295 = vadd.f32 %v257, %v294
    %296 = vmatmul.f32.gmra.mxu0 %v112
    %v297 = vpop.f32.mrf.mxu0
    %v298 = vadd.f32 %v257, %v297
    %299 = vdwg.mxu0
    %s300 = scalar_lea.vmem %s5, 16
    %v301 = vld [vmem:[%s300] sm:$0xff]
    %v302 = vld [vmem:[%s300 + $0x8] sm:$0xff]
    %s303 = scalar_lea.vmem %s7, 1
    %v304 = vld [vmem:[%s303] sm:$0x1]
    %v306 = vperm.slane %v304, 0
    %308 = vmatpush.msra.mxu0 0.0
    %309 = vmatpush.msra.mxu0 0.0
    %310 = vmatpush.msra.mxu0 0.0
    %311 = vmatpush.msra.mxu0 0.0
    %312 = vmatpush.msra.mxu0 0.0
    %313 = vmatpush.msra.mxu0 0.0
    %314 = vmatpush.msra.mxu0 0.0
    %315 = vmatpush.msra.mxu0 0.0
    %316 = vmatpush.msra.mxu0 0.0
    %317 = vmatpush.msra.mxu0 0.0
    %318 = vmatpush.msra.mxu0 0.0
    %319 = vmatpush.msra.mxu0 0.0
    %320 = vmatpush.msra.mxu0 0.0
    %321 = vmatpush.msra.mxu0 0.0
    %322 = vmatpush.msra.mxu0 %v302
    %323 = vmatpush.msra.mxu0 %v301
    %324 = vmatmul.f32.gmra.mxu0 %v91
    %v325 = vpop.f32.mrf.mxu0
    %v326 = vadd.f32 %v306, %v325
    %327 = vmatmul.f32.gmra.mxu0 %v94
    %v328 = vpop.f32.mrf.mxu0
    %v329 = vadd.f32 %v306, %v328
    %330 = vmatmul.f32.gmra.mxu0 %v97
    %v331 = vpop.f32.mrf.mxu0
    %v332 = vadd.f32 %v306, %v331
    %333 = vmatmul.f32.gmra.mxu0 %v100
    %v334 = vpop.f32.mrf.mxu0
    %v335 = vadd.f32 %v306, %v334
    %336 = vmatmul.f32.gmra.mxu0 %v103
    %v337 = vpop.f32.mrf.mxu0
    %v338 = vadd.f32 %v306, %v337
    %339 = vmatmul.f32.gmra.mxu0 %v106
    %v340 = vpop.f32.mrf.mxu0
    %v341 = vadd.f32 %v306, %v340
    %342 = vmatmul.f32.gmra.mxu0 %v109
    %v343 = vpop.f32.mrf.mxu0
    %v344 = vadd.f32 %v306, %v343
    %345 = vmatmul.f32.gmra.mxu0 %v112
    %v346 = vpop.f32.mrf.mxu0
    %v347 = vadd.f32 %v306, %v346
    %348 = vdwg.mxu0
    %s349 = scalar_lea.vmem %s5, 32
    %v350 = vld [vmem:[%s349] sm:$0xff]
    %v351 = vld [vmem:[%s349 + $0x8] sm:$0xff]
    %s352 = scalar_lea.vmem %s7, 2
    %v353 = vld [vmem:[%s352] sm:$0x1]
    %v355 = vperm.slane %v353, 0
    %357 = vmatpush.msra.mxu0 0.0
    %358 = vmatpush.msra.mxu0 0.0
    %359 = vmatpush.msra.mxu0 0.0
    %360 = vmatpush.msra.mxu0 0.0
    %361 = vmatpush.msra.mxu0 0.0
    %362 = vmatpush.msra.mxu0 0.0
    %363 = vmatpush.msra.mxu0 0.0
    %364 = vmatpush.msra.mxu0 0.0
    %365 = vmatpush.msra.mxu0 0.0
    %366 = vmatpush.msra.mxu0 0.0
    %367 = vmatpush.msra.mxu0 0.0
    %368 = vmatpush.msra.mxu0 0.0
    %369 = vmatpush.msra.mxu0 0.0
    %370 = vmatpush.msra.mxu0 0.0
    %371 = vmatpush.msra.mxu0 %v351
    %372 = vmatpush.msra.mxu0 %v350
    %373 = vmatmul.f32.gmra.mxu0 %v91
    %v374 = vpop.f32.mrf.mxu0
    %v375 = vadd.f32 %v355, %v374
    %376 = vmatmul.f32.gmra.mxu0 %v94
    %v377 = vpop.f32.mrf.mxu0
    %v378 = vadd.f32 %v355, %v377
    %379 = vmatmul.f32.gmra.mxu0 %v97
    %v380 = vpop.f32.mrf.mxu0
    %v381 = vadd.f32 %v355, %v380
    %382 = vmatmul.f32.gmra.mxu0 %v100
    %v383 = vpop.f32.mrf.mxu0
    %v384 = vadd.f32 %v355, %v383
    %385 = vmatmul.f32.gmra.mxu0 %v103
    %v386 = vpop.f32.mrf.mxu0
    %v387 = vadd.f32 %v355, %v386
    %388 = vmatmul.f32.gmra.mxu0 %v106
    %v389 = vpop.f32.mrf.mxu0
    %v390 = vadd.f32 %v355, %v389
    %391 = vmatmul.f32.gmra.mxu0 %v109
    %v392 = vpop.f32.mrf.mxu0
    %v393 = vadd.f32 %v355, %v392
    %394 = vmatmul.f32.gmra.mxu0 %v112
    %v395 = vpop.f32.mrf.mxu0
    %v396 = vadd.f32 %v355, %v395
    %397 = vdwg.mxu0
    %v398 = vld [vmem:[%s2] sm:$0xff]
    %v399 = vld [vmem:[%s2 + $0x8] sm:$0xff]
    %v400 = vld [vmem:[%s2 + $0x10] sm:$0xff]
    %v401 = vld [vmem:[%s2 + $0x18] sm:$0xff]
    %v402 = vld [vmem:[%s4] sm:$0x1]
    %v404 = vperm.slane %v402, 0
    %vm406 = vcmask 261120
    %v408 = vsel %vm406, 0.0, 0
    %410 = vmatpush.msra.mxu0 0.0
    %411 = vmatpush.msra.mxu0 0.0
    %412 = vmatpush.msra.mxu0 0.0
    %413 = vmatpush.msra.mxu0 0.0
    %414 = vmatpush.msra.mxu0 0.0
    %415 = vmatpush.msra.mxu0 0.0
    %416 = vmatpush.msra.mxu0 0.0
    %417 = vmatpush.msra.mxu0 0.0
    %418 = vmatpush.msra.mxu0 0.0
    %419 = vmatpush.msra.mxu0 0.0
    %420 = vmatpush.msra.mxu0 0.0
    %421 = vmatpush.msra.mxu0 0.0
    %422 = vmatpush.msra.mxu0 %v401
    %423 = vmatpush.msra.mxu0 %v400
    %424 = vmatpush.msra.mxu0 %v399
    %425 = vmatpush.msra.mxu0 %v398
    %426 = vmatmul.f32.gmra.mxu0 %v408
    %v427 = vpop.f32.mrf.mxu0
    %v428 = vadd.f32 %v404, %v427
    %429 = vdwg.mxu0
    %s430 = scalar_lea.vmem %s2, 32
    %v431 = vld [vmem:[%s430] sm:$0xff]
    %v432 = vld [vmem:[%s430 + $0x8] sm:$0xff]
    %v433 = vld [vmem:[%s430 + $0x10] sm:$0xff]
    %v434 = vld [vmem:[%s430 + $0x18] sm:$0xff]
    %s435 = scalar_lea.vmem %s4, 1
    %v436 = vld [vmem:[%s435] sm:$0x1]
    %v438 = vperm.slane %v436, 0
    %440 = vmatpush.msra.mxu0 0.0
    %441 = vmatpush.msra.mxu0 0.0
    %442 = vmatpush.msra.mxu0 0.0
    %443 = vmatpush.msra.mxu0 0.0
    %444 = vmatpush.msra.mxu0 0.0
    %445 = vmatpush.msra.mxu0 0.0
    %446 = vmatpush.msra.mxu0 0.0
    %447 = vmatpush.msra.mxu0 0.0
    %448 = vmatpush.msra.mxu0 0.0
    %449 = vmatpush.msra.mxu0 0.0
    %450 = vmatpush.msra.mxu0 0.0
    %451 = vmatpush.msra.mxu0 0.0
    %452 = vmatpush.msra.mxu0 %v434
    %453 = vmatpush.msra.mxu0 %v433
    %454 = vmatpush.msra.mxu0 %v432
    %455 = vmatpush.msra.mxu0 %v431
    %456 = vmatmul.f32.gmra.mxu0 %v408
    %v457 = vpop.f32.mrf.mxu0
    %v458 = vadd.f32 %v438, %v457
    %459 = vdwg.mxu0
    %s460 = scalar_lea.vmem %s2, 64
    %v461 = vld [vmem:[%s460] sm:$0xff]
    %v462 = vld [vmem:[%s460 + $0x8] sm:$0xff]
    %v463 = vld [vmem:[%s460 + $0x10] sm:$0xff]
    %v464 = vld [vmem:[%s460 + $0x18] sm:$0xff]
    %s465 = scalar_lea.vmem %s4, 2
    %v466 = vld [vmem:[%s465] sm:$0x1]
    %v468 = vperm.slane %v466, 0
    %470 = vmatpush.msra.mxu0 0.0
    %471 = vmatpush.msra.mxu0 0.0
    %472 = vmatpush.msra.mxu0 0.0
    %473 = vmatpush.msra.mxu0 0.0
    %474 = vmatpush.msra.mxu0 0.0
    %475 = vmatpush.msra.mxu0 0.0
    %476 = vmatpush.msra.mxu0 0.0
    %477 = vmatpush.msra.mxu0 0.0
    %478 = vmatpush.msra.mxu0 0.0
    %479 = vmatpush.msra.mxu0 0.0
    %480 = vmatpush.msra.mxu0 0.0
    %481 = vmatpush.msra.mxu0 0.0
    %482 = vmatpush.msra.mxu0 %v464
    %483 = vmatpush.msra.mxu0 %v463
    %484 = vmatpush.msra.mxu0 %v462
    %485 = vmatpush.msra.mxu0 %v461
    %486 = vmatmul.f32.gmra.mxu0 %v408
    %v487 = vpop.f32.mrf.mxu0
    %v488 = vadd.f32 %v468, %v487
    %489 = vdwg.mxu0
    %v490 = vadd.f32 %v132, %v428
    %v491 = vxor.u32 %v490, 2147483648
    %v492 = vmul.f32 %v491, 1.442695
    %v493 = vpow.pop %v492
    %v494 = vadd.f32 %v493, 1.0
    %v495 = vrcp.pop %v494
    %v496 = vmul.f32 %v494, %v495
    %v497 = vsub.f32 1.0, %v496
    %v498 = vmul.f32 %v495, %v497
    %v499 = vadd.f32 %v495, %v498
    %vm500 = vweird.f32 %v494
    %vm501 = vweird.f32 %v495
    %vm502 = vmor %vm500, %vm501
    %v503 = vsel %vm502, %v495, %v499
    %v504 = vand.u32 2147483647, %v494
    %vm505 = vcmp.eq.f32.partialorder %v504, 8.507059e+37
    %v506 = vand.u32 %v494, 2147483648
    %v507 = vor.u32 1.1754944e-38, %v506
    %v508 = vsel %vm505, %v507, %v503
    %v509 = vmul.f32 1.0, %v508
    %v510 = vadd.f32 %v181, %v458
    %v511 = vxor.u32 %v510, 2147483648
    %v512 = vmul.f32 %v511, 1.442695
    %v513 = vpow.pop %v512
    %v514 = vadd.f32 %v513, 1.0
    %v515 = vrcp.pop %v514
    %v516 = vmul.f32 %v514, %v515
    %v517 = vsub.f32 1.0, %v516
    %v518 = vmul.f32 %v515, %v517
    %v519 = vadd.f32 %v515, %v518
    %vm520 = vweird.f32 %v514
    %vm521 = vweird.f32 %v515
    %vm522 = vmor %vm520, %vm521
    %v523 = vsel %vm522, %v515, %v519
    %v524 = vand.u32 2147483647, %v514
    %vm525 = vcmp.eq.f32.partialorder %v524, 8.507059e+37
    %v526 = vand.u32 %v514, 2147483648
    %v527 = vor.u32 1.1754944e-38, %v526
    %v528 = vsel %vm525, %v527, %v523
    %v529 = vmul.f32 1.0, %v528
    %v530 = vmul.f32 %v509, %v488
    %v531 = vadd.f32 %v230, %v530
    %v532 = vtanh.pop %v531
    %v533 = vsub.f32 1.0, %v529
    %v534 = vmul.f32 %v533, %v532
    %v535 = vmul.f32 %v529, 0.0
    %v536 = vadd.f32 %v534, %v535
    %v537 = vld [vmem:[%s6] sm:$0xff]
    %v538 = vld [vmem:[%s6 + $0x8] sm:$0xff]
    %v539 = vld [vmem:[%s6 + $0x10] sm:$0xff]
    %v540 = vld [vmem:[%s6 + $0x18] sm:$0xff]
    %v541 = vld [vmem:[%s8] sm:$0x1]
    %v543 = vperm.slane %v541, 0
    %545 = vmatpush.msra.mxu0 0.0
    %546 = vmatpush.msra.mxu0 0.0
    %547 = vmatpush.msra.mxu0 0.0
    %548 = vmatpush.msra.mxu0 0.0
    %549 = vmatpush.msra.mxu0 0.0
    %550 = vmatpush.msra.mxu0 0.0
    %551 = vmatpush.msra.mxu0 0.0
    %552 = vmatpush.msra.mxu0 0.0
    %553 = vmatpush.msra.mxu0 0.0
    %554 = vmatpush.msra.mxu0 0.0
    %555 = vmatpush.msra.mxu0 0.0
    %556 = vmatpush.msra.mxu0 0.0
    %557 = vmatpush.msra.mxu0 %v540
    %558 = vmatpush.msra.mxu0 %v539
    %559 = vmatpush.msra.mxu0 %v538
    %560 = vmatpush.msra.mxu0 %v537
    %561 = vmatmul.f32.gmra.mxu0 %v408
    %v562 = vpop.f32.mrf.mxu0
    %v563 = vadd.f32 %v543, %v562
    %564 = vdwg.mxu0
    %s565 = scalar_lea.vmem %s6, 32
    %v566 = vld [vmem:[%s565] sm:$0xff]
    %v567 = vld [vmem:[%s565 + $0x8] sm:$0xff]
    %v568 = vld [vmem:[%s565 + $0x10] sm:$0xff]
    %v569 = vld [vmem:[%s565 + $0x18] sm:$0xff]
    %s570 = scalar_lea.vmem %s8, 1
    %v571 = vld [vmem:[%s570] sm:$0x1]
    %v573 = vperm.slane %v571, 0
    %575 = vmatpush.msra.mxu0 0.0
    %576 = vmatpush.msra.mxu0 0.0
    %577 = vmatpush.msra.mxu0 0.0
    %578 = vmatpush.msra.mxu0 0.0
    %579 = vmatpush.msra.mxu0 0.0
    %580 = vmatpush.msra.mxu0 0.0
    %581 = vmatpush.msra.mxu0 0.0
    %582 = vmatpush.msra.mxu0 0.0
    %583 = vmatpush.msra.mxu0 0.0
    %584 = vmatpush.msra.mxu0 0.0
    %585 = vmatpush.msra.mxu0 0.0
    %586 = vmatpush.msra.mxu0 0.0
    %587 = vmatpush.msra.mxu0 %v569
    %588 = vmatpush.msra.mxu0 %v568
    %589 = vmatpush.msra.mxu0 %v567
    %590 = vmatpush.msra.mxu0 %v566
    %591 = vmatmul.f32.gmra.mxu0 %v408
    %v592 = vpop.f32.mrf.mxu0
    %v593 = vadd.f32 %v573, %v592
    %594 = vdwg.mxu0
    %s595 = scalar_lea.vmem %s6, 64
    %v596 = vld [vmem:[%s595] sm:$0xff]
    %v597 = vld [vmem:[%s595 + $0x8] sm:$0xff]
    %v598 = vld [vmem:[%s595 + $0x10] sm:$0xff]
    %v599 = vld [vmem:[%s595 + $0x18] sm:$0xff]
    %s600 = scalar_lea.vmem %s8, 2
    %v601 = vld [vmem:[%s600] sm:$0x1]
    %v603 = vperm.slane %v601, 0
    %605 = vmatpush.msra.mxu0 0.0
    %606 = vmatpush.msra.mxu0 0.0
    %607 = vmatpush.msra.mxu0 0.0
    %608 = vmatpush.msra.mxu0 0.0
    %609 = vmatpush.msra.mxu0 0.0
    %610 = vmatpush.msra.mxu0 0.0
    %611 = vmatpush.msra.mxu0 0.0
    %612 = vmatpush.msra.mxu0 0.0
    %613 = vmatpush.msra.mxu0 0.0
    %614 = vmatpush.msra.mxu0 0.0
    %615 = vmatpush.msra.mxu0 0.0
    %616 = vmatpush.msra.mxu0 0.0
    %617 = vmatpush.msra.mxu0 %v599
    %618 = vmatpush.msra.mxu0 %v598
    %619 = vmatpush.msra.mxu0 %v597
    %620 = vmatpush.msra.mxu0 %v596
    %621 = vmatmul.f32.gmra.mxu0 %v408
    %v622 = vpop.f32.mrf.mxu0
    %v623 = vadd.f32 %v603, %v622
    %624 = vdwg.mxu0
    %v625 = vadd.f32 %v298, %v563
    %v626 = vxor.u32 %v625, 2147483648
    %v627 = vmul.f32 %v626, 1.442695
    %v628 = vpow.pop %v627
    %v629 = vadd.f32 %v628, 1.0
    %v630 = vrcp.pop %v629
    %v631 = vmul.f32 %v629, %v630
    %v632 = vsub.f32 1.0, %v631
    %v633 = vmul.f32 %v630, %v632
    %v634 = vadd.f32 %v630, %v633
    %vm635 = vweird.f32 %v629
    %vm636 = vweird.f32 %v630
    %vm637 = vmor %vm635, %vm636
    %v638 = vsel %vm637, %v630, %v634
    %v639 = vand.u32 2147483647, %v629
    %vm640 = vcmp.eq.f32.partialorder %v639, 8.507059e+37
    %v641 = vand.u32 %v629, 2147483648
    %v642 = vor.u32 1.1754944e-38, %v641
    %v643 = vsel %vm640, %v642, %v638
    %v644 = vmul.f32 1.0, %v643
    %v645 = vadd.f32 %v347, %v593
    %v646 = vxor.u32 %v645, 2147483648
    %v647 = vmul.f32 %v646, 1.442695
    %v648 = vpow.pop %v647
    %v649 = vadd.f32 %v648, 1.0
    %v650 = vrcp.pop %v649
    %v651 = vmul.f32 %v649, %v650
    %v652 = vsub.f32 1.0, %v651
    %v653 = vmul.f32 %v650, %v652
    %v654 = vadd.f32 %v650, %v653
    %vm655 = vweird.f32 %v649
    %vm656 = vweird.f32 %v650
    %vm657 = vmor %vm655, %vm656
    %v658 = vsel %vm657, %v650, %v654
    %v659 = vand.u32 2147483647, %v649
    %vm660 = vcmp.eq.f32.partialorder %v659, 8.507059e+37
    %v661 = vand.u32 %v649, 2147483648
    %v662 = vor.u32 1.1754944e-38, %v661
    %v663 = vsel %vm660, %v662, %v658
    %v664 = vmul.f32 1.0, %v663
    %v665 = vmul.f32 %v644, %v623
    %v666 = vadd.f32 %v396, %v665
    %v667 = vtanh.pop %v666
    %v668 = vsub.f32 1.0, %v664
    %v669 = vmul.f32 %v668, %v667
    %v670 = vmul.f32 %v664, 0.0
    %v671 = vadd.f32 %v669, %v670
    %v673 = vsel %vm406, %v536, 0
    %675 = vmatpush.msra.mxu0 0.0
    %676 = vmatpush.msra.mxu0 0.0
    %677 = vmatpush.msra.mxu0 0.0
    %678 = vmatpush.msra.mxu0 0.0
    %679 = vmatpush.msra.mxu0 0.0
    %680 = vmatpush.msra.mxu0 0.0
    %681 = vmatpush.msra.mxu0 0.0
    %682 = vmatpush.msra.mxu0 0.0
    %683 = vmatpush.msra.mxu0 0.0
    %684 = vmatpush.msra.mxu0 0.0
    %685 = vmatpush.msra.mxu0 0.0
    %686 = vmatpush.msra.mxu0 0.0
    %687 = vmatpush.msra.mxu0 %v401
    %688 = vmatpush.msra.mxu0 %v400
    %689 = vmatpush.msra.mxu0 %v399
    %690 = vmatpush.msra.mxu0 %v398
    %691 = vmatmul.f32.gmra.mxu0 %v673
    %v692 = vpop.f32.mrf.mxu0
    %v693 = vadd.f32 %v404, %v692
    %694 = vdwg.mxu0
    %695 = vmatpush.msra.mxu0 0.0
    %696 = vmatpush.msra.mxu0 0.0
    %697 = vmatpush.msra.mxu0 0.0
    %698 = vmatpush.msra.mxu0 0.0
    %699 = vmatpush.msra.mxu0 0.0
    %700 = vmatpush.msra.mxu0 0.0
    %701 = vmatpush.msra.mxu0 0.0
    %702 = vmatpush.msra.mxu0 0.0
    %703 = vmatpush.msra.mxu0 0.0
    %704 = vmatpush.msra.mxu0 0.0
    %705 = vmatpush.msra.mxu0 0.0
    %706 = vmatpush.msra.mxu0 0.0
    %707 = vmatpush.msra.mxu0 %v434
    %708 = vmatpush.msra.mxu0 %v433
    %709 = vmatpush.msra.mxu0 %v432
    %710 = vmatpush.msra.mxu0 %v431
    %711 = vmatmul.f32.gmra.mxu0 %v673
    %v712 = vpop.f32.mrf.mxu0
    %v713 = vadd.f32 %v438, %v712
    %714 = vdwg.mxu0
    %715 = vmatpush.msra.mxu0 0.0
    %716 = vmatpush.msra.mxu0 0.0
    %717 = vmatpush.msra.mxu0 0.0
    %718 = vmatpush.msra.mxu0 0.0
    %719 = vmatpush.msra.mxu0 0.0
    %720 = vmatpush.msra.mxu0 0.0
    %721 = vmatpush.msra.mxu0 0.0
    %722 = vmatpush.msra.mxu0 0.0
    %723 = vmatpush.msra.mxu0 0.0
    %724 = vmatpush.msra.mxu0 0.0
    %725 = vmatpush.msra.mxu0 0.0
    %726 = vmatpush.msra.mxu0 0.0
    %727 = vmatpush.msra.mxu0 %v464
    %728 = vmatpush.msra.mxu0 %v463
    %729 = vmatpush.msra.mxu0 %v462
    %730 = vmatpush.msra.mxu0 %v461
    %731 = vmatmul.f32.gmra.mxu0 %v673
    %v732 = vpop.f32.mrf.mxu0
    %v733 = vadd.f32 %v468, %v732
    %734 = vdwg.mxu0
    %v735 = vadd.f32 %v135, %v693
    %v736 = vxor.u32 %v735, 2147483648
    %v737 = vmul.f32 %v736, 1.442695
    %v738 = vpow.pop %v737
    %v739 = vadd.f32 %v738, 1.0
    %v740 = vrcp.pop %v739
    %v741 = vmul.f32 %v739, %v740
    %v742 = vsub.f32 1.0, %v741
    %v743 = vmul.f32 %v740, %v742
    %v744 = vadd.f32 %v740, %v743
    %vm745 = vweird.f32 %v739
    %vm746 = vweird.f32 %v740
    %vm747 = vmor %vm745, %vm746
    %v748 = vsel %vm747, %v740, %v744
    %v749 = vand.u32 2147483647, %v739
    %vm750 = vcmp.eq.f32.partialorder %v749, 8.507059e+37
    %v751 = vand.u32 %v739, 2147483648
    %v752 = vor.u32 1.1754944e-38, %v751
    %v753 = vsel %vm750, %v752, %v748
    %v754 = vmul.f32 1.0, %v753
    %v755 = vadd.f32 %v184, %v713
    %v756 = vxor.u32 %v755, 2147483648
    %v757 = vmul.f32 %v756, 1.442695
    %v758 = vpow.pop %v757
    %v759 = vadd.f32 %v758, 1.0
    %v760 = vrcp.pop %v759
    %v761 = vmul.f32 %v759, %v760
    %v762 = vsub.f32 1.0, %v761
    %v763 = vmul.f32 %v760, %v762
    %v764 = vadd.f32 %v760, %v763
    %vm765 = vweird.f32 %v759
    %vm766 = vweird.f32 %v760
    %vm767 = vmor %vm765, %vm766
    %v768 = vsel %vm767, %v760, %v764
    %v769 = vand.u32 2147483647, %v759
    %vm770 = vcmp.eq.f32.partialorder %v769, 8.507059e+37
    %v771 = vand.u32 %v759, 2147483648
    %v772 = vor.u32 1.1754944e-38, %v771
    %v773 = vsel %vm770, %v772, %v768
    %v774 = vmul.f32 1.0, %v773
    %v775 = vmul.f32 %v754, %v733
    %v776 = vadd.f32 %v233, %v775
    %v777 = vtanh.pop %v776
    %v778 = vsub.f32 1.0, %v774
    %v779 = vmul.f32 %v778, %v777
    %v780 = vmul.f32 %v774, %v536
    %v781 = vadd.f32 %v779, %v780
    %v783 = vsel %vm406, %v671, 0
    %785 = vmatpush.msra.mxu0 0.0
    %786 = vmatpush.msra.mxu0 0.0
    %787 = vmatpush.msra.mxu0 0.0
    %788 = vmatpush.msra.mxu0 0.0
    %789 = vmatpush.msra.mxu0 0.0
    %790 = vmatpush.msra.mxu0 0.0
    %791 = vmatpush.msra.mxu0 0.0
    %792 = vmatpush.msra.mxu0 0.0
    %793 = vmatpush.msra.mxu0 0.0
    %794 = vmatpush.msra.mxu0 0.0
    %795 = vmatpush.msra.mxu0 0.0
    %796 = vmatpush.msra.mxu0 0.0
    %797 = vmatpush.msra.mxu0 %v540
    %798 = vmatpush.msra.mxu0 %v539
    %799 = vmatpush.msra.mxu0 %v538
    %800 = vmatpush.msra.mxu0 %v537
    %801 = vmatmul.f32.gmra.mxu0 %v783
    %v802 = vpop.f32.mrf.mxu0
    %v803 = vadd.f32 %v543, %v802
    %804 = vdwg.mxu0
    %805 = vmatpush.msra.mxu0 0.0
    %806 = vmatpush.msra.mxu0 0.0
    %807 = vmatpush.msra.mxu0 0.0
    %808 = vmatpush.msra.mxu0 0.0
    %809 = vmatpush.msra.mxu0 0.0
    %810 = vmatpush.msra.mxu0 0.0
    %811 = vmatpush.msra.mxu0 0.0
    %812 = vmatpush.msra.mxu0 0.0
    %813 = vmatpush.msra.mxu0 0.0
    %814 = vmatpush.msra.mxu0 0.0
    %815 = vmatpush.msra.mxu0 0.0
    %816 = vmatpush.msra.mxu0 0.0
    %817 = vmatpush.msra.mxu0 %v569
    %818 = vmatpush.msra.mxu0 %v568
    %819 = vmatpush.msra.mxu0 %v567
    %820 = vmatpush.msra.mxu0 %v566
    %821 = vmatmul.f32.gmra.mxu0 %v783
    %v822 = vpop.f32.mrf.mxu0
    %v823 = vadd.f32 %v573, %v822
    %824 = vdwg.mxu0
    %825 = vmatpush.msra.mxu0 0.0
    %826 = vmatpush.msra.mxu0 0.0
    %827 = vmatpush.msra.mxu0 0.0
    %828 = vmatpush.msra.mxu0 0.0
    %829 = vmatpush.msra.mxu0 0.0
    %830 = vmatpush.msra.mxu0 0.0
    %831 = vmatpush.msra.mxu0 0.0
    %832 = vmatpush.msra.mxu0 0.0
    %833 = vmatpush.msra.mxu0 0.0
    %834 = vmatpush.msra.mxu0 0.0
    %835 = vmatpush.msra.mxu0 0.0
    %836 = vmatpush.msra.mxu0 0.0
    %837 = vmatpush.msra.mxu0 %v599
    %838 = vmatpush.msra.mxu0 %v598
    %839 = vmatpush.msra.mxu0 %v597
    %840 = vmatpush.msra.mxu0 %v596
    %841 = vmatmul.f32.gmra.mxu0 %v783
    %v842 = vpop.f32.mrf.mxu0
    %v843 = vadd.f32 %v603, %v842
    %844 = vdwg.mxu0
    %v845 = vadd.f32 %v295, %v803
    %v846 = vxor.u32 %v845, 2147483648
    %v847 = vmul.f32 %v846, 1.442695
    %v848 = vpow.pop %v847
    %v849 = vadd.f32 %v848, 1.0
    %v850 = vrcp.pop %v849
    %v851 = vmul.f32 %v849, %v850
    %v852 = vsub.f32 1.0, %v851
    %v853 = vmul.f32 %v850, %v852
    %v854 = vadd.f32 %v850, %v853
    %vm855 = vweird.f32 %v849
    %vm856 = vweird.f32 %v850
    %vm857 = vmor %vm855, %vm856
    %v858 = vsel %vm857, %v850, %v854
    %v859 = vand.u32 2147483647, %v849
    %vm860 = vcmp.eq.f32.partialorder %v859, 8.507059e+37
    %v861 = vand.u32 %v849, 2147483648
    %v862 = vor.u32 1.1754944e-38, %v861
    %v863 = vsel %vm860, %v862, %v858
    %v864 = vmul.f32 1.0, %v863
    %v865 = vadd.f32 %v344, %v823
    %v866 = vxor.u32 %v865, 2147483648
    %v867 = vmul.f32 %v866, 1.442695
    %v868 = vpow.pop %v867
    %v869 = vadd.f32 %v868, 1.0
    %v870 = vrcp.pop %v869
    %v871 = vmul.f32 %v869, %v870
    %v872 = vsub.f32 1.0, %v871
    %v873 = vmul.f32 %v870, %v872
    %v874 = vadd.f32 %v870, %v873
    %vm875 = vweird.f32 %v869
    %vm876 = vweird.f32 %v870
    %vm877 = vmor %vm875, %vm876
    %v878 = vsel %vm877, %v870, %v874
    %v879 = vand.u32 2147483647, %v869
    %vm880 = vcmp.eq.f32.partialorder %v879, 8.507059e+37
    %v881 = vand.u32 %v869, 2147483648
    %v882 = vor.u32 1.1754944e-38, %v881
    %v883 = vsel %vm880, %v882, %v878
    %v884 = vmul.f32 1.0, %v883
    %v885 = vmul.f32 %v864, %v843
    %v886 = vadd.f32 %v393, %v885
    %v887 = vtanh.pop %v886
    %v888 = vsub.f32 1.0, %v884
    %v889 = vmul.f32 %v888, %v887
    %v890 = vmul.f32 %v884, %v671
    %v891 = vadd.f32 %v889, %v890
    %v893 = vsel %vm406, %v781, 0
    %895 = vmatpush.msra.mxu0 0.0
    %896 = vmatpush.msra.mxu0 0.0
    %897 = vmatpush.msra.mxu0 0.0
    %898 = vmatpush.msra.mxu0 0.0
    %899 = vmatpush.msra.mxu0 0.0
    %900 = vmatpush.msra.mxu0 0.0
    %901 = vmatpush.msra.mxu0 0.0
    %902 = vmatpush.msra.mxu0 0.0
    %903 = vmatpush.msra.mxu0 0.0
    %904 = vmatpush.msra.mxu0 0.0
    %905 = vmatpush.msra.mxu0 0.0
    %906 = vmatpush.msra.mxu0 0.0
    %907 = vmatpush.msra.mxu0 %v401
    %908 = vmatpush.msra.mxu0 %v400
    %909 = vmatpush.msra.mxu0 %v399
    %910 = vmatpush.msra.mxu0 %v398
    %911 = vmatmul.f32.gmra.mxu0 %v893
    %v912 = vpop.f32.mrf.mxu0
    %v913 = vadd.f32 %v404, %v912
    %914 = vdwg.mxu0
    %915 = vmatpush.msra.mxu0 0.0
    %916 = vmatpush.msra.mxu0 0.0
    %917 = vmatpush.msra.mxu0 0.0
    %918 = vmatpush.msra.mxu0 0.0
    %919 = vmatpush.msra.mxu0 0.0
    %920 = vmatpush.msra.mxu0 0.0
    %921 = vmatpush.msra.mxu0 0.0
    %922 = vmatpush.msra.mxu0 0.0
    %923 = vmatpush.msra.mxu0 0.0
    %924 = vmatpush.msra.mxu0 0.0
    %925 = vmatpush.msra.mxu0 0.0
    %926 = vmatpush.msra.mxu0 0.0
    %927 = vmatpush.msra.mxu0 %v434
    %928 = vmatpush.msra.mxu0 %v433
    %929 = vmatpush.msra.mxu0 %v432
    %930 = vmatpush.msra.mxu0 %v431
    %931 = vmatmul.f32.gmra.mxu0 %v893
    %v932 = vpop.f32.mrf.mxu0
    %v933 = vadd.f32 %v438, %v932
    %934 = vdwg.mxu0
    %935 = vmatpush.msra.mxu0 0.0
    %936 = vmatpush.msra.mxu0 0.0
    %937 = vmatpush.msra.mxu0 0.0
    %938 = vmatpush.msra.mxu0 0.0
    %939 = vmatpush.msra.mxu0 0.0
    %940 = vmatpush.msra.mxu0 0.0
    %941 = vmatpush.msra.mxu0 0.0
    %942 = vmatpush.msra.mxu0 0.0
    %943 = vmatpush.msra.mxu0 0.0
    %944 = vmatpush.msra.mxu0 0.0
    %945 = vmatpush.msra.mxu0 0.0
    %946 = vmatpush.msra.mxu0 0.0
    %947 = vmatpush.msra.mxu0 %v464
    %948 = vmatpush.msra.mxu0 %v463
    %949 = vmatpush.msra.mxu0 %v462
    %950 = vmatpush.msra.mxu0 %v461
    %951 = vmatmul.f32.gmra.mxu0 %v893
    %v952 = vpop.f32.mrf.mxu0
    %v953 = vadd.f32 %v468, %v952
    %954 = vdwg.mxu0
    %v955 = vadd.f32 %v138, %v913
    %v956 = vxor.u32 %v955, 2147483648
    %v957 = vmul.f32 %v956, 1.442695
    %v958 = vpow.pop %v957
    %v959 = vadd.f32 %v958, 1.0
    %v960 = vrcp.pop %v959
    %v961 = vmul.f32 %v959, %v960
    %v962 = vsub.f32 1.0, %v961
    %v963 = vmul.f32 %v960, %v962
    %v964 = vadd.f32 %v960, %v963
    %vm965 = vweird.f32 %v959
    %vm966 = vweird.f32 %v960
    %vm967 = vmor %vm965, %vm966
    %v968 = vsel %vm967, %v960, %v964
    %v969 = vand.u32 2147483647, %v959
    %vm970 = vcmp.eq.f32.partialorder %v969, 8.507059e+37
    %v971 = vand.u32 %v959, 2147483648
    %v972 = vor.u32 1.1754944e-38, %v971
    %v973 = vsel %vm970, %v972, %v968
    %v974 = vmul.f32 1.0, %v973
    %v975 = vadd.f32 %v187, %v933
    %v976 = vxor.u32 %v975, 2147483648
    %v977 = vmul.f32 %v976, 1.442695
    %v978 = vpow.pop %v977
    %v979 = vadd.f32 %v978, 1.0
    %v980 = vrcp.pop %v979
    %v981 = vmul.f32 %v979, %v980
    %v982 = vsub.f32 1.0, %v981
    %v983 = vmul.f32 %v980, %v982
    %v984 = vadd.f32 %v980, %v983
    %vm985 = vweird.f32 %v979
    %vm986 = vweird.f32 %v980
    %vm987 = vmor %vm985, %vm986
    %v988 = vsel %vm987, %v980, %v984
    %v989 = vand.u32 2147483647, %v979
    %vm990 = vcmp.eq.f32.partialorder %v989, 8.507059e+37
    %v991 = vand.u32 %v979, 2147483648
    %v992 = vor.u32 1.1754944e-38, %v991
    %v993 = vsel %vm990, %v992, %v988
    %v994 = vmul.f32 1.0, %v993
    %v995 = vmul.f32 %v974, %v953
    %v996 = vadd.f32 %v236, %v995
    %v997 = vtanh.pop %v996
    %v998 = vsub.f32 1.0, %v994
    %v999 = vmul.f32 %v998, %v997
    %v1000 = vmul.f32 %v994, %v781
    %v1001 = vadd.f32 %v999, %v1000
    %v1003 = vsel %vm406, %v891, 0
    %1005 = vmatpush.msra.mxu0 0.0
    %1006 = vmatpush.msra.mxu0 0.0
    %1007 = vmatpush.msra.mxu0 0.0
    %1008 = vmatpush.msra.mxu0 0.0
    %1009 = vmatpush.msra.mxu0 0.0
    %1010 = vmatpush.msra.mxu0 0.0
    %1011 = vmatpush.msra.mxu0 0.0
    %1012 = vmatpush.msra.mxu0 0.0
    %1013 = vmatpush.msra.mxu0 0.0
    %1014 = vmatpush.msra.mxu0 0.0
    %1015 = vmatpush.msra.mxu0 0.0
    %1016 = vmatpush.msra.mxu0 0.0
    %1017 = vmatpush.msra.mxu0 %v540
    %1018 = vmatpush.msra.mxu0 %v539
    %1019 = vmatpush.msra.mxu0 %v538
    %1020 = vmatpush.msra.mxu0 %v537
    %1021 = vmatmul.f32.gmra.mxu0 %v1003
    %v1022 = vpop.f32.mrf.mxu0
    %v1023 = vadd.f32 %v543, %v1022
    %1024 = vdwg.mxu0
    %1025 = vmatpush.msra.mxu0 0.0
    %1026 = vmatpush.msra.mxu0 0.0
    %1027 = vmatpush.msra.mxu0 0.0
    %1028 = vmatpush.msra.mxu0 0.0
    %1029 = vmatpush.msra.mxu0 0.0
    %1030 = vmatpush.msra.mxu0 0.0
    %1031 = vmatpush.msra.mxu0 0.0
    %1032 = vmatpush.msra.mxu0 0.0
    %1033 = vmatpush.msra.mxu0 0.0
    %1034 = vmatpush.msra.mxu0 0.0
    %1035 = vmatpush.msra.mxu0 0.0
    %1036 = vmatpush.msra.mxu0 0.0
    %1037 = vmatpush.msra.mxu0 %v569
    %1038 = vmatpush.msra.mxu0 %v568
    %1039 = vmatpush.msra.mxu0 %v567
    %1040 = vmatpush.msra.mxu0 %v566
    %1041 = vmatmul.f32.gmra.mxu0 %v1003
    %v1042 = vpop.f32.mrf.mxu0
    %v1043 = vadd.f32 %v573, %v1042
    %1044 = vdwg.mxu0
    %1045 = vmatpush.msra.mxu0 0.0
    %1046 = vmatpush.msra.mxu0 0.0
    %1047 = vmatpush.msra.mxu0 0.0
    %1048 = vmatpush.msra.mxu0 0.0
    %1049 = vmatpush.msra.mxu0 0.0
    %1050 = vmatpush.msra.mxu0 0.0
    %1051 = vmatpush.msra.mxu0 0.0
    %1052 = vmatpush.msra.mxu0 0.0
    %1053 = vmatpush.msra.mxu0 0.0
    %1054 = vmatpush.msra.mxu0 0.0
    %1055 = vmatpush.msra.mxu0 0.0
    %1056 = vmatpush.msra.mxu0 0.0
    %1057 = vmatpush.msra.mxu0 %v599
    %1058 = vmatpush.msra.mxu0 %v598
    %1059 = vmatpush.msra.mxu0 %v597
    %1060 = vmatpush.msra.mxu0 %v596
    %1061 = vmatmul.f32.gmra.mxu0 %v1003
    %v1062 = vpop.f32.mrf.mxu0
    %v1063 = vadd.f32 %v603, %v1062
    %1064 = vdwg.mxu0
    %v1065 = vadd.f32 %v292, %v1023
    %v1066 = vxor.u32 %v1065, 2147483648
    %v1067 = vmul.f32 %v1066, 1.442695
    %v1068 = vpow.pop %v1067
    %v1069 = vadd.f32 %v1068, 1.0
    %v1070 = vrcp.pop %v1069
    %v1071 = vmul.f32 %v1069, %v1070
    %v1072 = vsub.f32 1.0, %v1071
    %v1073 = vmul.f32 %v1070, %v1072
    %v1074 = vadd.f32 %v1070, %v1073
    %vm1075 = vweird.f32 %v1069
    %vm1076 = vweird.f32 %v1070
    %vm1077 = vmor %vm1075, %vm1076
    %v1078 = vsel %vm1077, %v1070, %v1074
    %v1079 = vand.u32 2147483647, %v1069
    %vm1080 = vcmp.eq.f32.partialorder %v1079, 8.507059e+37
    %v1081 = vand.u32 %v1069, 2147483648
    %v1082 = vor.u32 1.1754944e-38, %v1081
    %v1083 = vsel %vm1080, %v1082, %v1078
    %v1084 = vmul.f32 1.0, %v1083
    %v1085 = vadd.f32 %v341, %v1043
    %v1086 = vxor.u32 %v1085, 2147483648
    %v1087 = vmul.f32 %v1086, 1.442695
    %v1088 = vpow.pop %v1087
    %v1089 = vadd.f32 %v1088, 1.0
    %v1090 = vrcp.pop %v1089
    %v1091 = vmul.f32 %v1089, %v1090
    %v1092 = vsub.f32 1.0, %v1091
    %v1093 = vmul.f32 %v1090, %v1092
    %v1094 = vadd.f32 %v1090, %v1093
    %vm1095 = vweird.f32 %v1089
    %vm1096 = vweird.f32 %v1090
    %vm1097 = vmor %vm1095, %vm1096
    %v1098 = vsel %vm1097, %v1090, %v1094
    %v1099 = vand.u32 2147483647, %v1089
    %vm1100 = vcmp.eq.f32.partialorder %v1099, 8.507059e+37
    %v1101 = vand.u32 %v1089, 2147483648
    %v1102 = vor.u32 1.1754944e-38, %v1101
    %v1103 = vsel %vm1100, %v1102, %v1098
    %v1104 = vmul.f32 1.0, %v1103
    %v1105 = vmul.f32 %v1084, %v1063
    %v1106 = vadd.f32 %v390, %v1105
    %v1107 = vtanh.pop %v1106
    %v1108 = vsub.f32 1.0, %v1104
    %v1109 = vmul.f32 %v1108, %v1107
    %v1110 = vmul.f32 %v1104, %v891
    %v1111 = vadd.f32 %v1109, %v1110
    %v1113 = vsel %vm406, %v1001, 0
    %1115 = vmatpush.msra.mxu0 0.0
    %1116 = vmatpush.msra.mxu0 0.0
    %1117 = vmatpush.msra.mxu0 0.0
    %1118 = vmatpush.msra.mxu0 0.0
    %1119 = vmatpush.msra.mxu0 0.0
    %1120 = vmatpush.msra.mxu0 0.0
    %1121 = vmatpush.msra.mxu0 0.0
    %1122 = vmatpush.msra.mxu0 0.0
    %1123 = vmatpush.msra.mxu0 0.0
    %1124 = vmatpush.msra.mxu0 0.0
    %1125 = vmatpush.msra.mxu0 0.0
    %1126 = vmatpush.msra.mxu0 0.0
    %1127 = vmatpush.msra.mxu0 %v401
    %1128 = vmatpush.msra.mxu0 %v400
    %1129 = vmatpush.msra.mxu0 %v399
    %1130 = vmatpush.msra.mxu0 %v398
    %1131 = vmatmul.f32.gmra.mxu0 %v1113
    %v1132 = vpop.f32.mrf.mxu0
    %v1133 = vadd.f32 %v404, %v1132
    %1134 = vdwg.mxu0
    %1135 = vmatpush.msra.mxu0 0.0
    %1136 = vmatpush.msra.mxu0 0.0
    %1137 = vmatpush.msra.mxu0 0.0
    %1138 = vmatpush.msra.mxu0 0.0
    %1139 = vmatpush.msra.mxu0 0.0
    %1140 = vmatpush.msra.mxu0 0.0
    %1141 = vmatpush.msra.mxu0 0.0
    %1142 = vmatpush.msra.mxu0 0.0
    %1143 = vmatpush.msra.mxu0 0.0
    %1144 = vmatpush.msra.mxu0 0.0
    %1145 = vmatpush.msra.mxu0 0.0
    %1146 = vmatpush.msra.mxu0 0.0
    %1147 = vmatpush.msra.mxu0 %v434
    %1148 = vmatpush.msra.mxu0 %v433
    %1149 = vmatpush.msra.mxu0 %v432
    %1150 = vmatpush.msra.mxu0 %v431
    %1151 = vmatmul.f32.gmra.mxu0 %v1113
    %v1152 = vpop.f32.mrf.mxu0
    %v1153 = vadd.f32 %v438, %v1152
    %1154 = vdwg.mxu0
    %1155 = vmatpush.msra.mxu0 0.0
    %1156 = vmatpush.msra.mxu0 0.0
    %1157 = vmatpush.msra.mxu0 0.0
    %1158 = vmatpush.msra.mxu0 0.0
    %1159 = vmatpush.msra.mxu0 0.0
    %1160 = vmatpush.msra.mxu0 0.0
    %1161 = vmatpush.msra.mxu0 0.0
    %1162 = vmatpush.msra.mxu0 0.0
    %1163 = vmatpush.msra.mxu0 0.0
    %1164 = vmatpush.msra.mxu0 0.0
    %1165 = vmatpush.msra.mxu0 0.0
    %1166 = vmatpush.msra.mxu0 0.0
    %1167 = vmatpush.msra.mxu0 %v464
    %1168 = vmatpush.msra.mxu0 %v463
    %1169 = vmatpush.msra.mxu0 %v462
    %1170 = vmatpush.msra.mxu0 %v461
    %1171 = vmatmul.f32.gmra.mxu0 %v1113
    %v1172 = vpop.f32.mrf.mxu0
    %v1173 = vadd.f32 %v468, %v1172
    %1174 = vdwg.mxu0
    %v1175 = vadd.f32 %v141, %v1133
    %v1176 = vxor.u32 %v1175, 2147483648
    %v1177 = vmul.f32 %v1176, 1.442695
    %v1178 = vpow.pop %v1177
    %v1179 = vadd.f32 %v1178, 1.0
    %v1180 = vrcp.pop %v1179
    %v1181 = vmul.f32 %v1179, %v1180
    %v1182 = vsub.f32 1.0, %v1181
    %v1183 = vmul.f32 %v1180, %v1182
    %v1184 = vadd.f32 %v1180, %v1183
    %vm1185 = vweird.f32 %v1179
    %vm1186 = vweird.f32 %v1180
    %vm1187 = vmor %vm1185, %vm1186
    %v1188 = vsel %vm1187, %v1180, %v1184
    %v1189 = vand.u32 2147483647, %v1179
    %vm1190 = vcmp.eq.f32.partialorder %v1189, 8.507059e+37
    %v1191 = vand.u32 %v1179, 2147483648
    %v1192 = vor.u32 1.1754944e-38, %v1191
    %v1193 = vsel %vm1190, %v1192, %v1188
    %v1194 = vmul.f32 1.0, %v1193
    %v1195 = vadd.f32 %v190, %v1153
    %v1196 = vxor.u32 %v1195, 2147483648
    %v1197 = vmul.f32 %v1196, 1.442695
    %v1198 = vpow.pop %v1197
    %v1199 = vadd.f32 %v1198, 1.0
    %v1200 = vrcp.pop %v1199
    %v1201 = vmul.f32 %v1199, %v1200
    %v1202 = vsub.f32 1.0, %v1201
    %v1203 = vmul.f32 %v1200, %v1202
    %v1204 = vadd.f32 %v1200, %v1203
    %vm1205 = vweird.f32 %v1199
    %vm1206 = vweird.f32 %v1200
    %vm1207 = vmor %vm1205, %vm1206
    %v1208 = vsel %vm1207, %v1200, %v1204
    %v1209 = vand.u32 2147483647, %v1199
    %vm1210 = vcmp.eq.f32.partialorder %v1209, 8.507059e+37
    %v1211 = vand.u32 %v1199, 2147483648
    %v1212 = vor.u32 1.1754944e-38, %v1211
    %v1213 = vsel %vm1210, %v1212, %v1208
    %v1214 = vmul.f32 1.0, %v1213
    %v1215 = vmul.f32 %v1194, %v1173
    %v1216 = vadd.f32 %v239, %v1215
    %v1217 = vtanh.pop %v1216
    %v1218 = vsub.f32 1.0, %v1214
    %v1219 = vmul.f32 %v1218, %v1217
    %v1220 = vmul.f32 %v1214, %v1001
    %v1221 = vadd.f32 %v1219, %v1220
    %v1223 = vsel %vm406, %v1111, 0
    %1225 = vmatpush.msra.mxu0 0.0
    %1226 = vmatpush.msra.mxu0 0.0
    %1227 = vmatpush.msra.mxu0 0.0
    %1228 = vmatpush.msra.mxu0 0.0
    %1229 = vmatpush.msra.mxu0 0.0
    %1230 = vmatpush.msra.mxu0 0.0
    %1231 = vmatpush.msra.mxu0 0.0
    %1232 = vmatpush.msra.mxu0 0.0
    %1233 = vmatpush.msra.mxu0 0.0
    %1234 = vmatpush.msra.mxu0 0.0
    %1235 = vmatpush.msra.mxu0 0.0
    %1236 = vmatpush.msra.mxu0 0.0
    %1237 = vmatpush.msra.mxu0 %v540
    %1238 = vmatpush.msra.mxu0 %v539
    %1239 = vmatpush.msra.mxu0 %v538
    %1240 = vmatpush.msra.mxu0 %v537
    %1241 = vmatmul.f32.gmra.mxu0 %v1223
    %v1242 = vpop.f32.mrf.mxu0
    %v1243 = vadd.f32 %v543, %v1242
    %1244 = vdwg.mxu0
    %1245 = vmatpush.msra.mxu0 0.0
    %1246 = vmatpush.msra.mxu0 0.0
    %1247 = vmatpush.msra.mxu0 0.0
    %1248 = vmatpush.msra.mxu0 0.0
    %1249 = vmatpush.msra.mxu0 0.0
    %1250 = vmatpush.msra.mxu0 0.0
    %1251 = vmatpush.msra.mxu0 0.0
    %1252 = vmatpush.msra.mxu0 0.0
    %1253 = vmatpush.msra.mxu0 0.0
    %1254 = vmatpush.msra.mxu0 0.0
    %1255 = vmatpush.msra.mxu0 0.0
    %1256 = vmatpush.msra.mxu0 0.0
    %1257 = vmatpush.msra.mxu0 %v569
    %1258 = vmatpush.msra.mxu0 %v568
    %1259 = vmatpush.msra.mxu0 %v567
    %1260 = vmatpush.msra.mxu0 %v566
    %1261 = vmatmul.f32.gmra.mxu0 %v1223
    %v1262 = vpop.f32.mrf.mxu0
    %v1263 = vadd.f32 %v573, %v1262
    %1264 = vdwg.mxu0
    %1265 = vmatpush.msra.mxu0 0.0
    %1266 = vmatpush.msra.mxu0 0.0
    %1267 = vmatpush.msra.mxu0 0.0
    %1268 = vmatpush.msra.mxu0 0.0
    %1269 = vmatpush.msra.mxu0 0.0
    %1270 = vmatpush.msra.mxu0 0.0
    %1271 = vmatpush.msra.mxu0 0.0
    %1272 = vmatpush.msra.mxu0 0.0
    %1273 = vmatpush.msra.mxu0 0.0
    %1274 = vmatpush.msra.mxu0 0.0
    %1275 = vmatpush.msra.mxu0 0.0
    %1276 = vmatpush.msra.mxu0 0.0
    %1277 = vmatpush.msra.mxu0 %v599
    %1278 = vmatpush.msra.mxu0 %v598
    %1279 = vmatpush.msra.mxu0 %v597
    %1280 = vmatpush.msra.mxu0 %v596
    %1281 = vmatmul.f32.gmra.mxu0 %v1223
    %v1282 = vpop.f32.mrf.mxu0
    %v1283 = vadd.f32 %v603, %v1282
    %1284 = vdwg.mxu0
    %v1285 = vadd.f32 %v289, %v1243
    %v1286 = vxor.u32 %v1285, 2147483648
    %v1287 = vmul.f32 %v1286, 1.442695
    %v1288 = vpow.pop %v1287
    %v1289 = vadd.f32 %v1288, 1.0
    %v1290 = vrcp.pop %v1289
    %v1291 = vmul.f32 %v1289, %v1290
    %v1292 = vsub.f32 1.0, %v1291
    %v1293 = vmul.f32 %v1290, %v1292
    %v1294 = vadd.f32 %v1290, %v1293
    %vm1295 = vweird.f32 %v1289
    %vm1296 = vweird.f32 %v1290
    %vm1297 = vmor %vm1295, %vm1296
    %v1298 = vsel %vm1297, %v1290, %v1294
    %v1299 = vand.u32 2147483647, %v1289
    %vm1300 = vcmp.eq.f32.partialorder %v1299, 8.507059e+37
    %v1301 = vand.u32 %v1289, 2147483648
    %v1302 = vor.u32 1.1754944e-38, %v1301
    %v1303 = vsel %vm1300, %v1302, %v1298
    %v1304 = vmul.f32 1.0, %v1303
    %v1305 = vadd.f32 %v338, %v1263
    %v1306 = vxor.u32 %v1305, 2147483648
    %v1307 = vmul.f32 %v1306, 1.442695
    %v1308 = vpow.pop %v1307
    %v1309 = vadd.f32 %v1308, 1.0
    %v1310 = vrcp.pop %v1309
    %v1311 = vmul.f32 %v1309, %v1310
    %v1312 = vsub.f32 1.0, %v1311
    %v1313 = vmul.f32 %v1310, %v1312
    %v1314 = vadd.f32 %v1310, %v1313
    %vm1315 = vweird.f32 %v1309
    %vm1316 = vweird.f32 %v1310
    %vm1317 = vmor %vm1315, %vm1316
    %v1318 = vsel %vm1317, %v1310, %v1314
    %v1319 = vand.u32 2147483647, %v1309
    %vm1320 = vcmp.eq.f32.partialorder %v1319, 8.507059e+37
    %v1321 = vand.u32 %v1309, 2147483648
    %v1322 = vor.u32 1.1754944e-38, %v1321
    %v1323 = vsel %vm1320, %v1322, %v1318
    %v1324 = vmul.f32 1.0, %v1323
    %v1325 = vmul.f32 %v1304, %v1283
    %v1326 = vadd.f32 %v387, %v1325
    %v1327 = vtanh.pop %v1326
    %v1328 = vsub.f32 1.0, %v1324
    %v1329 = vmul.f32 %v1328, %v1327
    %v1330 = vmul.f32 %v1324, %v1111
    %v1331 = vadd.f32 %v1329, %v1330
    %v1333 = vsel %vm406, %v1221, 0
    %1335 = vmatpush.msra.mxu0 0.0
    %1336 = vmatpush.msra.mxu0 0.0
    %1337 = vmatpush.msra.mxu0 0.0
    %1338 = vmatpush.msra.mxu0 0.0
    %1339 = vmatpush.msra.mxu0 0.0
    %1340 = vmatpush.msra.mxu0 0.0
    %1341 = vmatpush.msra.mxu0 0.0
    %1342 = vmatpush.msra.mxu0 0.0
    %1343 = vmatpush.msra.mxu0 0.0
    %1344 = vmatpush.msra.mxu0 0.0
    %1345 = vmatpush.msra.mxu0 0.0
    %1346 = vmatpush.msra.mxu0 0.0
    %1347 = vmatpush.msra.mxu0 %v401
    %1348 = vmatpush.msra.mxu0 %v400
    %1349 = vmatpush.msra.mxu0 %v399
    %1350 = vmatpush.msra.mxu0 %v398
    %1351 = vmatmul.f32.gmra.mxu0 %v1333
    %v1352 = vpop.f32.mrf.mxu0
    %v1353 = vadd.f32 %v404, %v1352
    %1354 = vdwg.mxu0
    %1355 = vmatpush.msra.mxu0 0.0
    %1356 = vmatpush.msra.mxu0 0.0
    %1357 = vmatpush.msra.mxu0 0.0
    %1358 = vmatpush.msra.mxu0 0.0
    %1359 = vmatpush.msra.mxu0 0.0
    %1360 = vmatpush.msra.mxu0 0.0
    %1361 = vmatpush.msra.mxu0 0.0
    %1362 = vmatpush.msra.mxu0 0.0
    %1363 = vmatpush.msra.mxu0 0.0
    %1364 = vmatpush.msra.mxu0 0.0
    %1365 = vmatpush.msra.mxu0 0.0
    %1366 = vmatpush.msra.mxu0 0.0
    %1367 = vmatpush.msra.mxu0 %v434
    %1368 = vmatpush.msra.mxu0 %v433
    %1369 = vmatpush.msra.mxu0 %v432
    %1370 = vmatpush.msra.mxu0 %v431
    %1371 = vmatmul.f32.gmra.mxu0 %v1333
    %v1372 = vpop.f32.mrf.mxu0
    %v1373 = vadd.f32 %v438, %v1372
    %1374 = vdwg.mxu0
    %1375 = vmatpush.msra.mxu0 0.0
    %1376 = vmatpush.msra.mxu0 0.0
    %1377 = vmatpush.msra.mxu0 0.0
    %1378 = vmatpush.msra.mxu0 0.0
    %1379 = vmatpush.msra.mxu0 0.0
    %1380 = vmatpush.msra.mxu0 0.0
    %1381 = vmatpush.msra.mxu0 0.0
    %1382 = vmatpush.msra.mxu0 0.0
    %1383 = vmatpush.msra.mxu0 0.0
    %1384 = vmatpush.msra.mxu0 0.0
    %1385 = vmatpush.msra.mxu0 0.0
    %1386 = vmatpush.msra.mxu0 0.0
    %1387 = vmatpush.msra.mxu0 %v464
    %1388 = vmatpush.msra.mxu0 %v463
    %1389 = vmatpush.msra.mxu0 %v462
    %1390 = vmatpush.msra.mxu0 %v461
    %1391 = vmatmul.f32.gmra.mxu0 %v1333
    %v1392 = vpop.f32.mrf.mxu0
    %v1393 = vadd.f32 %v468, %v1392
    %1394 = vdwg.mxu0
    %v1395 = vadd.f32 %v144, %v1353
    %v1396 = vxor.u32 %v1395, 2147483648
    %v1397 = vmul.f32 %v1396, 1.442695
    %v1398 = vpow.pop %v1397
    %v1399 = vadd.f32 %v1398, 1.0
    %v1400 = vrcp.pop %v1399
    %v1401 = vmul.f32 %v1399, %v1400
    %v1402 = vsub.f32 1.0, %v1401
    %v1403 = vmul.f32 %v1400, %v1402
    %v1404 = vadd.f32 %v1400, %v1403
    %vm1405 = vweird.f32 %v1399
    %vm1406 = vweird.f32 %v1400
    %vm1407 = vmor %vm1405, %vm1406
    %v1408 = vsel %vm1407, %v1400, %v1404
    %v1409 = vand.u32 2147483647, %v1399
    %vm1410 = vcmp.eq.f32.partialorder %v1409, 8.507059e+37
    %v1411 = vand.u32 %v1399, 2147483648
    %v1412 = vor.u32 1.1754944e-38, %v1411
    %v1413 = vsel %vm1410, %v1412, %v1408
    %v1414 = vmul.f32 1.0, %v1413
    %v1415 = vadd.f32 %v193, %v1373
    %v1416 = vxor.u32 %v1415, 2147483648
    %v1417 = vmul.f32 %v1416, 1.442695
    %v1418 = vpow.pop %v1417
    %v1419 = vadd.f32 %v1418, 1.0
    %v1420 = vrcp.pop %v1419
    %v1421 = vmul.f32 %v1419, %v1420
    %v1422 = vsub.f32 1.0, %v1421
    %v1423 = vmul.f32 %v1420, %v1422
    %v1424 = vadd.f32 %v1420, %v1423
    %vm1425 = vweird.f32 %v1419
    %vm1426 = vweird.f32 %v1420
    %vm1427 = vmor %vm1425, %vm1426
    %v1428 = vsel %vm1427, %v1420, %v1424
    %v1429 = vand.u32 2147483647, %v1419
    %vm1430 = vcmp.eq.f32.partialorder %v1429, 8.507059e+37
    %v1431 = vand.u32 %v1419, 2147483648
    %v1432 = vor.u32 1.1754944e-38, %v1431
    %v1433 = vsel %vm1430, %v1432, %v1428
    %v1434 = vmul.f32 1.0, %v1433
    %v1435 = vmul.f32 %v1414, %v1393
    %v1436 = vadd.f32 %v242, %v1435
    %v1437 = vtanh.pop %v1436
    %v1438 = vsub.f32 1.0, %v1434
    %v1439 = vmul.f32 %v1438, %v1437
    %v1440 = vmul.f32 %v1434, %v1221
    %v1441 = vadd.f32 %v1439, %v1440
    %v1443 = vsel %vm406, %v1331, 0
    %1445 = vmatpush.msra.mxu0 0.0
    %1446 = vmatpush.msra.mxu0 0.0
    %1447 = vmatpush.msra.mxu0 0.0
    %1448 = vmatpush.msra.mxu0 0.0
    %1449 = vmatpush.msra.mxu0 0.0
    %1450 = vmatpush.msra.mxu0 0.0
    %1451 = vmatpush.msra.mxu0 0.0
    %1452 = vmatpush.msra.mxu0 0.0
    %1453 = vmatpush.msra.mxu0 0.0
    %1454 = vmatpush.msra.mxu0 0.0
    %1455 = vmatpush.msra.mxu0 0.0
    %1456 = vmatpush.msra.mxu0 0.0
    %1457 = vmatpush.msra.mxu0 %v540
    %1458 = vmatpush.msra.mxu0 %v539
    %1459 = vmatpush.msra.mxu0 %v538
    %1460 = vmatpush.msra.mxu0 %v537
    %1461 = vmatmul.f32.gmra.mxu0 %v1443
    %v1462 = vpop.f32.mrf.mxu0
    %v1463 = vadd.f32 %v543, %v1462
    %1464 = vdwg.mxu0
    %1465 = vmatpush.msra.mxu0 0.0
    %1466 = vmatpush.msra.mxu0 0.0
    %1467 = vmatpush.msra.mxu0 0.0
    %1468 = vmatpush.msra.mxu0 0.0
    %1469 = vmatpush.msra.mxu0 0.0
    %1470 = vmatpush.msra.mxu0 0.0
    %1471 = vmatpush.msra.mxu0 0.0
    %1472 = vmatpush.msra.mxu0 0.0
    %1473 = vmatpush.msra.mxu0 0.0
    %1474 = vmatpush.msra.mxu0 0.0
    %1475 = vmatpush.msra.mxu0 0.0
    %1476 = vmatpush.msra.mxu0 0.0
    %1477 = vmatpush.msra.mxu0 %v569
    %1478 = vmatpush.msra.mxu0 %v568
    %1479 = vmatpush.msra.mxu0 %v567
    %1480 = vmatpush.msra.mxu0 %v566
    %1481 = vmatmul.f32.gmra.mxu0 %v1443
    %v1482 = vpop.f32.mrf.mxu0
    %v1483 = vadd.f32 %v573, %v1482
    %1484 = vdwg.mxu0
    %1485 = vmatpush.msra.mxu0 0.0
    %1486 = vmatpush.msra.mxu0 0.0
    %1487 = vmatpush.msra.mxu0 0.0
    %1488 = vmatpush.msra.mxu0 0.0
    %1489 = vmatpush.msra.mxu0 0.0
    %1490 = vmatpush.msra.mxu0 0.0
    %1491 = vmatpush.msra.mxu0 0.0
    %1492 = vmatpush.msra.mxu0 0.0
    %1493 = vmatpush.msra.mxu0 0.0
    %1494 = vmatpush.msra.mxu0 0.0
    %1495 = vmatpush.msra.mxu0 0.0
    %1496 = vmatpush.msra.mxu0 0.0
    %1497 = vmatpush.msra.mxu0 %v599
    %1498 = vmatpush.msra.mxu0 %v598
    %1499 = vmatpush.msra.mxu0 %v597
    %1500 = vmatpush.msra.mxu0 %v596
    %1501 = vmatmul.f32.gmra.mxu0 %v1443
    %v1502 = vpop.f32.mrf.mxu0
    %v1503 = vadd.f32 %v603, %v1502
    %1504 = vdwg.mxu0
    %v1505 = vadd.f32 %v286, %v1463
    %v1506 = vxor.u32 %v1505, 2147483648
    %v1507 = vmul.f32 %v1506, 1.442695
    %v1508 = vpow.pop %v1507
    %v1509 = vadd.f32 %v1508, 1.0
    %v1510 = vrcp.pop %v1509
    %v1511 = vmul.f32 %v1509, %v1510
    %v1512 = vsub.f32 1.0, %v1511
    %v1513 = vmul.f32 %v1510, %v1512
    %v1514 = vadd.f32 %v1510, %v1513
    %vm1515 = vweird.f32 %v1509
    %vm1516 = vweird.f32 %v1510
    %vm1517 = vmor %vm1515, %vm1516
    %v1518 = vsel %vm1517, %v1510, %v1514
    %v1519 = vand.u32 2147483647, %v1509
    %vm1520 = vcmp.eq.f32.partialorder %v1519, 8.507059e+37
    %v1521 = vand.u32 %v1509, 2147483648
    %v1522 = vor.u32 1.1754944e-38, %v1521
    %v1523 = vsel %vm1520, %v1522, %v1518
    %v1524 = vmul.f32 1.0, %v1523
    %v1525 = vadd.f32 %v335, %v1483
    %v1526 = vxor.u32 %v1525, 2147483648
    %v1527 = vmul.f32 %v1526, 1.442695
    %v1528 = vpow.pop %v1527
    %v1529 = vadd.f32 %v1528, 1.0
    %v1530 = vrcp.pop %v1529
    %v1531 = vmul.f32 %v1529, %v1530
    %v1532 = vsub.f32 1.0, %v1531
    %v1533 = vmul.f32 %v1530, %v1532
    %v1534 = vadd.f32 %v1530, %v1533
    %vm1535 = vweird.f32 %v1529
    %vm1536 = vweird.f32 %v1530
    %vm1537 = vmor %vm1535, %vm1536
    %v1538 = vsel %vm1537, %v1530, %v1534
    %v1539 = vand.u32 2147483647, %v1529
    %vm1540 = vcmp.eq.f32.partialorder %v1539, 8.507059e+37
    %v1541 = vand.u32 %v1529, 2147483648
    %v1542 = vor.u32 1.1754944e-38, %v1541
    %v1543 = vsel %vm1540, %v1542, %v1538
    %v1544 = vmul.f32 1.0, %v1543
    %v1545 = vmul.f32 %v1524, %v1503
    %v1546 = vadd.f32 %v384, %v1545
    %v1547 = vtanh.pop %v1546
    %v1548 = vsub.f32 1.0, %v1544
    %v1549 = vmul.f32 %v1548, %v1547
    %v1550 = vmul.f32 %v1544, %v1331
    %v1551 = vadd.f32 %v1549, %v1550
    %v1553 = vsel %vm406, %v1441, 0
    %1555 = vmatpush.msra.mxu0 0.0
    %1556 = vmatpush.msra.mxu0 0.0
    %1557 = vmatpush.msra.mxu0 0.0
    %1558 = vmatpush.msra.mxu0 0.0
    %1559 = vmatpush.msra.mxu0 0.0
    %1560 = vmatpush.msra.mxu0 0.0
    %1561 = vmatpush.msra.mxu0 0.0
    %1562 = vmatpush.msra.mxu0 0.0
    %1563 = vmatpush.msra.mxu0 0.0
    %1564 = vmatpush.msra.mxu0 0.0
    %1565 = vmatpush.msra.mxu0 0.0
    %1566 = vmatpush.msra.mxu0 0.0
    %1567 = vmatpush.msra.mxu0 %v401
    %1568 = vmatpush.msra.mxu0 %v400
    %1569 = vmatpush.msra.mxu0 %v399
    %1570 = vmatpush.msra.mxu0 %v398
    %1571 = vmatmul.f32.gmra.mxu0 %v1553
    %v1572 = vpop.f32.mrf.mxu0
    %v1573 = vadd.f32 %v404, %v1572
    %1574 = vdwg.mxu0
    %1575 = vmatpush.msra.mxu0 0.0
    %1576 = vmatpush.msra.mxu0 0.0
    %1577 = vmatpush.msra.mxu0 0.0
    %1578 = vmatpush.msra.mxu0 0.0
    %1579 = vmatpush.msra.mxu0 0.0
    %1580 = vmatpush.msra.mxu0 0.0
    %1581 = vmatpush.msra.mxu0 0.0
    %1582 = vmatpush.msra.mxu0 0.0
    %1583 = vmatpush.msra.mxu0 0.0
    %1584 = vmatpush.msra.mxu0 0.0
    %1585 = vmatpush.msra.mxu0 0.0
    %1586 = vmatpush.msra.mxu0 0.0
    %1587 = vmatpush.msra.mxu0 %v434
    %1588 = vmatpush.msra.mxu0 %v433
    %1589 = vmatpush.msra.mxu0 %v432
    %1590 = vmatpush.msra.mxu0 %v431
    %1591 = vmatmul.f32.gmra.mxu0 %v1553
    %v1592 = vpop.f32.mrf.mxu0
    %v1593 = vadd.f32 %v438, %v1592
    %1594 = vdwg.mxu0
    %1595 = vmatpush.msra.mxu0 0.0
    %1596 = vmatpush.msra.mxu0 0.0
    %1597 = vmatpush.msra.mxu0 0.0
    %1598 = vmatpush.msra.mxu0 0.0
    %1599 = vmatpush.msra.mxu0 0.0
    %1600 = vmatpush.msra.mxu0 0.0
    %1601 = vmatpush.msra.mxu0 0.0
    %1602 = vmatpush.msra.mxu0 0.0
    %1603 = vmatpush.msra.mxu0 0.0
    %1604 = vmatpush.msra.mxu0 0.0
    %1605 = vmatpush.msra.mxu0 0.0
    %1606 = vmatpush.msra.mxu0 0.0
    %1607 = vmatpush.msra.mxu0 %v464
    %1608 = vmatpush.msra.mxu0 %v463
    %1609 = vmatpush.msra.mxu0 %v462
    %1610 = vmatpush.msra.mxu0 %v461
    %1611 = vmatmul.f32.gmra.mxu0 %v1553
    %v1612 = vpop.f32.mrf.mxu0
    %v1613 = vadd.f32 %v468, %v1612
    %1614 = vdwg.mxu0
    %v1615 = vadd.f32 %v147, %v1573
    %v1616 = vxor.u32 %v1615, 2147483648
    %v1617 = vmul.f32 %v1616, 1.442695
    %v1618 = vpow.pop %v1617
    %v1619 = vadd.f32 %v1618, 1.0
    %v1620 = vrcp.pop %v1619
    %v1621 = vmul.f32 %v1619, %v1620
    %v1622 = vsub.f32 1.0, %v1621
    %v1623 = vmul.f32 %v1620, %v1622
    %v1624 = vadd.f32 %v1620, %v1623
    %vm1625 = vweird.f32 %v1619
    %vm1626 = vweird.f32 %v1620
    %vm1627 = vmor %vm1625, %vm1626
    %v1628 = vsel %vm1627, %v1620, %v1624
    %v1629 = vand.u32 2147483647, %v1619
    %vm1630 = vcmp.eq.f32.partialorder %v1629, 8.507059e+37
    %v1631 = vand.u32 %v1619, 2147483648
    %v1632 = vor.u32 1.1754944e-38, %v1631
    %v1633 = vsel %vm1630, %v1632, %v1628
    %v1634 = vmul.f32 1.0, %v1633
    %v1635 = vadd.f32 %v196, %v1593
    %v1636 = vxor.u32 %v1635, 2147483648
    %v1637 = vmul.f32 %v1636, 1.442695
    %v1638 = vpow.pop %v1637
    %v1639 = vadd.f32 %v1638, 1.0
    %v1640 = vrcp.pop %v1639
    %v1641 = vmul.f32 %v1639, %v1640
    %v1642 = vsub.f32 1.0, %v1641
    %v1643 = vmul.f32 %v1640, %v1642
    %v1644 = vadd.f32 %v1640, %v1643
    %vm1645 = vweird.f32 %v1639
    %vm1646 = vweird.f32 %v1640
    %vm1647 = vmor %vm1645, %vm1646
    %v1648 = vsel %vm1647, %v1640, %v1644
    %v1649 = vand.u32 2147483647, %v1639
    %vm1650 = vcmp.eq.f32.partialorder %v1649, 8.507059e+37
    %v1651 = vand.u32 %v1639, 2147483648
    %v1652 = vor.u32 1.1754944e-38, %v1651
    %v1653 = vsel %vm1650, %v1652, %v1648
    %v1654 = vmul.f32 1.0, %v1653
    %v1655 = vmul.f32 %v1634, %v1613
    %v1656 = vadd.f32 %v245, %v1655
    %v1657 = vtanh.pop %v1656
    %v1658 = vsub.f32 1.0, %v1654
    %v1659 = vmul.f32 %v1658, %v1657
    %v1660 = vmul.f32 %v1654, %v1441
    %v1661 = vadd.f32 %v1659, %v1660
    %v1663 = vsel %vm406, %v1551, 0
    %1665 = vmatpush.msra.mxu0 0.0
    %1666 = vmatpush.msra.mxu0 0.0
    %1667 = vmatpush.msra.mxu0 0.0
    %1668 = vmatpush.msra.mxu0 0.0
    %1669 = vmatpush.msra.mxu0 0.0
    %1670 = vmatpush.msra.mxu0 0.0
    %1671 = vmatpush.msra.mxu0 0.0
    %1672 = vmatpush.msra.mxu0 0.0
    %1673 = vmatpush.msra.mxu0 0.0
    %1674 = vmatpush.msra.mxu0 0.0
    %1675 = vmatpush.msra.mxu0 0.0
    %1676 = vmatpush.msra.mxu0 0.0
    %1677 = vmatpush.msra.mxu0 %v540
    %1678 = vmatpush.msra.mxu0 %v539
    %1679 = vmatpush.msra.mxu0 %v538
    %1680 = vmatpush.msra.mxu0 %v537
    %1681 = vmatmul.f32.gmra.mxu0 %v1663
    %v1682 = vpop.f32.mrf.mxu0
    %v1683 = vadd.f32 %v543, %v1682
    %1684 = vdwg.mxu0
    %1685 = vmatpush.msra.mxu0 0.0
    %1686 = vmatpush.msra.mxu0 0.0
    %1687 = vmatpush.msra.mxu0 0.0
    %1688 = vmatpush.msra.mxu0 0.0
    %1689 = vmatpush.msra.mxu0 0.0
    %1690 = vmatpush.msra.mxu0 0.0
    %1691 = vmatpush.msra.mxu0 0.0
    %1692 = vmatpush.msra.mxu0 0.0
    %1693 = vmatpush.msra.mxu0 0.0
    %1694 = vmatpush.msra.mxu0 0.0
    %1695 = vmatpush.msra.mxu0 0.0
    %1696 = vmatpush.msra.mxu0 0.0
    %1697 = vmatpush.msra.mxu0 %v569
    %1698 = vmatpush.msra.mxu0 %v568
    %1699 = vmatpush.msra.mxu0 %v567
    %1700 = vmatpush.msra.mxu0 %v566
    %1701 = vmatmul.f32.gmra.mxu0 %v1663
    %v1702 = vpop.f32.mrf.mxu0
    %v1703 = vadd.f32 %v573, %v1702
    %1704 = vdwg.mxu0
    %1705 = vmatpush.msra.mxu0 0.0
    %1706 = vmatpush.msra.mxu0 0.0
    %1707 = vmatpush.msra.mxu0 0.0
    %1708 = vmatpush.msra.mxu0 0.0
    %1709 = vmatpush.msra.mxu0 0.0
    %1710 = vmatpush.msra.mxu0 0.0
    %1711 = vmatpush.msra.mxu0 0.0
    %1712 = vmatpush.msra.mxu0 0.0
    %1713 = vmatpush.msra.mxu0 0.0
    %1714 = vmatpush.msra.mxu0 0.0
    %1715 = vmatpush.msra.mxu0 0.0
    %1716 = vmatpush.msra.mxu0 0.0
    %1717 = vmatpush.msra.mxu0 %v599
    %1718 = vmatpush.msra.mxu0 %v598
    %1719 = vmatpush.msra.mxu0 %v597
    %1720 = vmatpush.msra.mxu0 %v596
    %1721 = vmatmul.f32.gmra.mxu0 %v1663
    %v1722 = vpop.f32.mrf.mxu0
    %v1723 = vadd.f32 %v603, %v1722
    %1724 = vdwg.mxu0
    %v1725 = vadd.f32 %v283, %v1683
    %v1726 = vxor.u32 %v1725, 2147483648
    %v1727 = vmul.f32 %v1726, 1.442695
    %v1728 = vpow.pop %v1727
    %v1729 = vadd.f32 %v1728, 1.0
    %v1730 = vrcp.pop %v1729
    %v1731 = vmul.f32 %v1729, %v1730
    %v1732 = vsub.f32 1.0, %v1731
    %v1733 = vmul.f32 %v1730, %v1732
    %v1734 = vadd.f32 %v1730, %v1733
    %vm1735 = vweird.f32 %v1729
    %vm1736 = vweird.f32 %v1730
    %vm1737 = vmor %vm1735, %vm1736
    %v1738 = vsel %vm1737, %v1730, %v1734
    %v1739 = vand.u32 2147483647, %v1729
    %vm1740 = vcmp.eq.f32.partialorder %v1739, 8.507059e+37
    %v1741 = vand.u32 %v1729, 2147483648
    %v1742 = vor.u32 1.1754944e-38, %v1741
    %v1743 = vsel %vm1740, %v1742, %v1738
    %v1744 = vmul.f32 1.0, %v1743
    %v1745 = vadd.f32 %v332, %v1703
    %v1746 = vxor.u32 %v1745, 2147483648
    %v1747 = vmul.f32 %v1746, 1.442695
    %v1748 = vpow.pop %v1747
    %v1749 = vadd.f32 %v1748, 1.0
    %v1750 = vrcp.pop %v1749
    %v1751 = vmul.f32 %v1749, %v1750
    %v1752 = vsub.f32 1.0, %v1751
    %v1753 = vmul.f32 %v1750, %v1752
    %v1754 = vadd.f32 %v1750, %v1753
    %vm1755 = vweird.f32 %v1749
    %vm1756 = vweird.f32 %v1750
    %vm1757 = vmor %vm1755, %vm1756
    %v1758 = vsel %vm1757, %v1750, %v1754
    %v1759 = vand.u32 2147483647, %v1749
    %vm1760 = vcmp.eq.f32.partialorder %v1759, 8.507059e+37
    %v1761 = vand.u32 %v1749, 2147483648
    %v1762 = vor.u32 1.1754944e-38, %v1761
    %v1763 = vsel %vm1760, %v1762, %v1758
    %v1764 = vmul.f32 1.0, %v1763
    %v1765 = vmul.f32 %v1744, %v1723
    %v1766 = vadd.f32 %v381, %v1765
    %v1767 = vtanh.pop %v1766
    %v1768 = vsub.f32 1.0, %v1764
    %v1769 = vmul.f32 %v1768, %v1767
    %v1770 = vmul.f32 %v1764, %v1551
    %v1771 = vadd.f32 %v1769, %v1770
    %v1773 = vsel %vm406, %v1661, 0
    %1775 = vmatpush.msra.mxu0 0.0
    %1776 = vmatpush.msra.mxu0 0.0
    %1777 = vmatpush.msra.mxu0 0.0
    %1778 = vmatpush.msra.mxu0 0.0
    %1779 = vmatpush.msra.mxu0 0.0
    %1780 = vmatpush.msra.mxu0 0.0
    %1781 = vmatpush.msra.mxu0 0.0
    %1782 = vmatpush.msra.mxu0 0.0
    %1783 = vmatpush.msra.mxu0 0.0
    %1784 = vmatpush.msra.mxu0 0.0
    %1785 = vmatpush.msra.mxu0 0.0
    %1786 = vmatpush.msra.mxu0 0.0
    %1787 = vmatpush.msra.mxu0 %v401
    %1788 = vmatpush.msra.mxu0 %v400
    %1789 = vmatpush.msra.mxu0 %v399
    %1790 = vmatpush.msra.mxu0 %v398
    %1791 = vmatmul.f32.gmra.mxu0 %v1773
    %v1792 = vpop.f32.mrf.mxu0
    %v1793 = vadd.f32 %v404, %v1792
    %1794 = vdwg.mxu0
    %1795 = vmatpush.msra.mxu0 0.0
    %1796 = vmatpush.msra.mxu0 0.0
    %1797 = vmatpush.msra.mxu0 0.0
    %1798 = vmatpush.msra.mxu0 0.0
    %1799 = vmatpush.msra.mxu0 0.0
    %1800 = vmatpush.msra.mxu0 0.0
    %1801 = vmatpush.msra.mxu0 0.0
    %1802 = vmatpush.msra.mxu0 0.0
    %1803 = vmatpush.msra.mxu0 0.0
    %1804 = vmatpush.msra.mxu0 0.0
    %1805 = vmatpush.msra.mxu0 0.0
    %1806 = vmatpush.msra.mxu0 0.0
    %1807 = vmatpush.msra.mxu0 %v434
    %1808 = vmatpush.msra.mxu0 %v433
    %1809 = vmatpush.msra.mxu0 %v432
    %1810 = vmatpush.msra.mxu0 %v431
    %1811 = vmatmul.f32.gmra.mxu0 %v1773
    %v1812 = vpop.f32.mrf.mxu0
    %v1813 = vadd.f32 %v438, %v1812
    %1814 = vdwg.mxu0
    %1815 = vmatpush.msra.mxu0 0.0
    %1816 = vmatpush.msra.mxu0 0.0
    %1817 = vmatpush.msra.mxu0 0.0
    %1818 = vmatpush.msra.mxu0 0.0
    %1819 = vmatpush.msra.mxu0 0.0
    %1820 = vmatpush.msra.mxu0 0.0
    %1821 = vmatpush.msra.mxu0 0.0
    %1822 = vmatpush.msra.mxu0 0.0
    %1823 = vmatpush.msra.mxu0 0.0
    %1824 = vmatpush.msra.mxu0 0.0
    %1825 = vmatpush.msra.mxu0 0.0
    %1826 = vmatpush.msra.mxu0 0.0
    %1827 = vmatpush.msra.mxu0 %v464
    %1828 = vmatpush.msra.mxu0 %v463
    %1829 = vmatpush.msra.mxu0 %v462
    %1830 = vmatpush.msra.mxu0 %v461
    %1831 = vmatmul.f32.gmra.mxu0 %v1773
    %v1832 = vpop.f32.mrf.mxu0
    %v1833 = vadd.f32 %v468, %v1832
    %1834 = vdwg.mxu0
    %v1835 = vadd.f32 %v150, %v1793
    %v1836 = vxor.u32 %v1835, 2147483648
    %v1837 = vmul.f32 %v1836, 1.442695
    %v1838 = vpow.pop %v1837
    %v1839 = vadd.f32 %v1838, 1.0
    %v1840 = vrcp.pop %v1839
    %v1841 = vmul.f32 %v1839, %v1840
    %v1842 = vsub.f32 1.0, %v1841
    %v1843 = vmul.f32 %v1840, %v1842
    %v1844 = vadd.f32 %v1840, %v1843
    %vm1845 = vweird.f32 %v1839
    %vm1846 = vweird.f32 %v1840
    %vm1847 = vmor %vm1845, %vm1846
    %v1848 = vsel %vm1847, %v1840, %v1844
    %v1849 = vand.u32 2147483647, %v1839
    %vm1850 = vcmp.eq.f32.partialorder %v1849, 8.507059e+37
    %v1851 = vand.u32 %v1839, 2147483648
    %v1852 = vor.u32 1.1754944e-38, %v1851
    %v1853 = vsel %vm1850, %v1852, %v1848
    %v1854 = vmul.f32 1.0, %v1853
    %v1855 = vadd.f32 %v199, %v1813
    %v1856 = vxor.u32 %v1855, 2147483648
    %v1857 = vmul.f32 %v1856, 1.442695
    %v1858 = vpow.pop %v1857
    %v1859 = vadd.f32 %v1858, 1.0
    %v1860 = vrcp.pop %v1859
    %v1861 = vmul.f32 %v1859, %v1860
    %v1862 = vsub.f32 1.0, %v1861
    %v1863 = vmul.f32 %v1860, %v1862
    %v1864 = vadd.f32 %v1860, %v1863
    %vm1865 = vweird.f32 %v1859
    %vm1866 = vweird.f32 %v1860
    %vm1867 = vmor %vm1865, %vm1866
    %v1868 = vsel %vm1867, %v1860, %v1864
    %v1869 = vand.u32 2147483647, %v1859
    %vm1870 = vcmp.eq.f32.partialorder %v1869, 8.507059e+37
    %v1871 = vand.u32 %v1859, 2147483648
    %v1872 = vor.u32 1.1754944e-38, %v1871
    %v1873 = vsel %vm1870, %v1872, %v1868
    %v1874 = vmul.f32 1.0, %v1873
    %v1875 = vmul.f32 %v1854, %v1833
    %v1876 = vadd.f32 %v248, %v1875
    %v1877 = vtanh.pop %v1876
    %v1878 = vsub.f32 1.0, %v1874
    %v1879 = vmul.f32 %v1878, %v1877
    %v1880 = vmul.f32 %v1874, %v1661
    %v1881 = vadd.f32 %v1879, %v1880
    %v1883 = vsel %vm406, %v1771, 0
    %1885 = vmatpush.msra.mxu0 0.0
    %1886 = vmatpush.msra.mxu0 0.0
    %1887 = vmatpush.msra.mxu0 0.0
    %1888 = vmatpush.msra.mxu0 0.0
    %1889 = vmatpush.msra.mxu0 0.0
    %1890 = vmatpush.msra.mxu0 0.0
    %1891 = vmatpush.msra.mxu0 0.0
    %1892 = vmatpush.msra.mxu0 0.0
    %1893 = vmatpush.msra.mxu0 0.0
    %1894 = vmatpush.msra.mxu0 0.0
    %1895 = vmatpush.msra.mxu0 0.0
    %1896 = vmatpush.msra.mxu0 0.0
    %1897 = vmatpush.msra.mxu0 %v540
    %1898 = vmatpush.msra.mxu0 %v539
    %1899 = vmatpush.msra.mxu0 %v538
    %1900 = vmatpush.msra.mxu0 %v537
    %1901 = vmatmul.f32.gmra.mxu0 %v1883
    %v1902 = vpop.f32.mrf.mxu0
    %v1903 = vadd.f32 %v543, %v1902
    %1904 = vdwg.mxu0
    %1905 = vmatpush.msra.mxu0 0.0
    %1906 = vmatpush.msra.mxu0 0.0
    %1907 = vmatpush.msra.mxu0 0.0
    %1908 = vmatpush.msra.mxu0 0.0
    %1909 = vmatpush.msra.mxu0 0.0
    %1910 = vmatpush.msra.mxu0 0.0
    %1911 = vmatpush.msra.mxu0 0.0
    %1912 = vmatpush.msra.mxu0 0.0
    %1913 = vmatpush.msra.mxu0 0.0
    %1914 = vmatpush.msra.mxu0 0.0
    %1915 = vmatpush.msra.mxu0 0.0
    %1916 = vmatpush.msra.mxu0 0.0
    %1917 = vmatpush.msra.mxu0 %v569
    %1918 = vmatpush.msra.mxu0 %v568
    %1919 = vmatpush.msra.mxu0 %v567
    %1920 = vmatpush.msra.mxu0 %v566
    %1921 = vmatmul.f32.gmra.mxu0 %v1883
    %v1922 = vpop.f32.mrf.mxu0
    %v1923 = vadd.f32 %v573, %v1922
    %1924 = vdwg.mxu0
    %1925 = vmatpush.msra.mxu0 0.0
    %1926 = vmatpush.msra.mxu0 0.0
    %1927 = vmatpush.msra.mxu0 0.0
    %1928 = vmatpush.msra.mxu0 0.0
    %1929 = vmatpush.msra.mxu0 0.0
    %1930 = vmatpush.msra.mxu0 0.0
    %1931 = vmatpush.msra.mxu0 0.0
    %1932 = vmatpush.msra.mxu0 0.0
    %1933 = vmatpush.msra.mxu0 0.0
    %1934 = vmatpush.msra.mxu0 0.0
    %1935 = vmatpush.msra.mxu0 0.0
    %1936 = vmatpush.msra.mxu0 0.0
    %1937 = vmatpush.msra.mxu0 %v599
    %1938 = vmatpush.msra.mxu0 %v598
    %1939 = vmatpush.msra.mxu0 %v597
    %1940 = vmatpush.msra.mxu0 %v596
    %1941 = vmatmul.f32.gmra.mxu0 %v1883
    %v1942 = vpop.f32.mrf.mxu0
    %v1943 = vadd.f32 %v603, %v1942
    %1944 = vdwg.mxu0
    %v1945 = vadd.f32 %v280, %v1903
    %v1946 = vxor.u32 %v1945, 2147483648
    %v1947 = vmul.f32 %v1946, 1.442695
    %v1948 = vpow.pop %v1947
    %v1949 = vadd.f32 %v1948, 1.0
    %v1950 = vrcp.pop %v1949
    %v1951 = vmul.f32 %v1949, %v1950
    %v1952 = vsub.f32 1.0, %v1951
    %v1953 = vmul.f32 %v1950, %v1952
    %v1954 = vadd.f32 %v1950, %v1953
    %vm1955 = vweird.f32 %v1949
    %vm1956 = vweird.f32 %v1950
    %vm1957 = vmor %vm1955, %vm1956
    %v1958 = vsel %vm1957, %v1950, %v1954
    %v1959 = vand.u32 2147483647, %v1949
    %vm1960 = vcmp.eq.f32.partialorder %v1959, 8.507059e+37
    %v1961 = vand.u32 %v1949, 2147483648
    %v1962 = vor.u32 1.1754944e-38, %v1961
    %v1963 = vsel %vm1960, %v1962, %v1958
    %v1964 = vmul.f32 1.0, %v1963
    %v1965 = vadd.f32 %v329, %v1923
    %v1966 = vxor.u32 %v1965, 2147483648
    %v1967 = vmul.f32 %v1966, 1.442695
    %v1968 = vpow.pop %v1967
    %v1969 = vadd.f32 %v1968, 1.0
    %v1970 = vrcp.pop %v1969
    %v1971 = vmul.f32 %v1969, %v1970
    %v1972 = vsub.f32 1.0, %v1971
    %v1973 = vmul.f32 %v1970, %v1972
    %v1974 = vadd.f32 %v1970, %v1973
    %vm1975 = vweird.f32 %v1969
    %vm1976 = vweird.f32 %v1970
    %vm1977 = vmor %vm1975, %vm1976
    %v1978 = vsel %vm1977, %v1970, %v1974
    %v1979 = vand.u32 2147483647, %v1969
    %vm1980 = vcmp.eq.f32.partialorder %v1979, 8.507059e+37
    %v1981 = vand.u32 %v1969, 2147483648
    %v1982 = vor.u32 1.1754944e-38, %v1981
    %v1983 = vsel %vm1980, %v1982, %v1978
    %v1984 = vmul.f32 1.0, %v1983
    %v1985 = vmul.f32 %v1964, %v1943
    %v1986 = vadd.f32 %v378, %v1985
    %v1987 = vtanh.pop %v1986
    %v1988 = vsub.f32 1.0, %v1984
    %v1989 = vmul.f32 %v1988, %v1987
    %v1990 = vmul.f32 %v1984, %v1771
    %v1991 = vadd.f32 %v1989, %v1990
    %v1993 = vsel %vm406, %v1881, 0
    %1995 = vmatpush.msra.mxu0 0.0
    %1996 = vmatpush.msra.mxu0 0.0
    %1997 = vmatpush.msra.mxu0 0.0
    %1998 = vmatpush.msra.mxu0 0.0
    %1999 = vmatpush.msra.mxu0 0.0
    %2000 = vmatpush.msra.mxu0 0.0
    %2001 = vmatpush.msra.mxu0 0.0
    %2002 = vmatpush.msra.mxu0 0.0
    %2003 = vmatpush.msra.mxu0 0.0
    %2004 = vmatpush.msra.mxu0 0.0
    %2005 = vmatpush.msra.mxu0 0.0
    %2006 = vmatpush.msra.mxu0 0.0
    %2007 = vmatpush.msra.mxu0 %v401
    %2008 = vmatpush.msra.mxu0 %v400
    %2009 = vmatpush.msra.mxu0 %v399
    %2010 = vmatpush.msra.mxu0 %v398
    %2011 = vmatmul.f32.gmra.mxu0 %v1993
    %v2012 = vpop.f32.mrf.mxu0
    %v2013 = vadd.f32 %v404, %v2012
    %2014 = vdwg.mxu0
    %2015 = vmatpush.msra.mxu0 0.0
    %2016 = vmatpush.msra.mxu0 0.0
    %2017 = vmatpush.msra.mxu0 0.0
    %2018 = vmatpush.msra.mxu0 0.0
    %2019 = vmatpush.msra.mxu0 0.0
    %2020 = vmatpush.msra.mxu0 0.0
    %2021 = vmatpush.msra.mxu0 0.0
    %2022 = vmatpush.msra.mxu0 0.0
    %2023 = vmatpush.msra.mxu0 0.0
    %2024 = vmatpush.msra.mxu0 0.0
    %2025 = vmatpush.msra.mxu0 0.0
    %2026 = vmatpush.msra.mxu0 0.0
    %2027 = vmatpush.msra.mxu0 %v434
    %2028 = vmatpush.msra.mxu0 %v433
    %2029 = vmatpush.msra.mxu0 %v432
    %2030 = vmatpush.msra.mxu0 %v431
    %2031 = vmatmul.f32.gmra.mxu0 %v1993
    %v2032 = vpop.f32.mrf.mxu0
    %v2033 = vadd.f32 %v438, %v2032
    %2034 = vdwg.mxu0
    %2035 = vmatpush.msra.mxu0 0.0
    %2036 = vmatpush.msra.mxu0 0.0
    %2037 = vmatpush.msra.mxu0 0.0
    %2038 = vmatpush.msra.mxu0 0.0
    %2039 = vmatpush.msra.mxu0 0.0
    %2040 = vmatpush.msra.mxu0 0.0
    %2041 = vmatpush.msra.mxu0 0.0
    %2042 = vmatpush.msra.mxu0 0.0
    %2043 = vmatpush.msra.mxu0 0.0
    %2044 = vmatpush.msra.mxu0 0.0
    %2045 = vmatpush.msra.mxu0 0.0
    %2046 = vmatpush.msra.mxu0 0.0
    %2047 = vmatpush.msra.mxu0 %v464
    %2048 = vmatpush.msra.mxu0 %v463
    %2049 = vmatpush.msra.mxu0 %v462
    %2050 = vmatpush.msra.mxu0 %v461
    %2051 = vmatmul.f32.gmra.mxu0 %v1993
    %v2052 = vpop.f32.mrf.mxu0
    %v2053 = vadd.f32 %v468, %v2052
    %2054 = vdwg.mxu0
    %v2055 = vadd.f32 %v153, %v2013
    %v2056 = vxor.u32 %v2055, 2147483648
    %v2057 = vmul.f32 %v2056, 1.442695
    %v2058 = vpow.pop %v2057
    %v2059 = vadd.f32 %v2058, 1.0
    %v2060 = vrcp.pop %v2059
    %v2061 = vmul.f32 %v2059, %v2060
    %v2062 = vsub.f32 1.0, %v2061
    %v2063 = vmul.f32 %v2060, %v2062
    %v2064 = vadd.f32 %v2060, %v2063
    %vm2065 = vweird.f32 %v2059
    %vm2066 = vweird.f32 %v2060
    %vm2067 = vmor %vm2065, %vm2066
    %v2068 = vsel %vm2067, %v2060, %v2064
    %v2069 = vand.u32 2147483647, %v2059
    %vm2070 = vcmp.eq.f32.partialorder %v2069, 8.507059e+37
    %v2071 = vand.u32 %v2059, 2147483648
    %v2072 = vor.u32 1.1754944e-38, %v2071
    %v2073 = vsel %vm2070, %v2072, %v2068
    %v2074 = vmul.f32 1.0, %v2073
    %v2075 = vadd.f32 %v202, %v2033
    %v2076 = vxor.u32 %v2075, 2147483648
    %v2077 = vmul.f32 %v2076, 1.442695
    %v2078 = vpow.pop %v2077
    %v2079 = vadd.f32 %v2078, 1.0
    %v2080 = vrcp.pop %v2079
    %v2081 = vmul.f32 %v2079, %v2080
    %v2082 = vsub.f32 1.0, %v2081
    %v2083 = vmul.f32 %v2080, %v2082
    %v2084 = vadd.f32 %v2080, %v2083
    %vm2085 = vweird.f32 %v2079
    %vm2086 = vweird.f32 %v2080
    %vm2087 = vmor %vm2085, %vm2086
    %v2088 = vsel %vm2087, %v2080, %v2084
    %v2089 = vand.u32 2147483647, %v2079
    %vm2090 = vcmp.eq.f32.partialorder %v2089, 8.507059e+37
    %v2091 = vand.u32 %v2079, 2147483648
    %v2092 = vor.u32 1.1754944e-38, %v2091
    %v2093 = vsel %vm2090, %v2092, %v2088
    %v2094 = vmul.f32 1.0, %v2093
    %v2095 = vmul.f32 %v2074, %v2053
    %v2096 = vadd.f32 %v251, %v2095
    %v2097 = vtanh.pop %v2096
    %v2098 = vsub.f32 1.0, %v2094
    %v2099 = vmul.f32 %v2098, %v2097
    %v2100 = vmul.f32 %v2094, %v1881
    %v2101 = vadd.f32 %v2099, %v2100
    %v2103 = vsel %vm406, %v1991, 0
    %2105 = vmatpush.msra.mxu0 0.0
    %2106 = vmatpush.msra.mxu0 0.0
    %2107 = vmatpush.msra.mxu0 0.0
    %2108 = vmatpush.msra.mxu0 0.0
    %2109 = vmatpush.msra.mxu0 0.0
    %2110 = vmatpush.msra.mxu0 0.0
    %2111 = vmatpush.msra.mxu0 0.0
    %2112 = vmatpush.msra.mxu0 0.0
    %2113 = vmatpush.msra.mxu0 0.0
    %2114 = vmatpush.msra.mxu0 0.0
    %2115 = vmatpush.msra.mxu0 0.0
    %2116 = vmatpush.msra.mxu0 0.0
    %2117 = vmatpush.msra.mxu0 %v540
    %2118 = vmatpush.msra.mxu0 %v539
    %2119 = vmatpush.msra.mxu0 %v538
    %2120 = vmatpush.msra.mxu0 %v537
    %2121 = vmatmul.f32.gmra.mxu0 %v2103
    %v2122 = vpop.f32.mrf.mxu0
    %v2123 = vadd.f32 %v543, %v2122
    %2124 = vdwg.mxu0
    %2125 = vmatpush.msra.mxu0 0.0
    %2126 = vmatpush.msra.mxu0 0.0
    %2127 = vmatpush.msra.mxu0 0.0
    %2128 = vmatpush.msra.mxu0 0.0
    %2129 = vmatpush.msra.mxu0 0.0
    %2130 = vmatpush.msra.mxu0 0.0
    %2131 = vmatpush.msra.mxu0 0.0
    %2132 = vmatpush.msra.mxu0 0.0
    %2133 = vmatpush.msra.mxu0 0.0
    %2134 = vmatpush.msra.mxu0 0.0
    %2135 = vmatpush.msra.mxu0 0.0
    %2136 = vmatpush.msra.mxu0 0.0
    %2137 = vmatpush.msra.mxu0 %v569
    %2138 = vmatpush.msra.mxu0 %v568
    %2139 = vmatpush.msra.mxu0 %v567
    %2140 = vmatpush.msra.mxu0 %v566
    %2141 = vmatmul.f32.gmra.mxu0 %v2103
    %v2142 = vpop.f32.mrf.mxu0
    %v2143 = vadd.f32 %v573, %v2142
    %2144 = vdwg.mxu0
    %2145 = vmatpush.msra.mxu0 0.0
    %2146 = vmatpush.msra.mxu0 0.0
    %2147 = vmatpush.msra.mxu0 0.0
    %2148 = vmatpush.msra.mxu0 0.0
    %2149 = vmatpush.msra.mxu0 0.0
    %2150 = vmatpush.msra.mxu0 0.0
    %2151 = vmatpush.msra.mxu0 0.0
    %2152 = vmatpush.msra.mxu0 0.0
    %2153 = vmatpush.msra.mxu0 0.0
    %2154 = vmatpush.msra.mxu0 0.0
    %2155 = vmatpush.msra.mxu0 0.0
    %2156 = vmatpush.msra.mxu0 0.0
    %2157 = vmatpush.msra.mxu0 %v599
    %2158 = vmatpush.msra.mxu0 %v598
    %2159 = vmatpush.msra.mxu0 %v597
    %2160 = vmatpush.msra.mxu0 %v596
    %2161 = vmatmul.f32.gmra.mxu0 %v2103
    %v2162 = vpop.f32.mrf.mxu0
    %v2163 = vadd.f32 %v603, %v2162
    %2164 = vdwg.mxu0
    %v2165 = vadd.f32 %v277, %v2123
    %v2166 = vxor.u32 %v2165, 2147483648
    %v2167 = vmul.f32 %v2166, 1.442695
    %v2168 = vpow.pop %v2167
    %v2169 = vadd.f32 %v2168, 1.0
    %v2170 = vrcp.pop %v2169
    %v2171 = vmul.f32 %v2169, %v2170
    %v2172 = vsub.f32 1.0, %v2171
    %v2173 = vmul.f32 %v2170, %v2172
    %v2174 = vadd.f32 %v2170, %v2173
    %vm2175 = vweird.f32 %v2169
    %vm2176 = vweird.f32 %v2170
    %vm2177 = vmor %vm2175, %vm2176
    %v2178 = vsel %vm2177, %v2170, %v2174
    %v2179 = vand.u32 2147483647, %v2169
    %vm2180 = vcmp.eq.f32.partialorder %v2179, 8.507059e+37
    %v2181 = vand.u32 %v2169, 2147483648
    %v2182 = vor.u32 1.1754944e-38, %v2181
    %v2183 = vsel %vm2180, %v2182, %v2178
    %v2184 = vmul.f32 1.0, %v2183
    %v2185 = vadd.f32 %v326, %v2143
    %v2186 = vxor.u32 %v2185, 2147483648
    %v2187 = vmul.f32 %v2186, 1.442695
    %v2188 = vpow.pop %v2187
    %v2189 = vadd.f32 %v2188, 1.0
    %v2190 = vrcp.pop %v2189
    %v2191 = vmul.f32 %v2189, %v2190
    %v2192 = vsub.f32 1.0, %v2191
    %v2193 = vmul.f32 %v2190, %v2192
    %v2194 = vadd.f32 %v2190, %v2193
    %vm2195 = vweird.f32 %v2189
    %vm2196 = vweird.f32 %v2190
    %vm2197 = vmor %vm2195, %vm2196
    %v2198 = vsel %vm2197, %v2190, %v2194
    %v2199 = vand.u32 2147483647, %v2189
    %vm2200 = vcmp.eq.f32.partialorder %v2199, 8.507059e+37
    %v2201 = vand.u32 %v2189, 2147483648
    %v2202 = vor.u32 1.1754944e-38, %v2201
    %v2203 = vsel %vm2200, %v2202, %v2198
    %v2204 = vmul.f32 1.0, %v2203
    %v2205 = vmul.f32 %v2184, %v2163
    %v2206 = vadd.f32 %v375, %v2205
    %v2207 = vtanh.pop %v2206
    %v2208 = vsub.f32 1.0, %v2204
    %v2209 = vmul.f32 %v2208, %v2207
    %v2210 = vmul.f32 %v2204, %v1991
    %v2211 = vadd.f32 %v2209, %v2210
    %2213 = vrot.lane.b32.xlu0 %v2211, 32
    %v2214 = vpop.permute.xlu0 %2213
    %v2216 = vsel %vm406, %v2101, %v2214
    %v2217 = vld [vmem:[%s9] sm:$0xff]
    %v2218 = vld [vmem:[%s9 + $0x8] sm:$0xff]
    %v2219 = vld [vmem:[%s9 + $0x10] sm:$0xff]
    %v2220 = vld [vmem:[%s9 + $0x18] sm:$0xff]
    %v2221 = vld [vmem:[%s9 + $0x20] sm:$0xff]
    %v2222 = vld [vmem:[%s9 + $0x28] sm:$0xff]
    %v2223 = vld [vmem:[%s9 + $0x30] sm:$0xff]
    %v2224 = vld [vmem:[%s9 + $0x38] sm:$0xff]
    %v2225 = vld [vmem:[%s11] sm:$0x1]
    %v2227 = vperm.slane %v2225, 0
    %vm2229 = vcmask 523264
    %v2231 = vsel %vm2229, %v2216, 0
    %2233 = vmatpush.msra.mxu0 0.0
    %2234 = vmatpush.msra.mxu0 0.0
    %2235 = vmatpush.msra.mxu0 0.0
    %2236 = vmatpush.msra.mxu0 0.0
    %2237 = vmatpush.msra.mxu0 0.0
    %2238 = vmatpush.msra.mxu0 0.0
    %2239 = vmatpush.msra.mxu0 0.0
    %2240 = vmatpush.msra.mxu0 0.0
    %2241 = vmatpush.msra.mxu0 %v2224
    %2242 = vmatpush.msra.mxu0 %v2223
    %2243 = vmatpush.msra.mxu0 %v2222
    %2244 = vmatpush.msra.mxu0 %v2221
    %2245 = vmatpush.msra.mxu0 %v2220
    %2246 = vmatpush.msra.mxu0 %v2219
    %2247 = vmatpush.msra.mxu0 %v2218
    %2248 = vmatpush.msra.mxu0 %v2217
    %2249 = vmatmul.f32.gmra.mxu0 %v2231
    %v2250 = vpop.f32.mrf.mxu0
    %v2251 = vadd.f32 %v2227, %v2250
    %2252 = vdwg.mxu0
    %s2253 = scalar_lea.vmem %s9, 64
    %v2254 = vld [vmem:[%s2253] sm:$0xff]
    %v2255 = vld [vmem:[%s2253 + $0x8] sm:$0xff]
    %v2256 = vld [vmem:[%s2253 + $0x10] sm:$0xff]
    %v2257 = vld [vmem:[%s2253 + $0x18] sm:$0xff]
    %v2258 = vld [vmem:[%s2253 + $0x20] sm:$0xff]
    %v2259 = vld [vmem:[%s2253 + $0x28] sm:$0xff]
    %v2260 = vld [vmem:[%s2253 + $0x30] sm:$0xff]
    %v2261 = vld [vmem:[%s2253 + $0x38] sm:$0xff]
    %s2262 = scalar_lea.vmem %s11, 1
    %v2263 = vld [vmem:[%s2262] sm:$0x1]
    %v2265 = vperm.slane %v2263, 0
    %2267 = vmatpush.msra.mxu0 0.0
    %2268 = vmatpush.msra.mxu0 0.0
    %2269 = vmatpush.msra.mxu0 0.0
    %2270 = vmatpush.msra.mxu0 0.0
    %2271 = vmatpush.msra.mxu0 0.0
    %2272 = vmatpush.msra.mxu0 0.0
    %2273 = vmatpush.msra.mxu0 0.0
    %2274 = vmatpush.msra.mxu0 0.0
    %2275 = vmatpush.msra.mxu0 %v2261
    %2276 = vmatpush.msra.mxu0 %v2260
    %2277 = vmatpush.msra.mxu0 %v2259
    %2278 = vmatpush.msra.mxu0 %v2258
    %2279 = vmatpush.msra.mxu0 %v2257
    %2280 = vmatpush.msra.mxu0 %v2256
    %2281 = vmatpush.msra.mxu0 %v2255
    %2282 = vmatpush.msra.mxu0 %v2254
    %2283 = vmatmul.f32.gmra.mxu0 %v2231
    %v2284 = vpop.f32.mrf.mxu0
    %v2285 = vadd.f32 %v2265, %v2284
    %2286 = vdwg.mxu0
    %s2287 = scalar_lea.vmem %s9, 128
    %v2288 = vld [vmem:[%s2287] sm:$0xff]
    %v2289 = vld [vmem:[%s2287 + $0x8] sm:$0xff]
    %v2290 = vld [vmem:[%s2287 + $0x10] sm:$0xff]
    %v2291 = vld [vmem:[%s2287 + $0x18] sm:$0xff]
    %v2292 = vld [vmem:[%s2287 + $0x20] sm:$0xff]
    %v2293 = vld [vmem:[%s2287 + $0x28] sm:$0xff]
    %v2294 = vld [vmem:[%s2287 + $0x30] sm:$0xff]
    %v2295 = vld [vmem:[%s2287 + $0x38] sm:$0xff]
    %s2296 = scalar_lea.vmem %s11, 2
    %v2297 = vld [vmem:[%s2296] sm:$0x1]
    %v2299 = vperm.slane %v2297, 0
    %2301 = vmatpush.msra.mxu0 0.0
    %2302 = vmatpush.msra.mxu0 0.0
    %2303 = vmatpush.msra.mxu0 0.0
    %2304 = vmatpush.msra.mxu0 0.0
    %2305 = vmatpush.msra.mxu0 0.0
    %2306 = vmatpush.msra.mxu0 0.0
    %2307 = vmatpush.msra.mxu0 0.0
    %2308 = vmatpush.msra.mxu0 0.0
    %2309 = vmatpush.msra.mxu0 %v2295
    %2310 = vmatpush.msra.mxu0 %v2294
    %2311 = vmatpush.msra.mxu0 %v2293
    %2312 = vmatpush.msra.mxu0 %v2292
    %2313 = vmatpush.msra.mxu0 %v2291
    %2314 = vmatpush.msra.mxu0 %v2290
    %2315 = vmatpush.msra.mxu0 %v2289
    %2316 = vmatpush.msra.mxu0 %v2288
    %2317 = vmatmul.f32.gmra.mxu0 %v2231
    %v2318 = vpop.f32.mrf.mxu0
    %v2319 = vadd.f32 %v2299, %v2318
    %2320 = vdwg.mxu0
    %v2321 = vld [vmem:[%s13] sm:$0xff]
    %v2322 = vld [vmem:[%s13 + $0x8] sm:$0xff]
    %v2323 = vld [vmem:[%s13 + $0x10] sm:$0xff]
    %v2324 = vld [vmem:[%s13 + $0x18] sm:$0xff]
    %v2325 = vld [vmem:[%s13 + $0x20] sm:$0xff]
    %v2326 = vld [vmem:[%s13 + $0x28] sm:$0xff]
    %v2327 = vld [vmem:[%s13 + $0x30] sm:$0xff]
    %v2328 = vld [vmem:[%s13 + $0x38] sm:$0xff]
    %v2329 = vld [vmem:[%s15] sm:$0x1]
    %v2331 = vperm.slane %v2329, 0
    %2333 = vmatpush.msra.mxu0 0.0
    %2334 = vmatpush.msra.mxu0 0.0
    %2335 = vmatpush.msra.mxu0 0.0
    %2336 = vmatpush.msra.mxu0 0.0
    %2337 = vmatpush.msra.mxu0 0.0
    %2338 = vmatpush.msra.mxu0 0.0
    %2339 = vmatpush.msra.mxu0 0.0
    %2340 = vmatpush.msra.mxu0 0.0
    %2341 = vmatpush.msra.mxu0 %v2328
    %2342 = vmatpush.msra.mxu0 %v2327
    %2343 = vmatpush.msra.mxu0 %v2326
    %2344 = vmatpush.msra.mxu0 %v2325
    %2345 = vmatpush.msra.mxu0 %v2324
    %2346 = vmatpush.msra.mxu0 %v2323
    %2347 = vmatpush.msra.mxu0 %v2322
    %2348 = vmatpush.msra.mxu0 %v2321
    %2349 = vmatmul.f32.gmra.mxu0 %v2231
    %v2350 = vpop.f32.mrf.mxu0
    %v2351 = vadd.f32 %v2331, %v2350
    %2352 = vdwg.mxu0
    %s2353 = scalar_lea.vmem %s13, 64
    %v2354 = vld [vmem:[%s2353] sm:$0xff]
    %v2355 = vld [vmem:[%s2353 + $0x8] sm:$0xff]
    %v2356 = vld [vmem:[%s2353 + $0x10] sm:$0xff]
    %v2357 = vld [vmem:[%s2353 + $0x18] sm:$0xff]
    %v2358 = vld [vmem:[%s2353 + $0x20] sm:$0xff]
    %v2359 = vld [vmem:[%s2353 + $0x28] sm:$0xff]
    %v2360 = vld [vmem:[%s2353 + $0x30] sm:$0xff]
    %v2361 = vld [vmem:[%s2353 + $0x38] sm:$0xff]
    %s2362 = scalar_lea.vmem %s15, 1
    %v2363 = vld [vmem:[%s2362] sm:$0x1]
    %v2365 = vperm.slane %v2363, 0
    %2367 = vmatpush.msra.mxu0 0.0
    %2368 = vmatpush.msra.mxu0 0.0
    %2369 = vmatpush.msra.mxu0 0.0
    %2370 = vmatpush.msra.mxu0 0.0
    %2371 = vmatpush.msra.mxu0 0.0
    %2372 = vmatpush.msra.mxu0 0.0
    %2373 = vmatpush.msra.mxu0 0.0
    %2374 = vmatpush.msra.mxu0 0.0
    %2375 = vmatpush.msra.mxu0 %v2361
    %2376 = vmatpush.msra.mxu0 %v2360
    %2377 = vmatpush.msra.mxu0 %v2359
    %2378 = vmatpush.msra.mxu0 %v2358
    %2379 = vmatpush.msra.mxu0 %v2357
    %2380 = vmatpush.msra.mxu0 %v2356
    %2381 = vmatpush.msra.mxu0 %v2355
    %2382 = vmatpush.msra.mxu0 %v2354
    %2383 = vmatmul.f32.gmra.mxu0 %v2231
    %v2384 = vpop.f32.mrf.mxu0
    %v2385 = vadd.f32 %v2365, %v2384
    %2386 = vdwg.mxu0
    %s2387 = scalar_lea.vmem %s13, 128
    %v2388 = vld [vmem:[%s2387] sm:$0xff]
    %v2389 = vld [vmem:[%s2387 + $0x8] sm:$0xff]
    %v2390 = vld [vmem:[%s2387 + $0x10] sm:$0xff]
    %v2391 = vld [vmem:[%s2387 + $0x18] sm:$0xff]
    %v2392 = vld [vmem:[%s2387 + $0x20] sm:$0xff]
    %v2393 = vld [vmem:[%s2387 + $0x28] sm:$0xff]
    %v2394 = vld [vmem:[%s2387 + $0x30] sm:$0xff]
    %v2395 = vld [vmem:[%s2387 + $0x38] sm:$0xff]
    %s2396 = scalar_lea.vmem %s15, 2
    %v2397 = vld [vmem:[%s2396] sm:$0x1]
    %v2399 = vperm.slane %v2397, 0
    %2401 = vmatpush.msra.mxu0 0.0
    %2402 = vmatpush.msra.mxu0 0.0
    %2403 = vmatpush.msra.mxu0 0.0
    %2404 = vmatpush.msra.mxu0 0.0
    %2405 = vmatpush.msra.mxu0 0.0
    %2406 = vmatpush.msra.mxu0 0.0
    %2407 = vmatpush.msra.mxu0 0.0
    %2408 = vmatpush.msra.mxu0 0.0
    %2409 = vmatpush.msra.mxu0 %v2395
    %2410 = vmatpush.msra.mxu0 %v2394
    %2411 = vmatpush.msra.mxu0 %v2393
    %2412 = vmatpush.msra.mxu0 %v2392
    %2413 = vmatpush.msra.mxu0 %v2391
    %2414 = vmatpush.msra.mxu0 %v2390
    %2415 = vmatpush.msra.mxu0 %v2389
    %2416 = vmatpush.msra.mxu0 %v2388
    %2417 = vmatmul.f32.gmra.mxu0 %v2231
    %v2418 = vpop.f32.mrf.mxu0
    %v2419 = vadd.f32 %v2399, %v2418
    %2420 = vdwg.mxu0
    %v2421 = vld [vmem:[%s10] sm:$0xff]
    %v2422 = vld [vmem:[%s10 + $0x8] sm:$0xff]
    %v2423 = vld [vmem:[%s10 + $0x10] sm:$0xff]
    %v2424 = vld [vmem:[%s10 + $0x18] sm:$0xff]
    %v2425 = vld [vmem:[%s12] sm:$0x1]
    %2426 = vmatpush.msra.mxu0 0.0
    %2427 = vmatpush.msra.mxu0 0.0
    %2428 = vmatpush.msra.mxu0 0.0
    %2429 = vmatpush.msra.mxu0 0.0
    %2430 = vmatpush.msra.mxu0 0.0
    %2431 = vmatpush.msra.mxu0 0.0
    %2432 = vmatpush.msra.mxu0 0.0
    %2433 = vmatpush.msra.mxu0 0.0
    %2434 = vmatpush.msra.mxu0 0.0
    %2435 = vmatpush.msra.mxu0 0.0
    %2436 = vmatpush.msra.mxu0 0.0
    %2437 = vmatpush.msra.mxu0 0.0
    %2438 = vmatpush.msra.mxu0 %v2424
    %2439 = vmatpush.msra.mxu0 %v2423
    %2440 = vmatpush.msra.mxu0 %v2422
    %2441 = vmatpush.msra.mxu0 %v2421
    %2442 = vmatmul.f32.gmra.mxu0 %v408
    %v2443 = vpop.f32.mrf.mxu0
    %v2444 = vadd.f32 %v2425, %v2443
    %2445 = vdwg.mxu0
    %s2446 = scalar_lea.vmem %s10, 32
    %v2447 = vld [vmem:[%s2446] sm:$0xff]
    %v2448 = vld [vmem:[%s2446 + $0x8] sm:$0xff]
    %v2449 = vld [vmem:[%s2446 + $0x10] sm:$0xff]
    %v2450 = vld [vmem:[%s2446 + $0x18] sm:$0xff]
    %s2451 = scalar_lea.vmem %s12, 1
    %v2452 = vld [vmem:[%s2451] sm:$0x1]
    %2453 = vmatpush.msra.mxu0 0.0
    %2454 = vmatpush.msra.mxu0 0.0
    %2455 = vmatpush.msra.mxu0 0.0
    %2456 = vmatpush.msra.mxu0 0.0
    %2457 = vmatpush.msra.mxu0 0.0
    %2458 = vmatpush.msra.mxu0 0.0
    %2459 = vmatpush.msra.mxu0 0.0
    %2460 = vmatpush.msra.mxu0 0.0
    %2461 = vmatpush.msra.mxu0 0.0
    %2462 = vmatpush.msra.mxu0 0.0
    %2463 = vmatpush.msra.mxu0 0.0
    %2464 = vmatpush.msra.mxu0 0.0
    %2465 = vmatpush.msra.mxu0 %v2450
    %2466 = vmatpush.msra.mxu0 %v2449
    %2467 = vmatpush.msra.mxu0 %v2448
    %2468 = vmatpush.msra.mxu0 %v2447
    %2469 = vmatmul.f32.gmra.mxu0 %v408
    %v2470 = vpop.f32.mrf.mxu0
    %v2471 = vadd.f32 %v2452, %v2470
    %2472 = vdwg.mxu0
    %s2473 = scalar_lea.vmem %s10, 64
    %v2474 = vld [vmem:[%s2473] sm:$0xff]
    %v2475 = vld [vmem:[%s2473 + $0x8] sm:$0xff]
    %v2476 = vld [vmem:[%s2473 + $0x10] sm:$0xff]
    %v2477 = vld [vmem:[%s2473 + $0x18] sm:$0xff]
    %s2478 = scalar_lea.vmem %s12, 2
    %v2479 = vld [vmem:[%s2478] sm:$0x1]
    %2480 = vmatpush.msra.mxu0 0.0
    %2481 = vmatpush.msra.mxu0 0.0
    %2482 = vmatpush.msra.mxu0 0.0
    %2483 = vmatpush.msra.mxu0 0.0
    %2484 = vmatpush.msra.mxu0 0.0
    %2485 = vmatpush.msra.mxu0 0.0
    %2486 = vmatpush.msra.mxu0 0.0
    %2487 = vmatpush.msra.mxu0 0.0
    %2488 = vmatpush.msra.mxu0 0.0
    %2489 = vmatpush.msra.mxu0 0.0
    %2490 = vmatpush.msra.mxu0 0.0
    %2491 = vmatpush.msra.mxu0 0.0
    %2492 = vmatpush.msra.mxu0 %v2477
    %2493 = vmatpush.msra.mxu0 %v2476
    %2494 = vmatpush.msra.mxu0 %v2475
    %2495 = vmatpush.msra.mxu0 %v2474
    %2496 = vmatmul.f32.gmra.mxu0 %v408
    %v2497 = vpop.f32.mrf.mxu0
    %v2498 = vadd.f32 %v2479, %v2497
    %2499 = vdwg.mxu0
    %v2500 = vadd.f32 %v2251, %v2444
    %v2501 = vxor.u32 %v2500, 2147483648
    %v2502 = vmul.f32 %v2501, 1.442695
    %v2503 = vpow.pop %v2502
    %v2504 = vadd.f32 %v2503, 1.0
    %v2505 = vrcp.pop %v2504
    %v2506 = vmul.f32 %v2504, %v2505
    %v2507 = vsub.f32 1.0, %v2506
    %v2508 = vmul.f32 %v2505, %v2507
    %v2509 = vadd.f32 %v2505, %v2508
    %vm2510 = vweird.f32 %v2504
    %vm2511 = vweird.f32 %v2505
    %vm2512 = vmor %vm2510, %vm2511
    %v2513 = vsel %vm2512, %v2505, %v2509
    %v2514 = vand.u32 2147483647, %v2504
    %vm2515 = vcmp.eq.f32.partialorder %v2514, 8.507059e+37
    %v2516 = vand.u32 %v2504, 2147483648
    %v2517 = vor.u32 1.1754944e-38, %v2516
    %v2518 = vsel %vm2515, %v2517, %v2513
    %v2519 = vmul.f32 1.0, %v2518
    %v2520 = vadd.f32 %v2285, %v2471
    %v2521 = vxor.u32 %v2520, 2147483648
    %v2522 = vmul.f32 %v2521, 1.442695
    %v2523 = vpow.pop %v2522
    %v2524 = vadd.f32 %v2523, 1.0
    %v2525 = vrcp.pop %v2524
    %v2526 = vmul.f32 %v2524, %v2525
    %v2527 = vsub.f32 1.0, %v2526
    %v2528 = vmul.f32 %v2525, %v2527
    %v2529 = vadd.f32 %v2525, %v2528
    %vm2530 = vweird.f32 %v2524
    %vm2531 = vweird.f32 %v2525
    %vm2532 = vmor %vm2530, %vm2531
    %v2533 = vsel %vm2532, %v2525, %v2529
    %v2534 = vand.u32 2147483647, %v2524
    %vm2535 = vcmp.eq.f32.partialorder %v2534, 8.507059e+37
    %v2536 = vand.u32 %v2524, 2147483648
    %v2537 = vor.u32 1.1754944e-38, %v2536
    %v2538 = vsel %vm2535, %v2537, %v2533
    %v2539 = vmul.f32 1.0, %v2538
    %v2540 = vmul.f32 %v2519, %v2498
    %v2541 = vadd.f32 %v2319, %v2540
    %v2542 = vtanh.pop %v2541
    %v2543 = vsub.f32 1.0, %v2539
    %v2544 = vmul.f32 %v2543, %v2542
    %v2545 = vmul.f32 %v2539, 0.0
    %v2546 = vadd.f32 %v2544, %v2545
    %v2547 = vld [vmem:[%s14] sm:$0xff]
    %v2548 = vld [vmem:[%s14 + $0x8] sm:$0xff]
    %v2549 = vld [vmem:[%s14 + $0x10] sm:$0xff]
    %v2550 = vld [vmem:[%s14 + $0x18] sm:$0xff]
    %v2551 = vld [vmem:[%s16] sm:$0x1]
    %2552 = vmatpush.msra.mxu0 0.0
    %2553 = vmatpush.msra.mxu0 0.0
    %2554 = vmatpush.msra.mxu0 0.0
    %2555 = vmatpush.msra.mxu0 0.0
    %2556 = vmatpush.msra.mxu0 0.0
    %2557 = vmatpush.msra.mxu0 0.0
    %2558 = vmatpush.msra.mxu0 0.0
    %2559 = vmatpush.msra.mxu0 0.0
    %2560 = vmatpush.msra.mxu0 0.0
    %2561 = vmatpush.msra.mxu0 0.0
    %2562 = vmatpush.msra.mxu0 0.0
    %2563 = vmatpush.msra.mxu0 0.0
    %2564 = vmatpush.msra.mxu0 %v2550
    %2565 = vmatpush.msra.mxu0 %v2549
    %2566 = vmatpush.msra.mxu0 %v2548
    %2567 = vmatpush.msra.mxu0 %v2547
    %2568 = vmatmul.f32.gmra.mxu0 %v408
    %v2569 = vpop.f32.mrf.mxu0
    %v2570 = vadd.f32 %v2551, %v2569
    %2571 = vdwg.mxu0
    %s2572 = scalar_lea.vmem %s14, 32
    %v2573 = vld [vmem:[%s2572] sm:$0xff]
    %v2574 = vld [vmem:[%s2572 + $0x8] sm:$0xff]
    %v2575 = vld [vmem:[%s2572 + $0x10] sm:$0xff]
    %v2576 = vld [vmem:[%s2572 + $0x18] sm:$0xff]
    %s2577 = scalar_lea.vmem %s16, 1
    %v2578 = vld [vmem:[%s2577] sm:$0x1]
    %2579 = vmatpush.msra.mxu0 0.0
    %2580 = vmatpush.msra.mxu0 0.0
    %2581 = vmatpush.msra.mxu0 0.0
    %2582 = vmatpush.msra.mxu0 0.0
    %2583 = vmatpush.msra.mxu0 0.0
    %2584 = vmatpush.msra.mxu0 0.0
    %2585 = vmatpush.msra.mxu0 0.0
    %2586 = vmatpush.msra.mxu0 0.0
    %2587 = vmatpush.msra.mxu0 0.0
    %2588 = vmatpush.msra.mxu0 0.0
    %2589 = vmatpush.msra.mxu0 0.0
    %2590 = vmatpush.msra.mxu0 0.0
    %2591 = vmatpush.msra.mxu0 %v2576
    %2592 = vmatpush.msra.mxu0 %v2575
    %2593 = vmatpush.msra.mxu0 %v2574
    %2594 = vmatpush.msra.mxu0 %v2573
    %2595 = vmatmul.f32.gmra.mxu0 %v408
    %v2596 = vpop.f32.mrf.mxu0
    %v2597 = vadd.f32 %v2578, %v2596
    %2598 = vdwg.mxu0
    %s2599 = scalar_lea.vmem %s14, 64
    %v2600 = vld [vmem:[%s2599] sm:$0xff]
    %v2601 = vld [vmem:[%s2599 + $0x8] sm:$0xff]
    %v2602 = vld [vmem:[%s2599 + $0x10] sm:$0xff]
    %v2603 = vld [vmem:[%s2599 + $0x18] sm:$0xff]
    %s2604 = scalar_lea.vmem %s16, 2
    %v2605 = vld [vmem:[%s2604] sm:$0x1]
    %2606 = vmatpush.msra.mxu0 0.0
    %2607 = vmatpush.msra.mxu0 0.0
    %2608 = vmatpush.msra.mxu0 0.0
    %2609 = vmatpush.msra.mxu0 0.0
    %2610 = vmatpush.msra.mxu0 0.0
    %2611 = vmatpush.msra.mxu0 0.0
    %2612 = vmatpush.msra.mxu0 0.0
    %2613 = vmatpush.msra.mxu0 0.0
    %2614 = vmatpush.msra.mxu0 0.0
    %2615 = vmatpush.msra.mxu0 0.0
    %2616 = vmatpush.msra.mxu0 0.0
    %2617 = vmatpush.msra.mxu0 0.0
    %2618 = vmatpush.msra.mxu0 %v2603
    %2619 = vmatpush.msra.mxu0 %v2602
    %2620 = vmatpush.msra.mxu0 %v2601
    %2621 = vmatpush.msra.mxu0 %v2600
    %2622 = vmatmul.f32.gmra.mxu0 %v408
    %v2623 = vpop.f32.mrf.mxu0
    %v2624 = vadd.f32 %v2605, %v2623
    %2625 = vdwg.mxu0
    %v2627 = vrot.slane %v2570, 4
    %v2629 = vadd.f32 %v2351, %v2627
    %v2630 = vxor.u32 %v2629, 2147483648
    %v2631 = vmul.f32 %v2630, 1.442695
    %v2632 = vpow.pop %v2631
    %v2633 = vadd.f32 %v2632, 1.0
    %v2634 = vrcp.pop %v2633
    %v2635 = vmul.f32 %v2633, %v2634
    %v2636 = vsub.f32 1.0, %v2635
    %v2637 = vmul.f32 %v2634, %v2636
    %v2638 = vadd.f32 %v2634, %v2637
    %vm2639 = vweird.f32 %v2633
    %vm2640 = vweird.f32 %v2634
    %vm2641 = vmor %vm2639, %vm2640
    %v2642 = vsel %vm2641, %v2634, %v2638
    %v2643 = vand.u32 2147483647, %v2633
    %vm2644 = vcmp.eq.f32.partialorder %v2643, 8.507059e+37
    %v2645 = vand.u32 %v2633, 2147483648
    %v2646 = vor.u32 1.1754944e-38, %v2645
    %v2647 = vsel %vm2644, %v2646, %v2642
    %v2648 = vmul.f32 1.0, %v2647
    %v2650 = vrot.slane %v2597, 4
    %v2652 = vadd.f32 %v2385, %v2650
    %v2653 = vxor.u32 %v2652, 2147483648
    %v2654 = vmul.f32 %v2653, 1.442695
    %v2655 = vpow.pop %v2654
    %v2656 = vadd.f32 %v2655, 1.0
    %v2657 = vrcp.pop %v2656
    %v2658 = vmul.f32 %v2656, %v2657
    %v2659 = vsub.f32 1.0, %v2658
    %v2660 = vmul.f32 %v2657, %v2659
    %v2661 = vadd.f32 %v2657, %v2660
    %vm2662 = vweird.f32 %v2656
    %vm2663 = vweird.f32 %v2657
    %vm2664 = vmor %vm2662, %vm2663
    %v2665 = vsel %vm2664, %v2657, %v2661
    %v2666 = vand.u32 2147483647, %v2656
    %vm2667 = vcmp.eq.f32.partialorder %v2666, 8.507059e+37
    %v2668 = vand.u32 %v2656, 2147483648
    %v2669 = vor.u32 1.1754944e-38, %v2668
    %v2670 = vsel %vm2667, %v2669, %v2665
    %v2671 = vmul.f32 1.0, %v2670
    %v2673 = vrot.slane %v2624, 4
    %v2675 = vmul.f32 %v2648, %v2673
    %v2676 = vadd.f32 %v2419, %v2675
    %v2677 = vtanh.pop %v2676
    %v2678 = vsub.f32 1.0, %v2671
    %v2679 = vmul.f32 %v2678, %v2677
    %v2680 = vmul.f32 %v2671, 0.0
    %v2681 = vadd.f32 %v2679, %v2680
    %v2683 = vsel %vm406, %v2546, 0
    %2685 = vmatpush.msra.mxu0 0.0
    %2686 = vmatpush.msra.mxu0 0.0
    %2687 = vmatpush.msra.mxu0 0.0
    %2688 = vmatpush.msra.mxu0 0.0
    %2689 = vmatpush.msra.mxu0 0.0
    %2690 = vmatpush.msra.mxu0 0.0
    %2691 = vmatpush.msra.mxu0 0.0
    %2692 = vmatpush.msra.mxu0 0.0
    %2693 = vmatpush.msra.mxu0 0.0
    %2694 = vmatpush.msra.mxu0 0.0
    %2695 = vmatpush.msra.mxu0 0.0
    %2696 = vmatpush.msra.mxu0 0.0
    %2697 = vmatpush.msra.mxu0 %v2424
    %2698 = vmatpush.msra.mxu0 %v2423
    %2699 = vmatpush.msra.mxu0 %v2422
    %2700 = vmatpush.msra.mxu0 %v2421
    %2701 = vmatmul.f32.gmra.mxu0 %v2683
    %v2702 = vpop.f32.mrf.mxu0
    %v2703 = vadd.f32 %v2425, %v2702
    %2704 = vdwg.mxu0
    %2705 = vmatpush.msra.mxu0 0.0
    %2706 = vmatpush.msra.mxu0 0.0
    %2707 = vmatpush.msra.mxu0 0.0
    %2708 = vmatpush.msra.mxu0 0.0
    %2709 = vmatpush.msra.mxu0 0.0
    %2710 = vmatpush.msra.mxu0 0.0
    %2711 = vmatpush.msra.mxu0 0.0
    %2712 = vmatpush.msra.mxu0 0.0
    %2713 = vmatpush.msra.mxu0 0.0
    %2714 = vmatpush.msra.mxu0 0.0
    %2715 = vmatpush.msra.mxu0 0.0
    %2716 = vmatpush.msra.mxu0 0.0
    %2717 = vmatpush.msra.mxu0 %v2450
    %2718 = vmatpush.msra.mxu0 %v2449
    %2719 = vmatpush.msra.mxu0 %v2448
    %2720 = vmatpush.msra.mxu0 %v2447
    %2721 = vmatmul.f32.gmra.mxu0 %v2683
    %v2722 = vpop.f32.mrf.mxu0
    %v2723 = vadd.f32 %v2452, %v2722
    %2724 = vdwg.mxu0
    %2725 = vmatpush.msra.mxu0 0.0
    %2726 = vmatpush.msra.mxu0 0.0
    %2727 = vmatpush.msra.mxu0 0.0
    %2728 = vmatpush.msra.mxu0 0.0
    %2729 = vmatpush.msra.mxu0 0.0
    %2730 = vmatpush.msra.mxu0 0.0
    %2731 = vmatpush.msra.mxu0 0.0
    %2732 = vmatpush.msra.mxu0 0.0
    %2733 = vmatpush.msra.mxu0 0.0
    %2734 = vmatpush.msra.mxu0 0.0
    %2735 = vmatpush.msra.mxu0 0.0
    %2736 = vmatpush.msra.mxu0 0.0
    %2737 = vmatpush.msra.mxu0 %v2477
    %2738 = vmatpush.msra.mxu0 %v2476
    %2739 = vmatpush.msra.mxu0 %v2475
    %2740 = vmatpush.msra.mxu0 %v2474
    %2741 = vmatmul.f32.gmra.mxu0 %v2683
    %v2742 = vpop.f32.mrf.mxu0
    %v2743 = vadd.f32 %v2479, %v2742
    %2744 = vdwg.mxu0
    %v2746 = vrot.slane %v2703, 7
    %v2748 = vadd.f32 %v2251, %v2746
    %v2749 = vxor.u32 %v2748, 2147483648
    %v2750 = vmul.f32 %v2749, 1.442695
    %v2751 = vpow.pop %v2750
    %v2752 = vadd.f32 %v2751, 1.0
    %v2753 = vrcp.pop %v2752
    %v2754 = vmul.f32 %v2752, %v2753
    %v2755 = vsub.f32 1.0, %v2754
    %v2756 = vmul.f32 %v2753, %v2755
    %v2757 = vadd.f32 %v2753, %v2756
    %vm2758 = vweird.f32 %v2752
    %vm2759 = vweird.f32 %v2753
    %vm2760 = vmor %vm2758, %vm2759
    %v2761 = vsel %vm2760, %v2753, %v2757
    %v2762 = vand.u32 2147483647, %v2752
    %vm2763 = vcmp.eq.f32.partialorder %v2762, 8.507059e+37
    %v2764 = vand.u32 %v2752, 2147483648
    %v2765 = vor.u32 1.1754944e-38, %v2764
    %v2766 = vsel %vm2763, %v2765, %v2761
    %v2767 = vmul.f32 1.0, %v2766
    %v2769 = vrot.slane %v2723, 7
    %v2771 = vadd.f32 %v2285, %v2769
    %v2772 = vxor.u32 %v2771, 2147483648
    %v2773 = vmul.f32 %v2772, 1.442695
    %v2774 = vpow.pop %v2773
    %v2775 = vadd.f32 %v2774, 1.0
    %v2776 = vrcp.pop %v2775
    %v2777 = vmul.f32 %v2775, %v2776
    %v2778 = vsub.f32 1.0, %v2777
    %v2779 = vmul.f32 %v2776, %v2778
    %v2780 = vadd.f32 %v2776, %v2779
    %vm2781 = vweird.f32 %v2775
    %vm2782 = vweird.f32 %v2776
    %vm2783 = vmor %vm2781, %vm2782
    %v2784 = vsel %vm2783, %v2776, %v2780
    %v2785 = vand.u32 2147483647, %v2775
    %vm2786 = vcmp.eq.f32.partialorder %v2785, 8.507059e+37
    %v2787 = vand.u32 %v2775, 2147483648
    %v2788 = vor.u32 1.1754944e-38, %v2787
    %v2789 = vsel %vm2786, %v2788, %v2784
    %v2790 = vmul.f32 1.0, %v2789
    %v2792 = vrot.slane %v2743, 7
    %v2794 = vmul.f32 %v2767, %v2792
    %v2795 = vadd.f32 %v2319, %v2794
    %v2796 = vtanh.pop %v2795
    %v2797 = vsub.f32 1.0, %v2790
    %v2798 = vmul.f32 %v2797, %v2796
    %v2799 = vrot.slane %v2546, 7
    %v2801 = vmul.f32 %v2790, %v2799
    %v2802 = vadd.f32 %v2798, %v2801
    %v2804 = vrot.slane %v2681, 4
    %v2805 = vsel %vm406, %v2804, 0
    %2807 = vmatpush.msra.mxu0 0.0
    %2808 = vmatpush.msra.mxu0 0.0
    %2809 = vmatpush.msra.mxu0 0.0
    %2810 = vmatpush.msra.mxu0 0.0
    %2811 = vmatpush.msra.mxu0 0.0
    %2812 = vmatpush.msra.mxu0 0.0
    %2813 = vmatpush.msra.mxu0 0.0
    %2814 = vmatpush.msra.mxu0 0.0
    %2815 = vmatpush.msra.mxu0 0.0
    %2816 = vmatpush.msra.mxu0 0.0
    %2817 = vmatpush.msra.mxu0 0.0
    %2818 = vmatpush.msra.mxu0 0.0
    %2819 = vmatpush.msra.mxu0 %v2550
    %2820 = vmatpush.msra.mxu0 %v2549
    %2821 = vmatpush.msra.mxu0 %v2548
    %2822 = vmatpush.msra.mxu0 %v2547
    %2823 = vmatmul.f32.gmra.mxu0 %v2805
    %v2824 = vpop.f32.mrf.mxu0
    %v2825 = vadd.f32 %v2551, %v2824
    %2826 = vdwg.mxu0
    %2827 = vmatpush.msra.mxu0 0.0
    %2828 = vmatpush.msra.mxu0 0.0
    %2829 = vmatpush.msra.mxu0 0.0
    %2830 = vmatpush.msra.mxu0 0.0
    %2831 = vmatpush.msra.mxu0 0.0
    %2832 = vmatpush.msra.mxu0 0.0
    %2833 = vmatpush.msra.mxu0 0.0
    %2834 = vmatpush.msra.mxu0 0.0
    %2835 = vmatpush.msra.mxu0 0.0
    %2836 = vmatpush.msra.mxu0 0.0
    %2837 = vmatpush.msra.mxu0 0.0
    %2838 = vmatpush.msra.mxu0 0.0
    %2839 = vmatpush.msra.mxu0 %v2576
    %2840 = vmatpush.msra.mxu0 %v2575
    %2841 = vmatpush.msra.mxu0 %v2574
    %2842 = vmatpush.msra.mxu0 %v2573
    %2843 = vmatmul.f32.gmra.mxu0 %v2805
    %v2844 = vpop.f32.mrf.mxu0
    %v2845 = vadd.f32 %v2578, %v2844
    %2846 = vdwg.mxu0
    %2847 = vmatpush.msra.mxu0 0.0
    %2848 = vmatpush.msra.mxu0 0.0
    %2849 = vmatpush.msra.mxu0 0.0
    %2850 = vmatpush.msra.mxu0 0.0
    %2851 = vmatpush.msra.mxu0 0.0
    %2852 = vmatpush.msra.mxu0 0.0
    %2853 = vmatpush.msra.mxu0 0.0
    %2854 = vmatpush.msra.mxu0 0.0
    %2855 = vmatpush.msra.mxu0 0.0
    %2856 = vmatpush.msra.mxu0 0.0
    %2857 = vmatpush.msra.mxu0 0.0
    %2858 = vmatpush.msra.mxu0 0.0
    %2859 = vmatpush.msra.mxu0 %v2603
    %2860 = vmatpush.msra.mxu0 %v2602
    %2861 = vmatpush.msra.mxu0 %v2601
    %2862 = vmatpush.msra.mxu0 %v2600
    %2863 = vmatmul.f32.gmra.mxu0 %v2805
    %v2864 = vpop.f32.mrf.mxu0
    %v2865 = vadd.f32 %v2605, %v2864
    %2866 = vdwg.mxu0
    %v2868 = vrot.slane %v2825, 5
    %v2870 = vadd.f32 %v2351, %v2868
    %v2871 = vxor.u32 %v2870, 2147483648
    %v2872 = vmul.f32 %v2871, 1.442695
    %v2873 = vpow.pop %v2872
    %v2874 = vadd.f32 %v2873, 1.0
    %v2875 = vrcp.pop %v2874
    %v2876 = vmul.f32 %v2874, %v2875
    %v2877 = vsub.f32 1.0, %v2876
    %v2878 = vmul.f32 %v2875, %v2877
    %v2879 = vadd.f32 %v2875, %v2878
    %vm2880 = vweird.f32 %v2874
    %vm2881 = vweird.f32 %v2875
    %vm2882 = vmor %vm2880, %vm2881
    %v2883 = vsel %vm2882, %v2875, %v2879
    %v2884 = vand.u32 2147483647, %v2874
    %vm2885 = vcmp.eq.f32.partialorder %v2884, 8.507059e+37
    %v2886 = vand.u32 %v2874, 2147483648
    %v2887 = vor.u32 1.1754944e-38, %v2886
    %v2888 = vsel %vm2885, %v2887, %v2883
    %v2889 = vmul.f32 1.0, %v2888
    %v2891 = vrot.slane %v2845, 5
    %v2893 = vadd.f32 %v2385, %v2891
    %v2894 = vxor.u32 %v2893, 2147483648
    %v2895 = vmul.f32 %v2894, 1.442695
    %v2896 = vpow.pop %v2895
    %v2897 = vadd.f32 %v2896, 1.0
    %v2898 = vrcp.pop %v2897
    %v2899 = vmul.f32 %v2897, %v2898
    %v2900 = vsub.f32 1.0, %v2899
    %v2901 = vmul.f32 %v2898, %v2900
    %v2902 = vadd.f32 %v2898, %v2901
    %vm2903 = vweird.f32 %v2897
    %vm2904 = vweird.f32 %v2898
    %vm2905 = vmor %vm2903, %vm2904
    %v2906 = vsel %vm2905, %v2898, %v2902
    %v2907 = vand.u32 2147483647, %v2897
    %vm2908 = vcmp.eq.f32.partialorder %v2907, 8.507059e+37
    %v2909 = vand.u32 %v2897, 2147483648
    %v2910 = vor.u32 1.1754944e-38, %v2909
    %v2911 = vsel %vm2908, %v2910, %v2906
    %v2912 = vmul.f32 1.0, %v2911
    %v2914 = vrot.slane %v2865, 5
    %v2916 = vmul.f32 %v2889, %v2914
    %v2917 = vadd.f32 %v2419, %v2916
    %v2918 = vtanh.pop %v2917
    %v2919 = vsub.f32 1.0, %v2912
    %v2920 = vmul.f32 %v2919, %v2918
    %v2921 = vrot.slane %v2681, 1
    %v2923 = vmul.f32 %v2912, %v2921
    %v2924 = vadd.f32 %v2920, %v2923
    %v2926 = vrot.slane %v2802, 1
    %v2927 = vsel %vm406, %v2926, 0
    %2929 = vmatpush.msra.mxu0 0.0
    %2930 = vmatpush.msra.mxu0 0.0
    %2931 = vmatpush.msra.mxu0 0.0
    %2932 = vmatpush.msra.mxu0 0.0
    %2933 = vmatpush.msra.mxu0 0.0
    %2934 = vmatpush.msra.mxu0 0.0
    %2935 = vmatpush.msra.mxu0 0.0
    %2936 = vmatpush.msra.mxu0 0.0
    %2937 = vmatpush.msra.mxu0 0.0
    %2938 = vmatpush.msra.mxu0 0.0
    %2939 = vmatpush.msra.mxu0 0.0
    %2940 = vmatpush.msra.mxu0 0.0
    %2941 = vmatpush.msra.mxu0 %v2424
    %2942 = vmatpush.msra.mxu0 %v2423
    %2943 = vmatpush.msra.mxu0 %v2422
    %2944 = vmatpush.msra.mxu0 %v2421
    %2945 = vmatmul.f32.gmra.mxu0 %v2927
    %v2946 = vpop.f32.mrf.mxu0
    %v2947 = vadd.f32 %v2425, %v2946
    %2948 = vdwg.mxu0
    %2949 = vmatpush.msra.mxu0 0.0
    %2950 = vmatpush.msra.mxu0 0.0
    %2951 = vmatpush.msra.mxu0 0.0
    %2952 = vmatpush.msra.mxu0 0.0
    %2953 = vmatpush.msra.mxu0 0.0
    %2954 = vmatpush.msra.mxu0 0.0
    %2955 = vmatpush.msra.mxu0 0.0
    %2956 = vmatpush.msra.mxu0 0.0
    %2957 = vmatpush.msra.mxu0 0.0
    %2958 = vmatpush.msra.mxu0 0.0
    %2959 = vmatpush.msra.mxu0 0.0
    %2960 = vmatpush.msra.mxu0 0.0
    %2961 = vmatpush.msra.mxu0 %v2450
    %2962 = vmatpush.msra.mxu0 %v2449
    %2963 = vmatpush.msra.mxu0 %v2448
    %2964 = vmatpush.msra.mxu0 %v2447
    %2965 = vmatmul.f32.gmra.mxu0 %v2927
    %v2966 = vpop.f32.mrf.mxu0
    %v2967 = vadd.f32 %v2452, %v2966
    %2968 = vdwg.mxu0
    %2969 = vmatpush.msra.mxu0 0.0
    %2970 = vmatpush.msra.mxu0 0.0
    %2971 = vmatpush.msra.mxu0 0.0
    %2972 = vmatpush.msra.mxu0 0.0
    %2973 = vmatpush.msra.mxu0 0.0
    %2974 = vmatpush.msra.mxu0 0.0
    %2975 = vmatpush.msra.mxu0 0.0
    %2976 = vmatpush.msra.mxu0 0.0
    %2977 = vmatpush.msra.mxu0 0.0
    %2978 = vmatpush.msra.mxu0 0.0
    %2979 = vmatpush.msra.mxu0 0.0
    %2980 = vmatpush.msra.mxu0 0.0
    %2981 = vmatpush.msra.mxu0 %v2477
    %2982 = vmatpush.msra.mxu0 %v2476
    %2983 = vmatpush.msra.mxu0 %v2475
    %2984 = vmatpush.msra.mxu0 %v2474
    %2985 = vmatmul.f32.gmra.mxu0 %v2927
    %v2986 = vpop.f32.mrf.mxu0
    %v2987 = vadd.f32 %v2479, %v2986
    %2988 = vdwg.mxu0
    %v2990 = vrot.slane %v2947, 6
    %v2992 = vadd.f32 %v2251, %v2990
    %v2993 = vxor.u32 %v2992, 2147483648
    %v2994 = vmul.f32 %v2993, 1.442695
    %v2995 = vpow.pop %v2994
    %v2996 = vadd.f32 %v2995, 1.0
    %v2997 = vrcp.pop %v2996
    %v2998 = vmul.f32 %v2996, %v2997
    %v2999 = vsub.f32 1.0, %v2998
    %v3000 = vmul.f32 %v2997, %v2999
    %v3001 = vadd.f32 %v2997, %v3000
    %vm3002 = vweird.f32 %v2996
    %vm3003 = vweird.f32 %v2997
    %vm3004 = vmor %vm3002, %vm3003
    %v3005 = vsel %vm3004, %v2997, %v3001
    %v3006 = vand.u32 2147483647, %v2996
    %vm3007 = vcmp.eq.f32.partialorder %v3006, 8.507059e+37
    %v3008 = vand.u32 %v2996, 2147483648
    %v3009 = vor.u32 1.1754944e-38, %v3008
    %v3010 = vsel %vm3007, %v3009, %v3005
    %v3011 = vmul.f32 1.0, %v3010
    %v3013 = vrot.slane %v2967, 6
    %v3015 = vadd.f32 %v2285, %v3013
    %v3016 = vxor.u32 %v3015, 2147483648
    %v3017 = vmul.f32 %v3016, 1.442695
    %v3018 = vpow.pop %v3017
    %v3019 = vadd.f32 %v3018, 1.0
    %v3020 = vrcp.pop %v3019
    %v3021 = vmul.f32 %v3019, %v3020
    %v3022 = vsub.f32 1.0, %v3021
    %v3023 = vmul.f32 %v3020, %v3022
    %v3024 = vadd.f32 %v3020, %v3023
    %vm3025 = vweird.f32 %v3019
    %vm3026 = vweird.f32 %v3020
    %vm3027 = vmor %vm3025, %vm3026
    %v3028 = vsel %vm3027, %v3020, %v3024
    %v3029 = vand.u32 2147483647, %v3019
    %vm3030 = vcmp.eq.f32.partialorder %v3029, 8.507059e+37
    %v3031 = vand.u32 %v3019, 2147483648
    %v3032 = vor.u32 1.1754944e-38, %v3031
    %v3033 = vsel %vm3030, %v3032, %v3028
    %v3034 = vmul.f32 1.0, %v3033
    %v3036 = vrot.slane %v2987, 6
    %v3038 = vmul.f32 %v3011, %v3036
    %v3039 = vadd.f32 %v2319, %v3038
    %v3040 = vtanh.pop %v3039
    %v3041 = vsub.f32 1.0, %v3034
    %v3042 = vmul.f32 %v3041, %v3040
    %v3043 = vrot.slane %v2802, 7
    %v3045 = vmul.f32 %v3034, %v3043
    %v3046 = vadd.f32 %v3042, %v3045
    %v3048 = vrot.slane %v2924, 3
    %v3049 = vsel %vm406, %v3048, 0
    %3051 = vmatpush.msra.mxu0 0.0
    %3052 = vmatpush.msra.mxu0 0.0
    %3053 = vmatpush.msra.mxu0 0.0
    %3054 = vmatpush.msra.mxu0 0.0
    %3055 = vmatpush.msra.mxu0 0.0
    %3056 = vmatpush.msra.mxu0 0.0
    %3057 = vmatpush.msra.mxu0 0.0
    %3058 = vmatpush.msra.mxu0 0.0
    %3059 = vmatpush.msra.mxu0 0.0
    %3060 = vmatpush.msra.mxu0 0.0
    %3061 = vmatpush.msra.mxu0 0.0
    %3062 = vmatpush.msra.mxu0 0.0
    %3063 = vmatpush.msra.mxu0 %v2550
    %3064 = vmatpush.msra.mxu0 %v2549
    %3065 = vmatpush.msra.mxu0 %v2548
    %3066 = vmatpush.msra.mxu0 %v2547
    %3067 = vmatmul.f32.gmra.mxu0 %v3049
    %v3068 = vpop.f32.mrf.mxu0
    %v3069 = vadd.f32 %v2551, %v3068
    %3070 = vdwg.mxu0
    %3071 = vmatpush.msra.mxu0 0.0
    %3072 = vmatpush.msra.mxu0 0.0
    %3073 = vmatpush.msra.mxu0 0.0
    %3074 = vmatpush.msra.mxu0 0.0
    %3075 = vmatpush.msra.mxu0 0.0
    %3076 = vmatpush.msra.mxu0 0.0
    %3077 = vmatpush.msra.mxu0 0.0
    %3078 = vmatpush.msra.mxu0 0.0
    %3079 = vmatpush.msra.mxu0 0.0
    %3080 = vmatpush.msra.mxu0 0.0
    %3081 = vmatpush.msra.mxu0 0.0
    %3082 = vmatpush.msra.mxu0 0.0
    %3083 = vmatpush.msra.mxu0 %v2576
    %3084 = vmatpush.msra.mxu0 %v2575
    %3085 = vmatpush.msra.mxu0 %v2574
    %3086 = vmatpush.msra.mxu0 %v2573
    %3087 = vmatmul.f32.gmra.mxu0 %v3049
    %v3088 = vpop.f32.mrf.mxu0
    %v3089 = vadd.f32 %v2578, %v3088
    %3090 = vdwg.mxu0
    %3091 = vmatpush.msra.mxu0 0.0
    %3092 = vmatpush.msra.mxu0 0.0
    %3093 = vmatpush.msra.mxu0 0.0
    %3094 = vmatpush.msra.mxu0 0.0
    %3095 = vmatpush.msra.mxu0 0.0
    %3096 = vmatpush.msra.mxu0 0.0
    %3097 = vmatpush.msra.mxu0 0.0
    %3098 = vmatpush.msra.mxu0 0.0
    %3099 = vmatpush.msra.mxu0 0.0
    %3100 = vmatpush.msra.mxu0 0.0
    %3101 = vmatpush.msra.mxu0 0.0
    %3102 = vmatpush.msra.mxu0 0.0
    %3103 = vmatpush.msra.mxu0 %v2603
    %3104 = vmatpush.msra.mxu0 %v2602
    %3105 = vmatpush.msra.mxu0 %v2601
    %3106 = vmatpush.msra.mxu0 %v2600
    %3107 = vmatmul.f32.gmra.mxu0 %v3049
    %v3108 = vpop.f32.mrf.mxu0
    %v3109 = vadd.f32 %v2605, %v3108
    %3110 = vdwg.mxu0
    %v3112 = vrot.slane %v3069, 6
    %v3114 = vadd.f32 %v2351, %v3112
    %v3115 = vxor.u32 %v3114, 2147483648
    %v3116 = vmul.f32 %v3115, 1.442695
    %v3117 = vpow.pop %v3116
    %v3118 = vadd.f32 %v3117, 1.0
    %v3119 = vrcp.pop %v3118
    %v3120 = vmul.f32 %v3118, %v3119
    %v3121 = vsub.f32 1.0, %v3120
    %v3122 = vmul.f32 %v3119, %v3121
    %v3123 = vadd.f32 %v3119, %v3122
    %vm3124 = vweird.f32 %v3118
    %vm3125 = vweird.f32 %v3119
    %vm3126 = vmor %vm3124, %vm3125
    %v3127 = vsel %vm3126, %v3119, %v3123
    %v3128 = vand.u32 2147483647, %v3118
    %vm3129 = vcmp.eq.f32.partialorder %v3128, 8.507059e+37
    %v3130 = vand.u32 %v3118, 2147483648
    %v3131 = vor.u32 1.1754944e-38, %v3130
    %v3132 = vsel %vm3129, %v3131, %v3127
    %v3133 = vmul.f32 1.0, %v3132
    %v3135 = vrot.slane %v3089, 6
    %v3137 = vadd.f32 %v2385, %v3135
    %v3138 = vxor.u32 %v3137, 2147483648
    %v3139 = vmul.f32 %v3138, 1.442695
    %v3140 = vpow.pop %v3139
    %v3141 = vadd.f32 %v3140, 1.0
    %v3142 = vrcp.pop %v3141
    %v3143 = vmul.f32 %v3141, %v3142
    %v3144 = vsub.f32 1.0, %v3143
    %v3145 = vmul.f32 %v3142, %v3144
    %v3146 = vadd.f32 %v3142, %v3145
    %vm3147 = vweird.f32 %v3141
    %vm3148 = vweird.f32 %v3142
    %vm3149 = vmor %vm3147, %vm3148
    %v3150 = vsel %vm3149, %v3142, %v3146
    %v3151 = vand.u32 2147483647, %v3141
    %vm3152 = vcmp.eq.f32.partialorder %v3151, 8.507059e+37
    %v3153 = vand.u32 %v3141, 2147483648
    %v3154 = vor.u32 1.1754944e-38, %v3153
    %v3155 = vsel %vm3152, %v3154, %v3150
    %v3156 = vmul.f32 1.0, %v3155
    %v3158 = vrot.slane %v3109, 6
    %v3160 = vmul.f32 %v3133, %v3158
    %v3161 = vadd.f32 %v2419, %v3160
    %v3162 = vtanh.pop %v3161
    %v3163 = vsub.f32 1.0, %v3156
    %v3164 = vmul.f32 %v3163, %v3162
    %v3165 = vrot.slane %v2924, 1
    %v3167 = vmul.f32 %v3156, %v3165
    %v3168 = vadd.f32 %v3164, %v3167
    %v3170 = vrot.slane %v3046, 2
    %v3171 = vsel %vm406, %v3170, 0
    %3173 = vmatpush.msra.mxu0 0.0
    %3174 = vmatpush.msra.mxu0 0.0
    %3175 = vmatpush.msra.mxu0 0.0
    %3176 = vmatpush.msra.mxu0 0.0
    %3177 = vmatpush.msra.mxu0 0.0
    %3178 = vmatpush.msra.mxu0 0.0
    %3179 = vmatpush.msra.mxu0 0.0
    %3180 = vmatpush.msra.mxu0 0.0
    %3181 = vmatpush.msra.mxu0 0.0
    %3182 = vmatpush.msra.mxu0 0.0
    %3183 = vmatpush.msra.mxu0 0.0
    %3184 = vmatpush.msra.mxu0 0.0
    %3185 = vmatpush.msra.mxu0 %v2424
    %3186 = vmatpush.msra.mxu0 %v2423
    %3187 = vmatpush.msra.mxu0 %v2422
    %3188 = vmatpush.msra.mxu0 %v2421
    %3189 = vmatmul.f32.gmra.mxu0 %v3171
    %v3190 = vpop.f32.mrf.mxu0
    %v3191 = vadd.f32 %v2425, %v3190
    %3192 = vdwg.mxu0
    %3193 = vmatpush.msra.mxu0 0.0
    %3194 = vmatpush.msra.mxu0 0.0
    %3195 = vmatpush.msra.mxu0 0.0
    %3196 = vmatpush.msra.mxu0 0.0
    %3197 = vmatpush.msra.mxu0 0.0
    %3198 = vmatpush.msra.mxu0 0.0
    %3199 = vmatpush.msra.mxu0 0.0
    %3200 = vmatpush.msra.mxu0 0.0
    %3201 = vmatpush.msra.mxu0 0.0
    %3202 = vmatpush.msra.mxu0 0.0
    %3203 = vmatpush.msra.mxu0 0.0
    %3204 = vmatpush.msra.mxu0 0.0
    %3205 = vmatpush.msra.mxu0 %v2450
    %3206 = vmatpush.msra.mxu0 %v2449
    %3207 = vmatpush.msra.mxu0 %v2448
    %3208 = vmatpush.msra.mxu0 %v2447
    %3209 = vmatmul.f32.gmra.mxu0 %v3171
    %v3210 = vpop.f32.mrf.mxu0
    %v3211 = vadd.f32 %v2452, %v3210
    %3212 = vdwg.mxu0
    %3213 = vmatpush.msra.mxu0 0.0
    %3214 = vmatpush.msra.mxu0 0.0
    %3215 = vmatpush.msra.mxu0 0.0
    %3216 = vmatpush.msra.mxu0 0.0
    %3217 = vmatpush.msra.mxu0 0.0
    %3218 = vmatpush.msra.mxu0 0.0
    %3219 = vmatpush.msra.mxu0 0.0
    %3220 = vmatpush.msra.mxu0 0.0
    %3221 = vmatpush.msra.mxu0 0.0
    %3222 = vmatpush.msra.mxu0 0.0
    %3223 = vmatpush.msra.mxu0 0.0
    %3224 = vmatpush.msra.mxu0 0.0
    %3225 = vmatpush.msra.mxu0 %v2477
    %3226 = vmatpush.msra.mxu0 %v2476
    %3227 = vmatpush.msra.mxu0 %v2475
    %3228 = vmatpush.msra.mxu0 %v2474
    %3229 = vmatmul.f32.gmra.mxu0 %v3171
    %v3230 = vpop.f32.mrf.mxu0
    %v3231 = vadd.f32 %v2479, %v3230
    %3232 = vdwg.mxu0
    %v3234 = vrot.slane %v3191, 5
    %v3236 = vadd.f32 %v2251, %v3234
    %v3237 = vxor.u32 %v3236, 2147483648
    %v3238 = vmul.f32 %v3237, 1.442695
    %v3239 = vpow.pop %v3238
    %v3240 = vadd.f32 %v3239, 1.0
    %v3241 = vrcp.pop %v3240
    %v3242 = vmul.f32 %v3240, %v3241
    %v3243 = vsub.f32 1.0, %v3242
    %v3244 = vmul.f32 %v3241, %v3243
    %v3245 = vadd.f32 %v3241, %v3244
    %vm3246 = vweird.f32 %v3240
    %vm3247 = vweird.f32 %v3241
    %vm3248 = vmor %vm3246, %vm3247
    %v3249 = vsel %vm3248, %v3241, %v3245
    %v3250 = vand.u32 2147483647, %v3240
    %vm3251 = vcmp.eq.f32.partialorder %v3250, 8.507059e+37
    %v3252 = vand.u32 %v3240, 2147483648
    %v3253 = vor.u32 1.1754944e-38, %v3252
    %v3254 = vsel %vm3251, %v3253, %v3249
    %v3255 = vmul.f32 1.0, %v3254
    %v3257 = vrot.slane %v3211, 5
    %v3259 = vadd.f32 %v2285, %v3257
    %v3260 = vxor.u32 %v3259, 2147483648
    %v3261 = vmul.f32 %v3260, 1.442695
    %v3262 = vpow.pop %v3261
    %v3263 = vadd.f32 %v3262, 1.0
    %v3264 = vrcp.pop %v3263
    %v3265 = vmul.f32 %v3263, %v3264
    %v3266 = vsub.f32 1.0, %v3265
    %v3267 = vmul.f32 %v3264, %v3266
    %v3268 = vadd.f32 %v3264, %v3267
    %vm3269 = vweird.f32 %v3263
    %vm3270 = vweird.f32 %v3264
    %vm3271 = vmor %vm3269, %vm3270
    %v3272 = vsel %vm3271, %v3264, %v3268
    %v3273 = vand.u32 2147483647, %v3263
    %vm3274 = vcmp.eq.f32.partialorder %v3273, 8.507059e+37
    %v3275 = vand.u32 %v3263, 2147483648
    %v3276 = vor.u32 1.1754944e-38, %v3275
    %v3277 = vsel %vm3274, %v3276, %v3272
    %v3278 = vmul.f32 1.0, %v3277
    %v3280 = vrot.slane %v3231, 5
    %v3282 = vmul.f32 %v3255, %v3280
    %v3283 = vadd.f32 %v2319, %v3282
    %v3284 = vtanh.pop %v3283
    %v3285 = vsub.f32 1.0, %v3278
    %v3286 = vmul.f32 %v3285, %v3284
    %v3287 = vrot.slane %v3046, 7
    %v3289 = vmul.f32 %v3278, %v3287
    %v3290 = vadd.f32 %v3286, %v3289
    %v3292 = vrot.slane %v3168, 2
    %v3293 = vsel %vm406, %v3292, 0
    %3295 = vmatpush.msra.mxu0 0.0
    %3296 = vmatpush.msra.mxu0 0.0
    %3297 = vmatpush.msra.mxu0 0.0
    %3298 = vmatpush.msra.mxu0 0.0
    %3299 = vmatpush.msra.mxu0 0.0
    %3300 = vmatpush.msra.mxu0 0.0
    %3301 = vmatpush.msra.mxu0 0.0
    %3302 = vmatpush.msra.mxu0 0.0
    %3303 = vmatpush.msra.mxu0 0.0
    %3304 = vmatpush.msra.mxu0 0.0
    %3305 = vmatpush.msra.mxu0 0.0
    %3306 = vmatpush.msra.mxu0 0.0
    %3307 = vmatpush.msra.mxu0 %v2550
    %3308 = vmatpush.msra.mxu0 %v2549
    %3309 = vmatpush.msra.mxu0 %v2548
    %3310 = vmatpush.msra.mxu0 %v2547
    %3311 = vmatmul.f32.gmra.mxu0 %v3293
    %v3312 = vpop.f32.mrf.mxu0
    %v3313 = vadd.f32 %v2551, %v3312
    %3314 = vdwg.mxu0
    %3315 = vmatpush.msra.mxu0 0.0
    %3316 = vmatpush.msra.mxu0 0.0
    %3317 = vmatpush.msra.mxu0 0.0
    %3318 = vmatpush.msra.mxu0 0.0
    %3319 = vmatpush.msra.mxu0 0.0
    %3320 = vmatpush.msra.mxu0 0.0
    %3321 = vmatpush.msra.mxu0 0.0
    %3322 = vmatpush.msra.mxu0 0.0
    %3323 = vmatpush.msra.mxu0 0.0
    %3324 = vmatpush.msra.mxu0 0.0
    %3325 = vmatpush.msra.mxu0 0.0
    %3326 = vmatpush.msra.mxu0 0.0
    %3327 = vmatpush.msra.mxu0 %v2576
    %3328 = vmatpush.msra.mxu0 %v2575
    %3329 = vmatpush.msra.mxu0 %v2574
    %3330 = vmatpush.msra.mxu0 %v2573
    %3331 = vmatmul.f32.gmra.mxu0 %v3293
    %v3332 = vpop.f32.mrf.mxu0
    %v3333 = vadd.f32 %v2578, %v3332
    %3334 = vdwg.mxu0
    %3335 = vmatpush.msra.mxu0 0.0
    %3336 = vmatpush.msra.mxu0 0.0
    %3337 = vmatpush.msra.mxu0 0.0
    %3338 = vmatpush.msra.mxu0 0.0
    %3339 = vmatpush.msra.mxu0 0.0
    %3340 = vmatpush.msra.mxu0 0.0
    %3341 = vmatpush.msra.mxu0 0.0
    %3342 = vmatpush.msra.mxu0 0.0
    %3343 = vmatpush.msra.mxu0 0.0
    %3344 = vmatpush.msra.mxu0 0.0
    %3345 = vmatpush.msra.mxu0 0.0
    %3346 = vmatpush.msra.mxu0 0.0
    %3347 = vmatpush.msra.mxu0 %v2603
    %3348 = vmatpush.msra.mxu0 %v2602
    %3349 = vmatpush.msra.mxu0 %v2601
    %3350 = vmatpush.msra.mxu0 %v2600
    %3351 = vmatmul.f32.gmra.mxu0 %v3293
    %v3352 = vpop.f32.mrf.mxu0
    %v3353 = vadd.f32 %v2605, %v3352
    %3354 = vdwg.mxu0
    %v3356 = vrot.slane %v3313, 7
    %v3358 = vadd.f32 %v2351, %v3356
    %v3359 = vxor.u32 %v3358, 2147483648
    %v3360 = vmul.f32 %v3359, 1.442695
    %v3361 = vpow.pop %v3360
    %v3362 = vadd.f32 %v3361, 1.0
    %v3363 = vrcp.pop %v3362
    %v3364 = vmul.f32 %v3362, %v3363
    %v3365 = vsub.f32 1.0, %v3364
    %v3366 = vmul.f32 %v3363, %v3365
    %v3367 = vadd.f32 %v3363, %v3366
    %vm3368 = vweird.f32 %v3362
    %vm3369 = vweird.f32 %v3363
    %vm3370 = vmor %vm3368, %vm3369
    %v3371 = vsel %vm3370, %v3363, %v3367
    %v3372 = vand.u32 2147483647, %v3362
    %vm3373 = vcmp.eq.f32.partialorder %v3372, 8.507059e+37
    %v3374 = vand.u32 %v3362, 2147483648
    %v3375 = vor.u32 1.1754944e-38, %v3374
    %v3376 = vsel %vm3373, %v3375, %v3371
    %v3377 = vmul.f32 1.0, %v3376
    %v3379 = vrot.slane %v3333, 7
    %v3381 = vadd.f32 %v2385, %v3379
    %v3382 = vxor.u32 %v3381, 2147483648
    %v3383 = vmul.f32 %v3382, 1.442695
    %v3384 = vpow.pop %v3383
    %v3385 = vadd.f32 %v3384, 1.0
    %v3386 = vrcp.pop %v3385
    %v3387 = vmul.f32 %v3385, %v3386
    %v3388 = vsub.f32 1.0, %v3387
    %v3389 = vmul.f32 %v3386, %v3388
    %v3390 = vadd.f32 %v3386, %v3389
    %vm3391 = vweird.f32 %v3385
    %vm3392 = vweird.f32 %v3386
    %vm3393 = vmor %vm3391, %vm3392
    %v3394 = vsel %vm3393, %v3386, %v3390
    %v3395 = vand.u32 2147483647, %v3385
    %vm3396 = vcmp.eq.f32.partialorder %v3395, 8.507059e+37
    %v3397 = vand.u32 %v3385, 2147483648
    %v3398 = vor.u32 1.1754944e-38, %v3397
    %v3399 = vsel %vm3396, %v3398, %v3394
    %v3400 = vmul.f32 1.0, %v3399
    %v3402 = vrot.slane %v3353, 7
    %v3404 = vmul.f32 %v3377, %v3402
    %v3405 = vadd.f32 %v2419, %v3404
    %v3406 = vtanh.pop %v3405
    %v3407 = vsub.f32 1.0, %v3400
    %v3408 = vmul.f32 %v3407, %v3406
    %v3409 = vrot.slane %v3168, 1
    %v3411 = vmul.f32 %v3400, %v3409
    %v3412 = vadd.f32 %v3408, %v3411
    %v3414 = vrot.slane %v3290, 3
    %v3415 = vsel %vm406, %v3414, 0
    %3417 = vmatpush.msra.mxu0 0.0
    %3418 = vmatpush.msra.mxu0 0.0
    %3419 = vmatpush.msra.mxu0 0.0
    %3420 = vmatpush.msra.mxu0 0.0
    %3421 = vmatpush.msra.mxu0 0.0
    %3422 = vmatpush.msra.mxu0 0.0
    %3423 = vmatpush.msra.mxu0 0.0
    %3424 = vmatpush.msra.mxu0 0.0
    %3425 = vmatpush.msra.mxu0 0.0
    %3426 = vmatpush.msra.mxu0 0.0
    %3427 = vmatpush.msra.mxu0 0.0
    %3428 = vmatpush.msra.mxu0 0.0
    %3429 = vmatpush.msra.mxu0 %v2424
    %3430 = vmatpush.msra.mxu0 %v2423
    %3431 = vmatpush.msra.mxu0 %v2422
    %3432 = vmatpush.msra.mxu0 %v2421
    %3433 = vmatmul.f32.gmra.mxu0 %v3415
    %v3434 = vpop.f32.mrf.mxu0
    %v3435 = vadd.f32 %v2425, %v3434
    %3436 = vdwg.mxu0
    %3437 = vmatpush.msra.mxu0 0.0
    %3438 = vmatpush.msra.mxu0 0.0
    %3439 = vmatpush.msra.mxu0 0.0
    %3440 = vmatpush.msra.mxu0 0.0
    %3441 = vmatpush.msra.mxu0 0.0
    %3442 = vmatpush.msra.mxu0 0.0
    %3443 = vmatpush.msra.mxu0 0.0
    %3444 = vmatpush.msra.mxu0 0.0
    %3445 = vmatpush.msra.mxu0 0.0
    %3446 = vmatpush.msra.mxu0 0.0
    %3447 = vmatpush.msra.mxu0 0.0
    %3448 = vmatpush.msra.mxu0 0.0
    %3449 = vmatpush.msra.mxu0 %v2450
    %3450 = vmatpush.msra.mxu0 %v2449
    %3451 = vmatpush.msra.mxu0 %v2448
    %3452 = vmatpush.msra.mxu0 %v2447
    %3453 = vmatmul.f32.gmra.mxu0 %v3415
    %v3454 = vpop.f32.mrf.mxu0
    %v3455 = vadd.f32 %v2452, %v3454
    %3456 = vdwg.mxu0
    %3457 = vmatpush.msra.mxu0 0.0
    %3458 = vmatpush.msra.mxu0 0.0
    %3459 = vmatpush.msra.mxu0 0.0
    %3460 = vmatpush.msra.mxu0 0.0
    %3461 = vmatpush.msra.mxu0 0.0
    %3462 = vmatpush.msra.mxu0 0.0
    %3463 = vmatpush.msra.mxu0 0.0
    %3464 = vmatpush.msra.mxu0 0.0
    %3465 = vmatpush.msra.mxu0 0.0
    %3466 = vmatpush.msra.mxu0 0.0
    %3467 = vmatpush.msra.mxu0 0.0
    %3468 = vmatpush.msra.mxu0 0.0
    %3469 = vmatpush.msra.mxu0 %v2477
    %3470 = vmatpush.msra.mxu0 %v2476
    %3471 = vmatpush.msra.mxu0 %v2475
    %3472 = vmatpush.msra.mxu0 %v2474
    %3473 = vmatmul.f32.gmra.mxu0 %v3415
    %v3474 = vpop.f32.mrf.mxu0
    %v3475 = vadd.f32 %v2479, %v3474
    %3476 = vdwg.mxu0
    %v3478 = vrot.slane %v3435, 4
    %v3480 = vadd.f32 %v2251, %v3478
    %v3481 = vxor.u32 %v3480, 2147483648
    %v3482 = vmul.f32 %v3481, 1.442695
    %v3483 = vpow.pop %v3482
    %v3484 = vadd.f32 %v3483, 1.0
    %v3485 = vrcp.pop %v3484
    %v3486 = vmul.f32 %v3484, %v3485
    %v3487 = vsub.f32 1.0, %v3486
    %v3488 = vmul.f32 %v3485, %v3487
    %v3489 = vadd.f32 %v3485, %v3488
    %vm3490 = vweird.f32 %v3484
    %vm3491 = vweird.f32 %v3485
    %vm3492 = vmor %vm3490, %vm3491
    %v3493 = vsel %vm3492, %v3485, %v3489
    %v3494 = vand.u32 2147483647, %v3484
    %vm3495 = vcmp.eq.f32.partialorder %v3494, 8.507059e+37
    %v3496 = vand.u32 %v3484, 2147483648
    %v3497 = vor.u32 1.1754944e-38, %v3496
    %v3498 = vsel %vm3495, %v3497, %v3493
    %v3499 = vmul.f32 1.0, %v3498
    %v3501 = vrot.slane %v3455, 4
    %v3503 = vadd.f32 %v2285, %v3501
    %v3504 = vxor.u32 %v3503, 2147483648
    %v3505 = vmul.f32 %v3504, 1.442695
    %v3506 = vpow.pop %v3505
    %v3507 = vadd.f32 %v3506, 1.0
    %v3508 = vrcp.pop %v3507
    %v3509 = vmul.f32 %v3507, %v3508
    %v3510 = vsub.f32 1.0, %v3509
    %v3511 = vmul.f32 %v3508, %v3510
    %v3512 = vadd.f32 %v3508, %v3511
    %vm3513 = vweird.f32 %v3507
    %vm3514 = vweird.f32 %v3508
    %vm3515 = vmor %vm3513, %vm3514
    %v3516 = vsel %vm3515, %v3508, %v3512
    %v3517 = vand.u32 2147483647, %v3507
    %vm3518 = vcmp.eq.f32.partialorder %v3517, 8.507059e+37
    %v3519 = vand.u32 %v3507, 2147483648
    %v3520 = vor.u32 1.1754944e-38, %v3519
    %v3521 = vsel %vm3518, %v3520, %v3516
    %v3522 = vmul.f32 1.0, %v3521
    %v3524 = vrot.slane %v3475, 4
    %v3526 = vmul.f32 %v3499, %v3524
    %v3527 = vadd.f32 %v2319, %v3526
    %v3528 = vtanh.pop %v3527
    %v3529 = vsub.f32 1.0, %v3522
    %v3530 = vmul.f32 %v3529, %v3528
    %v3531 = vrot.slane %v3290, 7
    %v3533 = vmul.f32 %v3522, %v3531
    %v3534 = vadd.f32 %v3530, %v3533
    %v3536 = vrot.slane %v3412, 1
    %v3537 = vsel %vm406, %v3536, 0
    %3539 = vmatpush.msra.mxu0 0.0
    %3540 = vmatpush.msra.mxu0 0.0
    %3541 = vmatpush.msra.mxu0 0.0
    %3542 = vmatpush.msra.mxu0 0.0
    %3543 = vmatpush.msra.mxu0 0.0
    %3544 = vmatpush.msra.mxu0 0.0
    %3545 = vmatpush.msra.mxu0 0.0
    %3546 = vmatpush.msra.mxu0 0.0
    %3547 = vmatpush.msra.mxu0 0.0
    %3548 = vmatpush.msra.mxu0 0.0
    %3549 = vmatpush.msra.mxu0 0.0
    %3550 = vmatpush.msra.mxu0 0.0
    %3551 = vmatpush.msra.mxu0 %v2550
    %3552 = vmatpush.msra.mxu0 %v2549
    %3553 = vmatpush.msra.mxu0 %v2548
    %3554 = vmatpush.msra.mxu0 %v2547
    %3555 = vmatmul.f32.gmra.mxu0 %v3537
    %v3556 = vpop.f32.mrf.mxu0
    %v3557 = vadd.f32 %v2551, %v3556
    %3558 = vdwg.mxu0
    %3559 = vmatpush.msra.mxu0 0.0
    %3560 = vmatpush.msra.mxu0 0.0
    %3561 = vmatpush.msra.mxu0 0.0
    %3562 = vmatpush.msra.mxu0 0.0
    %3563 = vmatpush.msra.mxu0 0.0
    %3564 = vmatpush.msra.mxu0 0.0
    %3565 = vmatpush.msra.mxu0 0.0
    %3566 = vmatpush.msra.mxu0 0.0
    %3567 = vmatpush.msra.mxu0 0.0
    %3568 = vmatpush.msra.mxu0 0.0
    %3569 = vmatpush.msra.mxu0 0.0
    %3570 = vmatpush.msra.mxu0 0.0
    %3571 = vmatpush.msra.mxu0 %v2576
    %3572 = vmatpush.msra.mxu0 %v2575
    %3573 = vmatpush.msra.mxu0 %v2574
    %3574 = vmatpush.msra.mxu0 %v2573
    %3575 = vmatmul.f32.gmra.mxu0 %v3537
    %v3576 = vpop.f32.mrf.mxu0
    %v3577 = vadd.f32 %v2578, %v3576
    %3578 = vdwg.mxu0
    %3579 = vmatpush.msra.mxu0 0.0
    %3580 = vmatpush.msra.mxu0 0.0
    %3581 = vmatpush.msra.mxu0 0.0
    %3582 = vmatpush.msra.mxu0 0.0
    %3583 = vmatpush.msra.mxu0 0.0
    %3584 = vmatpush.msra.mxu0 0.0
    %3585 = vmatpush.msra.mxu0 0.0
    %3586 = vmatpush.msra.mxu0 0.0
    %3587 = vmatpush.msra.mxu0 0.0
    %3588 = vmatpush.msra.mxu0 0.0
    %3589 = vmatpush.msra.mxu0 0.0
    %3590 = vmatpush.msra.mxu0 0.0
    %3591 = vmatpush.msra.mxu0 %v2603
    %3592 = vmatpush.msra.mxu0 %v2602
    %3593 = vmatpush.msra.mxu0 %v2601
    %3594 = vmatpush.msra.mxu0 %v2600
    %3595 = vmatmul.f32.gmra.mxu0 %v3537
    %v3596 = vpop.f32.mrf.mxu0
    %v3597 = vadd.f32 %v2605, %v3596
    %3598 = vdwg.mxu0
    %v3599 = vadd.f32 %v2351, %v3557
    %v3600 = vxor.u32 %v3599, 2147483648
    %v3601 = vmul.f32 %v3600, 1.442695
    %v3602 = vpow.pop %v3601
    %v3603 = vadd.f32 %v3602, 1.0
    %v3604 = vrcp.pop %v3603
    %v3605 = vmul.f32 %v3603, %v3604
    %v3606 = vsub.f32 1.0, %v3605
    %v3607 = vmul.f32 %v3604, %v3606
    %v3608 = vadd.f32 %v3604, %v3607
    %vm3609 = vweird.f32 %v3603
    %vm3610 = vweird.f32 %v3604
    %vm3611 = vmor %vm3609, %vm3610
    %v3612 = vsel %vm3611, %v3604, %v3608
    %v3613 = vand.u32 2147483647, %v3603
    %vm3614 = vcmp.eq.f32.partialorder %v3613, 8.507059e+37
    %v3615 = vand.u32 %v3603, 2147483648
    %v3616 = vor.u32 1.1754944e-38, %v3615
    %v3617 = vsel %vm3614, %v3616, %v3612
    %v3618 = vmul.f32 1.0, %v3617
    %v3619 = vadd.f32 %v2385, %v3577
    %v3620 = vxor.u32 %v3619, 2147483648
    %v3621 = vmul.f32 %v3620, 1.442695
    %v3622 = vpow.pop %v3621
    %v3623 = vadd.f32 %v3622, 1.0
    %v3624 = vrcp.pop %v3623
    %v3625 = vmul.f32 %v3623, %v3624
    %v3626 = vsub.f32 1.0, %v3625
    %v3627 = vmul.f32 %v3624, %v3626
    %v3628 = vadd.f32 %v3624, %v3627
    %vm3629 = vweird.f32 %v3623
    %vm3630 = vweird.f32 %v3624
    %vm3631 = vmor %vm3629, %vm3630
    %v3632 = vsel %vm3631, %v3624, %v3628
    %v3633 = vand.u32 2147483647, %v3623
    %vm3634 = vcmp.eq.f32.partialorder %v3633, 8.507059e+37
    %v3635 = vand.u32 %v3623, 2147483648
    %v3636 = vor.u32 1.1754944e-38, %v3635
    %v3637 = vsel %vm3634, %v3636, %v3632
    %v3638 = vmul.f32 1.0, %v3637
    %v3639 = vmul.f32 %v3618, %v3597
    %v3640 = vadd.f32 %v2419, %v3639
    %v3641 = vtanh.pop %v3640
    %v3642 = vsub.f32 1.0, %v3638
    %v3643 = vmul.f32 %v3642, %v3641
    %v3645 = vmul.f32 %v3638, %v3536
    %v3646 = vadd.f32 %v3643, %v3645
    %v3648 = vrot.slane %v3646, 4
    %3649 = vrot.lane.b32.xlu0 %v3648, 32
    %v3650 = vpop.permute.xlu0 %3649
    %v3652 = vsel %vm406, %v3534, %v3650
    %v3653 = vld [vmem:[%s19] sm:$0x1]
    %s3654 = scalar_lea.vmem %s19, 1
    %v3655 = vld [vmem:[%s3654] sm:$0x1]
    %s3656 = scalar_lea.vmem %s19, 2
    %v3657 = vld [vmem:[%s3656] sm:$0x1]
    %v3658 = vld [vmem:[%s18] sm:$0xff]
    %v3659 = vld [vmem:[%s18 + $0x8] sm:$0xff]
    %v3660 = vld [vmem:[%s18 + $0x10] sm:$0xff]
    %v3661 = vld [vmem:[%s18 + $0x18] sm:$0xff]
    %v3662 = vld [vmem:[%s18 + $0x20] sm:$0xff]
    %v3663 = vld [vmem:[%s18 + $0x28] sm:$0xff]
    %v3664 = vld [vmem:[%s18 + $0x30] sm:$0xff]
    %v3665 = vld [vmem:[%s18 + $0x38] sm:$0xff]
    %v3666 = vld [vmem:[%s20] sm:$0x1]
    %v3668 = vrot.slane %v3652, 4
    %v3669 = vsel %vm2229, %v3668, 0
    %3671 = vmatpush.msra.mxu0 0.0
    %3672 = vmatpush.msra.mxu0 0.0
    %3673 = vmatpush.msra.mxu0 0.0
    %3674 = vmatpush.msra.mxu0 0.0
    %3675 = vmatpush.msra.mxu0 0.0
    %3676 = vmatpush.msra.mxu0 0.0
    %3677 = vmatpush.msra.mxu0 0.0
    %3678 = vmatpush.msra.mxu0 0.0
    %3679 = vmatpush.msra.mxu0 %v3665
    %3680 = vmatpush.msra.mxu0 %v3664
    %3681 = vmatpush.msra.mxu0 %v3663
    %3682 = vmatpush.msra.mxu0 %v3662
    %3683 = vmatpush.msra.mxu0 %v3661
    %3684 = vmatpush.msra.mxu0 %v3660
    %3685 = vmatpush.msra.mxu0 %v3659
    %3686 = vmatpush.msra.mxu0 %v3658
    %3687 = vmatmul.f32.gmra.mxu0 %v3669
    %v3688 = vpop.f32.mrf.mxu0
    %v3689 = vadd.f32 %v3666, %v3688
    %3690 = vdwg.mxu0
    %s3691 = scalar_lea.vmem %s18, 64
    %v3692 = vld [vmem:[%s3691] sm:$0xff]
    %v3693 = vld [vmem:[%s3691 + $0x8] sm:$0xff]
    %v3694 = vld [vmem:[%s3691 + $0x10] sm:$0xff]
    %v3695 = vld [vmem:[%s3691 + $0x18] sm:$0xff]
    %v3696 = vld [vmem:[%s3691 + $0x20] sm:$0xff]
    %v3697 = vld [vmem:[%s3691 + $0x28] sm:$0xff]
    %v3698 = vld [vmem:[%s3691 + $0x30] sm:$0xff]
    %v3699 = vld [vmem:[%s3691 + $0x38] sm:$0xff]
    %s3700 = scalar_lea.vmem %s20, 1
    %v3701 = vld [vmem:[%s3700] sm:$0x1]
    %3702 = vmatpush.msra.mxu0 0.0
    %3703 = vmatpush.msra.mxu0 0.0
    %3704 = vmatpush.msra.mxu0 0.0
    %3705 = vmatpush.msra.mxu0 0.0
    %3706 = vmatpush.msra.mxu0 0.0
    %3707 = vmatpush.msra.mxu0 0.0
    %3708 = vmatpush.msra.mxu0 0.0
    %3709 = vmatpush.msra.mxu0 0.0
    %3710 = vmatpush.msra.mxu0 %v3699
    %3711 = vmatpush.msra.mxu0 %v3698
    %3712 = vmatpush.msra.mxu0 %v3697
    %3713 = vmatpush.msra.mxu0 %v3696
    %3714 = vmatpush.msra.mxu0 %v3695
    %3715 = vmatpush.msra.mxu0 %v3694
    %3716 = vmatpush.msra.mxu0 %v3693
    %3717 = vmatpush.msra.mxu0 %v3692
    %3718 = vmatmul.f32.gmra.mxu0 %v3669
    %v3719 = vpop.f32.mrf.mxu0
    %v3720 = vadd.f32 %v3701, %v3719
    %3721 = vdwg.mxu0
    %s3722 = scalar_lea.vmem %s18, 128
    %v3723 = vld [vmem:[%s3722] sm:$0xff]
    %v3724 = vld [vmem:[%s3722 + $0x8] sm:$0xff]
    %v3725 = vld [vmem:[%s3722 + $0x10] sm:$0xff]
    %v3726 = vld [vmem:[%s3722 + $0x18] sm:$0xff]
    %v3727 = vld [vmem:[%s3722 + $0x20] sm:$0xff]
    %v3728 = vld [vmem:[%s3722 + $0x28] sm:$0xff]
    %v3729 = vld [vmem:[%s3722 + $0x30] sm:$0xff]
    %v3730 = vld [vmem:[%s3722 + $0x38] sm:$0xff]
    %s3731 = scalar_lea.vmem %s20, 2
    %v3732 = vld [vmem:[%s3731] sm:$0x1]
    %3733 = vmatpush.msra.mxu0 0.0
    %3734 = vmatpush.msra.mxu0 0.0
    %3735 = vmatpush.msra.mxu0 0.0
    %3736 = vmatpush.msra.mxu0 0.0
    %3737 = vmatpush.msra.mxu0 0.0
    %3738 = vmatpush.msra.mxu0 0.0
    %3739 = vmatpush.msra.mxu0 0.0
    %3740 = vmatpush.msra.mxu0 0.0
    %3741 = vmatpush.msra.mxu0 %v3730
    %3742 = vmatpush.msra.mxu0 %v3729
    %3743 = vmatpush.msra.mxu0 %v3728
    %3744 = vmatpush.msra.mxu0 %v3727
    %3745 = vmatpush.msra.mxu0 %v3726
    %3746 = vmatpush.msra.mxu0 %v3725
    %3747 = vmatpush.msra.mxu0 %v3724
    %3748 = vmatpush.msra.mxu0 %v3723
    %3749 = vmatmul.f32.gmra.mxu0 %v3669
    %v3750 = vpop.f32.mrf.mxu0
    %v3751 = vadd.f32 %v3732, %v3750
    %3752 = vdwg.mxu0
    %v3753 = vadd.f32 %v3653, %v3689
    %v3754 = vxor.u32 %v3753, 2147483648
    %v3755 = vmul.f32 %v3754, 1.442695
    %v3756 = vpow.pop %v3755
    %v3757 = vadd.f32 %v3756, 1.0
    %v3758 = vrcp.pop %v3757
    %v3759 = vmul.f32 %v3757, %v3758
    %v3760 = vsub.f32 1.0, %v3759
    %v3761 = vmul.f32 %v3758, %v3760
    %v3762 = vadd.f32 %v3758, %v3761
    %vm3763 = vweird.f32 %v3757
    %vm3764 = vweird.f32 %v3758
    %vm3765 = vmor %vm3763, %vm3764
    %v3766 = vsel %vm3765, %v3758, %v3762
    %v3767 = vand.u32 2147483647, %v3757
    %vm3768 = vcmp.eq.f32.partialorder %v3767, 8.507059e+37
    %v3769 = vand.u32 %v3757, 2147483648
    %v3770 = vor.u32 1.1754944e-38, %v3769
    %v3771 = vsel %vm3768, %v3770, %v3766
    %v3772 = vmul.f32 1.0, %v3771
    %v3773 = vadd.f32 %v3655, %v3720
    %v3774 = vxor.u32 %v3773, 2147483648
    %v3775 = vmul.f32 %v3774, 1.442695
    %v3776 = vpow.pop %v3775
    %v3777 = vadd.f32 %v3776, 1.0
    %v3778 = vrcp.pop %v3777
    %v3779 = vmul.f32 %v3777, %v3778
    %v3780 = vsub.f32 1.0, %v3779
    %v3781 = vmul.f32 %v3778, %v3780
    %v3782 = vadd.f32 %v3778, %v3781
    %vm3783 = vweird.f32 %v3777
    %vm3784 = vweird.f32 %v3778
    %vm3785 = vmor %vm3783, %vm3784
    %v3786 = vsel %vm3785, %v3778, %v3782
    %v3787 = vand.u32 2147483647, %v3777
    %vm3788 = vcmp.eq.f32.partialorder %v3787, 8.507059e+37
    %v3789 = vand.u32 %v3777, 2147483648
    %v3790 = vor.u32 1.1754944e-38, %v3789
    %v3791 = vsel %vm3788, %v3790, %v3786
    %v3792 = vmul.f32 1.0, %v3791
    %v3793 = vmul.f32 %v3772, %v3751
    %v3794 = vadd.f32 %v3657, %v3793
    %v3795 = vtanh.pop %v3794
    %v3796 = vsub.f32 1.0, %v3792
    %v3797 = vmul.f32 %v3796, %v3795
    %3798 = vst [vmem:[#allocation1] sm:$0xff] %v3652
    %s3799 = scalar_lea.vmem [#allocation1], 4
    %v3800 = vld [vmem:[%s3799] ss:$9 sm:$0xff]
    %v3802 = vmul.f32 %v3792, %v3800
    %v3803 = vadd.f32 %v3797, %v3802
    %v3804 = vld [vmem:[%s17] sm:$0xff]
    %v3805 = vld [vmem:[%s17 + $0x8] sm:$0xff]
    %v3806 = vld [vmem:[%s17 + $0x10] sm:$0xff]
    %v3807 = vld [vmem:[%s17 + $0x18] sm:$0xff]
    %v3808 = vld [vmem:[%s17 + $0x20] sm:$0xff]
    %v3809 = vld [vmem:[%s17 + $0x28] sm:$0xff]
    %v3810 = vld [vmem:[%s17 + $0x30] sm:$0xff]
    %v3811 = vld [vmem:[%s17 + $0x38] sm:$0xff]
    %v3813 = vsel %vm2229, %v3803, 0
    %3815 = vmatpush.msra.mxu0 0.0
    %3816 = vmatpush.msra.mxu0 0.0
    %3817 = vmatpush.msra.mxu0 0.0
    %3818 = vmatpush.msra.mxu0 0.0
    %3819 = vmatpush.msra.mxu0 0.0
    %3820 = vmatpush.msra.mxu0 0.0
    %3821 = vmatpush.msra.mxu0 0.0
    %3822 = vmatpush.msra.mxu0 0.0
    %3823 = vmatpush.msra.mxu0 %v3811
    %3824 = vmatpush.msra.mxu0 %v3810
    %3825 = vmatpush.msra.mxu0 %v3809
    %3826 = vmatpush.msra.mxu0 %v3808
    %3827 = vmatpush.msra.mxu0 %v3807
    %3828 = vmatpush.msra.mxu0 %v3806
    %3829 = vmatpush.msra.mxu0 %v3805
    %3830 = vmatpush.msra.mxu0 %v3804
    %3831 = vmatmul.f32.gmra.mxu0 %v3813
    %v3832 = vpop.f32.mrf.mxu0
    %v3833 = vadd.f32 %v3653, %v3832
    %3834 = vdwg.mxu0
    %s3835 = scalar_lea.vmem %s17, 64
    %v3836 = vld [vmem:[%s3835] sm:$0xff]
    %v3837 = vld [vmem:[%s3835 + $0x8] sm:$0xff]
    %v3838 = vld [vmem:[%s3835 + $0x10] sm:$0xff]
    %v3839 = vld [vmem:[%s3835 + $0x18] sm:$0xff]
    %v3840 = vld [vmem:[%s3835 + $0x20] sm:$0xff]
    %v3841 = vld [vmem:[%s3835 + $0x28] sm:$0xff]
    %v3842 = vld [vmem:[%s3835 + $0x30] sm:$0xff]
    %v3843 = vld [vmem:[%s3835 + $0x38] sm:$0xff]
    %3844 = vmatpush.msra.mxu0 0.0
    %3845 = vmatpush.msra.mxu0 0.0
    %3846 = vmatpush.msra.mxu0 0.0
    %3847 = vmatpush.msra.mxu0 0.0
    %3848 = vmatpush.msra.mxu0 0.0
    %3849 = vmatpush.msra.mxu0 0.0
    %3850 = vmatpush.msra.mxu0 0.0
    %3851 = vmatpush.msra.mxu0 0.0
    %3852 = vmatpush.msra.mxu0 %v3843
    %3853 = vmatpush.msra.mxu0 %v3842
    %3854 = vmatpush.msra.mxu0 %v3841
    %3855 = vmatpush.msra.mxu0 %v3840
    %3856 = vmatpush.msra.mxu0 %v3839
    %3857 = vmatpush.msra.mxu0 %v3838
    %3858 = vmatpush.msra.mxu0 %v3837
    %3859 = vmatpush.msra.mxu0 %v3836
    %3860 = vmatmul.f32.gmra.mxu0 %v3813
    %v3861 = vpop.f32.mrf.mxu0
    %v3862 = vadd.f32 %v3655, %v3861
    %3863 = vdwg.mxu0
    %s3864 = scalar_lea.vmem %s17, 128
    %v3865 = vld [vmem:[%s3864] sm:$0xff]
    %v3866 = vld [vmem:[%s3864 + $0x8] sm:$0xff]
    %v3867 = vld [vmem:[%s3864 + $0x10] sm:$0xff]
    %v3868 = vld [vmem:[%s3864 + $0x18] sm:$0xff]
    %v3869 = vld [vmem:[%s3864 + $0x20] sm:$0xff]
    %v3870 = vld [vmem:[%s3864 + $0x28] sm:$0xff]
    %v3871 = vld [vmem:[%s3864 + $0x30] sm:$0xff]
    %v3872 = vld [vmem:[%s3864 + $0x38] sm:$0xff]
    %3873 = vmatpush.msra.mxu0 0.0
    %3874 = vmatpush.msra.mxu0 0.0
    %3875 = vmatpush.msra.mxu0 0.0
    %3876 = vmatpush.msra.mxu0 0.0
    %3877 = vmatpush.msra.mxu0 0.0
    %3878 = vmatpush.msra.mxu0 0.0
    %3879 = vmatpush.msra.mxu0 0.0
    %3880 = vmatpush.msra.mxu0 0.0
    %3881 = vmatpush.msra.mxu0 %v3872
    %3882 = vmatpush.msra.mxu0 %v3871
    %3883 = vmatpush.msra.mxu0 %v3870
    %3884 = vmatpush.msra.mxu0 %v3869
    %3885 = vmatpush.msra.mxu0 %v3868
    %3886 = vmatpush.msra.mxu0 %v3867
    %3887 = vmatpush.msra.mxu0 %v3866
    %3888 = vmatpush.msra.mxu0 %v3865
    %3889 = vmatmul.f32.gmra.mxu0 %v3813
    %v3890 = vpop.f32.mrf.mxu0
    %v3891 = vadd.f32 %v3657, %v3890
    %3892 = vdwg.mxu0
    %3893 = vmatpush.msra.mxu0 0.0
    %3894 = vmatpush.msra.mxu0 0.0
    %3895 = vmatpush.msra.mxu0 0.0
    %3896 = vmatpush.msra.mxu0 0.0
    %3897 = vmatpush.msra.mxu0 0.0
    %3898 = vmatpush.msra.mxu0 0.0
    %3899 = vmatpush.msra.mxu0 0.0
    %3900 = vmatpush.msra.mxu0 0.0
    %3901 = vmatpush.msra.mxu0 %v3665
    %3902 = vmatpush.msra.mxu0 %v3664
    %3903 = vmatpush.msra.mxu0 %v3663
    %3904 = vmatpush.msra.mxu0 %v3662
    %3905 = vmatpush.msra.mxu0 %v3661
    %3906 = vmatpush.msra.mxu0 %v3660
    %3907 = vmatpush.msra.mxu0 %v3659
    %3908 = vmatpush.msra.mxu0 %v3658
    %3909 = vmatmul.f32.gmra.mxu0 %v3813
    %v3910 = vpop.f32.mrf.mxu0
    %v3911 = vadd.f32 %v3666, %v3910
    %3912 = vdwg.mxu0
    %3913 = vmatpush.msra.mxu0 0.0
    %3914 = vmatpush.msra.mxu0 0.0
    %3915 = vmatpush.msra.mxu0 0.0
    %3916 = vmatpush.msra.mxu0 0.0
    %3917 = vmatpush.msra.mxu0 0.0
    %3918 = vmatpush.msra.mxu0 0.0
    %3919 = vmatpush.msra.mxu0 0.0
    %3920 = vmatpush.msra.mxu0 0.0
    %3921 = vmatpush.msra.mxu0 %v3699
    %3922 = vmatpush.msra.mxu0 %v3698
    %3923 = vmatpush.msra.mxu0 %v3697
    %3924 = vmatpush.msra.mxu0 %v3696
    %3925 = vmatpush.msra.mxu0 %v3695
    %3926 = vmatpush.msra.mxu0 %v3694
    %3927 = vmatpush.msra.mxu0 %v3693
    %3928 = vmatpush.msra.mxu0 %v3692
    %3929 = vmatmul.f32.gmra.mxu0 %v3813
    %v3930 = vpop.f32.mrf.mxu0
    %v3931 = vadd.f32 %v3701, %v3930
    %3932 = vdwg.mxu0
    %3933 = vmatpush.msra.mxu0 0.0
    %3934 = vmatpush.msra.mxu0 0.0
    %3935 = vmatpush.msra.mxu0 0.0
    %3936 = vmatpush.msra.mxu0 0.0
    %3937 = vmatpush.msra.mxu0 0.0
    %3938 = vmatpush.msra.mxu0 0.0
    %3939 = vmatpush.msra.mxu0 0.0
    %3940 = vmatpush.msra.mxu0 0.0
    %3941 = vmatpush.msra.mxu0 %v3730
    %3942 = vmatpush.msra.mxu0 %v3729
    %3943 = vmatpush.msra.mxu0 %v3728
    %3944 = vmatpush.msra.mxu0 %v3727
    %3945 = vmatpush.msra.mxu0 %v3726
    %3946 = vmatpush.msra.mxu0 %v3725
    %3947 = vmatpush.msra.mxu0 %v3724
    %3948 = vmatpush.msra.mxu0 %v3723
    %3949 = vmatmul.f32.gmra.mxu0 %v3813
    %v3950 = vpop.f32.mrf.mxu0
    %v3951 = vadd.f32 %v3732, %v3950
    %3952 = vdwg.mxu0
    %v3953 = vadd.f32 %v3833, %v3911
    %v3954 = vxor.u32 %v3953, 2147483648
    %v3955 = vmul.f32 %v3954, 1.442695
    %v3956 = vpow.pop %v3955
    %v3957 = vadd.f32 %v3956, 1.0
    %v3958 = vrcp.pop %v3957
    %v3959 = vmul.f32 %v3957, %v3958
    %v3960 = vsub.f32 1.0, %v3959
    %v3961 = vmul.f32 %v3958, %v3960
    %v3962 = vadd.f32 %v3958, %v3961
    %vm3963 = vweird.f32 %v3957
    %vm3964 = vweird.f32 %v3958
    %vm3965 = vmor %vm3963, %vm3964
    %v3966 = vsel %vm3965, %v3958, %v3962
    %v3967 = vand.u32 2147483647, %v3957
    %vm3968 = vcmp.eq.f32.partialorder %v3967, 8.507059e+37
    %v3969 = vand.u32 %v3957, 2147483648
    %v3970 = vor.u32 1.1754944e-38, %v3969
    %v3971 = vsel %vm3968, %v3970, %v3966
    %v3972 = vmul.f32 1.0, %v3971
    %v3973 = vadd.f32 %v3862, %v3931
    %v3974 = vxor.u32 %v3973, 2147483648
    %v3975 = vmul.f32 %v3974, 1.442695
    %v3976 = vpow.pop %v3975
    %v3977 = vadd.f32 %v3976, 1.0
    %v3978 = vrcp.pop %v3977
    %v3979 = vmul.f32 %v3977, %v3978
    %v3980 = vsub.f32 1.0, %v3979
    %v3981 = vmul.f32 %v3978, %v3980
    %v3982 = vadd.f32 %v3978, %v3981
    %vm3983 = vweird.f32 %v3977
    %vm3984 = vweird.f32 %v3978
    %vm3985 = vmor %vm3983, %vm3984
    %v3986 = vsel %vm3985, %v3978, %v3982
    %v3987 = vand.u32 2147483647, %v3977
    %vm3988 = vcmp.eq.f32.partialorder %v3987, 8.507059e+37
    %v3989 = vand.u32 %v3977, 2147483648
    %v3990 = vor.u32 1.1754944e-38, %v3989
    %v3991 = vsel %vm3988, %v3990, %v3986
    %v3992 = vmul.f32 1.0, %v3991
    %v3993 = vmul.f32 %v3972, %v3951
    %v3994 = vadd.f32 %v3891, %v3993
    %v3995 = vtanh.pop %v3994
    %v3996 = vsub.f32 1.0, %v3992
    %v3997 = vmul.f32 %v3996, %v3995
    %v3998 = vmul.f32 %v3992, %v3803
    %v3999 = vadd.f32 %v3997, %v3998
    %v4001 = vsel %vm2229, %v3999, 0
    %4003 = vmatpush.msra.mxu0 0.0
    %4004 = vmatpush.msra.mxu0 0.0
    %4005 = vmatpush.msra.mxu0 0.0
    %4006 = vmatpush.msra.mxu0 0.0
    %4007 = vmatpush.msra.mxu0 0.0
    %4008 = vmatpush.msra.mxu0 0.0
    %4009 = vmatpush.msra.mxu0 0.0
    %4010 = vmatpush.msra.mxu0 0.0
    %4011 = vmatpush.msra.mxu0 %v3811
    %4012 = vmatpush.msra.mxu0 %v3810
    %4013 = vmatpush.msra.mxu0 %v3809
    %4014 = vmatpush.msra.mxu0 %v3808
    %4015 = vmatpush.msra.mxu0 %v3807
    %4016 = vmatpush.msra.mxu0 %v3806
    %4017 = vmatpush.msra.mxu0 %v3805
    %4018 = vmatpush.msra.mxu0 %v3804
    %4019 = vmatmul.f32.gmra.mxu0 %v4001
    %v4020 = vpop.f32.mrf.mxu0
    %v4021 = vadd.f32 %v3653, %v4020
    %4022 = vdwg.mxu0
    %4023 = vmatpush.msra.mxu0 0.0
    %4024 = vmatpush.msra.mxu0 0.0
    %4025 = vmatpush.msra.mxu0 0.0
    %4026 = vmatpush.msra.mxu0 0.0
    %4027 = vmatpush.msra.mxu0 0.0
    %4028 = vmatpush.msra.mxu0 0.0
    %4029 = vmatpush.msra.mxu0 0.0
    %4030 = vmatpush.msra.mxu0 0.0
    %4031 = vmatpush.msra.mxu0 %v3843
    %4032 = vmatpush.msra.mxu0 %v3842
    %4033 = vmatpush.msra.mxu0 %v3841
    %4034 = vmatpush.msra.mxu0 %v3840
    %4035 = vmatpush.msra.mxu0 %v3839
    %4036 = vmatpush.msra.mxu0 %v3838
    %4037 = vmatpush.msra.mxu0 %v3837
    %4038 = vmatpush.msra.mxu0 %v3836
    %4039 = vmatmul.f32.gmra.mxu0 %v4001
    %v4040 = vpop.f32.mrf.mxu0
    %v4041 = vadd.f32 %v3655, %v4040
    %4042 = vdwg.mxu0
    %4043 = vmatpush.msra.mxu0 0.0
    %4044 = vmatpush.msra.mxu0 0.0
    %4045 = vmatpush.msra.mxu0 0.0
    %4046 = vmatpush.msra.mxu0 0.0
    %4047 = vmatpush.msra.mxu0 0.0
    %4048 = vmatpush.msra.mxu0 0.0
    %4049 = vmatpush.msra.mxu0 0.0
    %4050 = vmatpush.msra.mxu0 0.0
    %4051 = vmatpush.msra.mxu0 %v3872
    %4052 = vmatpush.msra.mxu0 %v3871
    %4053 = vmatpush.msra.mxu0 %v3870
    %4054 = vmatpush.msra.mxu0 %v3869
    %4055 = vmatpush.msra.mxu0 %v3868
    %4056 = vmatpush.msra.mxu0 %v3867
    %4057 = vmatpush.msra.mxu0 %v3866
    %4058 = vmatpush.msra.mxu0 %v3865
    %4059 = vmatmul.f32.gmra.mxu0 %v4001
    %v4060 = vpop.f32.mrf.mxu0
    %v4061 = vadd.f32 %v3657, %v4060
    %4062 = vdwg.mxu0
    %4063 = vmatpush.msra.mxu0 0.0
    %4064 = vmatpush.msra.mxu0 0.0
    %4065 = vmatpush.msra.mxu0 0.0
    %4066 = vmatpush.msra.mxu0 0.0
    %4067 = vmatpush.msra.mxu0 0.0
    %4068 = vmatpush.msra.mxu0 0.0
    %4069 = vmatpush.msra.mxu0 0.0
    %4070 = vmatpush.msra.mxu0 0.0
    %4071 = vmatpush.msra.mxu0 %v3665
    %4072 = vmatpush.msra.mxu0 %v3664
    %4073 = vmatpush.msra.mxu0 %v3663
    %4074 = vmatpush.msra.mxu0 %v3662
    %4075 = vmatpush.msra.mxu0 %v3661
    %4076 = vmatpush.msra.mxu0 %v3660
    %4077 = vmatpush.msra.mxu0 %v3659
    %4078 = vmatpush.msra.mxu0 %v3658
    %4079 = vmatmul.f32.gmra.mxu0 %v4001
    %v4080 = vpop.f32.mrf.mxu0
    %v4081 = vadd.f32 %v3666, %v4080
    %4082 = vdwg.mxu0
    %4083 = vmatpush.msra.mxu0 0.0
    %4084 = vmatpush.msra.mxu0 0.0
    %4085 = vmatpush.msra.mxu0 0.0
    %4086 = vmatpush.msra.mxu0 0.0
    %4087 = vmatpush.msra.mxu0 0.0
    %4088 = vmatpush.msra.mxu0 0.0
    %4089 = vmatpush.msra.mxu0 0.0
    %4090 = vmatpush.msra.mxu0 0.0
    %4091 = vmatpush.msra.mxu0 %v3699
    %4092 = vmatpush.msra.mxu0 %v3698
    %4093 = vmatpush.msra.mxu0 %v3697
    %4094 = vmatpush.msra.mxu0 %v3696
    %4095 = vmatpush.msra.mxu0 %v3695
    %4096 = vmatpush.msra.mxu0 %v3694
    %4097 = vmatpush.msra.mxu0 %v3693
    %4098 = vmatpush.msra.mxu0 %v3692
    %4099 = vmatmul.f32.gmra.mxu0 %v4001
    %v4100 = vpop.f32.mrf.mxu0
    %v4101 = vadd.f32 %v3701, %v4100
    %4102 = vdwg.mxu0
    %4103 = vmatpush.msra.mxu0 0.0
    %4104 = vmatpush.msra.mxu0 0.0
    %4105 = vmatpush.msra.mxu0 0.0
    %4106 = vmatpush.msra.mxu0 0.0
    %4107 = vmatpush.msra.mxu0 0.0
    %4108 = vmatpush.msra.mxu0 0.0
    %4109 = vmatpush.msra.mxu0 0.0
    %4110 = vmatpush.msra.mxu0 0.0
    %4111 = vmatpush.msra.mxu0 %v3730
    %4112 = vmatpush.msra.mxu0 %v3729
    %4113 = vmatpush.msra.mxu0 %v3728
    %4114 = vmatpush.msra.mxu0 %v3727
    %4115 = vmatpush.msra.mxu0 %v3726
    %4116 = vmatpush.msra.mxu0 %v3725
    %4117 = vmatpush.msra.mxu0 %v3724
    %4118 = vmatpush.msra.mxu0 %v3723
    %4119 = vmatmul.f32.gmra.mxu0 %v4001
    %v4120 = vpop.f32.mrf.mxu0
    %v4121 = vadd.f32 %v3732, %v4120
    %4122 = vdwg.mxu0
    %v4123 = vadd.f32 %v4021, %v4081
    %v4124 = vxor.u32 %v4123, 2147483648
    %v4125 = vmul.f32 %v4124, 1.442695
    %v4126 = vpow.pop %v4125
    %v4127 = vadd.f32 %v4126, 1.0
    %v4128 = vrcp.pop %v4127
    %v4129 = vmul.f32 %v4127, %v4128
    %v4130 = vsub.f32 1.0, %v4129
    %v4131 = vmul.f32 %v4128, %v4130
    %v4132 = vadd.f32 %v4128, %v4131
    %vm4133 = vweird.f32 %v4127
    %vm4134 = vweird.f32 %v4128
    %vm4135 = vmor %vm4133, %vm4134
    %v4136 = vsel %vm4135, %v4128, %v4132
    %v4137 = vand.u32 2147483647, %v4127
    %vm4138 = vcmp.eq.f32.partialorder %v4137, 8.507059e+37
    %v4139 = vand.u32 %v4127, 2147483648
    %v4140 = vor.u32 1.1754944e-38, %v4139
    %v4141 = vsel %vm4138, %v4140, %v4136
    %v4142 = vmul.f32 1.0, %v4141
    %v4143 = vadd.f32 %v4041, %v4101
    %v4144 = vxor.u32 %v4143, 2147483648
    %v4145 = vmul.f32 %v4144, 1.442695
    %v4146 = vpow.pop %v4145
    %v4147 = vadd.f32 %v4146, 1.0
    %v4148 = vrcp.pop %v4147
    %v4149 = vmul.f32 %v4147, %v4148
    %v4150 = vsub.f32 1.0, %v4149
    %v4151 = vmul.f32 %v4148, %v4150
    %v4152 = vadd.f32 %v4148, %v4151
    %vm4153 = vweird.f32 %v4147
    %vm4154 = vweird.f32 %v4148
    %vm4155 = vmor %vm4153, %vm4154
    %v4156 = vsel %vm4155, %v4148, %v4152
    %v4157 = vand.u32 2147483647, %v4147
    %vm4158 = vcmp.eq.f32.partialorder %v4157, 8.507059e+37
    %v4159 = vand.u32 %v4147, 2147483648
    %v4160 = vor.u32 1.1754944e-38, %v4159
    %v4161 = vsel %vm4158, %v4160, %v4156
    %v4162 = vmul.f32 1.0, %v4161
    %v4163 = vmul.f32 %v4142, %v4121
    %v4164 = vadd.f32 %v4061, %v4163
    %v4165 = vtanh.pop %v4164
    %v4166 = vsub.f32 1.0, %v4162
    %v4167 = vmul.f32 %v4166, %v4165
    %v4168 = vmul.f32 %v4162, %v3999
    %v4169 = vadd.f32 %v4167, %v4168
    %v4171 = vsel %vm2229, %v4169, 0
    %4173 = vmatpush.msra.mxu0 0.0
    %4174 = vmatpush.msra.mxu0 0.0
    %4175 = vmatpush.msra.mxu0 0.0
    %4176 = vmatpush.msra.mxu0 0.0
    %4177 = vmatpush.msra.mxu0 0.0
    %4178 = vmatpush.msra.mxu0 0.0
    %4179 = vmatpush.msra.mxu0 0.0
    %4180 = vmatpush.msra.mxu0 0.0
    %4181 = vmatpush.msra.mxu0 %v3811
    %4182 = vmatpush.msra.mxu0 %v3810
    %4183 = vmatpush.msra.mxu0 %v3809
    %4184 = vmatpush.msra.mxu0 %v3808
    %4185 = vmatpush.msra.mxu0 %v3807
    %4186 = vmatpush.msra.mxu0 %v3806
    %4187 = vmatpush.msra.mxu0 %v3805
    %4188 = vmatpush.msra.mxu0 %v3804
    %4189 = vmatmul.f32.gmra.mxu0 %v4171
    %v4190 = vpop.f32.mrf.mxu0
    %v4191 = vadd.f32 %v3653, %v4190
    %4192 = vdwg.mxu0
    %4193 = vmatpush.msra.mxu0 0.0
    %4194 = vmatpush.msra.mxu0 0.0
    %4195 = vmatpush.msra.mxu0 0.0
    %4196 = vmatpush.msra.mxu0 0.0
    %4197 = vmatpush.msra.mxu0 0.0
    %4198 = vmatpush.msra.mxu0 0.0
    %4199 = vmatpush.msra.mxu0 0.0
    %4200 = vmatpush.msra.mxu0 0.0
    %4201 = vmatpush.msra.mxu0 %v3843
    %4202 = vmatpush.msra.mxu0 %v3842
    %4203 = vmatpush.msra.mxu0 %v3841
    %4204 = vmatpush.msra.mxu0 %v3840
    %4205 = vmatpush.msra.mxu0 %v3839
    %4206 = vmatpush.msra.mxu0 %v3838
    %4207 = vmatpush.msra.mxu0 %v3837
    %4208 = vmatpush.msra.mxu0 %v3836
    %4209 = vmatmul.f32.gmra.mxu0 %v4171
    %v4210 = vpop.f32.mrf.mxu0
    %v4211 = vadd.f32 %v3655, %v4210
    %4212 = vdwg.mxu0
    %4213 = vmatpush.msra.mxu0 0.0
    %4214 = vmatpush.msra.mxu0 0.0
    %4215 = vmatpush.msra.mxu0 0.0
    %4216 = vmatpush.msra.mxu0 0.0
    %4217 = vmatpush.msra.mxu0 0.0
    %4218 = vmatpush.msra.mxu0 0.0
    %4219 = vmatpush.msra.mxu0 0.0
    %4220 = vmatpush.msra.mxu0 0.0
    %4221 = vmatpush.msra.mxu0 %v3872
    %4222 = vmatpush.msra.mxu0 %v3871
    %4223 = vmatpush.msra.mxu0 %v3870
    %4224 = vmatpush.msra.mxu0 %v3869
    %4225 = vmatpush.msra.mxu0 %v3868
    %4226 = vmatpush.msra.mxu0 %v3867
    %4227 = vmatpush.msra.mxu0 %v3866
    %4228 = vmatpush.msra.mxu0 %v3865
    %4229 = vmatmul.f32.gmra.mxu0 %v4171
    %v4230 = vpop.f32.mrf.mxu0
    %v4231 = vadd.f32 %v3657, %v4230
    %4232 = vdwg.mxu0
    %4233 = vmatpush.msra.mxu0 0.0
    %4234 = vmatpush.msra.mxu0 0.0
    %4235 = vmatpush.msra.mxu0 0.0
    %4236 = vmatpush.msra.mxu0 0.0
    %4237 = vmatpush.msra.mxu0 0.0
    %4238 = vmatpush.msra.mxu0 0.0
    %4239 = vmatpush.msra.mxu0 0.0
    %4240 = vmatpush.msra.mxu0 0.0
    %4241 = vmatpush.msra.mxu0 %v3665
    %4242 = vmatpush.msra.mxu0 %v3664
    %4243 = vmatpush.msra.mxu0 %v3663
    %4244 = vmatpush.msra.mxu0 %v3662
    %4245 = vmatpush.msra.mxu0 %v3661
    %4246 = vmatpush.msra.mxu0 %v3660
    %4247 = vmatpush.msra.mxu0 %v3659
    %4248 = vmatpush.msra.mxu0 %v3658
    %4249 = vmatmul.f32.gmra.mxu0 %v4171
    %v4250 = vpop.f32.mrf.mxu0
    %v4251 = vadd.f32 %v3666, %v4250
    %4252 = vdwg.mxu0
    %4253 = vmatpush.msra.mxu0 0.0
    %4254 = vmatpush.msra.mxu0 0.0
    %4255 = vmatpush.msra.mxu0 0.0
    %4256 = vmatpush.msra.mxu0 0.0
    %4257 = vmatpush.msra.mxu0 0.0
    %4258 = vmatpush.msra.mxu0 0.0
    %4259 = vmatpush.msra.mxu0 0.0
    %4260 = vmatpush.msra.mxu0 0.0
    %4261 = vmatpush.msra.mxu0 %v3699
    %4262 = vmatpush.msra.mxu0 %v3698
    %4263 = vmatpush.msra.mxu0 %v3697
    %4264 = vmatpush.msra.mxu0 %v3696
    %4265 = vmatpush.msra.mxu0 %v3695
    %4266 = vmatpush.msra.mxu0 %v3694
    %4267 = vmatpush.msra.mxu0 %v3693
    %4268 = vmatpush.msra.mxu0 %v3692
    %4269 = vmatmul.f32.gmra.mxu0 %v4171
    %v4270 = vpop.f32.mrf.mxu0
    %v4271 = vadd.f32 %v3701, %v4270
    %4272 = vdwg.mxu0
    %4273 = vmatpush.msra.mxu0 0.0
    %4274 = vmatpush.msra.mxu0 0.0
    %4275 = vmatpush.msra.mxu0 0.0
    %4276 = vmatpush.msra.mxu0 0.0
    %4277 = vmatpush.msra.mxu0 0.0
    %4278 = vmatpush.msra.mxu0 0.0
    %4279 = vmatpush.msra.mxu0 0.0
    %4280 = vmatpush.msra.mxu0 0.0
    %4281 = vmatpush.msra.mxu0 %v3730
    %4282 = vmatpush.msra.mxu0 %v3729
    %4283 = vmatpush.msra.mxu0 %v3728
    %4284 = vmatpush.msra.mxu0 %v3727
    %4285 = vmatpush.msra.mxu0 %v3726
    %4286 = vmatpush.msra.mxu0 %v3725
    %4287 = vmatpush.msra.mxu0 %v3724
    %4288 = vmatpush.msra.mxu0 %v3723
    %4289 = vmatmul.f32.gmra.mxu0 %v4171
    %v4290 = vpop.f32.mrf.mxu0
    %v4291 = vadd.f32 %v3732, %v4290
    %4292 = vdwg.mxu0
    %v4293 = vadd.f32 %v4191, %v4251
    %v4294 = vxor.u32 %v4293, 2147483648
    %v4295 = vmul.f32 %v4294, 1.442695
    %v4296 = vpow.pop %v4295
    %v4297 = vadd.f32 %v4296, 1.0
    %v4298 = vrcp.pop %v4297
    %v4299 = vmul.f32 %v4297, %v4298
    %v4300 = vsub.f32 1.0, %v4299
    %v4301 = vmul.f32 %v4298, %v4300
    %v4302 = vadd.f32 %v4298, %v4301
    %vm4303 = vweird.f32 %v4297
    %vm4304 = vweird.f32 %v4298
    %vm4305 = vmor %vm4303, %vm4304
    %v4306 = vsel %vm4305, %v4298, %v4302
    %v4307 = vand.u32 2147483647, %v4297
    %vm4308 = vcmp.eq.f32.partialorder %v4307, 8.507059e+37
    %v4309 = vand.u32 %v4297, 2147483648
    %v4310 = vor.u32 1.1754944e-38, %v4309
    %v4311 = vsel %vm4308, %v4310, %v4306
    %v4312 = vmul.f32 1.0, %v4311
    %v4313 = vadd.f32 %v4211, %v4271
    %v4314 = vxor.u32 %v4313, 2147483648
    %v4315 = vmul.f32 %v4314, 1.442695
    %v4316 = vpow.pop %v4315
    %v4317 = vadd.f32 %v4316, 1.0
    %v4318 = vrcp.pop %v4317
    %v4319 = vmul.f32 %v4317, %v4318
    %v4320 = vsub.f32 1.0, %v4319
    %v4321 = vmul.f32 %v4318, %v4320
    %v4322 = vadd.f32 %v4318, %v4321
    %vm4323 = vweird.f32 %v4317
    %vm4324 = vweird.f32 %v4318
    %vm4325 = vmor %vm4323, %vm4324
    %v4326 = vsel %vm4325, %v4318, %v4322
    %v4327 = vand.u32 2147483647, %v4317
    %vm4328 = vcmp.eq.f32.partialorder %v4327, 8.507059e+37
    %v4329 = vand.u32 %v4317, 2147483648
    %v4330 = vor.u32 1.1754944e-38, %v4329
    %v4331 = vsel %vm4328, %v4330, %v4326
    %v4332 = vmul.f32 1.0, %v4331
    %v4333 = vmul.f32 %v4312, %v4291
    %v4334 = vadd.f32 %v4231, %v4333
    %v4335 = vtanh.pop %v4334
    %v4336 = vsub.f32 1.0, %v4332
    %v4337 = vmul.f32 %v4336, %v4335
    %v4338 = vmul.f32 %v4332, %v4169
    %v4339 = vadd.f32 %v4337, %v4338
    %v4341 = vsel %vm2229, %v4339, 0
    %4343 = vmatpush.msra.mxu0 0.0
    %4344 = vmatpush.msra.mxu0 0.0
    %4345 = vmatpush.msra.mxu0 0.0
    %4346 = vmatpush.msra.mxu0 0.0
    %4347 = vmatpush.msra.mxu0 0.0
    %4348 = vmatpush.msra.mxu0 0.0
    %4349 = vmatpush.msra.mxu0 0.0
    %4350 = vmatpush.msra.mxu0 0.0
    %4351 = vmatpush.msra.mxu0 %v3811
    %4352 = vmatpush.msra.mxu0 %v3810
    %4353 = vmatpush.msra.mxu0 %v3809
    %4354 = vmatpush.msra.mxu0 %v3808
    %4355 = vmatpush.msra.mxu0 %v3807
    %4356 = vmatpush.msra.mxu0 %v3806
    %4357 = vmatpush.msra.mxu0 %v3805
    %4358 = vmatpush.msra.mxu0 %v3804
    %4359 = vmatmul.f32.gmra.mxu0 %v4341
    %v4360 = vpop.f32.mrf.mxu0
    %v4361 = vadd.f32 %v3653, %v4360
    %4362 = vdwg.mxu0
    %4363 = vmatpush.msra.mxu0 0.0
    %4364 = vmatpush.msra.mxu0 0.0
    %4365 = vmatpush.msra.mxu0 0.0
    %4366 = vmatpush.msra.mxu0 0.0
    %4367 = vmatpush.msra.mxu0 0.0
    %4368 = vmatpush.msra.mxu0 0.0
    %4369 = vmatpush.msra.mxu0 0.0
    %4370 = vmatpush.msra.mxu0 0.0
    %4371 = vmatpush.msra.mxu0 %v3843
    %4372 = vmatpush.msra.mxu0 %v3842
    %4373 = vmatpush.msra.mxu0 %v3841
    %4374 = vmatpush.msra.mxu0 %v3840
    %4375 = vmatpush.msra.mxu0 %v3839
    %4376 = vmatpush.msra.mxu0 %v3838
    %4377 = vmatpush.msra.mxu0 %v3837
    %4378 = vmatpush.msra.mxu0 %v3836
    %4379 = vmatmul.f32.gmra.mxu0 %v4341
    %v4380 = vpop.f32.mrf.mxu0
    %v4381 = vadd.f32 %v3655, %v4380
    %4382 = vdwg.mxu0
    %4383 = vmatpush.msra.mxu0 0.0
    %4384 = vmatpush.msra.mxu0 0.0
    %4385 = vmatpush.msra.mxu0 0.0
    %4386 = vmatpush.msra.mxu0 0.0
    %4387 = vmatpush.msra.mxu0 0.0
    %4388 = vmatpush.msra.mxu0 0.0
    %4389 = vmatpush.msra.mxu0 0.0
    %4390 = vmatpush.msra.mxu0 0.0
    %4391 = vmatpush.msra.mxu0 %v3872
    %4392 = vmatpush.msra.mxu0 %v3871
    %4393 = vmatpush.msra.mxu0 %v3870
    %4394 = vmatpush.msra.mxu0 %v3869
    %4395 = vmatpush.msra.mxu0 %v3868
    %4396 = vmatpush.msra.mxu0 %v3867
    %4397 = vmatpush.msra.mxu0 %v3866
    %4398 = vmatpush.msra.mxu0 %v3865
    %4399 = vmatmul.f32.gmra.mxu0 %v4341
    %v4400 = vpop.f32.mrf.mxu0
    %v4401 = vadd.f32 %v3657, %v4400
    %4402 = vdwg.mxu0
    %4403 = vmatpush.msra.mxu0 0.0
    %4404 = vmatpush.msra.mxu0 0.0
    %4405 = vmatpush.msra.mxu0 0.0
    %4406 = vmatpush.msra.mxu0 0.0
    %4407 = vmatpush.msra.mxu0 0.0
    %4408 = vmatpush.msra.mxu0 0.0
    %4409 = vmatpush.msra.mxu0 0.0
    %4410 = vmatpush.msra.mxu0 0.0
    %4411 = vmatpush.msra.mxu0 %v3665
    %4412 = vmatpush.msra.mxu0 %v3664
    %4413 = vmatpush.msra.mxu0 %v3663
    %4414 = vmatpush.msra.mxu0 %v3662
    %4415 = vmatpush.msra.mxu0 %v3661
    %4416 = vmatpush.msra.mxu0 %v3660
    %4417 = vmatpush.msra.mxu0 %v3659
    %4418 = vmatpush.msra.mxu0 %v3658
    %4419 = vmatmul.f32.gmra.mxu0 %v4341
    %v4420 = vpop.f32.mrf.mxu0
    %v4421 = vadd.f32 %v3666, %v4420
    %4422 = vdwg.mxu0
    %4423 = vmatpush.msra.mxu0 0.0
    %4424 = vmatpush.msra.mxu0 0.0
    %4425 = vmatpush.msra.mxu0 0.0
    %4426 = vmatpush.msra.mxu0 0.0
    %4427 = vmatpush.msra.mxu0 0.0
    %4428 = vmatpush.msra.mxu0 0.0
    %4429 = vmatpush.msra.mxu0 0.0
    %4430 = vmatpush.msra.mxu0 0.0
    %4431 = vmatpush.msra.mxu0 %v3699
    %4432 = vmatpush.msra.mxu0 %v3698
    %4433 = vmatpush.msra.mxu0 %v3697
    %4434 = vmatpush.msra.mxu0 %v3696
    %4435 = vmatpush.msra.mxu0 %v3695
    %4436 = vmatpush.msra.mxu0 %v3694
    %4437 = vmatpush.msra.mxu0 %v3693
    %4438 = vmatpush.msra.mxu0 %v3692
    %4439 = vmatmul.f32.gmra.mxu0 %v4341
    %v4440 = vpop.f32.mrf.mxu0
    %v4441 = vadd.f32 %v3701, %v4440
    %4442 = vdwg.mxu0
    %4443 = vmatpush.msra.mxu0 0.0
    %4444 = vmatpush.msra.mxu0 0.0
    %4445 = vmatpush.msra.mxu0 0.0
    %4446 = vmatpush.msra.mxu0 0.0
    %4447 = vmatpush.msra.mxu0 0.0
    %4448 = vmatpush.msra.mxu0 0.0
    %4449 = vmatpush.msra.mxu0 0.0
    %4450 = vmatpush.msra.mxu0 0.0
    %4451 = vmatpush.msra.mxu0 %v3730
    %4452 = vmatpush.msra.mxu0 %v3729
    %4453 = vmatpush.msra.mxu0 %v3728
    %4454 = vmatpush.msra.mxu0 %v3727
    %4455 = vmatpush.msra.mxu0 %v3726
    %4456 = vmatpush.msra.mxu0 %v3725
    %4457 = vmatpush.msra.mxu0 %v3724
    %4458 = vmatpush.msra.mxu0 %v3723
    %4459 = vmatmul.f32.gmra.mxu0 %v4341
    %v4460 = vpop.f32.mrf.mxu0
    %v4461 = vadd.f32 %v3732, %v4460
    %4462 = vdwg.mxu0
    %v4463 = vadd.f32 %v4361, %v4421
    %v4464 = vxor.u32 %v4463, 2147483648
    %v4465 = vmul.f32 %v4464, 1.442695
    %v4466 = vpow.pop %v4465
    %v4467 = vadd.f32 %v4466, 1.0
    %v4468 = vrcp.pop %v4467
    %v4469 = vmul.f32 %v4467, %v4468
    %v4470 = vsub.f32 1.0, %v4469
    %v4471 = vmul.f32 %v4468, %v4470
    %v4472 = vadd.f32 %v4468, %v4471
    %vm4473 = vweird.f32 %v4467
    %vm4474 = vweird.f32 %v4468
    %vm4475 = vmor %vm4473, %vm4474
    %v4476 = vsel %vm4475, %v4468, %v4472
    %v4477 = vand.u32 2147483647, %v4467
    %vm4478 = vcmp.eq.f32.partialorder %v4477, 8.507059e+37
    %v4479 = vand.u32 %v4467, 2147483648
    %v4480 = vor.u32 1.1754944e-38, %v4479
    %v4481 = vsel %vm4478, %v4480, %v4476
    %v4482 = vmul.f32 1.0, %v4481
    %v4483 = vadd.f32 %v4381, %v4441
    %v4484 = vxor.u32 %v4483, 2147483648
    %v4485 = vmul.f32 %v4484, 1.442695
    %v4486 = vpow.pop %v4485
    %v4487 = vadd.f32 %v4486, 1.0
    %v4488 = vrcp.pop %v4487
    %v4489 = vmul.f32 %v4487, %v4488
    %v4490 = vsub.f32 1.0, %v4489
    %v4491 = vmul.f32 %v4488, %v4490
    %v4492 = vadd.f32 %v4488, %v4491
    %vm4493 = vweird.f32 %v4487
    %vm4494 = vweird.f32 %v4488
    %vm4495 = vmor %vm4493, %vm4494
    %v4496 = vsel %vm4495, %v4488, %v4492
    %v4497 = vand.u32 2147483647, %v4487
    %vm4498 = vcmp.eq.f32.partialorder %v4497, 8.507059e+37
    %v4499 = vand.u32 %v4487, 2147483648
    %v4500 = vor.u32 1.1754944e-38, %v4499
    %v4501 = vsel %vm4498, %v4500, %v4496
    %v4502 = vmul.f32 1.0, %v4501
    %v4503 = vmul.f32 %v4482, %v4461
    %v4504 = vadd.f32 %v4401, %v4503
    %v4505 = vtanh.pop %v4504
    %v4506 = vsub.f32 1.0, %v4502
    %v4507 = vmul.f32 %v4506, %v4505
    %v4508 = vmul.f32 %v4502, %v4339
    %v4509 = vadd.f32 %v4507, %v4508
    %v4510 = vrot.slane %v3999, 7
    %v4512 = vrot.slane %v4169, 6
    %v4514 = vrot.slane %v4339, 5
    %v4517 = vrot.slane %v4509, 4
    %vm4519 = vcmask 1040384
    %v4520 = vsel %vm4519, %v3803, %v4510
    %vm4521 = vcmask 1041408
    %v4522 = vsel %vm4521, %v4520, %v4512
    %vm4523 = vcmask 1042432
    %v4524 = vsel %vm4523, %v4522, %v4514
    %vm4525 = vcmask 1043456
    %v4526 = vsel %vm4525, %v4524, %v4517
    %v4527 = vld [vmem:[%s21] sm:$0xff]
    %v4528 = vld [vmem:[%s21 + $0x8] sm:$0xff]
    %v4529 = vld [vmem:[%s21 + $0x10] sm:$0xff]
    %v4530 = vld [vmem:[%s21 + $0x18] sm:$0xff]
    %v4531 = vld [vmem:[%s21 + $0x20] sm:$0xff]
    %v4532 = vld [vmem:[%s21 + $0x28] sm:$0xff]
    %v4533 = vld [vmem:[%s21 + $0x30] sm:$0xff]
    %v4534 = vld [vmem:[%s21 + $0x38] sm:$0xff]
    %v4535 = vld [vmem:[%s22] sm:$0x1]
    %v4537 = vperm.slane %v4535, 0
    %v4540 = vsel %vm2229, %v4526, 0
    %4542 = vmatpush.msra.mxu0 0.0
    %4543 = vmatpush.msra.mxu0 0.0
    %4544 = vmatpush.msra.mxu0 0.0
    %4545 = vmatpush.msra.mxu0 0.0
    %4546 = vmatpush.msra.mxu0 0.0
    %4547 = vmatpush.msra.mxu0 0.0
    %4548 = vmatpush.msra.mxu0 0.0
    %4549 = vmatpush.msra.mxu0 0.0
    %4550 = vmatpush.msra.mxu0 %v4534
    %4551 = vmatpush.msra.mxu0 %v4533
    %4552 = vmatpush.msra.mxu0 %v4532
    %4553 = vmatpush.msra.mxu0 %v4531
    %4554 = vmatpush.msra.mxu0 %v4530
    %4555 = vmatpush.msra.mxu0 %v4529
    %4556 = vmatpush.msra.mxu0 %v4528
    %4557 = vmatpush.msra.mxu0 %v4527
    %4558 = vmatmul.f32.gmra.mxu0 %v4540
    %v4559 = vpop.f32.mrf.mxu0
    %v4560 = vadd.f32 %v4537, %v4559
    %4561 = vdwg.mxu0
    %vm4562 = vcmask 61440
    %4563 = vst.msk [vmem:[#allocation2] sm:$0x1f] %vm4562, %v4560
    // Predicated region
    $region94: #{winseq2seq_forward.1} parent=1 // pred_check
      _
    $region95: #{winseq2seq_forward.1} parent=1 // pred_check_branch
      %4565 = sbr.rel (0) target = $region97
    $region96: #{winseq2seq_forward.1} parent=1 // pred_region
      %4567 = vsyncadd [#allocation3], 0
      %s4569 = sshll.u32 [#allocation2], 4
      %s4570 = int_to_ptr.vmem [resolvable:$true] %s4569
      %s4571 = sshll.u32 %s23, 4
      %s4572 = int_to_ptr.hbm [resolvable:$true] %s4571
      %4574 = dma.vmem_to_hbm [thread:$0]  %s4570, 128, %s4572, [#allocation3]
    $region97: #{winseq2seq_forward.1} parent=1 // pred_fallthru
      _
    // Predicated region
    $region98: #{winseq2seq_forward.1} parent=1 // pred_check
      _
    $region99: #{winseq2seq_forward.1} parent=1 // pred_check_branch
      %4576 = sbr.rel (0) target = $region101
    $region100: #{winseq2seq_forward.1} parent=1 // pred_region
      %4578 = dma.done [#allocation3], 128
    $region101: #{winseq2seq_forward.1} parent=1 // pred_fallthru
      _
    %4579 = vsyncpa [#allocation3], 1

</llo_original>
